<compile_context>
chip_gen: v5e
topology: v5e:2x2
jax: 0.10.0
libtpu: 0.0.40
codegen_flags: <defaults>
</compile_context>

<pallas_src>
import functools

import jax
import jax.numpy as jnp
from jax import lax
from jax.experimental import pallas as pl
from jax.experimental.pallas import tpu as pltpu


_BIG_NEG = -1e30  # finite "padding" sentinel for the max-pool (avoids -inf * gate)


def _round_up(v, m):
    return (v + m - 1) // m * m


def _cmaxgb2_kernel(ph_ref, wg_ref, wmax_ref, bmax_ref,
                    wpc_ref, bpc_ref, wpg_ref, bpg_ref,
                    out_ref, *, C, H, W, Ho, Wo):
    """B_BLK batch images per grid step; all math on lane-dense (HP, WP) canvases.

    ph_ref   : (B_BLK, 4, HP, WP) stride-2 phases of the zero-padded input; phase
               k = 2*p + q holds xpad[p::2, q::2] with (W, C) folded onto the lane
               axis (lane = w*C + c), zero-padded to the canvas.
    wg_ref   : (1, WP) int32   lane -> w-group index (the only mask data shipped)
    wmax_ref : (9, WP)         depthwise max-gate weights, tap-major, lane-tiled
    bmax_ref : (1, WP)
    wpc_ref  : (4, 9, WP)      depthwise pooling-conv weights (leaf, tap, lane)
    bpc_ref  : (4, WP)
    wpg_ref  : (3, 9, WP)      depthwise gate-conv weights   (gate, tap, lane)
    bpg_ref  : (3, WP)
    out_ref  : (B_BLK, HOP, WOP) re-biased output slab (interior at row 0 / lane 0)
    """
    B_BLK = ph_ref.shape[0]
    HP, WP = ph_ref.shape[2], ph_ref.shape[3]
    HOP, WOP = out_ref.shape[1], out_ref.shape[2]

    # Hoisted loads: one whole-ref read each, then indexed as in-register values.
    w_max = wmax_ref[...]       # (9, WP)
    b_max = bmax_ref[...]       # (1, WP)
    w_pc = wpc_ref[...]         # (4, 9, WP)
    b_pc = bpc_ref[...]         # (4, WP)
    w_pg = wpg_ref[...]         # (3, 9, WP)
    b_pg = bpg_ref[...]         # (3, WP)

    # ---- batch-invariant masks, generated in-kernel (no HBM traffic) -------------
    he = lax.broadcasted_iota(jnp.int32, (HP, WP), 0)          # canvas row index
    wg = jnp.broadcast_to(wg_ref[...], (HP, WP))               # lane -> w index
    # tap (di, dj) at canvas (he, wg) reads the original input at
    #   r = 2*he + di - 3,  s = 2*wg + dj - 3   (3-ring zero pad, stride 2, halo row)
    rv = [((2 * he + di - 3) >= 0) & ((2 * he + di - 3) < H) for di in range(3)]
    cv = [((2 * wg + dj - 3) >= 0) & ((2 * wg + dj - 3) < W) for dj in range(3)]
    ok = [rv[di] & cv[dj] for di in range(3) for dj in range(3)]   # max-pool validity
    intm = ((he >= 1) & (he <= Ho) & (wg >= 1) & (wg <= Wo)).astype(jnp.float32)

    def shift(x, dr, dc):
        """y[r, c] = x[r + dr, c + dc] (cyclic rolls; wrapped region masked/unused)."""
        if dr % HP:
            x = pltpu.roll(x, (-dr) % HP, axis=0)
        if dc % WP:
            x = pltpu.roll(x, (-dc) % WP, axis=1)
        return x

    for b in range(B_BLK):
        ph_b = ph_ref[b]                                     # (4, HP, WP)
        ph = {(p, q): ph_b[2 * p + q] for p in (0, 1) for q in (0, 1)}

        # 9 stride-2 conv taps on the halo-extended output canvas, shared by every
        # depthwise conv and the max-pool.
        taps = []
        for di in range(3):
            for dj in range(3):
                taps.append(shift(ph[(di % 2, dj % 2)], di // 2, (dj // 2) * C))

        def dwconv(w, bias):
            """Depthwise 3x3 stride-2 conv: 9-tap MAC with lane-tiled weights."""
            acc = taps[0] * w[0]
            for k in range(1, 9):
                acc = acc + taps[k] * w[k]
            return acc + bias

        # ---- max branch: maxpool(3, s2, p1) * (depthwise maxgate conv + bias) ----
        mx = jnp.where(ok[0], taps[0], _BIG_NEG)
        for k in range(1, 9):
            mx = jnp.maximum(mx, jnp.where(ok[k], taps[k], _BIG_NEG))
        out = mx * dwconv(w_max, b_max[0])

        # ---- level-1 nodes: sigmoid-gated pairs of stride-2 pooling convs --------
        nodes = []
        for c in range(2):
            g1 = jax.nn.sigmoid(dwconv(w_pg[2 * c], b_pg[c]))
            p1 = dwconv(w_pc[2 * c], b_pc[2 * c])
            p2 = dwconv(w_pc[2 * c + 1], b_pc[2 * c + 1])
            # zero the halo ring so the stage-2 pad-1 conv sees proper zero padding
            nodes.append((p2 + g1 * (p1 - p2)) * intm)

        # ---- level-2: stride-1 / pad-1 depthwise gate conv on node0 --------------
        acc = None
        for di in range(3):
            for dj in range(3):
                t = shift(nodes[0], di - 1, (dj - 1) * C) * w_pg[2][3 * di + dj]
                acc = t if acc is None else acc + t
        gg1 = jax.nn.sigmoid(acc + b_pg[2])
        out = out + nodes[1] + gg1 * (nodes[0] - nodes[1])

        # mask the halo (kills the -1e30 sentinel), re-bias so the interior starts
        # at row 0 / lane 0, and store only the aligned lane-dense output slab.
        out = out * intm
        out = shift(out, 1, C)
        out_ref[b] = out[:HOP, :WOP].astype(out_ref.dtype)


def cmaxgb2_forward(x_nchw, params):
    """PyTorch-style NCHW in/out.  XLA glue does layout folding, padding, the stride-2
    phase split and weight lane-tiling; all conv / pooling / gating math runs inside
    the Pallas kernel, B_BLK batch images per grid step."""
    N, C, H, W = x_nchw.shape
    assert H % 2 == 0 and W % 2 == 0, "even spatial dims required (stride-2 split)"
    Ho, Wo = H // 2, W // 2
    Hh, Wh = (H + 6) // 2, (W + 6) // 2          # phase grid (3-ring zero pad, /2)
    HP = _round_up(Hh, 8)                        # sublane-aligned compute canvas rows
    WP = _round_up(Wh * C, 128)                  # lane-aligned canvas width (w*C + c)
    HOP = _round_up(Ho, 8)                       # re-biased output slab rows
    WOP = _round_up(Wo * C, 128)                 # re-biased output slab lanes
    dtype = jnp.float32

    # ---- input: NCHW -> NHWC, zero-pad 3 rings, split into 4 stride-2 phases,
    #      fold (W, C) onto the lane axis, pad to the (HP, WP) canvas -------------
    x = jnp.transpose(x_nchw, (0, 2, 3, 1)).astype(dtype)
    xz = jnp.pad(x, ((0, 0), (3, 3), (3, 3), (0, 0)))
    ph_list = []
    for p in (0, 1):
        for q in (0, 1):
            ph = xz[:, p::2, q::2, :].reshape(N, Hh, Wh * C)
            ph_list.append(jnp.pad(ph, ((0, 0), (0, HP - Hh), (0, WP - Wh * C))))
    phases = jnp.stack(ph_list, axis=1)                               # (N, 4, HP, WP)

    # ---- lane-tiled depthwise weights / biases (read once in-kernel) ------------
    def lane_tile(a):   # (..., C) -> (..., WP) with value[..., l] = a[..., l % C]
        reps = -(-WP // C)
        return jnp.tile(a, reps)[..., :WP].astype(dtype)

    wmax = lane_tile(jnp.transpose(params['maxgate'][:, 0], (1, 2, 0)).reshape(9, C))
    wpc = lane_tile(jnp.transpose(params['pconvs'][:, 0], (3, 1, 2, 0)).reshape(4, 9, C))
    wpg = lane_tile(jnp.transpose(params['pgates'][:, 0], (3, 1, 2, 0)).reshape(3, 9, C))
    bmax = lane_tile(params['mb'][None, :])                           # (1, WP)
    bpc = lane_tile(params['pbs'].T)                                  # (4, WP)
    bpg = lane_tile(params['gbs'].T)                                  # (3, WP)

    # tiny lane -> w-group row: the only mask data shipped to the kernel (512 B);
    # the (9,HP,WP)/(HP,WP) masks themselves are rebuilt in-kernel from iota.
    wgrow = (jnp.arange(WP, dtype=jnp.int32) // C)[None, :]           # (1, WP)

    consts = [wgrow, wmax, bmax, wpc, bpc, wpg, bpg]

    # ---- batch blocking: largest divisor of N with a bounded per-step footprint,
    #      <=8-way in-kernel unroll, and >= min(4, N) grid steps (v7x: 2 TCs) -----
    per_image_bytes = (4 * HP * WP + HOP * WOP) * 4
    budget = 2 * 1024 * 1024
    min_steps = min(4, N)
    b_blk = 1
    for d in range(1, N + 1):
        if (N % d == 0 and d <= 8 and d * per_image_bytes <= budget
                and N // d >= min_steps):
            b_blk = d
    grid = (N // b_blk,)

    def const_spec(a):
        nd = a.ndim
        return pl.BlockSpec(a.shape, lambda i, _nd=nd: (0,) * _nd)

    # advisory cost model: ~7 depthwise 9-tap MAC chains + maxpool + blends per elem
    flops_per_elem = 7 * 18 + 17 + 18 + 14
    cost = pl.CostEstimate(
        flops=int(N * HP * WP * flops_per_elem),
        transcendentals=int(3 * N * HP * WP),
        bytes_accessed=int(4 * (phases.size + N * HOP * WOP
                                + sum(int(a.size) for a in consts))),
    )

    out_padded = pl.pallas_call(
        functools.partial(_cmaxgb2_kernel, C=C, H=H, W=W, Ho=Ho, Wo=Wo),
        out_shape=jax.ShapeDtypeStruct((N, HOP, WOP), dtype),
        grid=grid,
        in_specs=[pl.BlockSpec((b_blk, 4, HP, WP), lambda i: (i, 0, 0, 0))]
                 + [const_spec(a) for a in consts],
        out_specs=pl.BlockSpec((b_blk, HOP, WOP), lambda i: (i, 0, 0)),
        compiler_params=pltpu.CompilerParams(
            dimension_semantics=("parallel",),        # v7x: shard batch over 2 TCs
            vmem_limit_bytes=32 * 1024 * 1024,
            # let XLA fuse the pad / stride-2 phase-split prologue into the operand
            allow_input_fusion=[True] + [False] * len(consts),
        ),
        cost_estimate=cost,
    )(phases, *consts)

    # re-biased lane-dense slab: only a trailing-pad drop remains in the epilogue
    out = out_padded[:, :Ho, :Wo * C].reshape(N, Ho, Wo, C)
    return jnp.transpose(out, (0, 3, 1, 2))


def _ref_forward(x, params):
    """Pure-JAX (XLA) reference mirroring the PyTorch forward exactly."""
    C = x.shape[1]

    def dw(xin, w, b, stride):
        y = lax.conv_general_dilated(
            xin, w, window_strides=(stride, stride), padding=((1, 1), (1, 1)),
            dimension_numbers=('NCHW', 'OIHW', 'NCHW'),
            feature_group_count=C, precision=lax.Precision.HIGHEST)
        return y + b[None, :, None, None]

    max_out = lax.reduce_window(x, -jnp.inf, lax.max, (1, 1, 3, 3), (1, 1, 2, 2),
                                ((0, 0), (0, 0), (1, 1), (1, 1)))
    out = max_out * dw(x, params['maxgate'], params['mb'], 2)
    nodes = []
    for c in range(2):
        # bgates=False path: pgates[..., 2*c] with bias gbs[:, c]
        g1 = jax.nn.sigmoid(dw(x, params['pgates'][..., 2 * c],
                               params['gbs'][:, c], 2))
        p1 = dw(x, params['pconvs'][..., 2 * c], params['pbs'][:, 2 * c], 2)
        p2 = dw(x, params['pconvs'][..., 2 * c + 1], params['pbs'][:, 2 * c + 1], 2)
        nodes.append(g1 * p1 + (1.0 - g1) * p2)
    gg1 = jax.nn.sigmoid(dw(nodes[0], params['pgates'][..., 2],
                            params['gbs'][:, 2], 1))
    return out + nodes[0] * gg1 + nodes[1] * (1.0 - gg1)


if __name__ == "__main__":
    N, C, H, W = 2, 8, 16, 16            # in_planes = out_planes = 8
    key = jax.random.PRNGKey(0)
    ks = jax.random.split(key, 7)
    x = jax.random.normal(ks[0], (N, C, H, W), jnp.float32)
    params = dict(
        maxgate=0.3 * jax.random.normal(ks[1], (C, 1, 3, 3), jnp.float32),
        pconvs=0.3 * jax.random.normal(ks[2], (C, 1, 3, 3, 4), jnp.float32),
        pgates=0.3 * jax.random.normal(ks[3], (C, 1, 3, 3, 3), jnp.float32),
        mb=0.1 * jax.random.normal(ks[4], (C,), jnp.float32),
        pbs=0.1 * jax.random.normal(ks[5], (C, 4), jnp.float32),
        gbs=0.1 * jax.random.normal(ks[6], (C, 3), jnp.float32),
    )

    fwd = jax.jit(cmaxgb2_forward)
    out = jax.block_until_ready(fwd(x, params))
    ref = jax.block_until_ready(_ref_forward(x, params))

    assert out.shape == (N, C, H // 2, W // 2), out.shape
    max_err = float(jnp.max(jnp.abs(out - ref)))
    assert jnp.allclose(out, ref, atol=1e-4, rtol=1e-4), f"max_err={max_err}"
    print("KERNEL_OK")
</pallas_src>

<mosaic_0001>
module attributes {stable_mosaic.version = 11 : i64} {
  func.func @_cmaxgb2_kernel(%arg0: i32, %arg1: memref<1x4x16x128xf32, #tpu.memory_space<vmem>>, %arg2: memref<1x128xi32, #tpu.memory_space<vmem>>, %arg3: memref<9x128xf32, #tpu.memory_space<vmem>>, %arg4: memref<1x128xf32, #tpu.memory_space<vmem>>, %arg5: memref<4x9x128xf32, #tpu.memory_space<vmem>>, %arg6: memref<4x128xf32, #tpu.memory_space<vmem>>, %arg7: memref<3x9x128xf32, #tpu.memory_space<vmem>>, %arg8: memref<3x128xf32, #tpu.memory_space<vmem>>, %arg9: memref<1x8x128xf32, #tpu.memory_space<vmem>>) attributes {dimension_semantics = [#tpu.dimension_semantics<parallel>], iteration_bounds = array<i64: 2>, scalar_prefetch = 0 : i64, scratch_operands = 0 : i64, tpu.core_type = #tpu.core_type<tc>, window_params = [{transform_indices = @transform_0, window_bounds = array<i64: 1, 4, 16, 128>}, {pipeline_mode = #tpu.pipeline_mode<synchronous>, transform_indices = @transform_1, window_bounds = array<i64: 1, 128>}, {pipeline_mode = #tpu.pipeline_mode<synchronous>, transform_indices = @transform_2, window_bounds = array<i64: 9, 128>}, {pipeline_mode = #tpu.pipeline_mode<synchronous>, transform_indices = @transform_3, window_bounds = array<i64: 1, 128>}, {pipeline_mode = #tpu.pipeline_mode<synchronous>, transform_indices = @transform_4, window_bounds = array<i64: 4, 9, 128>}, {pipeline_mode = #tpu.pipeline_mode<synchronous>, transform_indices = @transform_5, window_bounds = array<i64: 4, 128>}, {pipeline_mode = #tpu.pipeline_mode<synchronous>, transform_indices = @transform_6, window_bounds = array<i64: 3, 9, 128>}, {pipeline_mode = #tpu.pipeline_mode<synchronous>, transform_indices = @transform_7, window_bounds = array<i64: 3, 128>}, {transform_indices = @transform_8, window_bounds = array<i64: 1, 8, 128>}]} {
    %c0 = arith.constant 0 : index
    %c0_0 = arith.constant 0 : index
    %0 = vector.load %arg3[%c0, %c0_0] : memref<9x128xf32, #tpu.memory_space<vmem>>, vector<9x128xf32>
    %c0_1 = arith.constant 0 : index
    %c0_2 = arith.constant 0 : index
    %1 = vector.load %arg4[%c0_1, %c0_2] : memref<1x128xf32, #tpu.memory_space<vmem>>, vector<1x128xf32>
    %c0_3 = arith.constant 0 : index
    %c0_4 = arith.constant 0 : index
    %c0_5 = arith.constant 0 : index
    %2 = vector.load %arg5[%c0_3, %c0_4, %c0_5] : memref<4x9x128xf32, #tpu.memory_space<vmem>>, vector<4x9x128xf32>
    %c0_6 = arith.constant 0 : index
    %c0_7 = arith.constant 0 : index
    %3 = vector.load %arg6[%c0_6, %c0_7] : memref<4x128xf32, #tpu.memory_space<vmem>>, vector<4x128xf32>
    %c0_8 = arith.constant 0 : index
    %c0_9 = arith.constant 0 : index
    %c0_10 = arith.constant 0 : index
    %4 = vector.load %arg7[%c0_8, %c0_9, %c0_10] : memref<3x9x128xf32, #tpu.memory_space<vmem>>, vector<3x9x128xf32>
    %c0_11 = arith.constant 0 : index
    %c0_12 = arith.constant 0 : index
    %5 = vector.load %arg8[%c0_11, %c0_12] : memref<3x128xf32, #tpu.memory_space<vmem>>, vector<3x128xf32>
    %6 = tpu.iota {dimensions = array<i32: 0>} : vector<16x128xi32>
    %c0_13 = arith.constant 0 : index
    %c0_14 = arith.constant 0 : index
    %7 = vector.load %arg2[%c0_13, %c0_14] : memref<1x128xi32, #tpu.memory_space<vmem>>, vector<1x128xi32>
    %8 = vector.shape_cast %7 : vector<1x128xi32> to vector<1x128xi32>
    %9 = vector.broadcast %8 : vector<1x128xi32> to vector<16x128xi32>
    %c2_i32 = arith.constant 2 : i32
    %10 = vector.broadcast %c2_i32 : i32 to vector<16x128xi32>
    %11 = arith.muli %10, %6 : vector<16x128xi32>
    %c0_i32 = arith.constant 0 : i32
    %12 = vector.broadcast %c0_i32 : i32 to vector<16x128xi32>
    %13 = arith.addi %11, %12 : vector<16x128xi32>
    %c3_i32 = arith.constant 3 : i32
    %14 = vector.broadcast %c3_i32 : i32 to vector<16x128xi32>
    %15 = arith.subi %13, %14 : vector<16x128xi32>
    %c0_i32_15 = arith.constant 0 : i32
    %16 = vector.broadcast %c0_i32_15 : i32 to vector<16x128xi32>
    %17 = arith.cmpi sge, %15, %16 : vector<16x128xi32>
    %c2_i32_16 = arith.constant 2 : i32
    %18 = vector.broadcast %c2_i32_16 : i32 to vector<16x128xi32>
    %19 = arith.muli %18, %6 : vector<16x128xi32>
    %c0_i32_17 = arith.constant 0 : i32
    %20 = vector.broadcast %c0_i32_17 : i32 to vector<16x128xi32>
    %21 = arith.addi %19, %20 : vector<16x128xi32>
    %c3_i32_18 = arith.constant 3 : i32
    %22 = vector.broadcast %c3_i32_18 : i32 to vector<16x128xi32>
    %23 = arith.subi %21, %22 : vector<16x128xi32>
    %c16_i32 = arith.constant 16 : i32
    %24 = vector.broadcast %c16_i32 : i32 to vector<16x128xi32>
    %25 = arith.cmpi slt, %23, %24 : vector<16x128xi32>
    %26 = arith.andi %17, %25 : vector<16x128xi1>
    %c2_i32_19 = arith.constant 2 : i32
    %27 = vector.broadcast %c2_i32_19 : i32 to vector<16x128xi32>
    %28 = arith.muli %27, %6 : vector<16x128xi32>
    %c1_i32 = arith.constant 1 : i32
    %29 = vector.broadcast %c1_i32 : i32 to vector<16x128xi32>
    %30 = arith.addi %28, %29 : vector<16x128xi32>
    %c3_i32_20 = arith.constant 3 : i32
    %31 = vector.broadcast %c3_i32_20 : i32 to vector<16x128xi32>
    %32 = arith.subi %30, %31 : vector<16x128xi32>
    %c0_i32_21 = arith.constant 0 : i32
    %33 = vector.broadcast %c0_i32_21 : i32 to vector<16x128xi32>
    %34 = arith.cmpi sge, %32, %33 : vector<16x128xi32>
    %c2_i32_22 = arith.constant 2 : i32
    %35 = vector.broadcast %c2_i32_22 : i32 to vector<16x128xi32>
    %36 = arith.muli %35, %6 : vector<16x128xi32>
    %c1_i32_23 = arith.constant 1 : i32
    %37 = vector.broadcast %c1_i32_23 : i32 to vector<16x128xi32>
    %38 = arith.addi %36, %37 : vector<16x128xi32>
    %c3_i32_24 = arith.constant 3 : i32
    %39 = vector.broadcast %c3_i32_24 : i32 to vector<16x128xi32>
    %40 = arith.subi %38, %39 : vector<16x128xi32>
    %c16_i32_25 = arith.constant 16 : i32
    %41 = vector.broadcast %c16_i32_25 : i32 to vector<16x128xi32>
    %42 = arith.cmpi slt, %40, %41 : vector<16x128xi32>
    %43 = arith.andi %34, %42 : vector<16x128xi1>
    %c2_i32_26 = arith.constant 2 : i32
    %44 = vector.broadcast %c2_i32_26 : i32 to vector<16x128xi32>
    %45 = arith.muli %44, %6 : vector<16x128xi32>
    %c2_i32_27 = arith.constant 2 : i32
    %46 = vector.broadcast %c2_i32_27 : i32 to vector<16x128xi32>
    %47 = arith.addi %45, %46 : vector<16x128xi32>
    %c3_i32_28 = arith.constant 3 : i32
    %48 = vector.broadcast %c3_i32_28 : i32 to vector<16x128xi32>
    %49 = arith.subi %47, %48 : vector<16x128xi32>
    %c0_i32_29 = arith.constant 0 : i32
    %50 = vector.broadcast %c0_i32_29 : i32 to vector<16x128xi32>
    %51 = arith.cmpi sge, %49, %50 : vector<16x128xi32>
    %c2_i32_30 = arith.constant 2 : i32
    %52 = vector.broadcast %c2_i32_30 : i32 to vector<16x128xi32>
    %53 = arith.muli %52, %6 : vector<16x128xi32>
    %c2_i32_31 = arith.constant 2 : i32
    %54 = vector.broadcast %c2_i32_31 : i32 to vector<16x128xi32>
    %55 = arith.addi %53, %54 : vector<16x128xi32>
    %c3_i32_32 = arith.constant 3 : i32
    %56 = vector.broadcast %c3_i32_32 : i32 to vector<16x128xi32>
    %57 = arith.subi %55, %56 : vector<16x128xi32>
    %c16_i32_33 = arith.constant 16 : i32
    %58 = vector.broadcast %c16_i32_33 : i32 to vector<16x128xi32>
    %59 = arith.cmpi slt, %57, %58 : vector<16x128xi32>
    %60 = arith.andi %51, %59 : vector<16x128xi1>
    %c2_i32_34 = arith.constant 2 : i32
    %61 = vector.broadcast %c2_i32_34 : i32 to vector<16x128xi32>
    %62 = arith.muli %61, %9 : vector<16x128xi32>
    %c0_i32_35 = arith.constant 0 : i32
    %63 = vector.broadcast %c0_i32_35 : i32 to vector<16x128xi32>
    %64 = arith.addi %62, %63 : vector<16x128xi32>
    %c3_i32_36 = arith.constant 3 : i32
    %65 = vector.broadcast %c3_i32_36 : i32 to vector<16x128xi32>
    %66 = arith.subi %64, %65 : vector<16x128xi32>
    %c0_i32_37 = arith.constant 0 : i32
    %67 = vector.broadcast %c0_i32_37 : i32 to vector<16x128xi32>
    %68 = arith.cmpi sge, %66, %67 : vector<16x128xi32>
    %c2_i32_38 = arith.constant 2 : i32
    %69 = vector.broadcast %c2_i32_38 : i32 to vector<16x128xi32>
    %70 = arith.muli %69, %9 : vector<16x128xi32>
    %c0_i32_39 = arith.constant 0 : i32
    %71 = vector.broadcast %c0_i32_39 : i32 to vector<16x128xi32>
    %72 = arith.addi %70, %71 : vector<16x128xi32>
    %c3_i32_40 = arith.constant 3 : i32
    %73 = vector.broadcast %c3_i32_40 : i32 to vector<16x128xi32>
    %74 = arith.subi %72, %73 : vector<16x128xi32>
    %c16_i32_41 = arith.constant 16 : i32
    %75 = vector.broadcast %c16_i32_41 : i32 to vector<16x128xi32>
    %76 = arith.cmpi slt, %74, %75 : vector<16x128xi32>
    %77 = arith.andi %68, %76 : vector<16x128xi1>
    %c2_i32_42 = arith.constant 2 : i32
    %78 = vector.broadcast %c2_i32_42 : i32 to vector<16x128xi32>
    %79 = arith.muli %78, %9 : vector<16x128xi32>
    %c1_i32_43 = arith.constant 1 : i32
    %80 = vector.broadcast %c1_i32_43 : i32 to vector<16x128xi32>
    %81 = arith.addi %79, %80 : vector<16x128xi32>
    %c3_i32_44 = arith.constant 3 : i32
    %82 = vector.broadcast %c3_i32_44 : i32 to vector<16x128xi32>
    %83 = arith.subi %81, %82 : vector<16x128xi32>
    %c0_i32_45 = arith.constant 0 : i32
    %84 = vector.broadcast %c0_i32_45 : i32 to vector<16x128xi32>
    %85 = arith.cmpi sge, %83, %84 : vector<16x128xi32>
    %c2_i32_46 = arith.constant 2 : i32
    %86 = vector.broadcast %c2_i32_46 : i32 to vector<16x128xi32>
    %87 = arith.muli %86, %9 : vector<16x128xi32>
    %c1_i32_47 = arith.constant 1 : i32
    %88 = vector.broadcast %c1_i32_47 : i32 to vector<16x128xi32>
    %89 = arith.addi %87, %88 : vector<16x128xi32>
    %c3_i32_48 = arith.constant 3 : i32
    %90 = vector.broadcast %c3_i32_48 : i32 to vector<16x128xi32>
    %91 = arith.subi %89, %90 : vector<16x128xi32>
    %c16_i32_49 = arith.constant 16 : i32
    %92 = vector.broadcast %c16_i32_49 : i32 to vector<16x128xi32>
    %93 = arith.cmpi slt, %91, %92 : vector<16x128xi32>
    %94 = arith.andi %85, %93 : vector<16x128xi1>
    %c2_i32_50 = arith.constant 2 : i32
    %95 = vector.broadcast %c2_i32_50 : i32 to vector<16x128xi32>
    %96 = arith.muli %95, %9 : vector<16x128xi32>
    %c2_i32_51 = arith.constant 2 : i32
    %97 = vector.broadcast %c2_i32_51 : i32 to vector<16x128xi32>
    %98 = arith.addi %96, %97 : vector<16x128xi32>
    %c3_i32_52 = arith.constant 3 : i32
    %99 = vector.broadcast %c3_i32_52 : i32 to vector<16x128xi32>
    %100 = arith.subi %98, %99 : vector<16x128xi32>
    %c0_i32_53 = arith.constant 0 : i32
    %101 = vector.broadcast %c0_i32_53 : i32 to vector<16x128xi32>
    %102 = arith.cmpi sge, %100, %101 : vector<16x128xi32>
    %c2_i32_54 = arith.constant 2 : i32
    %103 = vector.broadcast %c2_i32_54 : i32 to vector<16x128xi32>
    %104 = arith.muli %103, %9 : vector<16x128xi32>
    %c2_i32_55 = arith.constant 2 : i32
    %105 = vector.broadcast %c2_i32_55 : i32 to vector<16x128xi32>
    %106 = arith.addi %104, %105 : vector<16x128xi32>
    %c3_i32_56 = arith.constant 3 : i32
    %107 = vector.broadcast %c3_i32_56 : i32 to vector<16x128xi32>
    %108 = arith.subi %106, %107 : vector<16x128xi32>
    %c16_i32_57 = arith.constant 16 : i32
    %109 = vector.broadcast %c16_i32_57 : i32 to vector<16x128xi32>
    %110 = arith.cmpi slt, %108, %109 : vector<16x128xi32>
    %111 = arith.andi %102, %110 : vector<16x128xi1>
    %112 = arith.andi %26, %77 : vector<16x128xi1>
    %113 = arith.andi %26, %94 : vector<16x128xi1>
    %114 = arith.andi %26, %111 : vector<16x128xi1>
    %115 = arith.andi %43, %77 : vector<16x128xi1>
    %116 = arith.andi %43, %94 : vector<16x128xi1>
    %117 = arith.andi %43, %111 : vector<16x128xi1>
    %118 = arith.andi %60, %77 : vector<16x128xi1>
    %119 = arith.andi %60, %94 : vector<16x128xi1>
    %120 = arith.andi %60, %111 : vector<16x128xi1>
    %c1_i32_58 = arith.constant 1 : i32
    %121 = vector.broadcast %c1_i32_58 : i32 to vector<16x128xi32>
    %122 = arith.cmpi sge, %6, %121 : vector<16x128xi32>
    %c8_i32 = arith.constant 8 : i32
    %123 = vector.broadcast %c8_i32 : i32 to vector<16x128xi32>
    %124 = arith.cmpi sle, %6, %123 : vector<16x128xi32>
    %125 = arith.andi %122, %124 : vector<16x128xi1>
    %c1_i32_59 = arith.constant 1 : i32
    %126 = vector.broadcast %c1_i32_59 : i32 to vector<16x128xi32>
    %127 = arith.cmpi sge, %9, %126 : vector<16x128xi32>
    %128 = arith.andi %125, %127 : vector<16x128xi1>
    %c8_i32_60 = arith.constant 8 : i32
    %129 = vector.broadcast %c8_i32_60 : i32 to vector<16x128xi32>
    %130 = arith.cmpi sle, %9, %129 : vector<16x128xi32>
    %131 = arith.andi %128, %130 : vector<16x128xi1>
    %132 = arith.extui %131 : vector<16x128xi1> to vector<16x128xi32>
    %133 = arith.sitofp %132 : vector<16x128xi32> to vector<16x128xf32>
    %c0_61 = arith.constant 0 : index
    %c0_62 = arith.constant 0 : index
    %c0_63 = arith.constant 0 : index
    %c0_64 = arith.constant 0 : index
    %134 = vector.load %arg1[%c0_61, %c0_62, %c0_63, %c0_64] : memref<1x4x16x128xf32, #tpu.memory_space<vmem>>, vector<1x4x16x128xf32>
    %135 = vector.shape_cast %134 : vector<1x4x16x128xf32> to vector<4x16x128xf32>
    %136 = vector.extract_strided_slice %135 {offsets = [0, 0, 0], sizes = [1, 16, 128], strides = [1, 1, 1]} : vector<4x16x128xf32> to vector<1x16x128xf32>
    %137 = vector.shape_cast %136 : vector<1x16x128xf32> to vector<16x128xf32>
    %138 = vector.extract_strided_slice %135 {offsets = [1, 0, 0], sizes = [1, 16, 128], strides = [1, 1, 1]} : vector<4x16x128xf32> to vector<1x16x128xf32>
    %139 = vector.shape_cast %138 : vector<1x16x128xf32> to vector<16x128xf32>
    %140 = vector.extract_strided_slice %135 {offsets = [2, 0, 0], sizes = [1, 16, 128], strides = [1, 1, 1]} : vector<4x16x128xf32> to vector<1x16x128xf32>
    %141 = vector.shape_cast %140 : vector<1x16x128xf32> to vector<16x128xf32>
    %142 = vector.extract_strided_slice %135 {offsets = [3, 0, 0], sizes = [1, 16, 128], strides = [1, 1, 1]} : vector<4x16x128xf32> to vector<1x16x128xf32>
    %143 = vector.shape_cast %142 : vector<1x16x128xf32> to vector<16x128xf32>
    %c120_i32 = arith.constant 120 : i32
    %144 = tpu.dynamic_rotate %137 by %c120_i32 dim 1 : vector<16x128xf32>, i32 -> vector<16x128xf32>
    %c120_i32_65 = arith.constant 120 : i32
    %145 = tpu.dynamic_rotate %141 by %c120_i32_65 dim 1 : vector<16x128xf32>, i32 -> vector<16x128xf32>
    %c15_i32 = arith.constant 15 : i32
    %146 = tpu.dynamic_rotate %137 by %c15_i32 dim 0 : vector<16x128xf32>, i32 -> vector<16x128xf32>
    %c15_i32_66 = arith.constant 15 : i32
    %147 = tpu.dynamic_rotate %139 by %c15_i32_66 dim 0 : vector<16x128xf32>, i32 -> vector<16x128xf32>
    %c15_i32_67 = arith.constant 15 : i32
    %148 = tpu.dynamic_rotate %137 by %c15_i32_67 dim 0 : vector<16x128xf32>, i32 -> vector<16x128xf32>
    %c120_i32_68 = arith.constant 120 : i32
    %149 = tpu.dynamic_rotate %148 by %c120_i32_68 dim 1 : vector<16x128xf32>, i32 -> vector<16x128xf32>
    %cst = arith.constant -1.000000e+30 : f32
    %150 = vector.broadcast %cst : f32 to vector<16x128xf32>
    %151 = arith.select %112, %137, %150 : vector<16x128xi1>, vector<16x128xf32>
    %cst_69 = arith.constant -1.000000e+30 : f32
    %152 = vector.broadcast %cst_69 : f32 to vector<16x128xf32>
    %153 = arith.select %113, %139, %152 : vector<16x128xi1>, vector<16x128xf32>
    %154 = arith.maximumf %151, %153 : vector<16x128xf32>
    %cst_70 = arith.constant -1.000000e+30 : f32
    %155 = vector.broadcast %cst_70 : f32 to vector<16x128xf32>
    %156 = arith.select %114, %144, %155 : vector<16x128xi1>, vector<16x128xf32>
    %157 = arith.maximumf %154, %156 : vector<16x128xf32>
    %cst_71 = arith.constant -1.000000e+30 : f32
    %158 = vector.broadcast %cst_71 : f32 to vector<16x128xf32>
    %159 = arith.select %115, %141, %158 : vector<16x128xi1>, vector<16x128xf32>
    %160 = arith.maximumf %157, %159 : vector<16x128xf32>
    %cst_72 = arith.constant -1.000000e+30 : f32
    %161 = vector.broadcast %cst_72 : f32 to vector<16x128xf32>
    %162 = arith.select %116, %143, %161 : vector<16x128xi1>, vector<16x128xf32>
    %163 = arith.maximumf %160, %162 : vector<16x128xf32>
    %cst_73 = arith.constant -1.000000e+30 : f32
    %164 = vector.broadcast %cst_73 : f32 to vector<16x128xf32>
    %165 = arith.select %117, %145, %164 : vector<16x128xi1>, vector<16x128xf32>
    %166 = arith.maximumf %163, %165 : vector<16x128xf32>
    %cst_74 = arith.constant -1.000000e+30 : f32
    %167 = vector.broadcast %cst_74 : f32 to vector<16x128xf32>
    %168 = arith.select %118, %146, %167 : vector<16x128xi1>, vector<16x128xf32>
    %169 = arith.maximumf %166, %168 : vector<16x128xf32>
    %cst_75 = arith.constant -1.000000e+30 : f32
    %170 = vector.broadcast %cst_75 : f32 to vector<16x128xf32>
    %171 = arith.select %119, %147, %170 : vector<16x128xi1>, vector<16x128xf32>
    %172 = arith.maximumf %169, %171 : vector<16x128xf32>
    %cst_76 = arith.constant -1.000000e+30 : f32
    %173 = vector.broadcast %cst_76 : f32 to vector<16x128xf32>
    %174 = arith.select %120, %149, %173 : vector<16x128xi1>, vector<16x128xf32>
    %175 = arith.maximumf %172, %174 : vector<16x128xf32>
    %176 = vector.shape_cast %1 : vector<1x128xf32> to vector<128xf32>
    %177 = vector.extract_strided_slice %0 {offsets = [0, 0], sizes = [1, 128], strides = [1, 1]} : vector<9x128xf32> to vector<1x128xf32>
    %178 = vector.shape_cast %177 : vector<1x128xf32> to vector<128xf32>
    %179 = vector.shape_cast %178 : vector<128xf32> to vector<1x128xf32>
    %180 = vector.broadcast %179 : vector<1x128xf32> to vector<16x128xf32>
    %181 = arith.mulf %137, %180 : vector<16x128xf32>
    %182 = vector.extract_strided_slice %0 {offsets = [1, 0], sizes = [1, 128], strides = [1, 1]} : vector<9x128xf32> to vector<1x128xf32>
    %183 = vector.shape_cast %182 : vector<1x128xf32> to vector<128xf32>
    %184 = vector.shape_cast %183 : vector<128xf32> to vector<1x128xf32>
    %185 = vector.broadcast %184 : vector<1x128xf32> to vector<16x128xf32>
    %186 = arith.mulf %139, %185 : vector<16x128xf32>
    %187 = arith.addf %181, %186 : vector<16x128xf32>
    %188 = vector.extract_strided_slice %0 {offsets = [2, 0], sizes = [1, 128], strides = [1, 1]} : vector<9x128xf32> to vector<1x128xf32>
    %189 = vector.shape_cast %188 : vector<1x128xf32> to vector<128xf32>
    %190 = vector.shape_cast %189 : vector<128xf32> to vector<1x128xf32>
    %191 = vector.broadcast %190 : vector<1x128xf32> to vector<16x128xf32>
    %192 = arith.mulf %144, %191 : vector<16x128xf32>
    %193 = arith.addf %187, %192 : vector<16x128xf32>
    %194 = vector.extract_strided_slice %0 {offsets = [3, 0], sizes = [1, 128], strides = [1, 1]} : vector<9x128xf32> to vector<1x128xf32>
    %195 = vector.shape_cast %194 : vector<1x128xf32> to vector<128xf32>
    %196 = vector.shape_cast %195 : vector<128xf32> to vector<1x128xf32>
    %197 = vector.broadcast %196 : vector<1x128xf32> to vector<16x128xf32>
    %198 = arith.mulf %141, %197 : vector<16x128xf32>
    %199 = arith.addf %193, %198 : vector<16x128xf32>
    %200 = vector.extract_strided_slice %0 {offsets = [4, 0], sizes = [1, 128], strides = [1, 1]} : vector<9x128xf32> to vector<1x128xf32>
    %201 = vector.shape_cast %200 : vector<1x128xf32> to vector<128xf32>
    %202 = vector.shape_cast %201 : vector<128xf32> to vector<1x128xf32>
    %203 = vector.broadcast %202 : vector<1x128xf32> to vector<16x128xf32>
    %204 = arith.mulf %143, %203 : vector<16x128xf32>
    %205 = arith.addf %199, %204 : vector<16x128xf32>
    %206 = vector.extract_strided_slice %0 {offsets = [5, 0], sizes = [1, 128], strides = [1, 1]} : vector<9x128xf32> to vector<1x128xf32>
    %207 = vector.shape_cast %206 : vector<1x128xf32> to vector<128xf32>
    %208 = vector.shape_cast %207 : vector<128xf32> to vector<1x128xf32>
    %209 = vector.broadcast %208 : vector<1x128xf32> to vector<16x128xf32>
    %210 = arith.mulf %145, %209 : vector<16x128xf32>
    %211 = arith.addf %205, %210 : vector<16x128xf32>
    %212 = vector.extract_strided_slice %0 {offsets = [6, 0], sizes = [1, 128], strides = [1, 1]} : vector<9x128xf32> to vector<1x128xf32>
    %213 = vector.shape_cast %212 : vector<1x128xf32> to vector<128xf32>
    %214 = vector.shape_cast %213 : vector<128xf32> to vector<1x128xf32>
    %215 = vector.broadcast %214 : vector<1x128xf32> to vector<16x128xf32>
    %216 = arith.mulf %146, %215 : vector<16x128xf32>
    %217 = arith.addf %211, %216 : vector<16x128xf32>
    %218 = vector.extract_strided_slice %0 {offsets = [7, 0], sizes = [1, 128], strides = [1, 1]} : vector<9x128xf32> to vector<1x128xf32>
    %219 = vector.shape_cast %218 : vector<1x128xf32> to vector<128xf32>
    %220 = vector.shape_cast %219 : vector<128xf32> to vector<1x128xf32>
    %221 = vector.broadcast %220 : vector<1x128xf32> to vector<16x128xf32>
    %222 = arith.mulf %147, %221 : vector<16x128xf32>
    %223 = arith.addf %217, %222 : vector<16x128xf32>
    %224 = vector.extract_strided_slice %0 {offsets = [8, 0], sizes = [1, 128], strides = [1, 1]} : vector<9x128xf32> to vector<1x128xf32>
    %225 = vector.shape_cast %224 : vector<1x128xf32> to vector<128xf32>
    %226 = vector.shape_cast %225 : vector<128xf32> to vector<1x128xf32>
    %227 = vector.broadcast %226 : vector<1x128xf32> to vector<16x128xf32>
    %228 = arith.mulf %149, %227 : vector<16x128xf32>
    %229 = arith.addf %223, %228 : vector<16x128xf32>
    %230 = vector.shape_cast %176 : vector<128xf32> to vector<1x128xf32>
    %231 = vector.broadcast %230 : vector<1x128xf32> to vector<16x128xf32>
    %232 = arith.addf %229, %231 : vector<16x128xf32>
    %233 = arith.mulf %175, %232 : vector<16x128xf32>
    %234 = vector.extract_strided_slice %4 {offsets = [0, 0, 0], sizes = [1, 9, 128], strides = [1, 1, 1]} : vector<3x9x128xf32> to vector<1x9x128xf32>
    %235 = vector.shape_cast %234 : vector<1x9x128xf32> to vector<9x128xf32>
    %236 = vector.extract_strided_slice %5 {offsets = [0, 0], sizes = [1, 128], strides = [1, 1]} : vector<3x128xf32> to vector<1x128xf32>
    %237 = vector.shape_cast %236 : vector<1x128xf32> to vector<128xf32>
    %238 = vector.extract_strided_slice %235 {offsets = [0, 0], sizes = [1, 128], strides = [1, 1]} : vector<9x128xf32> to vector<1x128xf32>
    %239 = vector.shape_cast %238 : vector<1x128xf32> to vector<128xf32>
    %240 = vector.shape_cast %239 : vector<128xf32> to vector<1x128xf32>
    %241 = vector.broadcast %240 : vector<1x128xf32> to vector<16x128xf32>
    %242 = arith.mulf %137, %241 : vector<16x128xf32>
    %243 = vector.extract_strided_slice %235 {offsets = [1, 0], sizes = [1, 128], strides = [1, 1]} : vector<9x128xf32> to vector<1x128xf32>
    %244 = vector.shape_cast %243 : vector<1x128xf32> to vector<128xf32>
    %245 = vector.shape_cast %244 : vector<128xf32> to vector<1x128xf32>
    %246 = vector.broadcast %245 : vector<1x128xf32> to vector<16x128xf32>
    %247 = arith.mulf %139, %246 : vector<16x128xf32>
    %248 = arith.addf %242, %247 : vector<16x128xf32>
    %249 = vector.extract_strided_slice %235 {offsets = [2, 0], sizes = [1, 128], strides = [1, 1]} : vector<9x128xf32> to vector<1x128xf32>
    %250 = vector.shape_cast %249 : vector<1x128xf32> to vector<128xf32>
    %251 = vector.shape_cast %250 : vector<128xf32> to vector<1x128xf32>
    %252 = vector.broadcast %251 : vector<1x128xf32> to vector<16x128xf32>
    %253 = arith.mulf %144, %252 : vector<16x128xf32>
    %254 = arith.addf %248, %253 : vector<16x128xf32>
    %255 = vector.extract_strided_slice %235 {offsets = [3, 0], sizes = [1, 128], strides = [1, 1]} : vector<9x128xf32> to vector<1x128xf32>
    %256 = vector.shape_cast %255 : vector<1x128xf32> to vector<128xf32>
    %257 = vector.shape_cast %256 : vector<128xf32> to vector<1x128xf32>
    %258 = vector.broadcast %257 : vector<1x128xf32> to vector<16x128xf32>
    %259 = arith.mulf %141, %258 : vector<16x128xf32>
    %260 = arith.addf %254, %259 : vector<16x128xf32>
    %261 = vector.extract_strided_slice %235 {offsets = [4, 0], sizes = [1, 128], strides = [1, 1]} : vector<9x128xf32> to vector<1x128xf32>
    %262 = vector.shape_cast %261 : vector<1x128xf32> to vector<128xf32>
    %263 = vector.shape_cast %262 : vector<128xf32> to vector<1x128xf32>
    %264 = vector.broadcast %263 : vector<1x128xf32> to vector<16x128xf32>
    %265 = arith.mulf %143, %264 : vector<16x128xf32>
    %266 = arith.addf %260, %265 : vector<16x128xf32>
    %267 = vector.extract_strided_slice %235 {offsets = [5, 0], sizes = [1, 128], strides = [1, 1]} : vector<9x128xf32> to vector<1x128xf32>
    %268 = vector.shape_cast %267 : vector<1x128xf32> to vector<128xf32>
    %269 = vector.shape_cast %268 : vector<128xf32> to vector<1x128xf32>
    %270 = vector.broadcast %269 : vector<1x128xf32> to vector<16x128xf32>
    %271 = arith.mulf %145, %270 : vector<16x128xf32>
    %272 = arith.addf %266, %271 : vector<16x128xf32>
    %273 = vector.extract_strided_slice %235 {offsets = [6, 0], sizes = [1, 128], strides = [1, 1]} : vector<9x128xf32> to vector<1x128xf32>
    %274 = vector.shape_cast %273 : vector<1x128xf32> to vector<128xf32>
    %275 = vector.shape_cast %274 : vector<128xf32> to vector<1x128xf32>
    %276 = vector.broadcast %275 : vector<1x128xf32> to vector<16x128xf32>
    %277 = arith.mulf %146, %276 : vector<16x128xf32>
    %278 = arith.addf %272, %277 : vector<16x128xf32>
    %279 = vector.extract_strided_slice %235 {offsets = [7, 0], sizes = [1, 128], strides = [1, 1]} : vector<9x128xf32> to vector<1x128xf32>
    %280 = vector.shape_cast %279 : vector<1x128xf32> to vector<128xf32>
    %281 = vector.shape_cast %280 : vector<128xf32> to vector<1x128xf32>
    %282 = vector.broadcast %281 : vector<1x128xf32> to vector<16x128xf32>
    %283 = arith.mulf %147, %282 : vector<16x128xf32>
    %284 = arith.addf %278, %283 : vector<16x128xf32>
    %285 = vector.extract_strided_slice %235 {offsets = [8, 0], sizes = [1, 128], strides = [1, 1]} : vector<9x128xf32> to vector<1x128xf32>
    %286 = vector.shape_cast %285 : vector<1x128xf32> to vector<128xf32>
    %287 = vector.shape_cast %286 : vector<128xf32> to vector<1x128xf32>
    %288 = vector.broadcast %287 : vector<1x128xf32> to vector<16x128xf32>
    %289 = arith.mulf %149, %288 : vector<16x128xf32>
    %290 = arith.addf %284, %289 : vector<16x128xf32>
    %291 = vector.shape_cast %237 : vector<128xf32> to vector<1x128xf32>
    %292 = vector.broadcast %291 : vector<1x128xf32> to vector<16x128xf32>
    %293 = arith.addf %290, %292 : vector<16x128xf32>
    %294 = arith.negf %293 : vector<16x128xf32>
    %295 = math.exp %294 : vector<16x128xf32>
    %cst_77 = arith.constant 1.000000e+00 : f32
    %296 = vector.broadcast %cst_77 : f32 to vector<16x128xf32>
    %297 = arith.addf %296, %295 : vector<16x128xf32>
    %298 = arith.divf %296, %297 : vector<16x128xf32>
    %299 = vector.extract_strided_slice %2 {offsets = [0, 0, 0], sizes = [1, 9, 128], strides = [1, 1, 1]} : vector<4x9x128xf32> to vector<1x9x128xf32>
    %300 = vector.shape_cast %299 : vector<1x9x128xf32> to vector<9x128xf32>
    %301 = vector.extract_strided_slice %3 {offsets = [0, 0], sizes = [1, 128], strides = [1, 1]} : vector<4x128xf32> to vector<1x128xf32>
    %302 = vector.shape_cast %301 : vector<1x128xf32> to vector<128xf32>
    %303 = vector.extract_strided_slice %300 {offsets = [0, 0], sizes = [1, 128], strides = [1, 1]} : vector<9x128xf32> to vector<1x128xf32>
    %304 = vector.shape_cast %303 : vector<1x128xf32> to vector<128xf32>
    %305 = vector.shape_cast %304 : vector<128xf32> to vector<1x128xf32>
    %306 = vector.broadcast %305 : vector<1x128xf32> to vector<16x128xf32>
    %307 = arith.mulf %137, %306 : vector<16x128xf32>
    %308 = vector.extract_strided_slice %300 {offsets = [1, 0], sizes = [1, 128], strides = [1, 1]} : vector<9x128xf32> to vector<1x128xf32>
    %309 = vector.shape_cast %308 : vector<1x128xf32> to vector<128xf32>
    %310 = vector.shape_cast %309 : vector<128xf32> to vector<1x128xf32>
    %311 = vector.broadcast %310 : vector<1x128xf32> to vector<16x128xf32>
    %312 = arith.mulf %139, %311 : vector<16x128xf32>
    %313 = arith.addf %307, %312 : vector<16x128xf32>
    %314 = vector.extract_strided_slice %300 {offsets = [2, 0], sizes = [1, 128], strides = [1, 1]} : vector<9x128xf32> to vector<1x128xf32>
    %315 = vector.shape_cast %314 : vector<1x128xf32> to vector<128xf32>
    %316 = vector.shape_cast %315 : vector<128xf32> to vector<1x128xf32>
    %317 = vector.broadcast %316 : vector<1x128xf32> to vector<16x128xf32>
    %318 = arith.mulf %144, %317 : vector<16x128xf32>
    %319 = arith.addf %313, %318 : vector<16x128xf32>
    %320 = vector.extract_strided_slice %300 {offsets = [3, 0], sizes = [1, 128], strides = [1, 1]} : vector<9x128xf32> to vector<1x128xf32>
    %321 = vector.shape_cast %320 : vector<1x128xf32> to vector<128xf32>
    %322 = vector.shape_cast %321 : vector<128xf32> to vector<1x128xf32>
    %323 = vector.broadcast %322 : vector<1x128xf32> to vector<16x128xf32>
    %324 = arith.mulf %141, %323 : vector<16x128xf32>
    %325 = arith.addf %319, %324 : vector<16x128xf32>
    %326 = vector.extract_strided_slice %300 {offsets = [4, 0], sizes = [1, 128], strides = [1, 1]} : vector<9x128xf32> to vector<1x128xf32>
    %327 = vector.shape_cast %326 : vector<1x128xf32> to vector<128xf32>
    %328 = vector.shape_cast %327 : vector<128xf32> to vector<1x128xf32>
    %329 = vector.broadcast %328 : vector<1x128xf32> to vector<16x128xf32>
    %330 = arith.mulf %143, %329 : vector<16x128xf32>
    %331 = arith.addf %325, %330 : vector<16x128xf32>
    %332 = vector.extract_strided_slice %300 {offsets = [5, 0], sizes = [1, 128], strides = [1, 1]} : vector<9x128xf32> to vector<1x128xf32>
    %333 = vector.shape_cast %332 : vector<1x128xf32> to vector<128xf32>
    %334 = vector.shape_cast %333 : vector<128xf32> to vector<1x128xf32>
    %335 = vector.broadcast %334 : vector<1x128xf32> to vector<16x128xf32>
    %336 = arith.mulf %145, %335 : vector<16x128xf32>
    %337 = arith.addf %331, %336 : vector<16x128xf32>
    %338 = vector.extract_strided_slice %300 {offsets = [6, 0], sizes = [1, 128], strides = [1, 1]} : vector<9x128xf32> to vector<1x128xf32>
    %339 = vector.shape_cast %338 : vector<1x128xf32> to vector<128xf32>
    %340 = vector.shape_cast %339 : vector<128xf32> to vector<1x128xf32>
    %341 = vector.broadcast %340 : vector<1x128xf32> to vector<16x128xf32>
    %342 = arith.mulf %146, %341 : vector<16x128xf32>
    %343 = arith.addf %337, %342 : vector<16x128xf32>
    %344 = vector.extract_strided_slice %300 {offsets = [7, 0], sizes = [1, 128], strides = [1, 1]} : vector<9x128xf32> to vector<1x128xf32>
    %345 = vector.shape_cast %344 : vector<1x128xf32> to vector<128xf32>
    %346 = vector.shape_cast %345 : vector<128xf32> to vector<1x128xf32>
    %347 = vector.broadcast %346 : vector<1x128xf32> to vector<16x128xf32>
    %348 = arith.mulf %147, %347 : vector<16x128xf32>
    %349 = arith.addf %343, %348 : vector<16x128xf32>
    %350 = vector.extract_strided_slice %300 {offsets = [8, 0], sizes = [1, 128], strides = [1, 1]} : vector<9x128xf32> to vector<1x128xf32>
    %351 = vector.shape_cast %350 : vector<1x128xf32> to vector<128xf32>
    %352 = vector.shape_cast %351 : vector<128xf32> to vector<1x128xf32>
    %353 = vector.broadcast %352 : vector<1x128xf32> to vector<16x128xf32>
    %354 = arith.mulf %149, %353 : vector<16x128xf32>
    %355 = arith.addf %349, %354 : vector<16x128xf32>
    %356 = vector.shape_cast %302 : vector<128xf32> to vector<1x128xf32>
    %357 = vector.broadcast %356 : vector<1x128xf32> to vector<16x128xf32>
    %358 = arith.addf %355, %357 : vector<16x128xf32>
    %359 = vector.extract_strided_slice %2 {offsets = [1, 0, 0], sizes = [1, 9, 128], strides = [1, 1, 1]} : vector<4x9x128xf32> to vector<1x9x128xf32>
    %360 = vector.shape_cast %359 : vector<1x9x128xf32> to vector<9x128xf32>
    %361 = vector.extract_strided_slice %3 {offsets = [1, 0], sizes = [1, 128], strides = [1, 1]} : vector<4x128xf32> to vector<1x128xf32>
    %362 = vector.shape_cast %361 : vector<1x128xf32> to vector<128xf32>
    %363 = vector.extract_strided_slice %360 {offsets = [0, 0], sizes = [1, 128], strides = [1, 1]} : vector<9x128xf32> to vector<1x128xf32>
    %364 = vector.shape_cast %363 : vector<1x128xf32> to vector<128xf32>
    %365 = vector.shape_cast %364 : vector<128xf32> to vector<1x128xf32>
    %366 = vector.broadcast %365 : vector<1x128xf32> to vector<16x128xf32>
    %367 = arith.mulf %137, %366 : vector<16x128xf32>
    %368 = vector.extract_strided_slice %360 {offsets = [1, 0], sizes = [1, 128], strides = [1, 1]} : vector<9x128xf32> to vector<1x128xf32>
    %369 = vector.shape_cast %368 : vector<1x128xf32> to vector<128xf32>
    %370 = vector.shape_cast %369 : vector<128xf32> to vector<1x128xf32>
    %371 = vector.broadcast %370 : vector<1x128xf32> to vector<16x128xf32>
    %372 = arith.mulf %139, %371 : vector<16x128xf32>
    %373 = arith.addf %367, %372 : vector<16x128xf32>
    %374 = vector.extract_strided_slice %360 {offsets = [2, 0], sizes = [1, 128], strides = [1, 1]} : vector<9x128xf32> to vector<1x128xf32>
    %375 = vector.shape_cast %374 : vector<1x128xf32> to vector<128xf32>
    %376 = vector.shape_cast %375 : vector<128xf32> to vector<1x128xf32>
    %377 = vector.broadcast %376 : vector<1x128xf32> to vector<16x128xf32>
    %378 = arith.mulf %144, %377 : vector<16x128xf32>
    %379 = arith.addf %373, %378 : vector<16x128xf32>
    %380 = vector.extract_strided_slice %360 {offsets = [3, 0], sizes = [1, 128], strides = [1, 1]} : vector<9x128xf32> to vector<1x128xf32>
    %381 = vector.shape_cast %380 : vector<1x128xf32> to vector<128xf32>
    %382 = vector.shape_cast %381 : vector<128xf32> to vector<1x128xf32>
    %383 = vector.broadcast %382 : vector<1x128xf32> to vector<16x128xf32>
    %384 = arith.mulf %141, %383 : vector<16x128xf32>
    %385 = arith.addf %379, %384 : vector<16x128xf32>
    %386 = vector.extract_strided_slice %360 {offsets = [4, 0], sizes = [1, 128], strides = [1, 1]} : vector<9x128xf32> to vector<1x128xf32>
    %387 = vector.shape_cast %386 : vector<1x128xf32> to vector<128xf32>
    %388 = vector.shape_cast %387 : vector<128xf32> to vector<1x128xf32>
    %389 = vector.broadcast %388 : vector<1x128xf32> to vector<16x128xf32>
    %390 = arith.mulf %143, %389 : vector<16x128xf32>
    %391 = arith.addf %385, %390 : vector<16x128xf32>
    %392 = vector.extract_strided_slice %360 {offsets = [5, 0], sizes = [1, 128], strides = [1, 1]} : vector<9x128xf32> to vector<1x128xf32>
    %393 = vector.shape_cast %392 : vector<1x128xf32> to vector<128xf32>
    %394 = vector.shape_cast %393 : vector<128xf32> to vector<1x128xf32>
    %395 = vector.broadcast %394 : vector<1x128xf32> to vector<16x128xf32>
    %396 = arith.mulf %145, %395 : vector<16x128xf32>
    %397 = arith.addf %391, %396 : vector<16x128xf32>
    %398 = vector.extract_strided_slice %360 {offsets = [6, 0], sizes = [1, 128], strides = [1, 1]} : vector<9x128xf32> to vector<1x128xf32>
    %399 = vector.shape_cast %398 : vector<1x128xf32> to vector<128xf32>
    %400 = vector.shape_cast %399 : vector<128xf32> to vector<1x128xf32>
    %401 = vector.broadcast %400 : vector<1x128xf32> to vector<16x128xf32>
    %402 = arith.mulf %146, %401 : vector<16x128xf32>
    %403 = arith.addf %397, %402 : vector<16x128xf32>
    %404 = vector.extract_strided_slice %360 {offsets = [7, 0], sizes = [1, 128], strides = [1, 1]} : vector<9x128xf32> to vector<1x128xf32>
    %405 = vector.shape_cast %404 : vector<1x128xf32> to vector<128xf32>
    %406 = vector.shape_cast %405 : vector<128xf32> to vector<1x128xf32>
    %407 = vector.broadcast %406 : vector<1x128xf32> to vector<16x128xf32>
    %408 = arith.mulf %147, %407 : vector<16x128xf32>
    %409 = arith.addf %403, %408 : vector<16x128xf32>
    %410 = vector.extract_strided_slice %360 {offsets = [8, 0], sizes = [1, 128], strides = [1, 1]} : vector<9x128xf32> to vector<1x128xf32>
    %411 = vector.shape_cast %410 : vector<1x128xf32> to vector<128xf32>
    %412 = vector.shape_cast %411 : vector<128xf32> to vector<1x128xf32>
    %413 = vector.broadcast %412 : vector<1x128xf32> to vector<16x128xf32>
    %414 = arith.mulf %149, %413 : vector<16x128xf32>
    %415 = arith.addf %409, %414 : vector<16x128xf32>
    %416 = vector.shape_cast %362 : vector<128xf32> to vector<1x128xf32>
    %417 = vector.broadcast %416 : vector<1x128xf32> to vector<16x128xf32>
    %418 = arith.addf %415, %417 : vector<16x128xf32>
    %419 = arith.subf %358, %418 : vector<16x128xf32>
    %420 = arith.mulf %298, %419 : vector<16x128xf32>
    %421 = arith.addf %418, %420 : vector<16x128xf32>
    %422 = arith.mulf %421, %133 : vector<16x128xf32>
    %423 = vector.extract_strided_slice %4 {offsets = [2, 0, 0], sizes = [1, 9, 128], strides = [1, 1, 1]} : vector<3x9x128xf32> to vector<1x9x128xf32>
    %424 = vector.shape_cast %423 : vector<1x9x128xf32> to vector<9x128xf32>
    %425 = vector.extract_strided_slice %5 {offsets = [1, 0], sizes = [1, 128], strides = [1, 1]} : vector<3x128xf32> to vector<1x128xf32>
    %426 = vector.shape_cast %425 : vector<1x128xf32> to vector<128xf32>
    %427 = vector.extract_strided_slice %424 {offsets = [0, 0], sizes = [1, 128], strides = [1, 1]} : vector<9x128xf32> to vector<1x128xf32>
    %428 = vector.shape_cast %427 : vector<1x128xf32> to vector<128xf32>
    %429 = vector.shape_cast %428 : vector<128xf32> to vector<1x128xf32>
    %430 = vector.broadcast %429 : vector<1x128xf32> to vector<16x128xf32>
    %431 = arith.mulf %137, %430 : vector<16x128xf32>
    %432 = vector.extract_strided_slice %424 {offsets = [1, 0], sizes = [1, 128], strides = [1, 1]} : vector<9x128xf32> to vector<1x128xf32>
    %433 = vector.shape_cast %432 : vector<1x128xf32> to vector<128xf32>
    %434 = vector.shape_cast %433 : vector<128xf32> to vector<1x128xf32>
    %435 = vector.broadcast %434 : vector<1x128xf32> to vector<16x128xf32>
    %436 = arith.mulf %139, %435 : vector<16x128xf32>
    %437 = arith.addf %431, %436 : vector<16x128xf32>
    %438 = vector.extract_strided_slice %424 {offsets = [2, 0], sizes = [1, 128], strides = [1, 1]} : vector<9x128xf32> to vector<1x128xf32>
    %439 = vector.shape_cast %438 : vector<1x128xf32> to vector<128xf32>
    %440 = vector.shape_cast %439 : vector<128xf32> to vector<1x128xf32>
    %441 = vector.broadcast %440 : vector<1x128xf32> to vector<16x128xf32>
    %442 = arith.mulf %144, %441 : vector<16x128xf32>
    %443 = arith.addf %437, %442 : vector<16x128xf32>
    %444 = vector.extract_strided_slice %424 {offsets = [3, 0], sizes = [1, 128], strides = [1, 1]} : vector<9x128xf32> to vector<1x128xf32>
    %445 = vector.shape_cast %444 : vector<1x128xf32> to vector<128xf32>
    %446 = vector.shape_cast %445 : vector<128xf32> to vector<1x128xf32>
    %447 = vector.broadcast %446 : vector<1x128xf32> to vector<16x128xf32>
    %448 = arith.mulf %141, %447 : vector<16x128xf32>
    %449 = arith.addf %443, %448 : vector<16x128xf32>
    %450 = vector.extract_strided_slice %424 {offsets = [4, 0], sizes = [1, 128], strides = [1, 1]} : vector<9x128xf32> to vector<1x128xf32>
    %451 = vector.shape_cast %450 : vector<1x128xf32> to vector<128xf32>
    %452 = vector.shape_cast %451 : vector<128xf32> to vector<1x128xf32>
    %453 = vector.broadcast %452 : vector<1x128xf32> to vector<16x128xf32>
    %454 = arith.mulf %143, %453 : vector<16x128xf32>
    %455 = arith.addf %449, %454 : vector<16x128xf32>
    %456 = vector.extract_strided_slice %424 {offsets = [5, 0], sizes = [1, 128], strides = [1, 1]} : vector<9x128xf32> to vector<1x128xf32>
    %457 = vector.shape_cast %456 : vector<1x128xf32> to vector<128xf32>
    %458 = vector.shape_cast %457 : vector<128xf32> to vector<1x128xf32>
    %459 = vector.broadcast %458 : vector<1x128xf32> to vector<16x128xf32>
    %460 = arith.mulf %145, %459 : vector<16x128xf32>
    %461 = arith.addf %455, %460 : vector<16x128xf32>
    %462 = vector.extract_strided_slice %424 {offsets = [6, 0], sizes = [1, 128], strides = [1, 1]} : vector<9x128xf32> to vector<1x128xf32>
    %463 = vector.shape_cast %462 : vector<1x128xf32> to vector<128xf32>
    %464 = vector.shape_cast %463 : vector<128xf32> to vector<1x128xf32>
    %465 = vector.broadcast %464 : vector<1x128xf32> to vector<16x128xf32>
    %466 = arith.mulf %146, %465 : vector<16x128xf32>
    %467 = arith.addf %461, %466 : vector<16x128xf32>
    %468 = vector.extract_strided_slice %424 {offsets = [7, 0], sizes = [1, 128], strides = [1, 1]} : vector<9x128xf32> to vector<1x128xf32>
    %469 = vector.shape_cast %468 : vector<1x128xf32> to vector<128xf32>
    %470 = vector.shape_cast %469 : vector<128xf32> to vector<1x128xf32>
    %471 = vector.broadcast %470 : vector<1x128xf32> to vector<16x128xf32>
    %472 = arith.mulf %147, %471 : vector<16x128xf32>
    %473 = arith.addf %467, %472 : vector<16x128xf32>
    %474 = vector.extract_strided_slice %424 {offsets = [8, 0], sizes = [1, 128], strides = [1, 1]} : vector<9x128xf32> to vector<1x128xf32>
    %475 = vector.shape_cast %474 : vector<1x128xf32> to vector<128xf32>
    %476 = vector.shape_cast %475 : vector<128xf32> to vector<1x128xf32>
    %477 = vector.broadcast %476 : vector<1x128xf32> to vector<16x128xf32>
    %478 = arith.mulf %149, %477 : vector<16x128xf32>
    %479 = arith.addf %473, %478 : vector<16x128xf32>
    %480 = vector.shape_cast %426 : vector<128xf32> to vector<1x128xf32>
    %481 = vector.broadcast %480 : vector<1x128xf32> to vector<16x128xf32>
    %482 = arith.addf %479, %481 : vector<16x128xf32>
    %483 = arith.negf %482 : vector<16x128xf32>
    %484 = math.exp %483 : vector<16x128xf32>
    %cst_78 = arith.constant 1.000000e+00 : f32
    %485 = vector.broadcast %cst_78 : f32 to vector<16x128xf32>
    %486 = arith.addf %485, %484 : vector<16x128xf32>
    %487 = arith.divf %485, %486 : vector<16x128xf32>
    %488 = vector.extract_strided_slice %2 {offsets = [2, 0, 0], sizes = [1, 9, 128], strides = [1, 1, 1]} : vector<4x9x128xf32> to vector<1x9x128xf32>
    %489 = vector.shape_cast %488 : vector<1x9x128xf32> to vector<9x128xf32>
    %490 = vector.extract_strided_slice %3 {offsets = [2, 0], sizes = [1, 128], strides = [1, 1]} : vector<4x128xf32> to vector<1x128xf32>
    %491 = vector.shape_cast %490 : vector<1x128xf32> to vector<128xf32>
    %492 = vector.extract_strided_slice %489 {offsets = [0, 0], sizes = [1, 128], strides = [1, 1]} : vector<9x128xf32> to vector<1x128xf32>
    %493 = vector.shape_cast %492 : vector<1x128xf32> to vector<128xf32>
    %494 = vector.shape_cast %493 : vector<128xf32> to vector<1x128xf32>
    %495 = vector.broadcast %494 : vector<1x128xf32> to vector<16x128xf32>
    %496 = arith.mulf %137, %495 : vector<16x128xf32>
    %497 = vector.extract_strided_slice %489 {offsets = [1, 0], sizes = [1, 128], strides = [1, 1]} : vector<9x128xf32> to vector<1x128xf32>
    %498 = vector.shape_cast %497 : vector<1x128xf32> to vector<128xf32>
    %499 = vector.shape_cast %498 : vector<128xf32> to vector<1x128xf32>
    %500 = vector.broadcast %499 : vector<1x128xf32> to vector<16x128xf32>
    %501 = arith.mulf %139, %500 : vector<16x128xf32>
    %502 = arith.addf %496, %501 : vector<16x128xf32>
    %503 = vector.extract_strided_slice %489 {offsets = [2, 0], sizes = [1, 128], strides = [1, 1]} : vector<9x128xf32> to vector<1x128xf32>
    %504 = vector.shape_cast %503 : vector<1x128xf32> to vector<128xf32>
    %505 = vector.shape_cast %504 : vector<128xf32> to vector<1x128xf32>
    %506 = vector.broadcast %505 : vector<1x128xf32> to vector<16x128xf32>
    %507 = arith.mulf %144, %506 : vector<16x128xf32>
    %508 = arith.addf %502, %507 : vector<16x128xf32>
    %509 = vector.extract_strided_slice %489 {offsets = [3, 0], sizes = [1, 128], strides = [1, 1]} : vector<9x128xf32> to vector<1x128xf32>
    %510 = vector.shape_cast %509 : vector<1x128xf32> to vector<128xf32>
    %511 = vector.shape_cast %510 : vector<128xf32> to vector<1x128xf32>
    %512 = vector.broadcast %511 : vector<1x128xf32> to vector<16x128xf32>
    %513 = arith.mulf %141, %512 : vector<16x128xf32>
    %514 = arith.addf %508, %513 : vector<16x128xf32>
    %515 = vector.extract_strided_slice %489 {offsets = [4, 0], sizes = [1, 128], strides = [1, 1]} : vector<9x128xf32> to vector<1x128xf32>
    %516 = vector.shape_cast %515 : vector<1x128xf32> to vector<128xf32>
    %517 = vector.shape_cast %516 : vector<128xf32> to vector<1x128xf32>
    %518 = vector.broadcast %517 : vector<1x128xf32> to vector<16x128xf32>
    %519 = arith.mulf %143, %518 : vector<16x128xf32>
    %520 = arith.addf %514, %519 : vector<16x128xf32>
    %521 = vector.extract_strided_slice %489 {offsets = [5, 0], sizes = [1, 128], strides = [1, 1]} : vector<9x128xf32> to vector<1x128xf32>
    %522 = vector.shape_cast %521 : vector<1x128xf32> to vector<128xf32>
    %523 = vector.shape_cast %522 : vector<128xf32> to vector<1x128xf32>
    %524 = vector.broadcast %523 : vector<1x128xf32> to vector<16x128xf32>
    %525 = arith.mulf %145, %524 : vector<16x128xf32>
    %526 = arith.addf %520, %525 : vector<16x128xf32>
    %527 = vector.extract_strided_slice %489 {offsets = [6, 0], sizes = [1, 128], strides = [1, 1]} : vector<9x128xf32> to vector<1x128xf32>
    %528 = vector.shape_cast %527 : vector<1x128xf32> to vector<128xf32>
    %529 = vector.shape_cast %528 : vector<128xf32> to vector<1x128xf32>
    %530 = vector.broadcast %529 : vector<1x128xf32> to vector<16x128xf32>
    %531 = arith.mulf %146, %530 : vector<16x128xf32>
    %532 = arith.addf %526, %531 : vector<16x128xf32>
    %533 = vector.extract_strided_slice %489 {offsets = [7, 0], sizes = [1, 128], strides = [1, 1]} : vector<9x128xf32> to vector<1x128xf32>
    %534 = vector.shape_cast %533 : vector<1x128xf32> to vector<128xf32>
    %535 = vector.shape_cast %534 : vector<128xf32> to vector<1x128xf32>
    %536 = vector.broadcast %535 : vector<1x128xf32> to vector<16x128xf32>
    %537 = arith.mulf %147, %536 : vector<16x128xf32>
    %538 = arith.addf %532, %537 : vector<16x128xf32>
    %539 = vector.extract_strided_slice %489 {offsets = [8, 0], sizes = [1, 128], strides = [1, 1]} : vector<9x128xf32> to vector<1x128xf32>
    %540 = vector.shape_cast %539 : vector<1x128xf32> to vector<128xf32>
    %541 = vector.shape_cast %540 : vector<128xf32> to vector<1x128xf32>
    %542 = vector.broadcast %541 : vector<1x128xf32> to vector<16x128xf32>
    %543 = arith.mulf %149, %542 : vector<16x128xf32>
    %544 = arith.addf %538, %543 : vector<16x128xf32>
    %545 = vector.shape_cast %491 : vector<128xf32> to vector<1x128xf32>
    %546 = vector.broadcast %545 : vector<1x128xf32> to vector<16x128xf32>
    %547 = arith.addf %544, %546 : vector<16x128xf32>
    %548 = vector.extract_strided_slice %2 {offsets = [3, 0, 0], sizes = [1, 9, 128], strides = [1, 1, 1]} : vector<4x9x128xf32> to vector<1x9x128xf32>
    %549 = vector.shape_cast %548 : vector<1x9x128xf32> to vector<9x128xf32>
    %550 = vector.extract_strided_slice %3 {offsets = [3, 0], sizes = [1, 128], strides = [1, 1]} : vector<4x128xf32> to vector<1x128xf32>
    %551 = vector.shape_cast %550 : vector<1x128xf32> to vector<128xf32>
    %552 = vector.extract_strided_slice %549 {offsets = [0, 0], sizes = [1, 128], strides = [1, 1]} : vector<9x128xf32> to vector<1x128xf32>
    %553 = vector.shape_cast %552 : vector<1x128xf32> to vector<128xf32>
    %554 = vector.shape_cast %553 : vector<128xf32> to vector<1x128xf32>
    %555 = vector.broadcast %554 : vector<1x128xf32> to vector<16x128xf32>
    %556 = arith.mulf %137, %555 : vector<16x128xf32>
    %557 = vector.extract_strided_slice %549 {offsets = [1, 0], sizes = [1, 128], strides = [1, 1]} : vector<9x128xf32> to vector<1x128xf32>
    %558 = vector.shape_cast %557 : vector<1x128xf32> to vector<128xf32>
    %559 = vector.shape_cast %558 : vector<128xf32> to vector<1x128xf32>
    %560 = vector.broadcast %559 : vector<1x128xf32> to vector<16x128xf32>
    %561 = arith.mulf %139, %560 : vector<16x128xf32>
    %562 = arith.addf %556, %561 : vector<16x128xf32>
    %563 = vector.extract_strided_slice %549 {offsets = [2, 0], sizes = [1, 128], strides = [1, 1]} : vector<9x128xf32> to vector<1x128xf32>
    %564 = vector.shape_cast %563 : vector<1x128xf32> to vector<128xf32>
    %565 = vector.shape_cast %564 : vector<128xf32> to vector<1x128xf32>
    %566 = vector.broadcast %565 : vector<1x128xf32> to vector<16x128xf32>
    %567 = arith.mulf %144, %566 : vector<16x128xf32>
    %568 = arith.addf %562, %567 : vector<16x128xf32>
    %569 = vector.extract_strided_slice %549 {offsets = [3, 0], sizes = [1, 128], strides = [1, 1]} : vector<9x128xf32> to vector<1x128xf32>
    %570 = vector.shape_cast %569 : vector<1x128xf32> to vector<128xf32>
    %571 = vector.shape_cast %570 : vector<128xf32> to vector<1x128xf32>
    %572 = vector.broadcast %571 : vector<1x128xf32> to vector<16x128xf32>
    %573 = arith.mulf %141, %572 : vector<16x128xf32>
    %574 = arith.addf %568, %573 : vector<16x128xf32>
    %575 = vector.extract_strided_slice %549 {offsets = [4, 0], sizes = [1, 128], strides = [1, 1]} : vector<9x128xf32> to vector<1x128xf32>
    %576 = vector.shape_cast %575 : vector<1x128xf32> to vector<128xf32>
    %577 = vector.shape_cast %576 : vector<128xf32> to vector<1x128xf32>
    %578 = vector.broadcast %577 : vector<1x128xf32> to vector<16x128xf32>
    %579 = arith.mulf %143, %578 : vector<16x128xf32>
    %580 = arith.addf %574, %579 : vector<16x128xf32>
    %581 = vector.extract_strided_slice %549 {offsets = [5, 0], sizes = [1, 128], strides = [1, 1]} : vector<9x128xf32> to vector<1x128xf32>
    %582 = vector.shape_cast %581 : vector<1x128xf32> to vector<128xf32>
    %583 = vector.shape_cast %582 : vector<128xf32> to vector<1x128xf32>
    %584 = vector.broadcast %583 : vector<1x128xf32> to vector<16x128xf32>
    %585 = arith.mulf %145, %584 : vector<16x128xf32>
    %586 = arith.addf %580, %585 : vector<16x128xf32>
    %587 = vector.extract_strided_slice %549 {offsets = [6, 0], sizes = [1, 128], strides = [1, 1]} : vector<9x128xf32> to vector<1x128xf32>
    %588 = vector.shape_cast %587 : vector<1x128xf32> to vector<128xf32>
    %589 = vector.shape_cast %588 : vector<128xf32> to vector<1x128xf32>
    %590 = vector.broadcast %589 : vector<1x128xf32> to vector<16x128xf32>
    %591 = arith.mulf %146, %590 : vector<16x128xf32>
    %592 = arith.addf %586, %591 : vector<16x128xf32>
    %593 = vector.extract_strided_slice %549 {offsets = [7, 0], sizes = [1, 128], strides = [1, 1]} : vector<9x128xf32> to vector<1x128xf32>
    %594 = vector.shape_cast %593 : vector<1x128xf32> to vector<128xf32>
    %595 = vector.shape_cast %594 : vector<128xf32> to vector<1x128xf32>
    %596 = vector.broadcast %595 : vector<1x128xf32> to vector<16x128xf32>
    %597 = arith.mulf %147, %596 : vector<16x128xf32>
    %598 = arith.addf %592, %597 : vector<16x128xf32>
    %599 = vector.extract_strided_slice %549 {offsets = [8, 0], sizes = [1, 128], strides = [1, 1]} : vector<9x128xf32> to vector<1x128xf32>
    %600 = vector.shape_cast %599 : vector<1x128xf32> to vector<128xf32>
    %601 = vector.shape_cast %600 : vector<128xf32> to vector<1x128xf32>
    %602 = vector.broadcast %601 : vector<1x128xf32> to vector<16x128xf32>
    %603 = arith.mulf %149, %602 : vector<16x128xf32>
    %604 = arith.addf %598, %603 : vector<16x128xf32>
    %605 = vector.shape_cast %551 : vector<128xf32> to vector<1x128xf32>
    %606 = vector.broadcast %605 : vector<1x128xf32> to vector<16x128xf32>
    %607 = arith.addf %604, %606 : vector<16x128xf32>
    %608 = arith.subf %547, %607 : vector<16x128xf32>
    %609 = arith.mulf %487, %608 : vector<16x128xf32>
    %610 = arith.addf %607, %609 : vector<16x128xf32>
    %611 = arith.mulf %610, %133 : vector<16x128xf32>
    %c1_i32_79 = arith.constant 1 : i32
    %612 = tpu.dynamic_rotate %422 by %c1_i32_79 dim 0 : vector<16x128xf32>, i32 -> vector<16x128xf32>
    %c8_i32_80 = arith.constant 8 : i32
    %613 = tpu.dynamic_rotate %612 by %c8_i32_80 dim 1 : vector<16x128xf32>, i32 -> vector<16x128xf32>
    %614 = vector.extract_strided_slice %4 {offsets = [2, 0, 0], sizes = [1, 9, 128], strides = [1, 1, 1]} : vector<3x9x128xf32> to vector<1x9x128xf32>
    %615 = vector.shape_cast %614 : vector<1x9x128xf32> to vector<9x128xf32>
    %616 = vector.extract_strided_slice %615 {offsets = [0, 0], sizes = [1, 128], strides = [1, 1]} : vector<9x128xf32> to vector<1x128xf32>
    %617 = vector.shape_cast %616 : vector<1x128xf32> to vector<128xf32>
    %618 = vector.shape_cast %617 : vector<128xf32> to vector<1x128xf32>
    %619 = vector.broadcast %618 : vector<1x128xf32> to vector<16x128xf32>
    %620 = arith.mulf %613, %619 : vector<16x128xf32>
    %c1_i32_81 = arith.constant 1 : i32
    %621 = tpu.dynamic_rotate %422 by %c1_i32_81 dim 0 : vector<16x128xf32>, i32 -> vector<16x128xf32>
    %622 = vector.extract_strided_slice %4 {offsets = [2, 0, 0], sizes = [1, 9, 128], strides = [1, 1, 1]} : vector<3x9x128xf32> to vector<1x9x128xf32>
    %623 = vector.shape_cast %622 : vector<1x9x128xf32> to vector<9x128xf32>
    %624 = vector.extract_strided_slice %623 {offsets = [1, 0], sizes = [1, 128], strides = [1, 1]} : vector<9x128xf32> to vector<1x128xf32>
    %625 = vector.shape_cast %624 : vector<1x128xf32> to vector<128xf32>
    %626 = vector.shape_cast %625 : vector<128xf32> to vector<1x128xf32>
    %627 = vector.broadcast %626 : vector<1x128xf32> to vector<16x128xf32>
    %628 = arith.mulf %621, %627 : vector<16x128xf32>
    %629 = arith.addf %620, %628 : vector<16x128xf32>
    %c1_i32_82 = arith.constant 1 : i32
    %630 = tpu.dynamic_rotate %422 by %c1_i32_82 dim 0 : vector<16x128xf32>, i32 -> vector<16x128xf32>
    %c120_i32_83 = arith.constant 120 : i32
    %631 = tpu.dynamic_rotate %630 by %c120_i32_83 dim 1 : vector<16x128xf32>, i32 -> vector<16x128xf32>
    %632 = vector.extract_strided_slice %4 {offsets = [2, 0, 0], sizes = [1, 9, 128], strides = [1, 1, 1]} : vector<3x9x128xf32> to vector<1x9x128xf32>
    %633 = vector.shape_cast %632 : vector<1x9x128xf32> to vector<9x128xf32>
    %634 = vector.extract_strided_slice %633 {offsets = [2, 0], sizes = [1, 128], strides = [1, 1]} : vector<9x128xf32> to vector<1x128xf32>
    %635 = vector.shape_cast %634 : vector<1x128xf32> to vector<128xf32>
    %636 = vector.shape_cast %635 : vector<128xf32> to vector<1x128xf32>
    %637 = vector.broadcast %636 : vector<1x128xf32> to vector<16x128xf32>
    %638 = arith.mulf %631, %637 : vector<16x128xf32>
    %639 = arith.addf %629, %638 : vector<16x128xf32>
    %c8_i32_84 = arith.constant 8 : i32
    %640 = tpu.dynamic_rotate %422 by %c8_i32_84 dim 1 : vector<16x128xf32>, i32 -> vector<16x128xf32>
    %641 = vector.extract_strided_slice %4 {offsets = [2, 0, 0], sizes = [1, 9, 128], strides = [1, 1, 1]} : vector<3x9x128xf32> to vector<1x9x128xf32>
    %642 = vector.shape_cast %641 : vector<1x9x128xf32> to vector<9x128xf32>
    %643 = vector.extract_strided_slice %642 {offsets = [3, 0], sizes = [1, 128], strides = [1, 1]} : vector<9x128xf32> to vector<1x128xf32>
    %644 = vector.shape_cast %643 : vector<1x128xf32> to vector<128xf32>
    %645 = vector.shape_cast %644 : vector<128xf32> to vector<1x128xf32>
    %646 = vector.broadcast %645 : vector<1x128xf32> to vector<16x128xf32>
    %647 = arith.mulf %640, %646 : vector<16x128xf32>
    %648 = arith.addf %639, %647 : vector<16x128xf32>
    %649 = vector.extract_strided_slice %4 {offsets = [2, 0, 0], sizes = [1, 9, 128], strides = [1, 1, 1]} : vector<3x9x128xf32> to vector<1x9x128xf32>
    %650 = vector.shape_cast %649 : vector<1x9x128xf32> to vector<9x128xf32>
    %651 = vector.extract_strided_slice %650 {offsets = [4, 0], sizes = [1, 128], strides = [1, 1]} : vector<9x128xf32> to vector<1x128xf32>
    %652 = vector.shape_cast %651 : vector<1x128xf32> to vector<128xf32>
    %653 = vector.shape_cast %652 : vector<128xf32> to vector<1x128xf32>
    %654 = vector.broadcast %653 : vector<1x128xf32> to vector<16x128xf32>
    %655 = arith.mulf %422, %654 : vector<16x128xf32>
    %656 = arith.addf %648, %655 : vector<16x128xf32>
    %c120_i32_85 = arith.constant 120 : i32
    %657 = tpu.dynamic_rotate %422 by %c120_i32_85 dim 1 : vector<16x128xf32>, i32 -> vector<16x128xf32>
    %658 = vector.extract_strided_slice %4 {offsets = [2, 0, 0], sizes = [1, 9, 128], strides = [1, 1, 1]} : vector<3x9x128xf32> to vector<1x9x128xf32>
    %659 = vector.shape_cast %658 : vector<1x9x128xf32> to vector<9x128xf32>
    %660 = vector.extract_strided_slice %659 {offsets = [5, 0], sizes = [1, 128], strides = [1, 1]} : vector<9x128xf32> to vector<1x128xf32>
    %661 = vector.shape_cast %660 : vector<1x128xf32> to vector<128xf32>
    %662 = vector.shape_cast %661 : vector<128xf32> to vector<1x128xf32>
    %663 = vector.broadcast %662 : vector<1x128xf32> to vector<16x128xf32>
    %664 = arith.mulf %657, %663 : vector<16x128xf32>
    %665 = arith.addf %656, %664 : vector<16x128xf32>
    %c15_i32_86 = arith.constant 15 : i32
    %666 = tpu.dynamic_rotate %422 by %c15_i32_86 dim 0 : vector<16x128xf32>, i32 -> vector<16x128xf32>
    %c8_i32_87 = arith.constant 8 : i32
    %667 = tpu.dynamic_rotate %666 by %c8_i32_87 dim 1 : vector<16x128xf32>, i32 -> vector<16x128xf32>
    %668 = vector.extract_strided_slice %4 {offsets = [2, 0, 0], sizes = [1, 9, 128], strides = [1, 1, 1]} : vector<3x9x128xf32> to vector<1x9x128xf32>
    %669 = vector.shape_cast %668 : vector<1x9x128xf32> to vector<9x128xf32>
    %670 = vector.extract_strided_slice %669 {offsets = [6, 0], sizes = [1, 128], strides = [1, 1]} : vector<9x128xf32> to vector<1x128xf32>
    %671 = vector.shape_cast %670 : vector<1x128xf32> to vector<128xf32>
    %672 = vector.shape_cast %671 : vector<128xf32> to vector<1x128xf32>
    %673 = vector.broadcast %672 : vector<1x128xf32> to vector<16x128xf32>
    %674 = arith.mulf %667, %673 : vector<16x128xf32>
    %675 = arith.addf %665, %674 : vector<16x128xf32>
    %c15_i32_88 = arith.constant 15 : i32
    %676 = tpu.dynamic_rotate %422 by %c15_i32_88 dim 0 : vector<16x128xf32>, i32 -> vector<16x128xf32>
    %677 = vector.extract_strided_slice %4 {offsets = [2, 0, 0], sizes = [1, 9, 128], strides = [1, 1, 1]} : vector<3x9x128xf32> to vector<1x9x128xf32>
    %678 = vector.shape_cast %677 : vector<1x9x128xf32> to vector<9x128xf32>
    %679 = vector.extract_strided_slice %678 {offsets = [7, 0], sizes = [1, 128], strides = [1, 1]} : vector<9x128xf32> to vector<1x128xf32>
    %680 = vector.shape_cast %679 : vector<1x128xf32> to vector<128xf32>
    %681 = vector.shape_cast %680 : vector<128xf32> to vector<1x128xf32>
    %682 = vector.broadcast %681 : vector<1x128xf32> to vector<16x128xf32>
    %683 = arith.mulf %676, %682 : vector<16x128xf32>
    %684 = arith.addf %675, %683 : vector<16x128xf32>
    %c15_i32_89 = arith.constant 15 : i32
    %685 = tpu.dynamic_rotate %422 by %c15_i32_89 dim 0 : vector<16x128xf32>, i32 -> vector<16x128xf32>
    %c120_i32_90 = arith.constant 120 : i32
    %686 = tpu.dynamic_rotate %685 by %c120_i32_90 dim 1 : vector<16x128xf32>, i32 -> vector<16x128xf32>
    %687 = vector.extract_strided_slice %4 {offsets = [2, 0, 0], sizes = [1, 9, 128], strides = [1, 1, 1]} : vector<3x9x128xf32> to vector<1x9x128xf32>
    %688 = vector.shape_cast %687 : vector<1x9x128xf32> to vector<9x128xf32>
    %689 = vector.extract_strided_slice %688 {offsets = [8, 0], sizes = [1, 128], strides = [1, 1]} : vector<9x128xf32> to vector<1x128xf32>
    %690 = vector.shape_cast %689 : vector<1x128xf32> to vector<128xf32>
    %691 = vector.shape_cast %690 : vector<128xf32> to vector<1x128xf32>
    %692 = vector.broadcast %691 : vector<1x128xf32> to vector<16x128xf32>
    %693 = arith.mulf %686, %692 : vector<16x128xf32>
    %694 = arith.addf %684, %693 : vector<16x128xf32>
    %695 = vector.extract_strided_slice %5 {offsets = [2, 0], sizes = [1, 128], strides = [1, 1]} : vector<3x128xf32> to vector<1x128xf32>
    %696 = vector.shape_cast %695 : vector<1x128xf32> to vector<128xf32>
    %697 = vector.shape_cast %696 : vector<128xf32> to vector<1x128xf32>
    %698 = vector.broadcast %697 : vector<1x128xf32> to vector<16x128xf32>
    %699 = arith.addf %694, %698 : vector<16x128xf32>
    %700 = arith.negf %699 : vector<16x128xf32>
    %701 = math.exp %700 : vector<16x128xf32>
    %cst_91 = arith.constant 1.000000e+00 : f32
    %702 = vector.broadcast %cst_91 : f32 to vector<16x128xf32>
    %703 = arith.addf %702, %701 : vector<16x128xf32>
    %704 = arith.divf %702, %703 : vector<16x128xf32>
    %705 = arith.addf %233, %611 : vector<16x128xf32>
    %706 = arith.subf %422, %611 : vector<16x128xf32>
    %707 = arith.mulf %704, %706 : vector<16x128xf32>
    %708 = arith.addf %705, %707 : vector<16x128xf32>
    %709 = arith.mulf %708, %133 : vector<16x128xf32>
    %c15_i32_92 = arith.constant 15 : i32
    %710 = tpu.dynamic_rotate %709 by %c15_i32_92 dim 0 : vector<16x128xf32>, i32 -> vector<16x128xf32>
    %c120_i32_93 = arith.constant 120 : i32
    %711 = tpu.dynamic_rotate %710 by %c120_i32_93 dim 1 : vector<16x128xf32>, i32 -> vector<16x128xf32>
    %712 = vector.extract_strided_slice %711 {offsets = [0, 0], sizes = [8, 128], strides = [1, 1]} : vector<16x128xf32> to vector<8x128xf32>
    %c0_94 = arith.constant 0 : index
    %c0_95 = arith.constant 0 : index
    %c0_96 = arith.constant 0 : index
    %713 = vector.load %arg9[%c0_94, %c0_95, %c0_96] : memref<1x8x128xf32, #tpu.memory_space<vmem>>, vector<1x8x128xf32>
    %714 = vector.shape_cast %713 : vector<1x8x128xf32> to vector<8x128xf32>
    %715 = vector.shape_cast %712 : vector<8x128xf32> to vector<1x8x128xf32>
    tpu.vector_store %arg9[%c0_94, %c0_95, %c0_96], %715 {strides = array<i32>} : memref<1x8x128xf32, #tpu.memory_space<vmem>>, vector<1x8x128xf32>,
    return
  }
  func.func @transform_0(%arg0: i32) -> (i32, i32, i32, i32) {
    %c0_i32 = arith.constant 0 : i32
    %c0_i32_0 = arith.constant 0 : i32
    %c0_i32_1 = arith.constant 0 : i32
    %c0_i32_2 = arith.constant 0 : i32
    return %arg0, %c0_i32, %c0_i32_0, %c0_i32_1 : i32, i32, i32, i32
  }
  func.func @transform_1(%arg0: i32) -> (i32, i32) {
    %c0_i32 = arith.constant 0 : i32
    %c0_i32_0 = arith.constant 0 : i32
    %c0_i32_1 = arith.constant 0 : i32
    return %c0_i32, %c0_i32_0 : i32, i32
  }
  func.func @transform_2(%arg0: i32) -> (i32, i32) {
    %c0_i32 = arith.constant 0 : i32
    %c0_i32_0 = arith.constant 0 : i32
    %c0_i32_1 = arith.constant 0 : i32
    return %c0_i32, %c0_i32_0 : i32, i32
  }
  func.func @transform_3(%arg0: i32) -> (i32, i32) {
    %c0_i32 = arith.constant 0 : i32
    %c0_i32_0 = arith.constant 0 : i32
    %c0_i32_1 = arith.constant 0 : i32
    return %c0_i32, %c0_i32_0 : i32, i32
  }
  func.func @transform_4(%arg0: i32) -> (i32, i32, i32) {
    %c0_i32 = arith.constant 0 : i32
    %c0_i32_0 = arith.constant 0 : i32
    %c0_i32_1 = arith.constant 0 : i32
    %c0_i32_2 = arith.constant 0 : i32
    return %c0_i32, %c0_i32_0, %c0_i32_1 : i32, i32, i32
  }
  func.func @transform_5(%arg0: i32) -> (i32, i32) {
    %c0_i32 = arith.constant 0 : i32
    %c0_i32_0 = arith.constant 0 : i32
    %c0_i32_1 = arith.constant 0 : i32
    return %c0_i32, %c0_i32_0 : i32, i32
  }
  func.func @transform_6(%arg0: i32) -> (i32, i32, i32) {
    %c0_i32 = arith.constant 0 : i32
    %c0_i32_0 = arith.constant 0 : i32
    %c0_i32_1 = arith.constant 0 : i32
    %c0_i32_2 = arith.constant 0 : i32
    return %c0_i32, %c0_i32_0, %c0_i32_1 : i32, i32, i32
  }
  func.func @transform_7(%arg0: i32) -> (i32, i32) {
    %c0_i32 = arith.constant 0 : i32
    %c0_i32_0 = arith.constant 0 : i32
    %c0_i32_1 = arith.constant 0 : i32
    return %c0_i32, %c0_i32_0 : i32, i32
  }
  func.func @transform_8(%arg0: i32) -> (i32, i32, i32) {
    %c0_i32 = arith.constant 0 : i32
    %c0_i32_0 = arith.constant 0 : i32
    %c0_i32_1 = arith.constant 0 : i32
    return %arg0, %c0_i32, %c0_i32_0 : i32, i32, i32
  }
}

</mosaic_0001>

<llo_original>
// kernel: tile.33
$region0: #{tile.33}
  %s0 = inlined_call_operand.vmem [shape: f32[4,9,16,8], index: 0, kind: input, shape index: {}]
  %s1 = inlined_call_operand.vmem [shape: f32[4,9,128], index: 1, kind: output, shape index: {}]
  $region1: #{tile.33} parent=0
    #allocation0 [shape = 'u8[36864]{0}', space=vmem, size = 0x9000, scoped, tag = 'scoped mem for output reshape']
    %s2 = smov 3
    %v3 = vld [vmem:[%s0] ss:$16 sm:%s2]
    %s4 = smov 12
    %v5 = vld [vmem:[%s0] ss:$16 sm:%s4]
    %vm6 = vcmask 1043458
    %v7 = vsel %vm6, %v5, %v3
    %s8 = smov 48
    %v9 = vld [vmem:[%s0] ss:$16 sm:%s8]
    %vm10 = vcmask 1045508
    %v11 = vsel %vm10, %v9, %v7
    %s12 = smov 192
    %v13 = vld [vmem:[%s0] ss:$16 sm:%s12]
    %vm14 = vcmask 1047558
    %v15 = vsel %vm14, %v13, %v11
    %vm16 = vcmask 64512
    %17 = vst.msk [vmem:[#allocation0] sm:$0xf] %vm16, %v15
    %s18 = scalar_lea.vmem [#allocation0], 4
    %19 = vst.msk [vmem:[%s18] sm:$0xf0] %vm16, %v15
    %s20 = scalar_lea.vmem %s0, 128
    %s21 = smov 3
    %v22 = vld [vmem:[%s20] ss:$16 sm:%s21]
    %s23 = scalar_lea.vmem %s0, 128
    %s24 = smov 12
    %v25 = vld [vmem:[%s23] ss:$16 sm:%s24]
    %vm26 = vcmask 1043458
    %v27 = vsel %vm26, %v25, %v22
    %s28 = scalar_lea.vmem %s0, 128
    %s29 = smov 48
    %v30 = vld [vmem:[%s28] ss:$16 sm:%s29]
    %vm31 = vcmask 1045508
    %v32 = vsel %vm31, %v30, %v27
    %s33 = scalar_lea.vmem %s0, 128
    %s34 = smov 192
    %v35 = vld [vmem:[%s33] ss:$16 sm:%s34]
    %vm36 = vcmask 1047558
    %v37 = vsel %vm36, %v35, %v32
    %vm38 = vcmask 64512
    %s39 = scalar_lea.vmem [#allocation0], 16
    %40 = vst.msk [vmem:[%s39] sm:$0xf] %vm38, %v37
    %s41 = scalar_lea.vmem [#allocation0], 20
    %42 = vst.msk [vmem:[%s41] sm:$0xf0] %vm38, %v37
    %s43 = scalar_lea.vmem %s0, 256
    %s44 = smov 3
    %v45 = vld [vmem:[%s43] ss:$16 sm:%s44]
    %s46 = scalar_lea.vmem %s0, 256
    %s47 = smov 12
    %v48 = vld [vmem:[%s46] ss:$16 sm:%s47]
    %vm49 = vcmask 1043458
    %v50 = vsel %vm49, %v48, %v45
    %s51 = scalar_lea.vmem %s0, 256
    %s52 = smov 48
    %v53 = vld [vmem:[%s51] ss:$16 sm:%s52]
    %vm54 = vcmask 1045508
    %v55 = vsel %vm54, %v53, %v50
    %s56 = scalar_lea.vmem %s0, 256
    %s57 = smov 192
    %v58 = vld [vmem:[%s56] ss:$16 sm:%s57]
    %vm59 = vcmask 1047558
    %v60 = vsel %vm59, %v58, %v55
    %vm61 = vcmask 64512
    %s62 = scalar_lea.vmem [#allocation0], 32
    %63 = vst.msk [vmem:[%s62] sm:$0xf] %vm61, %v60
    %s64 = scalar_lea.vmem [#allocation0], 36
    %65 = vst.msk [vmem:[%s64] sm:$0xf0] %vm61, %v60
    %s66 = scalar_lea.vmem %s0, 384
    %s67 = smov 3
    %v68 = vld [vmem:[%s66] ss:$16 sm:%s67]
    %s69 = scalar_lea.vmem %s0, 384
    %s70 = smov 12
    %v71 = vld [vmem:[%s69] ss:$16 sm:%s70]
    %vm72 = vcmask 1043458
    %v73 = vsel %vm72, %v71, %v68
    %s74 = scalar_lea.vmem %s0, 384
    %s75 = smov 48
    %v76 = vld [vmem:[%s74] ss:$16 sm:%s75]
    %vm77 = vcmask 1045508
    %v78 = vsel %vm77, %v76, %v73
    %s79 = scalar_lea.vmem %s0, 384
    %s80 = smov 192
    %v81 = vld [vmem:[%s79] ss:$16 sm:%s80]
    %vm82 = vcmask 1047558
    %v83 = vsel %vm82, %v81, %v78
    %vm84 = vcmask 64512
    %s85 = scalar_lea.vmem [#allocation0], 48
    %86 = vst.msk [vmem:[%s85] sm:$0xf] %vm84, %v83
    %s87 = scalar_lea.vmem [#allocation0], 52
    %88 = vst.msk [vmem:[%s87] sm:$0xf0] %vm84, %v83
    %s89 = scalar_lea.vmem %s0, 512
    %s90 = smov 3
    %v91 = vld [vmem:[%s89] ss:$16 sm:%s90]
    %s92 = scalar_lea.vmem %s0, 512
    %s93 = smov 12
    %v94 = vld [vmem:[%s92] ss:$16 sm:%s93]
    %vm95 = vcmask 1043458
    %v96 = vsel %vm95, %v94, %v91
    %vm97 = vcmask 64512
    %s98 = scalar_lea.vmem [#allocation0], 64
    %99 = vst.msk [vmem:[%s98] sm:$0xf] %vm97, %v96
    %s100 = scalar_lea.vmem %s0, 15
    %s101 = smov 3
    %v102 = vld [vmem:[%s100] ss:$16 sm:%s101]
    %s103 = scalar_lea.vmem %s0, 15
    %s104 = smov 12
    %v105 = vld [vmem:[%s103] ss:$16 sm:%s104]
    %vm106 = vcmask 1043458
    %v107 = vsel %vm106, %v105, %v102
    %s108 = scalar_lea.vmem %s0, 15
    %s109 = smov 48
    %v110 = vld [vmem:[%s108] ss:$16 sm:%s109]
    %vm111 = vcmask 1045508
    %v112 = vsel %vm111, %v110, %v107
    %s113 = scalar_lea.vmem %s0, 15
    %s114 = smov 192
    %v115 = vld [vmem:[%s113] ss:$16 sm:%s114]
    %vm116 = vcmask 1047558
    %v117 = vsel %vm116, %v115, %v112
    %118 = vrot.lane.b32.xlu0 %v117, 120
    %v119 = vpop.permute.xlu0 %118
    %vm120 = vcmask 1048512
    %121 = vst.msk [vmem:[#allocation0] sm:$0xf] %vm120, %v119
    %s122 = scalar_lea.vmem [#allocation0], 4
    %123 = vst.msk [vmem:[%s122] sm:$0xf0] %vm120, %v119
    %s124 = scalar_lea.vmem %s0, 271
    %s125 = smov 3
    %v126 = vld [vmem:[%s124] ss:$16 sm:%s125]
    %s127 = scalar_lea.vmem %s0, 271
    %s128 = smov 12
    %v129 = vld [vmem:[%s127] ss:$16 sm:%s128]
    %vm130 = vcmask 1043458
    %v131 = vsel %vm130, %v129, %v126
    %s132 = scalar_lea.vmem %s0, 271
    %s133 = smov 48
    %v134 = vld [vmem:[%s132] ss:$16 sm:%s133]
    %vm135 = vcmask 1045508
    %v136 = vsel %vm135, %v134, %v131
    %s137 = scalar_lea.vmem %s0, 271
    %s138 = smov 192
    %v139 = vld [vmem:[%s137] ss:$16 sm:%s138]
    %vm140 = vcmask 1047558
    %v141 = vsel %vm140, %v139, %v136
    %142 = vrot.lane.b32.xlu0 %v141, 120
    %v143 = vpop.permute.xlu0 %142
    %vm144 = vcmask 1048512
    %s145 = scalar_lea.vmem [#allocation0], 32
    %146 = vst.msk [vmem:[%s145] sm:$0xf] %vm144, %v143
    %s147 = scalar_lea.vmem [#allocation0], 36
    %148 = vst.msk [vmem:[%s147] sm:$0xf0] %vm144, %v143
    %s149 = scalar_lea.vmem %s0, 527
    %s150 = smov 3
    %v151 = vld [vmem:[%s149] ss:$16 sm:%s150]
    %s152 = scalar_lea.vmem %s0, 527
    %s153 = smov 12
    %v154 = vld [vmem:[%s152] ss:$16 sm:%s153]
    %vm155 = vcmask 1043458
    %v156 = vsel %vm155, %v154, %v151
    %s157 = scalar_lea.vmem %s0, 79
    %s158 = smov 48
    %v159 = vld [vmem:[%s157] ss:$16 sm:%s158]
    %vm160 = vcmask 1045508
    %v161 = vsel %vm160, %v159, %v156
    %s162 = scalar_lea.vmem %s0, 79
    %s163 = smov 192
    %v164 = vld [vmem:[%s162] ss:$16 sm:%s163]
    %vm165 = vcmask 1047558
    %v166 = vsel %vm165, %v164, %v161
    %167 = vrot.lane.b32.xlu0 %v166, 120
    %v168 = vpop.permute.xlu0 %167
    %vm169 = vcmask 1048512
    %s170 = scalar_lea.vmem [#allocation0], 64
    %171 = vst.msk [vmem:[%s170] sm:$0xf] %vm169, %v168
    %s172 = scalar_lea.vmem [#allocation0], 12
    %173 = vst.msk [vmem:[%s172] sm:$0xf0] %vm169, %v168
    %s174 = scalar_lea.vmem %s0, 399
    %s175 = smov 3
    %v176 = vld [vmem:[%s174] ss:$16 sm:%s175]
    %s177 = scalar_lea.vmem %s0, 399
    %s178 = smov 12
    %v179 = vld [vmem:[%s177] ss:$16 sm:%s178]
    %vm180 = vcmask 1043458
    %v181 = vsel %vm180, %v179, %v176
    %s182 = scalar_lea.vmem %s0, 143
    %s183 = smov 48
    %v184 = vld [vmem:[%s182] ss:$16 sm:%s183]
    %vm185 = vcmask 1045508
    %v186 = vsel %vm185, %v184, %v181
    %s187 = scalar_lea.vmem %s0, 143
    %s188 = smov 192
    %v189 = vld [vmem:[%s187] ss:$16 sm:%s188]
    %vm190 = vcmask 1047558
    %v191 = vsel %vm190, %v189, %v186
    %192 = vrot.lane.b32.xlu0 %v191, 120
    %v193 = vpop.permute.xlu0 %192
    %vm194 = vcmask 1048512
    %s195 = scalar_lea.vmem [#allocation0], 48
    %196 = vst.msk [vmem:[%s195] sm:$0xf] %vm194, %v193
    %s197 = scalar_lea.vmem [#allocation0], 20
    %198 = vst.msk [vmem:[%s197] sm:$0xf0] %vm194, %v193
    %s199 = scalar_lea.vmem %s0, 463
    %s200 = smov 3
    %v201 = vld [vmem:[%s199] ss:$16 sm:%s200]
    %s202 = scalar_lea.vmem %s0, 463
    %s203 = smov 12
    %v204 = vld [vmem:[%s202] ss:$16 sm:%s203]
    %vm205 = vcmask 1043458
    %v206 = vsel %vm205, %v204, %v201
    %207 = vrot.lane.b32.xlu0 %v206, 120
    %v208 = vpop.permute.xlu0 %207
    %vm209 = vcmask 1048512
    %s210 = scalar_lea.vmem [#allocation0], 56
    %211 = vst.msk [vmem:[%s210] sm:$0xf] %vm209, %v208
    %s212 = scalar_lea.vmem %s0, 14
    %s213 = smov 3
    %v214 = vld [vmem:[%s212] ss:$16 sm:%s213]
    %s215 = scalar_lea.vmem %s0, 14
    %s216 = smov 12
    %v217 = vld [vmem:[%s215] ss:$16 sm:%s216]
    %vm218 = vcmask 1043458
    %v219 = vsel %vm218, %v217, %v214
    %s220 = scalar_lea.vmem %s0, 14
    %s221 = smov 48
    %v222 = vld [vmem:[%s220] ss:$16 sm:%s221]
    %vm223 = vcmask 1045508
    %v224 = vsel %vm223, %v222, %v219
    %s225 = scalar_lea.vmem %s0, 14
    %s226 = smov 192
    %v227 = vld [vmem:[%s225] ss:$16 sm:%s226]
    %vm228 = vcmask 1047558
    %v229 = vsel %vm228, %v227, %v224
    %230 = vrot.lane.b32.xlu0 %v229, 112
    %v231 = vpop.permute.xlu0 %230
    %vm232 = vcmask 982912
    %233 = vst.msk [vmem:[#allocation0] sm:$0xf] %vm232, %v231
    %s234 = scalar_lea.vmem [#allocation0], 4
    %235 = vst.msk [vmem:[%s234] sm:$0xf0] %vm232, %v231
    %s236 = scalar_lea.vmem %s0, 270
    %s237 = smov 3
    %v238 = vld [vmem:[%s236] ss:$16 sm:%s237]
    %s239 = scalar_lea.vmem %s0, 270
    %s240 = smov 12
    %v241 = vld [vmem:[%s239] ss:$16 sm:%s240]
    %vm242 = vcmask 1043458
    %v243 = vsel %vm242, %v241, %v238
    %s244 = scalar_lea.vmem %s0, 270
    %s245 = smov 48
    %v246 = vld [vmem:[%s244] ss:$16 sm:%s245]
    %vm247 = vcmask 1045508
    %v248 = vsel %vm247, %v246, %v243
    %s249 = scalar_lea.vmem %s0, 270
    %s250 = smov 192
    %v251 = vld [vmem:[%s249] ss:$16 sm:%s250]
    %vm252 = vcmask 1047558
    %v253 = vsel %vm252, %v251, %v248
    %254 = vrot.lane.b32.xlu0 %v253, 112
    %v255 = vpop.permute.xlu0 %254
    %vm256 = vcmask 982912
    %s257 = scalar_lea.vmem [#allocation0], 32
    %258 = vst.msk [vmem:[%s257] sm:$0xf] %vm256, %v255
    %s259 = scalar_lea.vmem [#allocation0], 36
    %260 = vst.msk [vmem:[%s259] sm:$0xf0] %vm256, %v255
    %s261 = scalar_lea.vmem %s0, 526
    %s262 = smov 3
    %v263 = vld [vmem:[%s261] ss:$16 sm:%s262]
    %s264 = scalar_lea.vmem %s0, 526
    %s265 = smov 12
    %v266 = vld [vmem:[%s264] ss:$16 sm:%s265]
    %vm267 = vcmask 1043458
    %v268 = vsel %vm267, %v266, %v263
    %s269 = scalar_lea.vmem %s0, 78
    %s270 = smov 48
    %v271 = vld [vmem:[%s269] ss:$16 sm:%s270]
    %vm272 = vcmask 1045508
    %v273 = vsel %vm272, %v271, %v268
    %s274 = scalar_lea.vmem %s0, 78
    %s275 = smov 192
    %v276 = vld [vmem:[%s274] ss:$16 sm:%s275]
    %vm277 = vcmask 1047558
    %v278 = vsel %vm277, %v276, %v273
    %279 = vrot.lane.b32.xlu0 %v278, 112
    %v280 = vpop.permute.xlu0 %279
    %vm281 = vcmask 982912
    %s282 = scalar_lea.vmem [#allocation0], 64
    %283 = vst.msk [vmem:[%s282] sm:$0xf] %vm281, %v280
    %s284 = scalar_lea.vmem [#allocation0], 12
    %285 = vst.msk [vmem:[%s284] sm:$0xf0] %vm281, %v280
    %s286 = scalar_lea.vmem %s0, 398
    %s287 = smov 3
    %v288 = vld [vmem:[%s286] ss:$16 sm:%s287]
    %s289 = scalar_lea.vmem %s0, 398
    %s290 = smov 12
    %v291 = vld [vmem:[%s289] ss:$16 sm:%s290]
    %vm292 = vcmask 1043458
    %v293 = vsel %vm292, %v291, %v288
    %s294 = scalar_lea.vmem %s0, 142
    %s295 = smov 48
    %v296 = vld [vmem:[%s294] ss:$16 sm:%s295]
    %vm297 = vcmask 1045508
    %v298 = vsel %vm297, %v296, %v293
    %s299 = scalar_lea.vmem %s0, 142
    %s300 = smov 192
    %v301 = vld [vmem:[%s299] ss:$16 sm:%s300]
    %vm302 = vcmask 1047558
    %v303 = vsel %vm302, %v301, %v298
    %304 = vrot.lane.b32.xlu0 %v303, 112
    %v305 = vpop.permute.xlu0 %304
    %vm306 = vcmask 982912
    %s307 = scalar_lea.vmem [#allocation0], 48
    %308 = vst.msk [vmem:[%s307] sm:$0xf] %vm306, %v305
    %s309 = scalar_lea.vmem [#allocation0], 20
    %310 = vst.msk [vmem:[%s309] sm:$0xf0] %vm306, %v305
    %s311 = scalar_lea.vmem %s0, 462
    %s312 = smov 3
    %v313 = vld [vmem:[%s311] ss:$16 sm:%s312]
    %s314 = scalar_lea.vmem %s0, 462
    %s315 = smov 12
    %v316 = vld [vmem:[%s314] ss:$16 sm:%s315]
    %vm317 = vcmask 1043458
    %v318 = vsel %vm317, %v316, %v313
    %319 = vrot.lane.b32.xlu0 %v318, 112
    %v320 = vpop.permute.xlu0 %319
    %vm321 = vcmask 982912
    %s322 = scalar_lea.vmem [#allocation0], 56
    %323 = vst.msk [vmem:[%s322] sm:$0xf] %vm321, %v320
    %s324 = scalar_lea.vmem %s0, 13
    %s325 = smov 3
    %v326 = vld [vmem:[%s324] ss:$16 sm:%s325]
    %s327 = scalar_lea.vmem %s0, 13
    %s328 = smov 12
    %v329 = vld [vmem:[%s327] ss:$16 sm:%s328]
    %vm330 = vcmask 1043458
    %v331 = vsel %vm330, %v329, %v326
    %s332 = scalar_lea.vmem %s0, 13
    %s333 = smov 48
    %v334 = vld [vmem:[%s332] ss:$16 sm:%s333]
    %vm335 = vcmask 1045508
    %v336 = vsel %vm335, %v334, %v331
    %s337 = scalar_lea.vmem %s0, 13
    %s338 = smov 192
    %v339 = vld [vmem:[%s337] ss:$16 sm:%s338]
    %vm340 = vcmask 1047558
    %v341 = vsel %vm340, %v339, %v336
    %342 = vrot.lane.b32.xlu0 %v341, 104
    %v343 = vpop.permute.xlu0 %342
    %vm344 = vcmask 917312
    %345 = vst.msk [vmem:[#allocation0] sm:$0xf] %vm344, %v343
    %s346 = scalar_lea.vmem [#allocation0], 4
    %347 = vst.msk [vmem:[%s346] sm:$0xf0] %vm344, %v343
    %s348 = scalar_lea.vmem %s0, 269
    %s349 = smov 3
    %v350 = vld [vmem:[%s348] ss:$16 sm:%s349]
    %s351 = scalar_lea.vmem %s0, 269
    %s352 = smov 12
    %v353 = vld [vmem:[%s351] ss:$16 sm:%s352]
    %vm354 = vcmask 1043458
    %v355 = vsel %vm354, %v353, %v350
    %s356 = scalar_lea.vmem %s0, 269
    %s357 = smov 48
    %v358 = vld [vmem:[%s356] ss:$16 sm:%s357]
    %vm359 = vcmask 1045508
    %v360 = vsel %vm359, %v358, %v355
    %s361 = scalar_lea.vmem %s0, 269
    %s362 = smov 192
    %v363 = vld [vmem:[%s361] ss:$16 sm:%s362]
    %vm364 = vcmask 1047558
    %v365 = vsel %vm364, %v363, %v360
    %366 = vrot.lane.b32.xlu0 %v365, 104
    %v367 = vpop.permute.xlu0 %366
    %vm368 = vcmask 917312
    %s369 = scalar_lea.vmem [#allocation0], 32
    %370 = vst.msk [vmem:[%s369] sm:$0xf] %vm368, %v367
    %s371 = scalar_lea.vmem [#allocation0], 36
    %372 = vst.msk [vmem:[%s371] sm:$0xf0] %vm368, %v367
    %s373 = scalar_lea.vmem %s0, 525
    %s374 = smov 3
    %v375 = vld [vmem:[%s373] ss:$16 sm:%s374]
    %s376 = scalar_lea.vmem %s0, 525
    %s377 = smov 12
    %v378 = vld [vmem:[%s376] ss:$16 sm:%s377]
    %vm379 = vcmask 1043458
    %v380 = vsel %vm379, %v378, %v375
    %s381 = scalar_lea.vmem %s0, 77
    %s382 = smov 48
    %v383 = vld [vmem:[%s381] ss:$16 sm:%s382]
    %vm384 = vcmask 1045508
    %v385 = vsel %vm384, %v383, %v380
    %s386 = scalar_lea.vmem %s0, 77
    %s387 = smov 192
    %v388 = vld [vmem:[%s386] ss:$16 sm:%s387]
    %vm389 = vcmask 1047558
    %v390 = vsel %vm389, %v388, %v385
    %391 = vrot.lane.b32.xlu0 %v390, 104
    %v392 = vpop.permute.xlu0 %391
    %vm393 = vcmask 917312
    %s394 = scalar_lea.vmem [#allocation0], 64
    %395 = vst.msk [vmem:[%s394] sm:$0xf] %vm393, %v392
    %s396 = scalar_lea.vmem [#allocation0], 12
    %397 = vst.msk [vmem:[%s396] sm:$0xf0] %vm393, %v392
    %s398 = scalar_lea.vmem %s0, 397
    %s399 = smov 3
    %v400 = vld [vmem:[%s398] ss:$16 sm:%s399]
    %s401 = scalar_lea.vmem %s0, 397
    %s402 = smov 12
    %v403 = vld [vmem:[%s401] ss:$16 sm:%s402]
    %vm404 = vcmask 1043458
    %v405 = vsel %vm404, %v403, %v400
    %s406 = scalar_lea.vmem %s0, 141
    %s407 = smov 48
    %v408 = vld [vmem:[%s406] ss:$16 sm:%s407]
    %vm409 = vcmask 1045508
    %v410 = vsel %vm409, %v408, %v405
    %s411 = scalar_lea.vmem %s0, 141
    %s412 = smov 192
    %v413 = vld [vmem:[%s411] ss:$16 sm:%s412]
    %vm414 = vcmask 1047558
    %v415 = vsel %vm414, %v413, %v410
    %416 = vrot.lane.b32.xlu0 %v415, 104
    %v417 = vpop.permute.xlu0 %416
    %vm418 = vcmask 917312
    %s419 = scalar_lea.vmem [#allocation0], 48
    %420 = vst.msk [vmem:[%s419] sm:$0xf] %vm418, %v417
    %s421 = scalar_lea.vmem [#allocation0], 20
    %422 = vst.msk [vmem:[%s421] sm:$0xf0] %vm418, %v417
    %s423 = scalar_lea.vmem %s0, 461
    %s424 = smov 3
    %v425 = vld [vmem:[%s423] ss:$16 sm:%s424]
    %s426 = scalar_lea.vmem %s0, 461
    %s427 = smov 12
    %v428 = vld [vmem:[%s426] ss:$16 sm:%s427]
    %vm429 = vcmask 1043458
    %v430 = vsel %vm429, %v428, %v425
    %431 = vrot.lane.b32.xlu0 %v430, 104
    %v432 = vpop.permute.xlu0 %431
    %vm433 = vcmask 917312
    %s434 = scalar_lea.vmem [#allocation0], 56
    %435 = vst.msk [vmem:[%s434] sm:$0xf] %vm433, %v432
    %s436 = scalar_lea.vmem %s0, 12
    %s437 = smov 3
    %v438 = vld [vmem:[%s436] ss:$16 sm:%s437]
    %s439 = scalar_lea.vmem %s0, 12
    %s440 = smov 12
    %v441 = vld [vmem:[%s439] ss:$16 sm:%s440]
    %vm442 = vcmask 1043458
    %v443 = vsel %vm442, %v441, %v438
    %s444 = scalar_lea.vmem %s0, 12
    %s445 = smov 48
    %v446 = vld [vmem:[%s444] ss:$16 sm:%s445]
    %vm447 = vcmask 1045508
    %v448 = vsel %vm447, %v446, %v443
    %s449 = scalar_lea.vmem %s0, 12
    %s450 = smov 192
    %v451 = vld [vmem:[%s449] ss:$16 sm:%s450]
    %vm452 = vcmask 1047558
    %v453 = vsel %vm452, %v451, %v448
    %454 = vrot.lane.b32.xlu0 %v453, 96
    %v455 = vpop.permute.xlu0 %454
    %vm456 = vcmask 851712
    %457 = vst.msk [vmem:[#allocation0] sm:$0xf] %vm456, %v455
    %s458 = scalar_lea.vmem [#allocation0], 4
    %459 = vst.msk [vmem:[%s458] sm:$0xf0] %vm456, %v455
    %s460 = scalar_lea.vmem %s0, 268
    %s461 = smov 3
    %v462 = vld [vmem:[%s460] ss:$16 sm:%s461]
    %s463 = scalar_lea.vmem %s0, 268
    %s464 = smov 12
    %v465 = vld [vmem:[%s463] ss:$16 sm:%s464]
    %vm466 = vcmask 1043458
    %v467 = vsel %vm466, %v465, %v462
    %s468 = scalar_lea.vmem %s0, 268
    %s469 = smov 48
    %v470 = vld [vmem:[%s468] ss:$16 sm:%s469]
    %vm471 = vcmask 1045508
    %v472 = vsel %vm471, %v470, %v467
    %s473 = scalar_lea.vmem %s0, 268
    %s474 = smov 192
    %v475 = vld [vmem:[%s473] ss:$16 sm:%s474]
    %vm476 = vcmask 1047558
    %v477 = vsel %vm476, %v475, %v472
    %478 = vrot.lane.b32.xlu0 %v477, 96
    %v479 = vpop.permute.xlu0 %478
    %vm480 = vcmask 851712
    %s481 = scalar_lea.vmem [#allocation0], 32
    %482 = vst.msk [vmem:[%s481] sm:$0xf] %vm480, %v479
    %s483 = scalar_lea.vmem [#allocation0], 36
    %484 = vst.msk [vmem:[%s483] sm:$0xf0] %vm480, %v479
    %s485 = scalar_lea.vmem %s0, 524
    %s486 = smov 3
    %v487 = vld [vmem:[%s485] ss:$16 sm:%s486]
    %s488 = scalar_lea.vmem %s0, 524
    %s489 = smov 12
    %v490 = vld [vmem:[%s488] ss:$16 sm:%s489]
    %vm491 = vcmask 1043458
    %v492 = vsel %vm491, %v490, %v487
    %s493 = scalar_lea.vmem %s0, 76
    %s494 = smov 48
    %v495 = vld [vmem:[%s493] ss:$16 sm:%s494]
    %vm496 = vcmask 1045508
    %v497 = vsel %vm496, %v495, %v492
    %s498 = scalar_lea.vmem %s0, 76
    %s499 = smov 192
    %v500 = vld [vmem:[%s498] ss:$16 sm:%s499]
    %vm501 = vcmask 1047558
    %v502 = vsel %vm501, %v500, %v497
    %503 = vrot.lane.b32.xlu0 %v502, 96
    %v504 = vpop.permute.xlu0 %503
    %vm505 = vcmask 851712
    %s506 = scalar_lea.vmem [#allocation0], 64
    %507 = vst.msk [vmem:[%s506] sm:$0xf] %vm505, %v504
    %s508 = scalar_lea.vmem [#allocation0], 12
    %509 = vst.msk [vmem:[%s508] sm:$0xf0] %vm505, %v504
    %s510 = scalar_lea.vmem %s0, 396
    %s511 = smov 3
    %v512 = vld [vmem:[%s510] ss:$16 sm:%s511]
    %s513 = scalar_lea.vmem %s0, 396
    %s514 = smov 12
    %v515 = vld [vmem:[%s513] ss:$16 sm:%s514]
    %vm516 = vcmask 1043458
    %v517 = vsel %vm516, %v515, %v512
    %s518 = scalar_lea.vmem %s0, 140
    %s519 = smov 48
    %v520 = vld [vmem:[%s518] ss:$16 sm:%s519]
    %vm521 = vcmask 1045508
    %v522 = vsel %vm521, %v520, %v517
    %s523 = scalar_lea.vmem %s0, 140
    %s524 = smov 192
    %v525 = vld [vmem:[%s523] ss:$16 sm:%s524]
    %vm526 = vcmask 1047558
    %v527 = vsel %vm526, %v525, %v522
    %528 = vrot.lane.b32.xlu0 %v527, 96
    %v529 = vpop.permute.xlu0 %528
    %vm530 = vcmask 851712
    %s531 = scalar_lea.vmem [#allocation0], 48
    %532 = vst.msk [vmem:[%s531] sm:$0xf] %vm530, %v529
    %s533 = scalar_lea.vmem [#allocation0], 20
    %534 = vst.msk [vmem:[%s533] sm:$0xf0] %vm530, %v529
    %s535 = scalar_lea.vmem %s0, 460
    %s536 = smov 3
    %v537 = vld [vmem:[%s535] ss:$16 sm:%s536]
    %s538 = scalar_lea.vmem %s0, 460
    %s539 = smov 12
    %v540 = vld [vmem:[%s538] ss:$16 sm:%s539]
    %vm541 = vcmask 1043458
    %v542 = vsel %vm541, %v540, %v537
    %543 = vrot.lane.b32.xlu0 %v542, 96
    %v544 = vpop.permute.xlu0 %543
    %vm545 = vcmask 851712
    %s546 = scalar_lea.vmem [#allocation0], 56
    %547 = vst.msk [vmem:[%s546] sm:$0xf] %vm545, %v544
    %s548 = scalar_lea.vmem %s0, 11
    %s549 = smov 3
    %v550 = vld [vmem:[%s548] ss:$16 sm:%s549]
    %s551 = scalar_lea.vmem %s0, 11
    %s552 = smov 12
    %v553 = vld [vmem:[%s551] ss:$16 sm:%s552]
    %vm554 = vcmask 1043458
    %v555 = vsel %vm554, %v553, %v550
    %s556 = scalar_lea.vmem %s0, 11
    %s557 = smov 48
    %v558 = vld [vmem:[%s556] ss:$16 sm:%s557]
    %vm559 = vcmask 1045508
    %v560 = vsel %vm559, %v558, %v555
    %s561 = scalar_lea.vmem %s0, 11
    %s562 = smov 192
    %v563 = vld [vmem:[%s561] ss:$16 sm:%s562]
    %vm564 = vcmask 1047558
    %v565 = vsel %vm564, %v563, %v560
    %566 = vrot.lane.b32.xlu0 %v565, 88
    %v567 = vpop.permute.xlu0 %566
    %vm568 = vcmask 786112
    %569 = vst.msk [vmem:[#allocation0] sm:$0xf] %vm568, %v567
    %s570 = scalar_lea.vmem [#allocation0], 4
    %571 = vst.msk [vmem:[%s570] sm:$0xf0] %vm568, %v567
    %s572 = scalar_lea.vmem %s0, 267
    %s573 = smov 3
    %v574 = vld [vmem:[%s572] ss:$16 sm:%s573]
    %s575 = scalar_lea.vmem %s0, 267
    %s576 = smov 12
    %v577 = vld [vmem:[%s575] ss:$16 sm:%s576]
    %vm578 = vcmask 1043458
    %v579 = vsel %vm578, %v577, %v574
    %s580 = scalar_lea.vmem %s0, 267
    %s581 = smov 48
    %v582 = vld [vmem:[%s580] ss:$16 sm:%s581]
    %vm583 = vcmask 1045508
    %v584 = vsel %vm583, %v582, %v579
    %s585 = scalar_lea.vmem %s0, 267
    %s586 = smov 192
    %v587 = vld [vmem:[%s585] ss:$16 sm:%s586]
    %vm588 = vcmask 1047558
    %v589 = vsel %vm588, %v587, %v584
    %590 = vrot.lane.b32.xlu0 %v589, 88
    %v591 = vpop.permute.xlu0 %590
    %vm592 = vcmask 786112
    %s593 = scalar_lea.vmem [#allocation0], 32
    %594 = vst.msk [vmem:[%s593] sm:$0xf] %vm592, %v591
    %s595 = scalar_lea.vmem [#allocation0], 36
    %596 = vst.msk [vmem:[%s595] sm:$0xf0] %vm592, %v591
    %s597 = scalar_lea.vmem %s0, 523
    %s598 = smov 3
    %v599 = vld [vmem:[%s597] ss:$16 sm:%s598]
    %s600 = scalar_lea.vmem %s0, 523
    %s601 = smov 12
    %v602 = vld [vmem:[%s600] ss:$16 sm:%s601]
    %vm603 = vcmask 1043458
    %v604 = vsel %vm603, %v602, %v599
    %s605 = scalar_lea.vmem %s0, 75
    %s606 = smov 48
    %v607 = vld [vmem:[%s605] ss:$16 sm:%s606]
    %vm608 = vcmask 1045508
    %v609 = vsel %vm608, %v607, %v604
    %s610 = scalar_lea.vmem %s0, 75
    %s611 = smov 192
    %v612 = vld [vmem:[%s610] ss:$16 sm:%s611]
    %vm613 = vcmask 1047558
    %v614 = vsel %vm613, %v612, %v609
    %615 = vrot.lane.b32.xlu0 %v614, 88
    %v616 = vpop.permute.xlu0 %615
    %vm617 = vcmask 786112
    %s618 = scalar_lea.vmem [#allocation0], 64
    %619 = vst.msk [vmem:[%s618] sm:$0xf] %vm617, %v616
    %s620 = scalar_lea.vmem [#allocation0], 12
    %621 = vst.msk [vmem:[%s620] sm:$0xf0] %vm617, %v616
    %s622 = scalar_lea.vmem %s0, 395
    %s623 = smov 3
    %v624 = vld [vmem:[%s622] ss:$16 sm:%s623]
    %s625 = scalar_lea.vmem %s0, 395
    %s626 = smov 12
    %v627 = vld [vmem:[%s625] ss:$16 sm:%s626]
    %vm628 = vcmask 1043458
    %v629 = vsel %vm628, %v627, %v624
    %s630 = scalar_lea.vmem %s0, 139
    %s631 = smov 48
    %v632 = vld [vmem:[%s630] ss:$16 sm:%s631]
    %vm633 = vcmask 1045508
    %v634 = vsel %vm633, %v632, %v629
    %s635 = scalar_lea.vmem %s0, 139
    %s636 = smov 192
    %v637 = vld [vmem:[%s635] ss:$16 sm:%s636]
    %vm638 = vcmask 1047558
    %v639 = vsel %vm638, %v637, %v634
    %640 = vrot.lane.b32.xlu0 %v639, 88
    %v641 = vpop.permute.xlu0 %640
    %vm642 = vcmask 786112
    %s643 = scalar_lea.vmem [#allocation0], 48
    %644 = vst.msk [vmem:[%s643] sm:$0xf] %vm642, %v641
    %s645 = scalar_lea.vmem [#allocation0], 20
    %646 = vst.msk [vmem:[%s645] sm:$0xf0] %vm642, %v641
    %s647 = scalar_lea.vmem %s0, 459
    %s648 = smov 3
    %v649 = vld [vmem:[%s647] ss:$16 sm:%s648]
    %s650 = scalar_lea.vmem %s0, 459
    %s651 = smov 12
    %v652 = vld [vmem:[%s650] ss:$16 sm:%s651]
    %vm653 = vcmask 1043458
    %v654 = vsel %vm653, %v652, %v649
    %655 = vrot.lane.b32.xlu0 %v654, 88
    %v656 = vpop.permute.xlu0 %655
    %vm657 = vcmask 786112
    %s658 = scalar_lea.vmem [#allocation0], 56
    %659 = vst.msk [vmem:[%s658] sm:$0xf] %vm657, %v656
    %s660 = scalar_lea.vmem %s0, 10
    %s661 = smov 3
    %v662 = vld [vmem:[%s660] ss:$16 sm:%s661]
    %s663 = scalar_lea.vmem %s0, 10
    %s664 = smov 12
    %v665 = vld [vmem:[%s663] ss:$16 sm:%s664]
    %vm666 = vcmask 1043458
    %v667 = vsel %vm666, %v665, %v662
    %s668 = scalar_lea.vmem %s0, 10
    %s669 = smov 48
    %v670 = vld [vmem:[%s668] ss:$16 sm:%s669]
    %vm671 = vcmask 1045508
    %v672 = vsel %vm671, %v670, %v667
    %s673 = scalar_lea.vmem %s0, 10
    %s674 = smov 192
    %v675 = vld [vmem:[%s673] ss:$16 sm:%s674]
    %vm676 = vcmask 1047558
    %v677 = vsel %vm676, %v675, %v672
    %678 = vrot.lane.b32.xlu0 %v677, 80
    %v679 = vpop.permute.xlu0 %678
    %vm680 = vcmask 720512
    %681 = vst.msk [vmem:[#allocation0] sm:$0xf] %vm680, %v679
    %s682 = scalar_lea.vmem [#allocation0], 4
    %683 = vst.msk [vmem:[%s682] sm:$0xf0] %vm680, %v679
    %s684 = scalar_lea.vmem %s0, 266
    %s685 = smov 3
    %v686 = vld [vmem:[%s684] ss:$16 sm:%s685]
    %s687 = scalar_lea.vmem %s0, 266
    %s688 = smov 12
    %v689 = vld [vmem:[%s687] ss:$16 sm:%s688]
    %vm690 = vcmask 1043458
    %v691 = vsel %vm690, %v689, %v686
    %s692 = scalar_lea.vmem %s0, 266
    %s693 = smov 48
    %v694 = vld [vmem:[%s692] ss:$16 sm:%s693]
    %vm695 = vcmask 1045508
    %v696 = vsel %vm695, %v694, %v691
    %s697 = scalar_lea.vmem %s0, 266
    %s698 = smov 192
    %v699 = vld [vmem:[%s697] ss:$16 sm:%s698]
    %vm700 = vcmask 1047558
    %v701 = vsel %vm700, %v699, %v696
    %702 = vrot.lane.b32.xlu0 %v701, 80
    %v703 = vpop.permute.xlu0 %702
    %vm704 = vcmask 720512
    %s705 = scalar_lea.vmem [#allocation0], 32
    %706 = vst.msk [vmem:[%s705] sm:$0xf] %vm704, %v703
    %s707 = scalar_lea.vmem [#allocation0], 36
    %708 = vst.msk [vmem:[%s707] sm:$0xf0] %vm704, %v703
    %s709 = scalar_lea.vmem %s0, 522
    %s710 = smov 3
    %v711 = vld [vmem:[%s709] ss:$16 sm:%s710]
    %s712 = scalar_lea.vmem %s0, 522
    %s713 = smov 12
    %v714 = vld [vmem:[%s712] ss:$16 sm:%s713]
    %vm715 = vcmask 1043458
    %v716 = vsel %vm715, %v714, %v711
    %s717 = scalar_lea.vmem %s0, 74
    %s718 = smov 48
    %v719 = vld [vmem:[%s717] ss:$16 sm:%s718]
    %vm720 = vcmask 1045508
    %v721 = vsel %vm720, %v719, %v716
    %s722 = scalar_lea.vmem %s0, 74
    %s723 = smov 192
    %v724 = vld [vmem:[%s722] ss:$16 sm:%s723]
    %vm725 = vcmask 1047558
    %v726 = vsel %vm725, %v724, %v721
    %727 = vrot.lane.b32.xlu0 %v726, 80
    %v728 = vpop.permute.xlu0 %727
    %vm729 = vcmask 720512
    %s730 = scalar_lea.vmem [#allocation0], 64
    %731 = vst.msk [vmem:[%s730] sm:$0xf] %vm729, %v728
    %s732 = scalar_lea.vmem [#allocation0], 12
    %733 = vst.msk [vmem:[%s732] sm:$0xf0] %vm729, %v728
    %s734 = scalar_lea.vmem %s0, 394
    %s735 = smov 3
    %v736 = vld [vmem:[%s734] ss:$16 sm:%s735]
    %s737 = scalar_lea.vmem %s0, 394
    %s738 = smov 12
    %v739 = vld [vmem:[%s737] ss:$16 sm:%s738]
    %vm740 = vcmask 1043458
    %v741 = vsel %vm740, %v739, %v736
    %s742 = scalar_lea.vmem %s0, 138
    %s743 = smov 48
    %v744 = vld [vmem:[%s742] ss:$16 sm:%s743]
    %vm745 = vcmask 1045508
    %v746 = vsel %vm745, %v744, %v741
    %s747 = scalar_lea.vmem %s0, 138
    %s748 = smov 192
    %v749 = vld [vmem:[%s747] ss:$16 sm:%s748]
    %vm750 = vcmask 1047558
    %v751 = vsel %vm750, %v749, %v746
    %752 = vrot.lane.b32.xlu0 %v751, 80
    %v753 = vpop.permute.xlu0 %752
    %vm754 = vcmask 720512
    %s755 = scalar_lea.vmem [#allocation0], 48
    %756 = vst.msk [vmem:[%s755] sm:$0xf] %vm754, %v753
    %s757 = scalar_lea.vmem [#allocation0], 20
    %758 = vst.msk [vmem:[%s757] sm:$0xf0] %vm754, %v753
    %s759 = scalar_lea.vmem %s0, 458
    %s760 = smov 3
    %v761 = vld [vmem:[%s759] ss:$16 sm:%s760]
    %s762 = scalar_lea.vmem %s0, 458
    %s763 = smov 12
    %v764 = vld [vmem:[%s762] ss:$16 sm:%s763]
    %vm765 = vcmask 1043458
    %v766 = vsel %vm765, %v764, %v761
    %767 = vrot.lane.b32.xlu0 %v766, 80
    %v768 = vpop.permute.xlu0 %767
    %vm769 = vcmask 720512
    %s770 = scalar_lea.vmem [#allocation0], 56
    %771 = vst.msk [vmem:[%s770] sm:$0xf] %vm769, %v768
    %s772 = scalar_lea.vmem %s0, 9
    %s773 = smov 3
    %v774 = vld [vmem:[%s772] ss:$16 sm:%s773]
    %s775 = scalar_lea.vmem %s0, 9
    %s776 = smov 12
    %v777 = vld [vmem:[%s775] ss:$16 sm:%s776]
    %vm778 = vcmask 1043458
    %v779 = vsel %vm778, %v777, %v774
    %s780 = scalar_lea.vmem %s0, 9
    %s781 = smov 48
    %v782 = vld [vmem:[%s780] ss:$16 sm:%s781]
    %vm783 = vcmask 1045508
    %v784 = vsel %vm783, %v782, %v779
    %s785 = scalar_lea.vmem %s0, 9
    %s786 = smov 192
    %v787 = vld [vmem:[%s785] ss:$16 sm:%s786]
    %vm788 = vcmask 1047558
    %v789 = vsel %vm788, %v787, %v784
    %790 = vrot.lane.b32.xlu0 %v789, 72
    %v791 = vpop.permute.xlu0 %790
    %vm792 = vcmask 654912
    %793 = vst.msk [vmem:[#allocation0] sm:$0xf] %vm792, %v791
    %s794 = scalar_lea.vmem [#allocation0], 4
    %795 = vst.msk [vmem:[%s794] sm:$0xf0] %vm792, %v791
    %s796 = scalar_lea.vmem %s0, 265
    %s797 = smov 3
    %v798 = vld [vmem:[%s796] ss:$16 sm:%s797]
    %s799 = scalar_lea.vmem %s0, 265
    %s800 = smov 12
    %v801 = vld [vmem:[%s799] ss:$16 sm:%s800]
    %vm802 = vcmask 1043458
    %v803 = vsel %vm802, %v801, %v798
    %s804 = scalar_lea.vmem %s0, 265
    %s805 = smov 48
    %v806 = vld [vmem:[%s804] ss:$16 sm:%s805]
    %vm807 = vcmask 1045508
    %v808 = vsel %vm807, %v806, %v803
    %s809 = scalar_lea.vmem %s0, 265
    %s810 = smov 192
    %v811 = vld [vmem:[%s809] ss:$16 sm:%s810]
    %vm812 = vcmask 1047558
    %v813 = vsel %vm812, %v811, %v808
    %814 = vrot.lane.b32.xlu0 %v813, 72
    %v815 = vpop.permute.xlu0 %814
    %vm816 = vcmask 654912
    %s817 = scalar_lea.vmem [#allocation0], 32
    %818 = vst.msk [vmem:[%s817] sm:$0xf] %vm816, %v815
    %s819 = scalar_lea.vmem [#allocation0], 36
    %820 = vst.msk [vmem:[%s819] sm:$0xf0] %vm816, %v815
    %s821 = scalar_lea.vmem %s0, 521
    %s822 = smov 3
    %v823 = vld [vmem:[%s821] ss:$16 sm:%s822]
    %s824 = scalar_lea.vmem %s0, 521
    %s825 = smov 12
    %v826 = vld [vmem:[%s824] ss:$16 sm:%s825]
    %vm827 = vcmask 1043458
    %v828 = vsel %vm827, %v826, %v823
    %s829 = scalar_lea.vmem %s0, 73
    %s830 = smov 48
    %v831 = vld [vmem:[%s829] ss:$16 sm:%s830]
    %vm832 = vcmask 1045508
    %v833 = vsel %vm832, %v831, %v828
    %s834 = scalar_lea.vmem %s0, 73
    %s835 = smov 192
    %v836 = vld [vmem:[%s834] ss:$16 sm:%s835]
    %vm837 = vcmask 1047558
    %v838 = vsel %vm837, %v836, %v833
    %839 = vrot.lane.b32.xlu0 %v838, 72
    %v840 = vpop.permute.xlu0 %839
    %vm841 = vcmask 654912
    %s842 = scalar_lea.vmem [#allocation0], 64
    %843 = vst.msk [vmem:[%s842] sm:$0xf] %vm841, %v840
    %s844 = scalar_lea.vmem [#allocation0], 12
    %845 = vst.msk [vmem:[%s844] sm:$0xf0] %vm841, %v840
    %s846 = scalar_lea.vmem %s0, 393
    %s847 = smov 3
    %v848 = vld [vmem:[%s846] ss:$16 sm:%s847]
    %s849 = scalar_lea.vmem %s0, 393
    %s850 = smov 12
    %v851 = vld [vmem:[%s849] ss:$16 sm:%s850]
    %vm852 = vcmask 1043458
    %v853 = vsel %vm852, %v851, %v848
    %s854 = scalar_lea.vmem %s0, 137
    %s855 = smov 48
    %v856 = vld [vmem:[%s854] ss:$16 sm:%s855]
    %vm857 = vcmask 1045508
    %v858 = vsel %vm857, %v856, %v853
    %s859 = scalar_lea.vmem %s0, 137
    %s860 = smov 192
    %v861 = vld [vmem:[%s859] ss:$16 sm:%s860]
    %vm862 = vcmask 1047558
    %v863 = vsel %vm862, %v861, %v858
    %864 = vrot.lane.b32.xlu0 %v863, 72
    %v865 = vpop.permute.xlu0 %864
    %vm866 = vcmask 654912
    %s867 = scalar_lea.vmem [#allocation0], 48
    %868 = vst.msk [vmem:[%s867] sm:$0xf] %vm866, %v865
    %s869 = scalar_lea.vmem [#allocation0], 20
    %870 = vst.msk [vmem:[%s869] sm:$0xf0] %vm866, %v865
    %s871 = scalar_lea.vmem %s0, 457
    %s872 = smov 3
    %v873 = vld [vmem:[%s871] ss:$16 sm:%s872]
    %s874 = scalar_lea.vmem %s0, 457
    %s875 = smov 12
    %v876 = vld [vmem:[%s874] ss:$16 sm:%s875]
    %vm877 = vcmask 1043458
    %v878 = vsel %vm877, %v876, %v873
    %879 = vrot.lane.b32.xlu0 %v878, 72
    %v880 = vpop.permute.xlu0 %879
    %vm881 = vcmask 654912
    %s882 = scalar_lea.vmem [#allocation0], 56
    %883 = vst.msk [vmem:[%s882] sm:$0xf] %vm881, %v880
    %s884 = scalar_lea.vmem %s0, 8
    %s885 = smov 3
    %v886 = vld [vmem:[%s884] ss:$16 sm:%s885]
    %s887 = scalar_lea.vmem %s0, 8
    %s888 = smov 12
    %v889 = vld [vmem:[%s887] ss:$16 sm:%s888]
    %vm890 = vcmask 1043458
    %v891 = vsel %vm890, %v889, %v886
    %s892 = scalar_lea.vmem %s0, 8
    %s893 = smov 48
    %v894 = vld [vmem:[%s892] ss:$16 sm:%s893]
    %vm895 = vcmask 1045508
    %v896 = vsel %vm895, %v894, %v891
    %s897 = scalar_lea.vmem %s0, 8
    %s898 = smov 192
    %v899 = vld [vmem:[%s897] ss:$16 sm:%s898]
    %vm900 = vcmask 1047558
    %v901 = vsel %vm900, %v899, %v896
    %902 = vrot.lane.b32.xlu0 %v901, 64
    %v903 = vpop.permute.xlu0 %902
    %vm904 = vcmask 589312
    %905 = vst.msk [vmem:[#allocation0] sm:$0xf] %vm904, %v903
    %s906 = scalar_lea.vmem [#allocation0], 4
    %907 = vst.msk [vmem:[%s906] sm:$0xf0] %vm904, %v903
    %s908 = scalar_lea.vmem %s0, 264
    %s909 = smov 3
    %v910 = vld [vmem:[%s908] ss:$16 sm:%s909]
    %s911 = scalar_lea.vmem %s0, 264
    %s912 = smov 12
    %v913 = vld [vmem:[%s911] ss:$16 sm:%s912]
    %vm914 = vcmask 1043458
    %v915 = vsel %vm914, %v913, %v910
    %s916 = scalar_lea.vmem %s0, 264
    %s917 = smov 48
    %v918 = vld [vmem:[%s916] ss:$16 sm:%s917]
    %vm919 = vcmask 1045508
    %v920 = vsel %vm919, %v918, %v915
    %s921 = scalar_lea.vmem %s0, 264
    %s922 = smov 192
    %v923 = vld [vmem:[%s921] ss:$16 sm:%s922]
    %vm924 = vcmask 1047558
    %v925 = vsel %vm924, %v923, %v920
    %926 = vrot.lane.b32.xlu0 %v925, 64
    %v927 = vpop.permute.xlu0 %926
    %vm928 = vcmask 589312
    %s929 = scalar_lea.vmem [#allocation0], 32
    %930 = vst.msk [vmem:[%s929] sm:$0xf] %vm928, %v927
    %s931 = scalar_lea.vmem [#allocation0], 36
    %932 = vst.msk [vmem:[%s931] sm:$0xf0] %vm928, %v927
    %s933 = scalar_lea.vmem %s0, 520
    %s934 = smov 3
    %v935 = vld [vmem:[%s933] ss:$16 sm:%s934]
    %s936 = scalar_lea.vmem %s0, 520
    %s937 = smov 12
    %v938 = vld [vmem:[%s936] ss:$16 sm:%s937]
    %vm939 = vcmask 1043458
    %v940 = vsel %vm939, %v938, %v935
    %s941 = scalar_lea.vmem %s0, 72
    %s942 = smov 48
    %v943 = vld [vmem:[%s941] ss:$16 sm:%s942]
    %vm944 = vcmask 1045508
    %v945 = vsel %vm944, %v943, %v940
    %s946 = scalar_lea.vmem %s0, 72
    %s947 = smov 192
    %v948 = vld [vmem:[%s946] ss:$16 sm:%s947]
    %vm949 = vcmask 1047558
    %v950 = vsel %vm949, %v948, %v945
    %951 = vrot.lane.b32.xlu0 %v950, 64
    %v952 = vpop.permute.xlu0 %951
    %vm953 = vcmask 589312
    %s954 = scalar_lea.vmem [#allocation0], 64
    %955 = vst.msk [vmem:[%s954] sm:$0xf] %vm953, %v952
    %s956 = scalar_lea.vmem [#allocation0], 12
    %957 = vst.msk [vmem:[%s956] sm:$0xf0] %vm953, %v952
    %s958 = scalar_lea.vmem %s0, 392
    %s959 = smov 3
    %v960 = vld [vmem:[%s958] ss:$16 sm:%s959]
    %s961 = scalar_lea.vmem %s0, 392
    %s962 = smov 12
    %v963 = vld [vmem:[%s961] ss:$16 sm:%s962]
    %vm964 = vcmask 1043458
    %v965 = vsel %vm964, %v963, %v960
    %s966 = scalar_lea.vmem %s0, 136
    %s967 = smov 48
    %v968 = vld [vmem:[%s966] ss:$16 sm:%s967]
    %vm969 = vcmask 1045508
    %v970 = vsel %vm969, %v968, %v965
    %s971 = scalar_lea.vmem %s0, 136
    %s972 = smov 192
    %v973 = vld [vmem:[%s971] ss:$16 sm:%s972]
    %vm974 = vcmask 1047558
    %v975 = vsel %vm974, %v973, %v970
    %976 = vrot.lane.b32.xlu0 %v975, 64
    %v977 = vpop.permute.xlu0 %976
    %vm978 = vcmask 589312
    %s979 = scalar_lea.vmem [#allocation0], 48
    %980 = vst.msk [vmem:[%s979] sm:$0xf] %vm978, %v977
    %s981 = scalar_lea.vmem [#allocation0], 20
    %982 = vst.msk [vmem:[%s981] sm:$0xf0] %vm978, %v977
    %s983 = scalar_lea.vmem %s0, 456
    %s984 = smov 3
    %v985 = vld [vmem:[%s983] ss:$16 sm:%s984]
    %s986 = scalar_lea.vmem %s0, 456
    %s987 = smov 12
    %v988 = vld [vmem:[%s986] ss:$16 sm:%s987]
    %vm989 = vcmask 1043458
    %v990 = vsel %vm989, %v988, %v985
    %991 = vrot.lane.b32.xlu0 %v990, 64
    %v992 = vpop.permute.xlu0 %991
    %vm993 = vcmask 589312
    %s994 = scalar_lea.vmem [#allocation0], 56
    %995 = vst.msk [vmem:[%s994] sm:$0xf] %vm993, %v992
    %s996 = scalar_lea.vmem %s0, 7
    %s997 = smov 3
    %v998 = vld [vmem:[%s996] ss:$16 sm:%s997]
    %s999 = scalar_lea.vmem %s0, 7
    %s1000 = smov 12
    %v1001 = vld [vmem:[%s999] ss:$16 sm:%s1000]
    %vm1002 = vcmask 1043458
    %v1003 = vsel %vm1002, %v1001, %v998
    %s1004 = scalar_lea.vmem %s0, 7
    %s1005 = smov 48
    %v1006 = vld [vmem:[%s1004] ss:$16 sm:%s1005]
    %vm1007 = vcmask 1045508
    %v1008 = vsel %vm1007, %v1006, %v1003
    %s1009 = scalar_lea.vmem %s0, 7
    %s1010 = smov 192
    %v1011 = vld [vmem:[%s1009] ss:$16 sm:%s1010]
    %vm1012 = vcmask 1047558
    %v1013 = vsel %vm1012, %v1011, %v1008
    %1014 = vrot.lane.b32.xlu0 %v1013, 56
    %v1015 = vpop.permute.xlu0 %1014
    %vm1016 = vcmask 523712
    %1017 = vst.msk [vmem:[#allocation0] sm:$0xf] %vm1016, %v1015
    %s1018 = scalar_lea.vmem [#allocation0], 4
    %1019 = vst.msk [vmem:[%s1018] sm:$0xf0] %vm1016, %v1015
    %s1020 = scalar_lea.vmem %s0, 263
    %s1021 = smov 3
    %v1022 = vld [vmem:[%s1020] ss:$16 sm:%s1021]
    %s1023 = scalar_lea.vmem %s0, 263
    %s1024 = smov 12
    %v1025 = vld [vmem:[%s1023] ss:$16 sm:%s1024]
    %vm1026 = vcmask 1043458
    %v1027 = vsel %vm1026, %v1025, %v1022
    %s1028 = scalar_lea.vmem %s0, 263
    %s1029 = smov 48
    %v1030 = vld [vmem:[%s1028] ss:$16 sm:%s1029]
    %vm1031 = vcmask 1045508
    %v1032 = vsel %vm1031, %v1030, %v1027
    %s1033 = scalar_lea.vmem %s0, 263
    %s1034 = smov 192
    %v1035 = vld [vmem:[%s1033] ss:$16 sm:%s1034]
    %vm1036 = vcmask 1047558
    %v1037 = vsel %vm1036, %v1035, %v1032
    %1038 = vrot.lane.b32.xlu0 %v1037, 56
    %v1039 = vpop.permute.xlu0 %1038
    %vm1040 = vcmask 523712
    %s1041 = scalar_lea.vmem [#allocation0], 32
    %1042 = vst.msk [vmem:[%s1041] sm:$0xf] %vm1040, %v1039
    %s1043 = scalar_lea.vmem [#allocation0], 36
    %1044 = vst.msk [vmem:[%s1043] sm:$0xf0] %vm1040, %v1039
    %s1045 = scalar_lea.vmem %s0, 519
    %s1046 = smov 3
    %v1047 = vld [vmem:[%s1045] ss:$16 sm:%s1046]
    %s1048 = scalar_lea.vmem %s0, 519
    %s1049 = smov 12
    %v1050 = vld [vmem:[%s1048] ss:$16 sm:%s1049]
    %vm1051 = vcmask 1043458
    %v1052 = vsel %vm1051, %v1050, %v1047
    %s1053 = scalar_lea.vmem %s0, 71
    %s1054 = smov 48
    %v1055 = vld [vmem:[%s1053] ss:$16 sm:%s1054]
    %vm1056 = vcmask 1045508
    %v1057 = vsel %vm1056, %v1055, %v1052
    %s1058 = scalar_lea.vmem %s0, 71
    %s1059 = smov 192
    %v1060 = vld [vmem:[%s1058] ss:$16 sm:%s1059]
    %vm1061 = vcmask 1047558
    %v1062 = vsel %vm1061, %v1060, %v1057
    %1063 = vrot.lane.b32.xlu0 %v1062, 56
    %v1064 = vpop.permute.xlu0 %1063
    %vm1065 = vcmask 523712
    %s1066 = scalar_lea.vmem [#allocation0], 64
    %1067 = vst.msk [vmem:[%s1066] sm:$0xf] %vm1065, %v1064
    %s1068 = scalar_lea.vmem [#allocation0], 12
    %1069 = vst.msk [vmem:[%s1068] sm:$0xf0] %vm1065, %v1064
    %s1070 = scalar_lea.vmem %s0, 391
    %s1071 = smov 3
    %v1072 = vld [vmem:[%s1070] ss:$16 sm:%s1071]
    %s1073 = scalar_lea.vmem %s0, 391
    %s1074 = smov 12
    %v1075 = vld [vmem:[%s1073] ss:$16 sm:%s1074]
    %vm1076 = vcmask 1043458
    %v1077 = vsel %vm1076, %v1075, %v1072
    %s1078 = scalar_lea.vmem %s0, 135
    %s1079 = smov 48
    %v1080 = vld [vmem:[%s1078] ss:$16 sm:%s1079]
    %vm1081 = vcmask 1045508
    %v1082 = vsel %vm1081, %v1080, %v1077
    %s1083 = scalar_lea.vmem %s0, 135
    %s1084 = smov 192
    %v1085 = vld [vmem:[%s1083] ss:$16 sm:%s1084]
    %vm1086 = vcmask 1047558
    %v1087 = vsel %vm1086, %v1085, %v1082
    %1088 = vrot.lane.b32.xlu0 %v1087, 56
    %v1089 = vpop.permute.xlu0 %1088
    %vm1090 = vcmask 523712
    %s1091 = scalar_lea.vmem [#allocation0], 48
    %1092 = vst.msk [vmem:[%s1091] sm:$0xf] %vm1090, %v1089
    %s1093 = scalar_lea.vmem [#allocation0], 20
    %1094 = vst.msk [vmem:[%s1093] sm:$0xf0] %vm1090, %v1089
    %s1095 = scalar_lea.vmem %s0, 455
    %s1096 = smov 3
    %v1097 = vld [vmem:[%s1095] ss:$16 sm:%s1096]
    %s1098 = scalar_lea.vmem %s0, 455
    %s1099 = smov 12
    %v1100 = vld [vmem:[%s1098] ss:$16 sm:%s1099]
    %vm1101 = vcmask 1043458
    %v1102 = vsel %vm1101, %v1100, %v1097
    %1103 = vrot.lane.b32.xlu0 %v1102, 56
    %v1104 = vpop.permute.xlu0 %1103
    %vm1105 = vcmask 523712
    %s1106 = scalar_lea.vmem [#allocation0], 56
    %1107 = vst.msk [vmem:[%s1106] sm:$0xf] %vm1105, %v1104
    %s1108 = scalar_lea.vmem %s0, 6
    %s1109 = smov 3
    %v1110 = vld [vmem:[%s1108] ss:$16 sm:%s1109]
    %s1111 = scalar_lea.vmem %s0, 6
    %s1112 = smov 12
    %v1113 = vld [vmem:[%s1111] ss:$16 sm:%s1112]
    %vm1114 = vcmask 1043458
    %v1115 = vsel %vm1114, %v1113, %v1110
    %s1116 = scalar_lea.vmem %s0, 6
    %s1117 = smov 48
    %v1118 = vld [vmem:[%s1116] ss:$16 sm:%s1117]
    %vm1119 = vcmask 1045508
    %v1120 = vsel %vm1119, %v1118, %v1115
    %s1121 = scalar_lea.vmem %s0, 6
    %s1122 = smov 192
    %v1123 = vld [vmem:[%s1121] ss:$16 sm:%s1122]
    %vm1124 = vcmask 1047558
    %v1125 = vsel %vm1124, %v1123, %v1120
    %1126 = vrot.lane.b32.xlu0 %v1125, 48
    %v1127 = vpop.permute.xlu0 %1126
    %vm1128 = vcmask 458112
    %1129 = vst.msk [vmem:[#allocation0] sm:$0xf] %vm1128, %v1127
    %s1130 = scalar_lea.vmem [#allocation0], 4
    %1131 = vst.msk [vmem:[%s1130] sm:$0xf0] %vm1128, %v1127
    %s1132 = scalar_lea.vmem %s0, 262
    %s1133 = smov 3
    %v1134 = vld [vmem:[%s1132] ss:$16 sm:%s1133]
    %s1135 = scalar_lea.vmem %s0, 262
    %s1136 = smov 12
    %v1137 = vld [vmem:[%s1135] ss:$16 sm:%s1136]
    %vm1138 = vcmask 1043458
    %v1139 = vsel %vm1138, %v1137, %v1134
    %s1140 = scalar_lea.vmem %s0, 262
    %s1141 = smov 48
    %v1142 = vld [vmem:[%s1140] ss:$16 sm:%s1141]
    %vm1143 = vcmask 1045508
    %v1144 = vsel %vm1143, %v1142, %v1139
    %s1145 = scalar_lea.vmem %s0, 262
    %s1146 = smov 192
    %v1147 = vld [vmem:[%s1145] ss:$16 sm:%s1146]
    %vm1148 = vcmask 1047558
    %v1149 = vsel %vm1148, %v1147, %v1144
    %1150 = vrot.lane.b32.xlu0 %v1149, 48
    %v1151 = vpop.permute.xlu0 %1150
    %vm1152 = vcmask 458112
    %s1153 = scalar_lea.vmem [#allocation0], 32
    %1154 = vst.msk [vmem:[%s1153] sm:$0xf] %vm1152, %v1151
    %s1155 = scalar_lea.vmem [#allocation0], 36
    %1156 = vst.msk [vmem:[%s1155] sm:$0xf0] %vm1152, %v1151
    %s1157 = scalar_lea.vmem %s0, 518
    %s1158 = smov 3
    %v1159 = vld [vmem:[%s1157] ss:$16 sm:%s1158]
    %s1160 = scalar_lea.vmem %s0, 518
    %s1161 = smov 12
    %v1162 = vld [vmem:[%s1160] ss:$16 sm:%s1161]
    %vm1163 = vcmask 1043458
    %v1164 = vsel %vm1163, %v1162, %v1159
    %s1165 = scalar_lea.vmem %s0, 70
    %s1166 = smov 48
    %v1167 = vld [vmem:[%s1165] ss:$16 sm:%s1166]
    %vm1168 = vcmask 1045508
    %v1169 = vsel %vm1168, %v1167, %v1164
    %s1170 = scalar_lea.vmem %s0, 70
    %s1171 = smov 192
    %v1172 = vld [vmem:[%s1170] ss:$16 sm:%s1171]
    %vm1173 = vcmask 1047558
    %v1174 = vsel %vm1173, %v1172, %v1169
    %1175 = vrot.lane.b32.xlu0 %v1174, 48
    %v1176 = vpop.permute.xlu0 %1175
    %vm1177 = vcmask 458112
    %s1178 = scalar_lea.vmem [#allocation0], 64
    %1179 = vst.msk [vmem:[%s1178] sm:$0xf] %vm1177, %v1176
    %s1180 = scalar_lea.vmem [#allocation0], 12
    %1181 = vst.msk [vmem:[%s1180] sm:$0xf0] %vm1177, %v1176
    %s1182 = scalar_lea.vmem %s0, 390
    %s1183 = smov 3
    %v1184 = vld [vmem:[%s1182] ss:$16 sm:%s1183]
    %s1185 = scalar_lea.vmem %s0, 390
    %s1186 = smov 12
    %v1187 = vld [vmem:[%s1185] ss:$16 sm:%s1186]
    %vm1188 = vcmask 1043458
    %v1189 = vsel %vm1188, %v1187, %v1184
    %s1190 = scalar_lea.vmem %s0, 134
    %s1191 = smov 48
    %v1192 = vld [vmem:[%s1190] ss:$16 sm:%s1191]
    %vm1193 = vcmask 1045508
    %v1194 = vsel %vm1193, %v1192, %v1189
    %s1195 = scalar_lea.vmem %s0, 134
    %s1196 = smov 192
    %v1197 = vld [vmem:[%s1195] ss:$16 sm:%s1196]
    %vm1198 = vcmask 1047558
    %v1199 = vsel %vm1198, %v1197, %v1194
    %1200 = vrot.lane.b32.xlu0 %v1199, 48
    %v1201 = vpop.permute.xlu0 %1200
    %vm1202 = vcmask 458112
    %s1203 = scalar_lea.vmem [#allocation0], 48
    %1204 = vst.msk [vmem:[%s1203] sm:$0xf] %vm1202, %v1201
    %s1205 = scalar_lea.vmem [#allocation0], 20
    %1206 = vst.msk [vmem:[%s1205] sm:$0xf0] %vm1202, %v1201
    %s1207 = scalar_lea.vmem %s0, 454
    %s1208 = smov 3
    %v1209 = vld [vmem:[%s1207] ss:$16 sm:%s1208]
    %s1210 = scalar_lea.vmem %s0, 454
    %s1211 = smov 12
    %v1212 = vld [vmem:[%s1210] ss:$16 sm:%s1211]
    %vm1213 = vcmask 1043458
    %v1214 = vsel %vm1213, %v1212, %v1209
    %1215 = vrot.lane.b32.xlu0 %v1214, 48
    %v1216 = vpop.permute.xlu0 %1215
    %vm1217 = vcmask 458112
    %s1218 = scalar_lea.vmem [#allocation0], 56
    %1219 = vst.msk [vmem:[%s1218] sm:$0xf] %vm1217, %v1216
    %s1220 = scalar_lea.vmem %s0, 5
    %s1221 = smov 3
    %v1222 = vld [vmem:[%s1220] ss:$16 sm:%s1221]
    %s1223 = scalar_lea.vmem %s0, 5
    %s1224 = smov 12
    %v1225 = vld [vmem:[%s1223] ss:$16 sm:%s1224]
    %vm1226 = vcmask 1043458
    %v1227 = vsel %vm1226, %v1225, %v1222
    %s1228 = scalar_lea.vmem %s0, 5
    %s1229 = smov 48
    %v1230 = vld [vmem:[%s1228] ss:$16 sm:%s1229]
    %vm1231 = vcmask 1045508
    %v1232 = vsel %vm1231, %v1230, %v1227
    %s1233 = scalar_lea.vmem %s0, 5
    %s1234 = smov 192
    %v1235 = vld [vmem:[%s1233] ss:$16 sm:%s1234]
    %vm1236 = vcmask 1047558
    %v1237 = vsel %vm1236, %v1235, %v1232
    %1238 = vrot.lane.b32.xlu0 %v1237, 40
    %v1239 = vpop.permute.xlu0 %1238
    %vm1240 = vcmask 392512
    %1241 = vst.msk [vmem:[#allocation0] sm:$0xf] %vm1240, %v1239
    %s1242 = scalar_lea.vmem [#allocation0], 4
    %1243 = vst.msk [vmem:[%s1242] sm:$0xf0] %vm1240, %v1239
    %s1244 = scalar_lea.vmem %s0, 261
    %s1245 = smov 3
    %v1246 = vld [vmem:[%s1244] ss:$16 sm:%s1245]
    %s1247 = scalar_lea.vmem %s0, 261
    %s1248 = smov 12
    %v1249 = vld [vmem:[%s1247] ss:$16 sm:%s1248]
    %vm1250 = vcmask 1043458
    %v1251 = vsel %vm1250, %v1249, %v1246
    %s1252 = scalar_lea.vmem %s0, 261
    %s1253 = smov 48
    %v1254 = vld [vmem:[%s1252] ss:$16 sm:%s1253]
    %vm1255 = vcmask 1045508
    %v1256 = vsel %vm1255, %v1254, %v1251
    %s1257 = scalar_lea.vmem %s0, 261
    %s1258 = smov 192
    %v1259 = vld [vmem:[%s1257] ss:$16 sm:%s1258]
    %vm1260 = vcmask 1047558
    %v1261 = vsel %vm1260, %v1259, %v1256
    %1262 = vrot.lane.b32.xlu0 %v1261, 40
    %v1263 = vpop.permute.xlu0 %1262
    %vm1264 = vcmask 392512
    %s1265 = scalar_lea.vmem [#allocation0], 32
    %1266 = vst.msk [vmem:[%s1265] sm:$0xf] %vm1264, %v1263
    %s1267 = scalar_lea.vmem [#allocation0], 36
    %1268 = vst.msk [vmem:[%s1267] sm:$0xf0] %vm1264, %v1263
    %s1269 = scalar_lea.vmem %s0, 517
    %s1270 = smov 3
    %v1271 = vld [vmem:[%s1269] ss:$16 sm:%s1270]
    %s1272 = scalar_lea.vmem %s0, 517
    %s1273 = smov 12
    %v1274 = vld [vmem:[%s1272] ss:$16 sm:%s1273]
    %vm1275 = vcmask 1043458
    %v1276 = vsel %vm1275, %v1274, %v1271
    %s1277 = scalar_lea.vmem %s0, 69
    %s1278 = smov 48
    %v1279 = vld [vmem:[%s1277] ss:$16 sm:%s1278]
    %vm1280 = vcmask 1045508
    %v1281 = vsel %vm1280, %v1279, %v1276
    %s1282 = scalar_lea.vmem %s0, 69
    %s1283 = smov 192
    %v1284 = vld [vmem:[%s1282] ss:$16 sm:%s1283]
    %vm1285 = vcmask 1047558
    %v1286 = vsel %vm1285, %v1284, %v1281
    %1287 = vrot.lane.b32.xlu0 %v1286, 40
    %v1288 = vpop.permute.xlu0 %1287
    %vm1289 = vcmask 392512
    %s1290 = scalar_lea.vmem [#allocation0], 64
    %1291 = vst.msk [vmem:[%s1290] sm:$0xf] %vm1289, %v1288
    %s1292 = scalar_lea.vmem [#allocation0], 12
    %1293 = vst.msk [vmem:[%s1292] sm:$0xf0] %vm1289, %v1288
    %s1294 = scalar_lea.vmem %s0, 389
    %s1295 = smov 3
    %v1296 = vld [vmem:[%s1294] ss:$16 sm:%s1295]
    %s1297 = scalar_lea.vmem %s0, 389
    %s1298 = smov 12
    %v1299 = vld [vmem:[%s1297] ss:$16 sm:%s1298]
    %vm1300 = vcmask 1043458
    %v1301 = vsel %vm1300, %v1299, %v1296
    %s1302 = scalar_lea.vmem %s0, 133
    %s1303 = smov 48
    %v1304 = vld [vmem:[%s1302] ss:$16 sm:%s1303]
    %vm1305 = vcmask 1045508
    %v1306 = vsel %vm1305, %v1304, %v1301
    %s1307 = scalar_lea.vmem %s0, 133
    %s1308 = smov 192
    %v1309 = vld [vmem:[%s1307] ss:$16 sm:%s1308]
    %vm1310 = vcmask 1047558
    %v1311 = vsel %vm1310, %v1309, %v1306
    %1312 = vrot.lane.b32.xlu0 %v1311, 40
    %v1313 = vpop.permute.xlu0 %1312
    %vm1314 = vcmask 392512
    %s1315 = scalar_lea.vmem [#allocation0], 48
    %1316 = vst.msk [vmem:[%s1315] sm:$0xf] %vm1314, %v1313
    %s1317 = scalar_lea.vmem [#allocation0], 20
    %1318 = vst.msk [vmem:[%s1317] sm:$0xf0] %vm1314, %v1313
    %s1319 = scalar_lea.vmem %s0, 453
    %s1320 = smov 3
    %v1321 = vld [vmem:[%s1319] ss:$16 sm:%s1320]
    %s1322 = scalar_lea.vmem %s0, 453
    %s1323 = smov 12
    %v1324 = vld [vmem:[%s1322] ss:$16 sm:%s1323]
    %vm1325 = vcmask 1043458
    %v1326 = vsel %vm1325, %v1324, %v1321
    %1327 = vrot.lane.b32.xlu0 %v1326, 40
    %v1328 = vpop.permute.xlu0 %1327
    %vm1329 = vcmask 392512
    %s1330 = scalar_lea.vmem [#allocation0], 56
    %1331 = vst.msk [vmem:[%s1330] sm:$0xf] %vm1329, %v1328
    %s1332 = scalar_lea.vmem %s0, 4
    %s1333 = smov 3
    %v1334 = vld [vmem:[%s1332] ss:$16 sm:%s1333]
    %s1335 = scalar_lea.vmem %s0, 4
    %s1336 = smov 12
    %v1337 = vld [vmem:[%s1335] ss:$16 sm:%s1336]
    %vm1338 = vcmask 1043458
    %v1339 = vsel %vm1338, %v1337, %v1334
    %s1340 = scalar_lea.vmem %s0, 4
    %s1341 = smov 48
    %v1342 = vld [vmem:[%s1340] ss:$16 sm:%s1341]
    %vm1343 = vcmask 1045508
    %v1344 = vsel %vm1343, %v1342, %v1339
    %s1345 = scalar_lea.vmem %s0, 4
    %s1346 = smov 192
    %v1347 = vld [vmem:[%s1345] ss:$16 sm:%s1346]
    %vm1348 = vcmask 1047558
    %v1349 = vsel %vm1348, %v1347, %v1344
    %1350 = vrot.lane.b32.xlu0 %v1349, 32
    %v1351 = vpop.permute.xlu0 %1350
    %vm1352 = vcmask 326912
    %1353 = vst.msk [vmem:[#allocation0] sm:$0xf] %vm1352, %v1351
    %s1354 = scalar_lea.vmem [#allocation0], 4
    %1355 = vst.msk [vmem:[%s1354] sm:$0xf0] %vm1352, %v1351
    %s1356 = scalar_lea.vmem %s0, 260
    %s1357 = smov 3
    %v1358 = vld [vmem:[%s1356] ss:$16 sm:%s1357]
    %s1359 = scalar_lea.vmem %s0, 260
    %s1360 = smov 12
    %v1361 = vld [vmem:[%s1359] ss:$16 sm:%s1360]
    %vm1362 = vcmask 1043458
    %v1363 = vsel %vm1362, %v1361, %v1358
    %s1364 = scalar_lea.vmem %s0, 260
    %s1365 = smov 48
    %v1366 = vld [vmem:[%s1364] ss:$16 sm:%s1365]
    %vm1367 = vcmask 1045508
    %v1368 = vsel %vm1367, %v1366, %v1363
    %s1369 = scalar_lea.vmem %s0, 260
    %s1370 = smov 192
    %v1371 = vld [vmem:[%s1369] ss:$16 sm:%s1370]
    %vm1372 = vcmask 1047558
    %v1373 = vsel %vm1372, %v1371, %v1368
    %1374 = vrot.lane.b32.xlu0 %v1373, 32
    %v1375 = vpop.permute.xlu0 %1374
    %vm1376 = vcmask 326912
    %s1377 = scalar_lea.vmem [#allocation0], 32
    %1378 = vst.msk [vmem:[%s1377] sm:$0xf] %vm1376, %v1375
    %s1379 = scalar_lea.vmem [#allocation0], 36
    %1380 = vst.msk [vmem:[%s1379] sm:$0xf0] %vm1376, %v1375
    %s1381 = scalar_lea.vmem %s0, 516
    %s1382 = smov 3
    %v1383 = vld [vmem:[%s1381] ss:$16 sm:%s1382]
    %s1384 = scalar_lea.vmem %s0, 516
    %s1385 = smov 12
    %v1386 = vld [vmem:[%s1384] ss:$16 sm:%s1385]
    %vm1387 = vcmask 1043458
    %v1388 = vsel %vm1387, %v1386, %v1383
    %s1389 = scalar_lea.vmem %s0, 68
    %s1390 = smov 48
    %v1391 = vld [vmem:[%s1389] ss:$16 sm:%s1390]
    %vm1392 = vcmask 1045508
    %v1393 = vsel %vm1392, %v1391, %v1388
    %s1394 = scalar_lea.vmem %s0, 68
    %s1395 = smov 192
    %v1396 = vld [vmem:[%s1394] ss:$16 sm:%s1395]
    %vm1397 = vcmask 1047558
    %v1398 = vsel %vm1397, %v1396, %v1393
    %1399 = vrot.lane.b32.xlu0 %v1398, 32
    %v1400 = vpop.permute.xlu0 %1399
    %vm1401 = vcmask 326912
    %s1402 = scalar_lea.vmem [#allocation0], 64
    %1403 = vst.msk [vmem:[%s1402] sm:$0xf] %vm1401, %v1400
    %s1404 = scalar_lea.vmem [#allocation0], 12
    %1405 = vst.msk [vmem:[%s1404] sm:$0xf0] %vm1401, %v1400
    %s1406 = scalar_lea.vmem %s0, 388
    %s1407 = smov 3
    %v1408 = vld [vmem:[%s1406] ss:$16 sm:%s1407]
    %s1409 = scalar_lea.vmem %s0, 388
    %s1410 = smov 12
    %v1411 = vld [vmem:[%s1409] ss:$16 sm:%s1410]
    %vm1412 = vcmask 1043458
    %v1413 = vsel %vm1412, %v1411, %v1408
    %s1414 = scalar_lea.vmem %s0, 132
    %s1415 = smov 48
    %v1416 = vld [vmem:[%s1414] ss:$16 sm:%s1415]
    %vm1417 = vcmask 1045508
    %v1418 = vsel %vm1417, %v1416, %v1413
    %s1419 = scalar_lea.vmem %s0, 132
    %s1420 = smov 192
    %v1421 = vld [vmem:[%s1419] ss:$16 sm:%s1420]
    %vm1422 = vcmask 1047558
    %v1423 = vsel %vm1422, %v1421, %v1418
    %1424 = vrot.lane.b32.xlu0 %v1423, 32
    %v1425 = vpop.permute.xlu0 %1424
    %vm1426 = vcmask 326912
    %s1427 = scalar_lea.vmem [#allocation0], 48
    %1428 = vst.msk [vmem:[%s1427] sm:$0xf] %vm1426, %v1425
    %s1429 = scalar_lea.vmem [#allocation0], 20
    %1430 = vst.msk [vmem:[%s1429] sm:$0xf0] %vm1426, %v1425
    %s1431 = scalar_lea.vmem %s0, 452
    %s1432 = smov 3
    %v1433 = vld [vmem:[%s1431] ss:$16 sm:%s1432]
    %s1434 = scalar_lea.vmem %s0, 452
    %s1435 = smov 12
    %v1436 = vld [vmem:[%s1434] ss:$16 sm:%s1435]
    %vm1437 = vcmask 1043458
    %v1438 = vsel %vm1437, %v1436, %v1433
    %1439 = vrot.lane.b32.xlu0 %v1438, 32
    %v1440 = vpop.permute.xlu0 %1439
    %vm1441 = vcmask 326912
    %s1442 = scalar_lea.vmem [#allocation0], 56
    %1443 = vst.msk [vmem:[%s1442] sm:$0xf] %vm1441, %v1440
    %s1444 = scalar_lea.vmem %s0, 3
    %s1445 = smov 3
    %v1446 = vld [vmem:[%s1444] ss:$16 sm:%s1445]
    %s1447 = scalar_lea.vmem %s0, 3
    %s1448 = smov 12
    %v1449 = vld [vmem:[%s1447] ss:$16 sm:%s1448]
    %vm1450 = vcmask 1043458
    %v1451 = vsel %vm1450, %v1449, %v1446
    %s1452 = scalar_lea.vmem %s0, 3
    %s1453 = smov 48
    %v1454 = vld [vmem:[%s1452] ss:$16 sm:%s1453]
    %vm1455 = vcmask 1045508
    %v1456 = vsel %vm1455, %v1454, %v1451
    %s1457 = scalar_lea.vmem %s0, 3
    %s1458 = smov 192
    %v1459 = vld [vmem:[%s1457] ss:$16 sm:%s1458]
    %vm1460 = vcmask 1047558
    %v1461 = vsel %vm1460, %v1459, %v1456
    %1462 = vrot.lane.b32.xlu0 %v1461, 24
    %v1463 = vpop.permute.xlu0 %1462
    %vm1464 = vcmask 261312
    %1465 = vst.msk [vmem:[#allocation0] sm:$0xf] %vm1464, %v1463
    %s1466 = scalar_lea.vmem [#allocation0], 4
    %1467 = vst.msk [vmem:[%s1466] sm:$0xf0] %vm1464, %v1463
    %s1468 = scalar_lea.vmem %s0, 259
    %s1469 = smov 3
    %v1470 = vld [vmem:[%s1468] ss:$16 sm:%s1469]
    %s1471 = scalar_lea.vmem %s0, 259
    %s1472 = smov 12
    %v1473 = vld [vmem:[%s1471] ss:$16 sm:%s1472]
    %vm1474 = vcmask 1043458
    %v1475 = vsel %vm1474, %v1473, %v1470
    %s1476 = scalar_lea.vmem %s0, 259
    %s1477 = smov 48
    %v1478 = vld [vmem:[%s1476] ss:$16 sm:%s1477]
    %vm1479 = vcmask 1045508
    %v1480 = vsel %vm1479, %v1478, %v1475
    %s1481 = scalar_lea.vmem %s0, 259
    %s1482 = smov 192
    %v1483 = vld [vmem:[%s1481] ss:$16 sm:%s1482]
    %vm1484 = vcmask 1047558
    %v1485 = vsel %vm1484, %v1483, %v1480
    %1486 = vrot.lane.b32.xlu0 %v1485, 24
    %v1487 = vpop.permute.xlu0 %1486
    %vm1488 = vcmask 261312
    %s1489 = scalar_lea.vmem [#allocation0], 32
    %1490 = vst.msk [vmem:[%s1489] sm:$0xf] %vm1488, %v1487
    %s1491 = scalar_lea.vmem [#allocation0], 36
    %1492 = vst.msk [vmem:[%s1491] sm:$0xf0] %vm1488, %v1487
    %s1493 = scalar_lea.vmem %s0, 515
    %s1494 = smov 3
    %v1495 = vld [vmem:[%s1493] ss:$16 sm:%s1494]
    %s1496 = scalar_lea.vmem %s0, 515
    %s1497 = smov 12
    %v1498 = vld [vmem:[%s1496] ss:$16 sm:%s1497]
    %vm1499 = vcmask 1043458
    %v1500 = vsel %vm1499, %v1498, %v1495
    %s1501 = scalar_lea.vmem %s0, 67
    %s1502 = smov 48
    %v1503 = vld [vmem:[%s1501] ss:$16 sm:%s1502]
    %vm1504 = vcmask 1045508
    %v1505 = vsel %vm1504, %v1503, %v1500
    %s1506 = scalar_lea.vmem %s0, 67
    %s1507 = smov 192
    %v1508 = vld [vmem:[%s1506] ss:$16 sm:%s1507]
    %vm1509 = vcmask 1047558
    %v1510 = vsel %vm1509, %v1508, %v1505
    %1511 = vrot.lane.b32.xlu0 %v1510, 24
    %v1512 = vpop.permute.xlu0 %1511
    %vm1513 = vcmask 261312
    %s1514 = scalar_lea.vmem [#allocation0], 64
    %1515 = vst.msk [vmem:[%s1514] sm:$0xf] %vm1513, %v1512
    %s1516 = scalar_lea.vmem [#allocation0], 12
    %1517 = vst.msk [vmem:[%s1516] sm:$0xf0] %vm1513, %v1512
    %s1518 = scalar_lea.vmem %s0, 387
    %s1519 = smov 3
    %v1520 = vld [vmem:[%s1518] ss:$16 sm:%s1519]
    %s1521 = scalar_lea.vmem %s0, 387
    %s1522 = smov 12
    %v1523 = vld [vmem:[%s1521] ss:$16 sm:%s1522]
    %vm1524 = vcmask 1043458
    %v1525 = vsel %vm1524, %v1523, %v1520
    %s1526 = scalar_lea.vmem %s0, 131
    %s1527 = smov 48
    %v1528 = vld [vmem:[%s1526] ss:$16 sm:%s1527]
    %vm1529 = vcmask 1045508
    %v1530 = vsel %vm1529, %v1528, %v1525
    %s1531 = scalar_lea.vmem %s0, 131
    %s1532 = smov 192
    %v1533 = vld [vmem:[%s1531] ss:$16 sm:%s1532]
    %vm1534 = vcmask 1047558
    %v1535 = vsel %vm1534, %v1533, %v1530
    %1536 = vrot.lane.b32.xlu0 %v1535, 24
    %v1537 = vpop.permute.xlu0 %1536
    %vm1538 = vcmask 261312
    %s1539 = scalar_lea.vmem [#allocation0], 48
    %1540 = vst.msk [vmem:[%s1539] sm:$0xf] %vm1538, %v1537
    %s1541 = scalar_lea.vmem [#allocation0], 20
    %1542 = vst.msk [vmem:[%s1541] sm:$0xf0] %vm1538, %v1537
    %s1543 = scalar_lea.vmem %s0, 451
    %s1544 = smov 3
    %v1545 = vld [vmem:[%s1543] ss:$16 sm:%s1544]
    %s1546 = scalar_lea.vmem %s0, 451
    %s1547 = smov 12
    %v1548 = vld [vmem:[%s1546] ss:$16 sm:%s1547]
    %vm1549 = vcmask 1043458
    %v1550 = vsel %vm1549, %v1548, %v1545
    %1551 = vrot.lane.b32.xlu0 %v1550, 24
    %v1552 = vpop.permute.xlu0 %1551
    %vm1553 = vcmask 261312
    %s1554 = scalar_lea.vmem [#allocation0], 56
    %1555 = vst.msk [vmem:[%s1554] sm:$0xf] %vm1553, %v1552
    %s1556 = scalar_lea.vmem %s0, 2
    %s1557 = smov 3
    %v1558 = vld [vmem:[%s1556] ss:$16 sm:%s1557]
    %s1559 = scalar_lea.vmem %s0, 2
    %s1560 = smov 12
    %v1561 = vld [vmem:[%s1559] ss:$16 sm:%s1560]
    %vm1562 = vcmask 1043458
    %v1563 = vsel %vm1562, %v1561, %v1558
    %s1564 = scalar_lea.vmem %s0, 2
    %s1565 = smov 48
    %v1566 = vld [vmem:[%s1564] ss:$16 sm:%s1565]
    %vm1567 = vcmask 1045508
    %v1568 = vsel %vm1567, %v1566, %v1563
    %s1569 = scalar_lea.vmem %s0, 2
    %s1570 = smov 192
    %v1571 = vld [vmem:[%s1569] ss:$16 sm:%s1570]
    %vm1572 = vcmask 1047558
    %v1573 = vsel %vm1572, %v1571, %v1568
    %1574 = vrot.lane.b32.xlu0 %v1573, 16
    %v1575 = vpop.permute.xlu0 %1574
    %vm1576 = vcmask 195712
    %1577 = vst.msk [vmem:[#allocation0] sm:$0xf] %vm1576, %v1575
    %s1578 = scalar_lea.vmem [#allocation0], 4
    %1579 = vst.msk [vmem:[%s1578] sm:$0xf0] %vm1576, %v1575
    %s1580 = scalar_lea.vmem %s0, 258
    %s1581 = smov 3
    %v1582 = vld [vmem:[%s1580] ss:$16 sm:%s1581]
    %s1583 = scalar_lea.vmem %s0, 258
    %s1584 = smov 12
    %v1585 = vld [vmem:[%s1583] ss:$16 sm:%s1584]
    %vm1586 = vcmask 1043458
    %v1587 = vsel %vm1586, %v1585, %v1582
    %s1588 = scalar_lea.vmem %s0, 258
    %s1589 = smov 48
    %v1590 = vld [vmem:[%s1588] ss:$16 sm:%s1589]
    %vm1591 = vcmask 1045508
    %v1592 = vsel %vm1591, %v1590, %v1587
    %s1593 = scalar_lea.vmem %s0, 258
    %s1594 = smov 192
    %v1595 = vld [vmem:[%s1593] ss:$16 sm:%s1594]
    %vm1596 = vcmask 1047558
    %v1597 = vsel %vm1596, %v1595, %v1592
    %1598 = vrot.lane.b32.xlu0 %v1597, 16
    %v1599 = vpop.permute.xlu0 %1598
    %vm1600 = vcmask 195712
    %s1601 = scalar_lea.vmem [#allocation0], 32
    %1602 = vst.msk [vmem:[%s1601] sm:$0xf] %vm1600, %v1599
    %s1603 = scalar_lea.vmem [#allocation0], 36
    %1604 = vst.msk [vmem:[%s1603] sm:$0xf0] %vm1600, %v1599
    %s1605 = scalar_lea.vmem %s0, 514
    %s1606 = smov 3
    %v1607 = vld [vmem:[%s1605] ss:$16 sm:%s1606]
    %s1608 = scalar_lea.vmem %s0, 514
    %s1609 = smov 12
    %v1610 = vld [vmem:[%s1608] ss:$16 sm:%s1609]
    %vm1611 = vcmask 1043458
    %v1612 = vsel %vm1611, %v1610, %v1607
    %s1613 = scalar_lea.vmem %s0, 66
    %s1614 = smov 48
    %v1615 = vld [vmem:[%s1613] ss:$16 sm:%s1614]
    %vm1616 = vcmask 1045508
    %v1617 = vsel %vm1616, %v1615, %v1612
    %s1618 = scalar_lea.vmem %s0, 66
    %s1619 = smov 192
    %v1620 = vld [vmem:[%s1618] ss:$16 sm:%s1619]
    %vm1621 = vcmask 1047558
    %v1622 = vsel %vm1621, %v1620, %v1617
    %1623 = vrot.lane.b32.xlu0 %v1622, 16
    %v1624 = vpop.permute.xlu0 %1623
    %vm1625 = vcmask 195712
    %s1626 = scalar_lea.vmem [#allocation0], 64
    %1627 = vst.msk [vmem:[%s1626] sm:$0xf] %vm1625, %v1624
    %s1628 = scalar_lea.vmem [#allocation0], 12
    %1629 = vst.msk [vmem:[%s1628] sm:$0xf0] %vm1625, %v1624
    %s1630 = scalar_lea.vmem %s0, 386
    %s1631 = smov 3
    %v1632 = vld [vmem:[%s1630] ss:$16 sm:%s1631]
    %s1633 = scalar_lea.vmem %s0, 386
    %s1634 = smov 12
    %v1635 = vld [vmem:[%s1633] ss:$16 sm:%s1634]
    %vm1636 = vcmask 1043458
    %v1637 = vsel %vm1636, %v1635, %v1632
    %s1638 = scalar_lea.vmem %s0, 130
    %s1639 = smov 48
    %v1640 = vld [vmem:[%s1638] ss:$16 sm:%s1639]
    %vm1641 = vcmask 1045508
    %v1642 = vsel %vm1641, %v1640, %v1637
    %s1643 = scalar_lea.vmem %s0, 130
    %s1644 = smov 192
    %v1645 = vld [vmem:[%s1643] ss:$16 sm:%s1644]
    %vm1646 = vcmask 1047558
    %v1647 = vsel %vm1646, %v1645, %v1642
    %1648 = vrot.lane.b32.xlu0 %v1647, 16
    %v1649 = vpop.permute.xlu0 %1648
    %vm1650 = vcmask 195712
    %s1651 = scalar_lea.vmem [#allocation0], 48
    %1652 = vst.msk [vmem:[%s1651] sm:$0xf] %vm1650, %v1649
    %s1653 = scalar_lea.vmem [#allocation0], 20
    %1654 = vst.msk [vmem:[%s1653] sm:$0xf0] %vm1650, %v1649
    %s1655 = scalar_lea.vmem %s0, 450
    %s1656 = smov 3
    %v1657 = vld [vmem:[%s1655] ss:$16 sm:%s1656]
    %s1658 = scalar_lea.vmem %s0, 450
    %s1659 = smov 12
    %v1660 = vld [vmem:[%s1658] ss:$16 sm:%s1659]
    %vm1661 = vcmask 1043458
    %v1662 = vsel %vm1661, %v1660, %v1657
    %1663 = vrot.lane.b32.xlu0 %v1662, 16
    %v1664 = vpop.permute.xlu0 %1663
    %vm1665 = vcmask 195712
    %s1666 = scalar_lea.vmem [#allocation0], 56
    %1667 = vst.msk [vmem:[%s1666] sm:$0xf] %vm1665, %v1664
    %s1668 = scalar_lea.vmem %s0, 1
    %s1669 = smov 3
    %v1670 = vld [vmem:[%s1668] ss:$16 sm:%s1669]
    %s1671 = scalar_lea.vmem %s0, 1
    %s1672 = smov 12
    %v1673 = vld [vmem:[%s1671] ss:$16 sm:%s1672]
    %vm1674 = vcmask 1043458
    %v1675 = vsel %vm1674, %v1673, %v1670
    %s1676 = scalar_lea.vmem %s0, 1
    %s1677 = smov 48
    %v1678 = vld [vmem:[%s1676] ss:$16 sm:%s1677]
    %vm1679 = vcmask 1045508
    %v1680 = vsel %vm1679, %v1678, %v1675
    %s1681 = scalar_lea.vmem %s0, 1
    %s1682 = smov 192
    %v1683 = vld [vmem:[%s1681] ss:$16 sm:%s1682]
    %vm1684 = vcmask 1047558
    %v1685 = vsel %vm1684, %v1683, %v1680
    %1686 = vrot.lane.b32.xlu0 %v1685, 8
    %v1687 = vpop.permute.xlu0 %1686
    %vm1688 = vcmask 130112
    %1689 = vst.msk [vmem:[#allocation0] sm:$0xf] %vm1688, %v1687
    %s1690 = scalar_lea.vmem [#allocation0], 4
    %1691 = vst.msk [vmem:[%s1690] sm:$0xf0] %vm1688, %v1687
    %s1692 = scalar_lea.vmem %s0, 257
    %s1693 = smov 3
    %v1694 = vld [vmem:[%s1692] ss:$16 sm:%s1693]
    %s1695 = scalar_lea.vmem %s0, 257
    %s1696 = smov 12
    %v1697 = vld [vmem:[%s1695] ss:$16 sm:%s1696]
    %vm1698 = vcmask 1043458
    %v1699 = vsel %vm1698, %v1697, %v1694
    %s1700 = scalar_lea.vmem %s0, 257
    %s1701 = smov 48
    %v1702 = vld [vmem:[%s1700] ss:$16 sm:%s1701]
    %vm1703 = vcmask 1045508
    %v1704 = vsel %vm1703, %v1702, %v1699
    %s1705 = scalar_lea.vmem %s0, 257
    %s1706 = smov 192
    %v1707 = vld [vmem:[%s1705] ss:$16 sm:%s1706]
    %vm1708 = vcmask 1047558
    %v1709 = vsel %vm1708, %v1707, %v1704
    %1710 = vrot.lane.b32.xlu0 %v1709, 8
    %v1711 = vpop.permute.xlu0 %1710
    %vm1712 = vcmask 130112
    %s1713 = scalar_lea.vmem [#allocation0], 32
    %1714 = vst.msk [vmem:[%s1713] sm:$0xf] %vm1712, %v1711
    %s1715 = scalar_lea.vmem [#allocation0], 36
    %1716 = vst.msk [vmem:[%s1715] sm:$0xf0] %vm1712, %v1711
    %s1717 = scalar_lea.vmem %s0, 513
    %s1718 = smov 3
    %v1719 = vld [vmem:[%s1717] ss:$16 sm:%s1718]
    %s1720 = scalar_lea.vmem %s0, 513
    %s1721 = smov 12
    %v1722 = vld [vmem:[%s1720] ss:$16 sm:%s1721]
    %vm1723 = vcmask 1043458
    %v1724 = vsel %vm1723, %v1722, %v1719
    %s1725 = scalar_lea.vmem %s0, 65
    %s1726 = smov 48
    %v1727 = vld [vmem:[%s1725] ss:$16 sm:%s1726]
    %vm1728 = vcmask 1045508
    %v1729 = vsel %vm1728, %v1727, %v1724
    %s1730 = scalar_lea.vmem %s0, 65
    %s1731 = smov 192
    %v1732 = vld [vmem:[%s1730] ss:$16 sm:%s1731]
    %vm1733 = vcmask 1047558
    %v1734 = vsel %vm1733, %v1732, %v1729
    %1735 = vrot.lane.b32.xlu0 %v1734, 8
    %v1736 = vpop.permute.xlu0 %1735
    %vm1737 = vcmask 130112
    %s1738 = scalar_lea.vmem [#allocation0], 64
    %1739 = vst.msk [vmem:[%s1738] sm:$0xf] %vm1737, %v1736
    %s1740 = scalar_lea.vmem [#allocation0], 12
    %1741 = vst.msk [vmem:[%s1740] sm:$0xf0] %vm1737, %v1736
    %s1742 = scalar_lea.vmem %s0, 385
    %s1743 = smov 3
    %v1744 = vld [vmem:[%s1742] ss:$16 sm:%s1743]
    %s1745 = scalar_lea.vmem %s0, 385
    %s1746 = smov 12
    %v1747 = vld [vmem:[%s1745] ss:$16 sm:%s1746]
    %vm1748 = vcmask 1043458
    %v1749 = vsel %vm1748, %v1747, %v1744
    %s1750 = scalar_lea.vmem %s0, 129
    %s1751 = smov 48
    %v1752 = vld [vmem:[%s1750] ss:$16 sm:%s1751]
    %vm1753 = vcmask 1045508
    %v1754 = vsel %vm1753, %v1752, %v1749
    %s1755 = scalar_lea.vmem %s0, 129
    %s1756 = smov 192
    %v1757 = vld [vmem:[%s1755] ss:$16 sm:%s1756]
    %vm1758 = vcmask 1047558
    %v1759 = vsel %vm1758, %v1757, %v1754
    %1760 = vrot.lane.b32.xlu0 %v1759, 8
    %v1761 = vpop.permute.xlu0 %1760
    %vm1762 = vcmask 130112
    %s1763 = scalar_lea.vmem [#allocation0], 48
    %1764 = vst.msk [vmem:[%s1763] sm:$0xf] %vm1762, %v1761
    %s1765 = scalar_lea.vmem [#allocation0], 20
    %1766 = vst.msk [vmem:[%s1765] sm:$0xf0] %vm1762, %v1761
    %s1767 = scalar_lea.vmem %s0, 449
    %s1768 = smov 3
    %v1769 = vld [vmem:[%s1767] ss:$16 sm:%s1768]
    %s1770 = scalar_lea.vmem %s0, 449
    %s1771 = smov 12
    %v1772 = vld [vmem:[%s1770] ss:$16 sm:%s1771]
    %vm1773 = vcmask 1043458
    %v1774 = vsel %vm1773, %v1772, %v1769
    %1775 = vrot.lane.b32.xlu0 %v1774, 8
    %v1776 = vpop.permute.xlu0 %1775
    %vm1777 = vcmask 130112
    %s1778 = scalar_lea.vmem [#allocation0], 56
    %1779 = vst.msk [vmem:[%s1778] sm:$0xf] %vm1777, %v1776
    %s1781 = ssub.s32 16, 1
    %v1782 = vld [vmem:[#allocation0] sm:%s1781]
    %s1784 = ssub.s32 16, 1
    %1785 = vst [vmem:[%s1] sm:%s1784] %v1782
    %s1786 = scalar_lea.vmem [#allocation0], 8
    %v1787 = vld [vmem:[%s1786] sm:%s1781]
    %s1789 = ssub.s32 16, 1
    %s1790 = scalar_lea.vmem %s1, 4
    %1791 = vst [vmem:[%s1790] sm:%s1789] %v1787
    %s1792 = scalar_lea.vmem [#allocation0], 16
    %v1793 = vld [vmem:[%s1792] sm:%s1781]
    %s1795 = ssub.s32 16, 1
    %s1796 = scalar_lea.vmem %s1, 8
    %1797 = vst [vmem:[%s1796] sm:%s1795] %v1793
    %s1798 = scalar_lea.vmem [#allocation0], 24
    %v1799 = vld [vmem:[%s1798] sm:%s1781]
    %s1801 = ssub.s32 16, 1
    %s1802 = scalar_lea.vmem %s1, 12
    %1803 = vst [vmem:[%s1802] sm:%s1801] %v1799
    %s1804 = scalar_lea.vmem [#allocation0], 32
    %v1805 = vld [vmem:[%s1804] sm:%s1781]
    %s1807 = ssub.s32 16, 1
    %s1808 = scalar_lea.vmem %s1, 16
    %1809 = vst [vmem:[%s1808] sm:%s1807] %v1805
    %s1810 = scalar_lea.vmem [#allocation0], 40
    %v1811 = vld [vmem:[%s1810] sm:%s1781]
    %s1813 = ssub.s32 16, 1
    %s1814 = scalar_lea.vmem %s1, 20
    %1815 = vst [vmem:[%s1814] sm:%s1813] %v1811
    %s1816 = scalar_lea.vmem [#allocation0], 48
    %v1817 = vld [vmem:[%s1816] sm:%s1781]
    %s1819 = ssub.s32 16, 1
    %s1820 = scalar_lea.vmem %s1, 24
    %1821 = vst [vmem:[%s1820] sm:%s1819] %v1817
    %s1822 = scalar_lea.vmem [#allocation0], 56
    %v1823 = vld [vmem:[%s1822] sm:%s1781]
    %s1825 = ssub.s32 16, 1
    %s1826 = scalar_lea.vmem %s1, 28
    %1827 = vst [vmem:[%s1826] sm:%s1825] %v1823
    %s1828 = scalar_lea.vmem [#allocation0], 64
    %v1829 = vld [vmem:[%s1828] sm:%s1781]
    %s1831 = ssub.s32 16, 1
    %s1832 = scalar_lea.vmem %s1, 32
    %1833 = vst [vmem:[%s1832] sm:%s1831] %v1829

// kernel: tile.37
$region0: #{tile.37}
  %s0 = inlined_call_operand.vmem [shape: f32[3,9,16,8], index: 0, kind: input, shape index: {}]
  %s1 = inlined_call_operand.vmem [shape: f32[3,9,128], index: 1, kind: output, shape index: {}]
  $region1: #{tile.37} parent=0
    #allocation0 [shape = 'u8[36864]{0}', space=vmem, size = 0x9000, scoped, tag = 'scoped mem for output reshape']
    %s2 = smov 3
    %v3 = vld [vmem:[%s0] ss:$16 sm:%s2]
    %s4 = smov 12
    %v5 = vld [vmem:[%s0] ss:$16 sm:%s4]
    %vm6 = vcmask 1043458
    %v7 = vsel %vm6, %v5, %v3
    %s8 = smov 48
    %v9 = vld [vmem:[%s0] ss:$16 sm:%s8]
    %vm10 = vcmask 1045508
    %v11 = vsel %vm10, %v9, %v7
    %s12 = smov 192
    %v13 = vld [vmem:[%s0] ss:$16 sm:%s12]
    %vm14 = vcmask 1047558
    %v15 = vsel %vm14, %v13, %v11
    %vm16 = vcmask 64512
    %17 = vst.msk [vmem:[#allocation0] sm:$0x7] %vm16, %v15
    %s18 = scalar_lea.vmem [#allocation0], 5
    %19 = vst.msk [vmem:[%s18] sm:$0x38] %vm16, %v15
    %s20 = scalar_lea.vmem [#allocation0], 10
    %21 = vst.msk [vmem:[%s20] sm:$0xc0] %vm16, %v15
    %s22 = scalar_lea.vmem %s0, 128
    %s23 = smov 3
    %v24 = vld [vmem:[%s22] ss:$16 sm:%s23]
    %s25 = scalar_lea.vmem %s0, 128
    %s26 = smov 12
    %v27 = vld [vmem:[%s25] ss:$16 sm:%s26]
    %vm28 = vcmask 1043458
    %v29 = vsel %vm28, %v27, %v24
    %s30 = scalar_lea.vmem %s0, 128
    %s31 = smov 48
    %v32 = vld [vmem:[%s30] ss:$16 sm:%s31]
    %vm33 = vcmask 1045508
    %v34 = vsel %vm33, %v32, %v29
    %s35 = scalar_lea.vmem %s0, 128
    %s36 = smov 192
    %v37 = vld [vmem:[%s35] ss:$16 sm:%s36]
    %vm38 = vcmask 1047558
    %v39 = vsel %vm38, %v37, %v34
    %vm40 = vcmask 64512
    %s41 = scalar_lea.vmem [#allocation0], 18
    %42 = vst.msk [vmem:[%s41] ss:$6 sm:$0x3] %vm40, %v39
    %s43 = scalar_lea.vmem [#allocation0], 23
    %44 = vst.msk [vmem:[%s43] sm:$0xc] %vm40, %v39
    %s45 = scalar_lea.vmem [#allocation0], 28
    %46 = vst.msk [vmem:[%s45] sm:$0x70] %vm40, %v39
    %s47 = scalar_lea.vmem [#allocation0], 33
    %48 = vst.msk [vmem:[%s47] sm:$0x80] %vm40, %v39
    %s49 = scalar_lea.vmem %s0, 256
    %s50 = smov 3
    %v51 = vld [vmem:[%s49] ss:$16 sm:%s50]
    %s52 = scalar_lea.vmem %s0, 256
    %s53 = smov 12
    %v54 = vld [vmem:[%s52] ss:$16 sm:%s53]
    %vm55 = vcmask 1043458
    %v56 = vsel %vm55, %v54, %v51
    %s57 = scalar_lea.vmem %s0, 256
    %s58 = smov 48
    %v59 = vld [vmem:[%s57] ss:$16 sm:%s58]
    %vm60 = vcmask 1045508
    %v61 = vsel %vm60, %v59, %v56
    %s62 = scalar_lea.vmem %s0, 256
    %s63 = smov 192
    %v64 = vld [vmem:[%s62] ss:$16 sm:%s63]
    %vm65 = vcmask 1047558
    %v66 = vsel %vm65, %v64, %v61
    %vm67 = vcmask 64512
    %s68 = scalar_lea.vmem [#allocation0], 41
    %69 = vst.msk [vmem:[%s68] sm:$0x3] %vm67, %v66
    %s70 = scalar_lea.vmem [#allocation0], 46
    %71 = vst.msk [vmem:[%s70] sm:$0x1c] %vm67, %v66
    %s72 = scalar_lea.vmem [#allocation0], 51
    %73 = vst.msk [vmem:[%s72] sm:$0xe0] %vm67, %v66
    %s74 = scalar_lea.vmem %s0, 384
    %s75 = smov 3
    %v76 = vld [vmem:[%s74] ss:$16 sm:%s75]
    %s77 = scalar_lea.vmem %s0, 414
    %v78 = vld [vmem:[%s77] sm:$0x4]
    %vm79 = vcmask 1042434
    %v80 = vsel %vm79, %v78, %v76
    %vm81 = vcmask 64512
    %s82 = scalar_lea.vmem [#allocation0], 64
    %83 = vst.msk [vmem:[%s82] sm:$0x7] %vm81, %v80
    %s84 = scalar_lea.vmem %s0, 15
    %s85 = smov 3
    %v86 = vld [vmem:[%s84] ss:$16 sm:%s85]
    %s87 = scalar_lea.vmem %s0, 15
    %s88 = smov 12
    %v89 = vld [vmem:[%s87] ss:$16 sm:%s88]
    %vm90 = vcmask 1043458
    %v91 = vsel %vm90, %v89, %v86
    %s92 = scalar_lea.vmem %s0, 15
    %s93 = smov 48
    %v94 = vld [vmem:[%s92] ss:$16 sm:%s93]
    %vm95 = vcmask 1045508
    %v96 = vsel %vm95, %v94, %v91
    %s97 = scalar_lea.vmem %s0, 15
    %s98 = smov 192
    %v99 = vld [vmem:[%s97] ss:$16 sm:%s98]
    %vm100 = vcmask 1047558
    %v101 = vsel %vm100, %v99, %v96
    %102 = vrot.lane.b32.xlu0 %v101, 120
    %v103 = vpop.permute.xlu0 %102
    %vm104 = vcmask 1048512
    %105 = vst.msk [vmem:[#allocation0] sm:$0x7] %vm104, %v103
    %s106 = scalar_lea.vmem [#allocation0], 5
    %107 = vst.msk [vmem:[%s106] sm:$0x38] %vm104, %v103
    %s108 = scalar_lea.vmem [#allocation0], 10
    %109 = vst.msk [vmem:[%s108] sm:$0xc0] %vm104, %v103
    %s110 = scalar_lea.vmem %s0, 207
    %s111 = smov 3
    %v112 = vld [vmem:[%s110] ss:$16 sm:%s111]
    %s113 = scalar_lea.vmem %s0, 207
    %s114 = smov 12
    %v115 = vld [vmem:[%s113] ss:$16 sm:%s114]
    %vm116 = vcmask 1043458
    %v117 = vsel %vm116, %v115, %v112
    %s118 = scalar_lea.vmem %s0, 207
    %s119 = smov 48
    %v120 = vld [vmem:[%s118] ss:$16 sm:%s119]
    %vm121 = vcmask 1045508
    %v122 = vsel %vm121, %v120, %v117
    %s123 = scalar_lea.vmem %s0, 207
    %s124 = smov 192
    %v125 = vld [vmem:[%s123] ss:$16 sm:%s124]
    %vm126 = vcmask 1047558
    %v127 = vsel %vm126, %v125, %v122
    %128 = vrot.lane.b32.xlu0 %v127, 120
    %v129 = vpop.permute.xlu0 %128
    %vm130 = vcmask 1048512
    %s131 = scalar_lea.vmem [#allocation0], 32
    %132 = vst.msk [vmem:[%s131] sm:$0x7] %vm130, %v129
    %s133 = scalar_lea.vmem [#allocation0], 37
    %134 = vst.msk [vmem:[%s133] sm:$0x38] %vm130, %v129
    %s135 = scalar_lea.vmem [#allocation0], 42
    %136 = vst.msk [vmem:[%s135] sm:$0xc0] %vm130, %v129
    %s137 = scalar_lea.vmem %s0, 399
    %s138 = smov 3
    %v139 = vld [vmem:[%s137] ss:$16 sm:%s138]
    %s140 = scalar_lea.vmem %s0, 429
    %v141 = vld [vmem:[%s140] sm:$0x4]
    %vm142 = vcmask 1042434
    %v143 = vsel %vm142, %v141, %v139
    %s144 = scalar_lea.vmem %s0, 95
    %s145 = smov 24
    %v146 = vld [vmem:[%s144] ss:$16 sm:%s145]
    %vm147 = vcmask 1044483
    %v148 = vsel %vm147, %v146, %v143
    %s149 = scalar_lea.vmem %s0, 95
    %s150 = smov 96
    %v151 = vld [vmem:[%s149] ss:$16 sm:%s150]
    %vm152 = vcmask 1046533
    %v153 = vsel %vm152, %v151, %v148
    %s154 = scalar_lea.vmem %s0, 328
    %v155 = vld [vmem:[%s154] sm:$0x80]
    %vm156 = vcmask 1047559
    %v157 = vsel %vm156, %v155, %v153
    %158 = vrot.lane.b32.xlu0 %v157, 120
    %v159 = vpop.permute.xlu0 %158
    %vm160 = vcmask 1048512
    %s161 = scalar_lea.vmem [#allocation0], 64
    %162 = vst.msk [vmem:[%s161] sm:$0x7] %vm160, %v159
    %163 = vst.msk [vmem:[#allocation0] ss:$6 sm:$0x18] %vm160, %v159
    %s164 = scalar_lea.vmem [#allocation0], 20
    %165 = vst.msk [vmem:[%s164] sm:$0x60] %vm160, %v159
    %s166 = scalar_lea.vmem [#allocation0], 43
    %167 = vst.msk [vmem:[%s166] sm:$0x80] %vm160, %v159
    %s168 = scalar_lea.vmem %s0, 351
    %s169 = smov 3
    %v170 = vld [vmem:[%s168] ss:$16 sm:%s169]
    %s171 = scalar_lea.vmem %s0, 381
    %v172 = vld [vmem:[%s171] sm:$0x4]
    %vm173 = vcmask 1042434
    %v174 = vsel %vm173, %v172, %v170
    %175 = vrot.lane.b32.xlu0 %v174, 120
    %v176 = vpop.permute.xlu0 %175
    %vm177 = vcmask 1048512
    %s178 = scalar_lea.vmem [#allocation0], 56
    %179 = vst.msk [vmem:[%s178] sm:$0x7] %vm177, %v176
    %s180 = scalar_lea.vmem %s0, 14
    %s181 = smov 3
    %v182 = vld [vmem:[%s180] ss:$16 sm:%s181]
    %s183 = scalar_lea.vmem %s0, 14
    %s184 = smov 12
    %v185 = vld [vmem:[%s183] ss:$16 sm:%s184]
    %vm186 = vcmask 1043458
    %v187 = vsel %vm186, %v185, %v182
    %s188 = scalar_lea.vmem %s0, 14
    %s189 = smov 48
    %v190 = vld [vmem:[%s188] ss:$16 sm:%s189]
    %vm191 = vcmask 1045508
    %v192 = vsel %vm191, %v190, %v187
    %s193 = scalar_lea.vmem %s0, 14
    %s194 = smov 192
    %v195 = vld [vmem:[%s193] ss:$16 sm:%s194]
    %vm196 = vcmask 1047558
    %v197 = vsel %vm196, %v195, %v192
    %198 = vrot.lane.b32.xlu0 %v197, 112
    %v199 = vpop.permute.xlu0 %198
    %vm200 = vcmask 982912
    %201 = vst.msk [vmem:[#allocation0] sm:$0x7] %vm200, %v199
    %s202 = scalar_lea.vmem [#allocation0], 5
    %203 = vst.msk [vmem:[%s202] sm:$0x38] %vm200, %v199
    %s204 = scalar_lea.vmem [#allocation0], 10
    %205 = vst.msk [vmem:[%s204] sm:$0xc0] %vm200, %v199
    %s206 = scalar_lea.vmem %s0, 206
    %s207 = smov 3
    %v208 = vld [vmem:[%s206] ss:$16 sm:%s207]
    %s209 = scalar_lea.vmem %s0, 206
    %s210 = smov 12
    %v211 = vld [vmem:[%s209] ss:$16 sm:%s210]
    %vm212 = vcmask 1043458
    %v213 = vsel %vm212, %v211, %v208
    %s214 = scalar_lea.vmem %s0, 206
    %s215 = smov 48
    %v216 = vld [vmem:[%s214] ss:$16 sm:%s215]
    %vm217 = vcmask 1045508
    %v218 = vsel %vm217, %v216, %v213
    %s219 = scalar_lea.vmem %s0, 206
    %s220 = smov 192
    %v221 = vld [vmem:[%s219] ss:$16 sm:%s220]
    %vm222 = vcmask 1047558
    %v223 = vsel %vm222, %v221, %v218
    %224 = vrot.lane.b32.xlu0 %v223, 112
    %v225 = vpop.permute.xlu0 %224
    %vm226 = vcmask 982912
    %s227 = scalar_lea.vmem [#allocation0], 32
    %228 = vst.msk [vmem:[%s227] sm:$0x7] %vm226, %v225
    %s229 = scalar_lea.vmem [#allocation0], 37
    %230 = vst.msk [vmem:[%s229] sm:$0x38] %vm226, %v225
    %s231 = scalar_lea.vmem [#allocation0], 42
    %232 = vst.msk [vmem:[%s231] sm:$0xc0] %vm226, %v225
    %s233 = scalar_lea.vmem %s0, 398
    %s234 = smov 3
    %v235 = vld [vmem:[%s233] ss:$16 sm:%s234]
    %s236 = scalar_lea.vmem %s0, 428
    %v237 = vld [vmem:[%s236] sm:$0x4]
    %vm238 = vcmask 1042434
    %v239 = vsel %vm238, %v237, %v235
    %s240 = scalar_lea.vmem %s0, 94
    %s241 = smov 24
    %v242 = vld [vmem:[%s240] ss:$16 sm:%s241]
    %vm243 = vcmask 1044483
    %v244 = vsel %vm243, %v242, %v239
    %s245 = scalar_lea.vmem %s0, 94
    %s246 = smov 96
    %v247 = vld [vmem:[%s245] ss:$16 sm:%s246]
    %vm248 = vcmask 1046533
    %v249 = vsel %vm248, %v247, %v244
    %s250 = scalar_lea.vmem %s0, 327
    %v251 = vld [vmem:[%s250] sm:$0x80]
    %vm252 = vcmask 1047559
    %v253 = vsel %vm252, %v251, %v249
    %254 = vrot.lane.b32.xlu0 %v253, 112
    %v255 = vpop.permute.xlu0 %254
    %vm256 = vcmask 982912
    %s257 = scalar_lea.vmem [#allocation0], 64
    %258 = vst.msk [vmem:[%s257] sm:$0x7] %vm256, %v255
    %259 = vst.msk [vmem:[#allocation0] ss:$6 sm:$0x18] %vm256, %v255
    %s260 = scalar_lea.vmem [#allocation0], 20
    %261 = vst.msk [vmem:[%s260] sm:$0x60] %vm256, %v255
    %s262 = scalar_lea.vmem [#allocation0], 43
    %263 = vst.msk [vmem:[%s262] sm:$0x80] %vm256, %v255
    %s264 = scalar_lea.vmem %s0, 350
    %s265 = smov 3
    %v266 = vld [vmem:[%s264] ss:$16 sm:%s265]
    %s267 = scalar_lea.vmem %s0, 380
    %v268 = vld [vmem:[%s267] sm:$0x4]
    %vm269 = vcmask 1042434
    %v270 = vsel %vm269, %v268, %v266
    %271 = vrot.lane.b32.xlu0 %v270, 112
    %v272 = vpop.permute.xlu0 %271
    %vm273 = vcmask 982912
    %s274 = scalar_lea.vmem [#allocation0], 56
    %275 = vst.msk [vmem:[%s274] sm:$0x7] %vm273, %v272
    %s276 = scalar_lea.vmem %s0, 13
    %s277 = smov 3
    %v278 = vld [vmem:[%s276] ss:$16 sm:%s277]
    %s279 = scalar_lea.vmem %s0, 13
    %s280 = smov 12
    %v281 = vld [vmem:[%s279] ss:$16 sm:%s280]
    %vm282 = vcmask 1043458
    %v283 = vsel %vm282, %v281, %v278
    %s284 = scalar_lea.vmem %s0, 13
    %s285 = smov 48
    %v286 = vld [vmem:[%s284] ss:$16 sm:%s285]
    %vm287 = vcmask 1045508
    %v288 = vsel %vm287, %v286, %v283
    %s289 = scalar_lea.vmem %s0, 13
    %s290 = smov 192
    %v291 = vld [vmem:[%s289] ss:$16 sm:%s290]
    %vm292 = vcmask 1047558
    %v293 = vsel %vm292, %v291, %v288
    %294 = vrot.lane.b32.xlu0 %v293, 104
    %v295 = vpop.permute.xlu0 %294
    %vm296 = vcmask 917312
    %297 = vst.msk [vmem:[#allocation0] sm:$0x7] %vm296, %v295
    %s298 = scalar_lea.vmem [#allocation0], 5
    %299 = vst.msk [vmem:[%s298] sm:$0x38] %vm296, %v295
    %s300 = scalar_lea.vmem [#allocation0], 10
    %301 = vst.msk [vmem:[%s300] sm:$0xc0] %vm296, %v295
    %s302 = scalar_lea.vmem %s0, 205
    %s303 = smov 3
    %v304 = vld [vmem:[%s302] ss:$16 sm:%s303]
    %s305 = scalar_lea.vmem %s0, 205
    %s306 = smov 12
    %v307 = vld [vmem:[%s305] ss:$16 sm:%s306]
    %vm308 = vcmask 1043458
    %v309 = vsel %vm308, %v307, %v304
    %s310 = scalar_lea.vmem %s0, 205
    %s311 = smov 48
    %v312 = vld [vmem:[%s310] ss:$16 sm:%s311]
    %vm313 = vcmask 1045508
    %v314 = vsel %vm313, %v312, %v309
    %s315 = scalar_lea.vmem %s0, 205
    %s316 = smov 192
    %v317 = vld [vmem:[%s315] ss:$16 sm:%s316]
    %vm318 = vcmask 1047558
    %v319 = vsel %vm318, %v317, %v314
    %320 = vrot.lane.b32.xlu0 %v319, 104
    %v321 = vpop.permute.xlu0 %320
    %vm322 = vcmask 917312
    %s323 = scalar_lea.vmem [#allocation0], 32
    %324 = vst.msk [vmem:[%s323] sm:$0x7] %vm322, %v321
    %s325 = scalar_lea.vmem [#allocation0], 37
    %326 = vst.msk [vmem:[%s325] sm:$0x38] %vm322, %v321
    %s327 = scalar_lea.vmem [#allocation0], 42
    %328 = vst.msk [vmem:[%s327] sm:$0xc0] %vm322, %v321
    %s329 = scalar_lea.vmem %s0, 397
    %s330 = smov 3
    %v331 = vld [vmem:[%s329] ss:$16 sm:%s330]
    %s332 = scalar_lea.vmem %s0, 427
    %v333 = vld [vmem:[%s332] sm:$0x4]
    %vm334 = vcmask 1042434
    %v335 = vsel %vm334, %v333, %v331
    %s336 = scalar_lea.vmem %s0, 93
    %s337 = smov 24
    %v338 = vld [vmem:[%s336] ss:$16 sm:%s337]
    %vm339 = vcmask 1044483
    %v340 = vsel %vm339, %v338, %v335
    %s341 = scalar_lea.vmem %s0, 93
    %s342 = smov 96
    %v343 = vld [vmem:[%s341] ss:$16 sm:%s342]
    %vm344 = vcmask 1046533
    %v345 = vsel %vm344, %v343, %v340
    %s346 = scalar_lea.vmem %s0, 326
    %v347 = vld [vmem:[%s346] sm:$0x80]
    %vm348 = vcmask 1047559
    %v349 = vsel %vm348, %v347, %v345
    %350 = vrot.lane.b32.xlu0 %v349, 104
    %v351 = vpop.permute.xlu0 %350
    %vm352 = vcmask 917312
    %s353 = scalar_lea.vmem [#allocation0], 64
    %354 = vst.msk [vmem:[%s353] sm:$0x7] %vm352, %v351
    %355 = vst.msk [vmem:[#allocation0] ss:$6 sm:$0x18] %vm352, %v351
    %s356 = scalar_lea.vmem [#allocation0], 20
    %357 = vst.msk [vmem:[%s356] sm:$0x60] %vm352, %v351
    %s358 = scalar_lea.vmem [#allocation0], 43
    %359 = vst.msk [vmem:[%s358] sm:$0x80] %vm352, %v351
    %s360 = scalar_lea.vmem %s0, 349
    %s361 = smov 3
    %v362 = vld [vmem:[%s360] ss:$16 sm:%s361]
    %s363 = scalar_lea.vmem %s0, 379
    %v364 = vld [vmem:[%s363] sm:$0x4]
    %vm365 = vcmask 1042434
    %v366 = vsel %vm365, %v364, %v362
    %367 = vrot.lane.b32.xlu0 %v366, 104
    %v368 = vpop.permute.xlu0 %367
    %vm369 = vcmask 917312
    %s370 = scalar_lea.vmem [#allocation0], 56
    %371 = vst.msk [vmem:[%s370] sm:$0x7] %vm369, %v368
    %s372 = scalar_lea.vmem %s0, 12
    %s373 = smov 3
    %v374 = vld [vmem:[%s372] ss:$16 sm:%s373]
    %s375 = scalar_lea.vmem %s0, 12
    %s376 = smov 12
    %v377 = vld [vmem:[%s375] ss:$16 sm:%s376]
    %vm378 = vcmask 1043458
    %v379 = vsel %vm378, %v377, %v374
    %s380 = scalar_lea.vmem %s0, 12
    %s381 = smov 48
    %v382 = vld [vmem:[%s380] ss:$16 sm:%s381]
    %vm383 = vcmask 1045508
    %v384 = vsel %vm383, %v382, %v379
    %s385 = scalar_lea.vmem %s0, 12
    %s386 = smov 192
    %v387 = vld [vmem:[%s385] ss:$16 sm:%s386]
    %vm388 = vcmask 1047558
    %v389 = vsel %vm388, %v387, %v384
    %390 = vrot.lane.b32.xlu0 %v389, 96
    %v391 = vpop.permute.xlu0 %390
    %vm392 = vcmask 851712
    %393 = vst.msk [vmem:[#allocation0] sm:$0x7] %vm392, %v391
    %s394 = scalar_lea.vmem [#allocation0], 5
    %395 = vst.msk [vmem:[%s394] sm:$0x38] %vm392, %v391
    %s396 = scalar_lea.vmem [#allocation0], 10
    %397 = vst.msk [vmem:[%s396] sm:$0xc0] %vm392, %v391
    %s398 = scalar_lea.vmem %s0, 204
    %s399 = smov 3
    %v400 = vld [vmem:[%s398] ss:$16 sm:%s399]
    %s401 = scalar_lea.vmem %s0, 204
    %s402 = smov 12
    %v403 = vld [vmem:[%s401] ss:$16 sm:%s402]
    %vm404 = vcmask 1043458
    %v405 = vsel %vm404, %v403, %v400
    %s406 = scalar_lea.vmem %s0, 204
    %s407 = smov 48
    %v408 = vld [vmem:[%s406] ss:$16 sm:%s407]
    %vm409 = vcmask 1045508
    %v410 = vsel %vm409, %v408, %v405
    %s411 = scalar_lea.vmem %s0, 204
    %s412 = smov 192
    %v413 = vld [vmem:[%s411] ss:$16 sm:%s412]
    %vm414 = vcmask 1047558
    %v415 = vsel %vm414, %v413, %v410
    %416 = vrot.lane.b32.xlu0 %v415, 96
    %v417 = vpop.permute.xlu0 %416
    %vm418 = vcmask 851712
    %s419 = scalar_lea.vmem [#allocation0], 32
    %420 = vst.msk [vmem:[%s419] sm:$0x7] %vm418, %v417
    %s421 = scalar_lea.vmem [#allocation0], 37
    %422 = vst.msk [vmem:[%s421] sm:$0x38] %vm418, %v417
    %s423 = scalar_lea.vmem [#allocation0], 42
    %424 = vst.msk [vmem:[%s423] sm:$0xc0] %vm418, %v417
    %s425 = scalar_lea.vmem %s0, 396
    %s426 = smov 3
    %v427 = vld [vmem:[%s425] ss:$16 sm:%s426]
    %s428 = scalar_lea.vmem %s0, 426
    %v429 = vld [vmem:[%s428] sm:$0x4]
    %vm430 = vcmask 1042434
    %v431 = vsel %vm430, %v429, %v427
    %s432 = scalar_lea.vmem %s0, 92
    %s433 = smov 24
    %v434 = vld [vmem:[%s432] ss:$16 sm:%s433]
    %vm435 = vcmask 1044483
    %v436 = vsel %vm435, %v434, %v431
    %s437 = scalar_lea.vmem %s0, 92
    %s438 = smov 96
    %v439 = vld [vmem:[%s437] ss:$16 sm:%s438]
    %vm440 = vcmask 1046533
    %v441 = vsel %vm440, %v439, %v436
    %s442 = scalar_lea.vmem %s0, 325
    %v443 = vld [vmem:[%s442] sm:$0x80]
    %vm444 = vcmask 1047559
    %v445 = vsel %vm444, %v443, %v441
    %446 = vrot.lane.b32.xlu0 %v445, 96
    %v447 = vpop.permute.xlu0 %446
    %vm448 = vcmask 851712
    %s449 = scalar_lea.vmem [#allocation0], 64
    %450 = vst.msk [vmem:[%s449] sm:$0x7] %vm448, %v447
    %451 = vst.msk [vmem:[#allocation0] ss:$6 sm:$0x18] %vm448, %v447
    %s452 = scalar_lea.vmem [#allocation0], 20
    %453 = vst.msk [vmem:[%s452] sm:$0x60] %vm448, %v447
    %s454 = scalar_lea.vmem [#allocation0], 43
    %455 = vst.msk [vmem:[%s454] sm:$0x80] %vm448, %v447
    %s456 = scalar_lea.vmem %s0, 348
    %s457 = smov 3
    %v458 = vld [vmem:[%s456] ss:$16 sm:%s457]
    %s459 = scalar_lea.vmem %s0, 378
    %v460 = vld [vmem:[%s459] sm:$0x4]
    %vm461 = vcmask 1042434
    %v462 = vsel %vm461, %v460, %v458
    %463 = vrot.lane.b32.xlu0 %v462, 96
    %v464 = vpop.permute.xlu0 %463
    %vm465 = vcmask 851712
    %s466 = scalar_lea.vmem [#allocation0], 56
    %467 = vst.msk [vmem:[%s466] sm:$0x7] %vm465, %v464
    %s468 = scalar_lea.vmem %s0, 11
    %s469 = smov 3
    %v470 = vld [vmem:[%s468] ss:$16 sm:%s469]
    %s471 = scalar_lea.vmem %s0, 11
    %s472 = smov 12
    %v473 = vld [vmem:[%s471] ss:$16 sm:%s472]
    %vm474 = vcmask 1043458
    %v475 = vsel %vm474, %v473, %v470
    %s476 = scalar_lea.vmem %s0, 11
    %s477 = smov 48
    %v478 = vld [vmem:[%s476] ss:$16 sm:%s477]
    %vm479 = vcmask 1045508
    %v480 = vsel %vm479, %v478, %v475
    %s481 = scalar_lea.vmem %s0, 11
    %s482 = smov 192
    %v483 = vld [vmem:[%s481] ss:$16 sm:%s482]
    %vm484 = vcmask 1047558
    %v485 = vsel %vm484, %v483, %v480
    %486 = vrot.lane.b32.xlu0 %v485, 88
    %v487 = vpop.permute.xlu0 %486
    %vm488 = vcmask 786112
    %489 = vst.msk [vmem:[#allocation0] sm:$0x7] %vm488, %v487
    %s490 = scalar_lea.vmem [#allocation0], 5
    %491 = vst.msk [vmem:[%s490] sm:$0x38] %vm488, %v487
    %s492 = scalar_lea.vmem [#allocation0], 10
    %493 = vst.msk [vmem:[%s492] sm:$0xc0] %vm488, %v487
    %s494 = scalar_lea.vmem %s0, 203
    %s495 = smov 3
    %v496 = vld [vmem:[%s494] ss:$16 sm:%s495]
    %s497 = scalar_lea.vmem %s0, 203
    %s498 = smov 12
    %v499 = vld [vmem:[%s497] ss:$16 sm:%s498]
    %vm500 = vcmask 1043458
    %v501 = vsel %vm500, %v499, %v496
    %s502 = scalar_lea.vmem %s0, 203
    %s503 = smov 48
    %v504 = vld [vmem:[%s502] ss:$16 sm:%s503]
    %vm505 = vcmask 1045508
    %v506 = vsel %vm505, %v504, %v501
    %s507 = scalar_lea.vmem %s0, 203
    %s508 = smov 192
    %v509 = vld [vmem:[%s507] ss:$16 sm:%s508]
    %vm510 = vcmask 1047558
    %v511 = vsel %vm510, %v509, %v506
    %512 = vrot.lane.b32.xlu0 %v511, 88
    %v513 = vpop.permute.xlu0 %512
    %vm514 = vcmask 786112
    %s515 = scalar_lea.vmem [#allocation0], 32
    %516 = vst.msk [vmem:[%s515] sm:$0x7] %vm514, %v513
    %s517 = scalar_lea.vmem [#allocation0], 37
    %518 = vst.msk [vmem:[%s517] sm:$0x38] %vm514, %v513
    %s519 = scalar_lea.vmem [#allocation0], 42
    %520 = vst.msk [vmem:[%s519] sm:$0xc0] %vm514, %v513
    %s521 = scalar_lea.vmem %s0, 395
    %s522 = smov 3
    %v523 = vld [vmem:[%s521] ss:$16 sm:%s522]
    %s524 = scalar_lea.vmem %s0, 425
    %v525 = vld [vmem:[%s524] sm:$0x4]
    %vm526 = vcmask 1042434
    %v527 = vsel %vm526, %v525, %v523
    %s528 = scalar_lea.vmem %s0, 91
    %s529 = smov 24
    %v530 = vld [vmem:[%s528] ss:$16 sm:%s529]
    %vm531 = vcmask 1044483
    %v532 = vsel %vm531, %v530, %v527
    %s533 = scalar_lea.vmem %s0, 91
    %s534 = smov 96
    %v535 = vld [vmem:[%s533] ss:$16 sm:%s534]
    %vm536 = vcmask 1046533
    %v537 = vsel %vm536, %v535, %v532
    %s538 = scalar_lea.vmem %s0, 324
    %v539 = vld [vmem:[%s538] sm:$0x80]
    %vm540 = vcmask 1047559
    %v541 = vsel %vm540, %v539, %v537
    %542 = vrot.lane.b32.xlu0 %v541, 88
    %v543 = vpop.permute.xlu0 %542
    %vm544 = vcmask 786112
    %s545 = scalar_lea.vmem [#allocation0], 64
    %546 = vst.msk [vmem:[%s545] sm:$0x7] %vm544, %v543
    %547 = vst.msk [vmem:[#allocation0] ss:$6 sm:$0x18] %vm544, %v543
    %s548 = scalar_lea.vmem [#allocation0], 20
    %549 = vst.msk [vmem:[%s548] sm:$0x60] %vm544, %v543
    %s550 = scalar_lea.vmem [#allocation0], 43
    %551 = vst.msk [vmem:[%s550] sm:$0x80] %vm544, %v543
    %s552 = scalar_lea.vmem %s0, 347
    %s553 = smov 3
    %v554 = vld [vmem:[%s552] ss:$16 sm:%s553]
    %s555 = scalar_lea.vmem %s0, 377
    %v556 = vld [vmem:[%s555] sm:$0x4]
    %vm557 = vcmask 1042434
    %v558 = vsel %vm557, %v556, %v554
    %559 = vrot.lane.b32.xlu0 %v558, 88
    %v560 = vpop.permute.xlu0 %559
    %vm561 = vcmask 786112
    %s562 = scalar_lea.vmem [#allocation0], 56
    %563 = vst.msk [vmem:[%s562] sm:$0x7] %vm561, %v560
    %s564 = scalar_lea.vmem %s0, 10
    %s565 = smov 3
    %v566 = vld [vmem:[%s564] ss:$16 sm:%s565]
    %s567 = scalar_lea.vmem %s0, 10
    %s568 = smov 12
    %v569 = vld [vmem:[%s567] ss:$16 sm:%s568]
    %vm570 = vcmask 1043458
    %v571 = vsel %vm570, %v569, %v566
    %s572 = scalar_lea.vmem %s0, 10
    %s573 = smov 48
    %v574 = vld [vmem:[%s572] ss:$16 sm:%s573]
    %vm575 = vcmask 1045508
    %v576 = vsel %vm575, %v574, %v571
    %s577 = scalar_lea.vmem %s0, 10
    %s578 = smov 192
    %v579 = vld [vmem:[%s577] ss:$16 sm:%s578]
    %vm580 = vcmask 1047558
    %v581 = vsel %vm580, %v579, %v576
    %582 = vrot.lane.b32.xlu0 %v581, 80
    %v583 = vpop.permute.xlu0 %582
    %vm584 = vcmask 720512
    %585 = vst.msk [vmem:[#allocation0] sm:$0x7] %vm584, %v583
    %s586 = scalar_lea.vmem [#allocation0], 5
    %587 = vst.msk [vmem:[%s586] sm:$0x38] %vm584, %v583
    %s588 = scalar_lea.vmem [#allocation0], 10
    %589 = vst.msk [vmem:[%s588] sm:$0xc0] %vm584, %v583
    %s590 = scalar_lea.vmem %s0, 202
    %s591 = smov 3
    %v592 = vld [vmem:[%s590] ss:$16 sm:%s591]
    %s593 = scalar_lea.vmem %s0, 202
    %s594 = smov 12
    %v595 = vld [vmem:[%s593] ss:$16 sm:%s594]
    %vm596 = vcmask 1043458
    %v597 = vsel %vm596, %v595, %v592
    %s598 = scalar_lea.vmem %s0, 202
    %s599 = smov 48
    %v600 = vld [vmem:[%s598] ss:$16 sm:%s599]
    %vm601 = vcmask 1045508
    %v602 = vsel %vm601, %v600, %v597
    %s603 = scalar_lea.vmem %s0, 202
    %s604 = smov 192
    %v605 = vld [vmem:[%s603] ss:$16 sm:%s604]
    %vm606 = vcmask 1047558
    %v607 = vsel %vm606, %v605, %v602
    %608 = vrot.lane.b32.xlu0 %v607, 80
    %v609 = vpop.permute.xlu0 %608
    %vm610 = vcmask 720512
    %s611 = scalar_lea.vmem [#allocation0], 32
    %612 = vst.msk [vmem:[%s611] sm:$0x7] %vm610, %v609
    %s613 = scalar_lea.vmem [#allocation0], 37
    %614 = vst.msk [vmem:[%s613] sm:$0x38] %vm610, %v609
    %s615 = scalar_lea.vmem [#allocation0], 42
    %616 = vst.msk [vmem:[%s615] sm:$0xc0] %vm610, %v609
    %s617 = scalar_lea.vmem %s0, 394
    %s618 = smov 3
    %v619 = vld [vmem:[%s617] ss:$16 sm:%s618]
    %s620 = scalar_lea.vmem %s0, 424
    %v621 = vld [vmem:[%s620] sm:$0x4]
    %vm622 = vcmask 1042434
    %v623 = vsel %vm622, %v621, %v619
    %s624 = scalar_lea.vmem %s0, 90
    %s625 = smov 24
    %v626 = vld [vmem:[%s624] ss:$16 sm:%s625]
    %vm627 = vcmask 1044483
    %v628 = vsel %vm627, %v626, %v623
    %s629 = scalar_lea.vmem %s0, 90
    %s630 = smov 96
    %v631 = vld [vmem:[%s629] ss:$16 sm:%s630]
    %vm632 = vcmask 1046533
    %v633 = vsel %vm632, %v631, %v628
    %s634 = scalar_lea.vmem %s0, 323
    %v635 = vld [vmem:[%s634] sm:$0x80]
    %vm636 = vcmask 1047559
    %v637 = vsel %vm636, %v635, %v633
    %638 = vrot.lane.b32.xlu0 %v637, 80
    %v639 = vpop.permute.xlu0 %638
    %vm640 = vcmask 720512
    %s641 = scalar_lea.vmem [#allocation0], 64
    %642 = vst.msk [vmem:[%s641] sm:$0x7] %vm640, %v639
    %643 = vst.msk [vmem:[#allocation0] ss:$6 sm:$0x18] %vm640, %v639
    %s644 = scalar_lea.vmem [#allocation0], 20
    %645 = vst.msk [vmem:[%s644] sm:$0x60] %vm640, %v639
    %s646 = scalar_lea.vmem [#allocation0], 43
    %647 = vst.msk [vmem:[%s646] sm:$0x80] %vm640, %v639
    %s648 = scalar_lea.vmem %s0, 346
    %s649 = smov 3
    %v650 = vld [vmem:[%s648] ss:$16 sm:%s649]
    %s651 = scalar_lea.vmem %s0, 376
    %v652 = vld [vmem:[%s651] sm:$0x4]
    %vm653 = vcmask 1042434
    %v654 = vsel %vm653, %v652, %v650
    %655 = vrot.lane.b32.xlu0 %v654, 80
    %v656 = vpop.permute.xlu0 %655
    %vm657 = vcmask 720512
    %s658 = scalar_lea.vmem [#allocation0], 56
    %659 = vst.msk [vmem:[%s658] sm:$0x7] %vm657, %v656
    %s660 = scalar_lea.vmem %s0, 9
    %s661 = smov 3
    %v662 = vld [vmem:[%s660] ss:$16 sm:%s661]
    %s663 = scalar_lea.vmem %s0, 9
    %s664 = smov 12
    %v665 = vld [vmem:[%s663] ss:$16 sm:%s664]
    %vm666 = vcmask 1043458
    %v667 = vsel %vm666, %v665, %v662
    %s668 = scalar_lea.vmem %s0, 9
    %s669 = smov 48
    %v670 = vld [vmem:[%s668] ss:$16 sm:%s669]
    %vm671 = vcmask 1045508
    %v672 = vsel %vm671, %v670, %v667
    %s673 = scalar_lea.vmem %s0, 9
    %s674 = smov 192
    %v675 = vld [vmem:[%s673] ss:$16 sm:%s674]
    %vm676 = vcmask 1047558
    %v677 = vsel %vm676, %v675, %v672
    %678 = vrot.lane.b32.xlu0 %v677, 72
    %v679 = vpop.permute.xlu0 %678
    %vm680 = vcmask 654912
    %681 = vst.msk [vmem:[#allocation0] sm:$0x7] %vm680, %v679
    %s682 = scalar_lea.vmem [#allocation0], 5
    %683 = vst.msk [vmem:[%s682] sm:$0x38] %vm680, %v679
    %s684 = scalar_lea.vmem [#allocation0], 10
    %685 = vst.msk [vmem:[%s684] sm:$0xc0] %vm680, %v679
    %s686 = scalar_lea.vmem %s0, 201
    %s687 = smov 3
    %v688 = vld [vmem:[%s686] ss:$16 sm:%s687]
    %s689 = scalar_lea.vmem %s0, 201
    %s690 = smov 12
    %v691 = vld [vmem:[%s689] ss:$16 sm:%s690]
    %vm692 = vcmask 1043458
    %v693 = vsel %vm692, %v691, %v688
    %s694 = scalar_lea.vmem %s0, 201
    %s695 = smov 48
    %v696 = vld [vmem:[%s694] ss:$16 sm:%s695]
    %vm697 = vcmask 1045508
    %v698 = vsel %vm697, %v696, %v693
    %s699 = scalar_lea.vmem %s0, 201
    %s700 = smov 192
    %v701 = vld [vmem:[%s699] ss:$16 sm:%s700]
    %vm702 = vcmask 1047558
    %v703 = vsel %vm702, %v701, %v698
    %704 = vrot.lane.b32.xlu0 %v703, 72
    %v705 = vpop.permute.xlu0 %704
    %vm706 = vcmask 654912
    %s707 = scalar_lea.vmem [#allocation0], 32
    %708 = vst.msk [vmem:[%s707] sm:$0x7] %vm706, %v705
    %s709 = scalar_lea.vmem [#allocation0], 37
    %710 = vst.msk [vmem:[%s709] sm:$0x38] %vm706, %v705
    %s711 = scalar_lea.vmem [#allocation0], 42
    %712 = vst.msk [vmem:[%s711] sm:$0xc0] %vm706, %v705
    %s713 = scalar_lea.vmem %s0, 393
    %s714 = smov 3
    %v715 = vld [vmem:[%s713] ss:$16 sm:%s714]
    %s716 = scalar_lea.vmem %s0, 423
    %v717 = vld [vmem:[%s716] sm:$0x4]
    %vm718 = vcmask 1042434
    %v719 = vsel %vm718, %v717, %v715
    %s720 = scalar_lea.vmem %s0, 89
    %s721 = smov 24
    %v722 = vld [vmem:[%s720] ss:$16 sm:%s721]
    %vm723 = vcmask 1044483
    %v724 = vsel %vm723, %v722, %v719
    %s725 = scalar_lea.vmem %s0, 89
    %s726 = smov 96
    %v727 = vld [vmem:[%s725] ss:$16 sm:%s726]
    %vm728 = vcmask 1046533
    %v729 = vsel %vm728, %v727, %v724
    %s730 = scalar_lea.vmem %s0, 322
    %v731 = vld [vmem:[%s730] sm:$0x80]
    %vm732 = vcmask 1047559
    %v733 = vsel %vm732, %v731, %v729
    %734 = vrot.lane.b32.xlu0 %v733, 72
    %v735 = vpop.permute.xlu0 %734
    %vm736 = vcmask 654912
    %s737 = scalar_lea.vmem [#allocation0], 64
    %738 = vst.msk [vmem:[%s737] sm:$0x7] %vm736, %v735
    %739 = vst.msk [vmem:[#allocation0] ss:$6 sm:$0x18] %vm736, %v735
    %s740 = scalar_lea.vmem [#allocation0], 20
    %741 = vst.msk [vmem:[%s740] sm:$0x60] %vm736, %v735
    %s742 = scalar_lea.vmem [#allocation0], 43
    %743 = vst.msk [vmem:[%s742] sm:$0x80] %vm736, %v735
    %s744 = scalar_lea.vmem %s0, 345
    %s745 = smov 3
    %v746 = vld [vmem:[%s744] ss:$16 sm:%s745]
    %s747 = scalar_lea.vmem %s0, 375
    %v748 = vld [vmem:[%s747] sm:$0x4]
    %vm749 = vcmask 1042434
    %v750 = vsel %vm749, %v748, %v746
    %751 = vrot.lane.b32.xlu0 %v750, 72
    %v752 = vpop.permute.xlu0 %751
    %vm753 = vcmask 654912
    %s754 = scalar_lea.vmem [#allocation0], 56
    %755 = vst.msk [vmem:[%s754] sm:$0x7] %vm753, %v752
    %s756 = scalar_lea.vmem %s0, 8
    %s757 = smov 3
    %v758 = vld [vmem:[%s756] ss:$16 sm:%s757]
    %s759 = scalar_lea.vmem %s0, 8
    %s760 = smov 12
    %v761 = vld [vmem:[%s759] ss:$16 sm:%s760]
    %vm762 = vcmask 1043458
    %v763 = vsel %vm762, %v761, %v758
    %s764 = scalar_lea.vmem %s0, 8
    %s765 = smov 48
    %v766 = vld [vmem:[%s764] ss:$16 sm:%s765]
    %vm767 = vcmask 1045508
    %v768 = vsel %vm767, %v766, %v763
    %s769 = scalar_lea.vmem %s0, 8
    %s770 = smov 192
    %v771 = vld [vmem:[%s769] ss:$16 sm:%s770]
    %vm772 = vcmask 1047558
    %v773 = vsel %vm772, %v771, %v768
    %774 = vrot.lane.b32.xlu0 %v773, 64
    %v775 = vpop.permute.xlu0 %774
    %vm776 = vcmask 589312
    %777 = vst.msk [vmem:[#allocation0] sm:$0x7] %vm776, %v775
    %s778 = scalar_lea.vmem [#allocation0], 5
    %779 = vst.msk [vmem:[%s778] sm:$0x38] %vm776, %v775
    %s780 = scalar_lea.vmem [#allocation0], 10
    %781 = vst.msk [vmem:[%s780] sm:$0xc0] %vm776, %v775
    %s782 = scalar_lea.vmem %s0, 200
    %s783 = smov 3
    %v784 = vld [vmem:[%s782] ss:$16 sm:%s783]
    %s785 = scalar_lea.vmem %s0, 200
    %s786 = smov 12
    %v787 = vld [vmem:[%s785] ss:$16 sm:%s786]
    %vm788 = vcmask 1043458
    %v789 = vsel %vm788, %v787, %v784
    %s790 = scalar_lea.vmem %s0, 200
    %s791 = smov 48
    %v792 = vld [vmem:[%s790] ss:$16 sm:%s791]
    %vm793 = vcmask 1045508
    %v794 = vsel %vm793, %v792, %v789
    %s795 = scalar_lea.vmem %s0, 200
    %s796 = smov 192
    %v797 = vld [vmem:[%s795] ss:$16 sm:%s796]
    %vm798 = vcmask 1047558
    %v799 = vsel %vm798, %v797, %v794
    %800 = vrot.lane.b32.xlu0 %v799, 64
    %v801 = vpop.permute.xlu0 %800
    %vm802 = vcmask 589312
    %s803 = scalar_lea.vmem [#allocation0], 32
    %804 = vst.msk [vmem:[%s803] sm:$0x7] %vm802, %v801
    %s805 = scalar_lea.vmem [#allocation0], 37
    %806 = vst.msk [vmem:[%s805] sm:$0x38] %vm802, %v801
    %s807 = scalar_lea.vmem [#allocation0], 42
    %808 = vst.msk [vmem:[%s807] sm:$0xc0] %vm802, %v801
    %s809 = scalar_lea.vmem %s0, 392
    %s810 = smov 3
    %v811 = vld [vmem:[%s809] ss:$16 sm:%s810]
    %s812 = scalar_lea.vmem %s0, 422
    %v813 = vld [vmem:[%s812] sm:$0x4]
    %vm814 = vcmask 1042434
    %v815 = vsel %vm814, %v813, %v811
    %s816 = scalar_lea.vmem %s0, 88
    %s817 = smov 24
    %v818 = vld [vmem:[%s816] ss:$16 sm:%s817]
    %vm819 = vcmask 1044483
    %v820 = vsel %vm819, %v818, %v815
    %s821 = scalar_lea.vmem %s0, 88
    %s822 = smov 96
    %v823 = vld [vmem:[%s821] ss:$16 sm:%s822]
    %vm824 = vcmask 1046533
    %v825 = vsel %vm824, %v823, %v820
    %s826 = scalar_lea.vmem %s0, 321
    %v827 = vld [vmem:[%s826] sm:$0x80]
    %vm828 = vcmask 1047559
    %v829 = vsel %vm828, %v827, %v825
    %830 = vrot.lane.b32.xlu0 %v829, 64
    %v831 = vpop.permute.xlu0 %830
    %vm832 = vcmask 589312
    %s833 = scalar_lea.vmem [#allocation0], 64
    %834 = vst.msk [vmem:[%s833] sm:$0x7] %vm832, %v831
    %835 = vst.msk [vmem:[#allocation0] ss:$6 sm:$0x18] %vm832, %v831
    %s836 = scalar_lea.vmem [#allocation0], 20
    %837 = vst.msk [vmem:[%s836] sm:$0x60] %vm832, %v831
    %s838 = scalar_lea.vmem [#allocation0], 43
    %839 = vst.msk [vmem:[%s838] sm:$0x80] %vm832, %v831
    %s840 = scalar_lea.vmem %s0, 344
    %s841 = smov 3
    %v842 = vld [vmem:[%s840] ss:$16 sm:%s841]
    %s843 = scalar_lea.vmem %s0, 374
    %v844 = vld [vmem:[%s843] sm:$0x4]
    %vm845 = vcmask 1042434
    %v846 = vsel %vm845, %v844, %v842
    %847 = vrot.lane.b32.xlu0 %v846, 64
    %v848 = vpop.permute.xlu0 %847
    %vm849 = vcmask 589312
    %s850 = scalar_lea.vmem [#allocation0], 56
    %851 = vst.msk [vmem:[%s850] sm:$0x7] %vm849, %v848
    %s852 = scalar_lea.vmem %s0, 7
    %s853 = smov 3
    %v854 = vld [vmem:[%s852] ss:$16 sm:%s853]
    %s855 = scalar_lea.vmem %s0, 7
    %s856 = smov 12
    %v857 = vld [vmem:[%s855] ss:$16 sm:%s856]
    %vm858 = vcmask 1043458
    %v859 = vsel %vm858, %v857, %v854
    %s860 = scalar_lea.vmem %s0, 7
    %s861 = smov 48
    %v862 = vld [vmem:[%s860] ss:$16 sm:%s861]
    %vm863 = vcmask 1045508
    %v864 = vsel %vm863, %v862, %v859
    %s865 = scalar_lea.vmem %s0, 7
    %s866 = smov 192
    %v867 = vld [vmem:[%s865] ss:$16 sm:%s866]
    %vm868 = vcmask 1047558
    %v869 = vsel %vm868, %v867, %v864
    %870 = vrot.lane.b32.xlu0 %v869, 56
    %v871 = vpop.permute.xlu0 %870
    %vm872 = vcmask 523712
    %873 = vst.msk [vmem:[#allocation0] sm:$0x7] %vm872, %v871
    %s874 = scalar_lea.vmem [#allocation0], 5
    %875 = vst.msk [vmem:[%s874] sm:$0x38] %vm872, %v871
    %s876 = scalar_lea.vmem [#allocation0], 10
    %877 = vst.msk [vmem:[%s876] sm:$0xc0] %vm872, %v871
    %s878 = scalar_lea.vmem %s0, 199
    %s879 = smov 3
    %v880 = vld [vmem:[%s878] ss:$16 sm:%s879]
    %s881 = scalar_lea.vmem %s0, 199
    %s882 = smov 12
    %v883 = vld [vmem:[%s881] ss:$16 sm:%s882]
    %vm884 = vcmask 1043458
    %v885 = vsel %vm884, %v883, %v880
    %s886 = scalar_lea.vmem %s0, 199
    %s887 = smov 48
    %v888 = vld [vmem:[%s886] ss:$16 sm:%s887]
    %vm889 = vcmask 1045508
    %v890 = vsel %vm889, %v888, %v885
    %s891 = scalar_lea.vmem %s0, 199
    %s892 = smov 192
    %v893 = vld [vmem:[%s891] ss:$16 sm:%s892]
    %vm894 = vcmask 1047558
    %v895 = vsel %vm894, %v893, %v890
    %896 = vrot.lane.b32.xlu0 %v895, 56
    %v897 = vpop.permute.xlu0 %896
    %vm898 = vcmask 523712
    %s899 = scalar_lea.vmem [#allocation0], 32
    %900 = vst.msk [vmem:[%s899] sm:$0x7] %vm898, %v897
    %s901 = scalar_lea.vmem [#allocation0], 37
    %902 = vst.msk [vmem:[%s901] sm:$0x38] %vm898, %v897
    %s903 = scalar_lea.vmem [#allocation0], 42
    %904 = vst.msk [vmem:[%s903] sm:$0xc0] %vm898, %v897
    %s905 = scalar_lea.vmem %s0, 391
    %s906 = smov 3
    %v907 = vld [vmem:[%s905] ss:$16 sm:%s906]
    %s908 = scalar_lea.vmem %s0, 421
    %v909 = vld [vmem:[%s908] sm:$0x4]
    %vm910 = vcmask 1042434
    %v911 = vsel %vm910, %v909, %v907
    %s912 = scalar_lea.vmem %s0, 87
    %s913 = smov 24
    %v914 = vld [vmem:[%s912] ss:$16 sm:%s913]
    %vm915 = vcmask 1044483
    %v916 = vsel %vm915, %v914, %v911
    %s917 = scalar_lea.vmem %s0, 87
    %s918 = smov 96
    %v919 = vld [vmem:[%s917] ss:$16 sm:%s918]
    %vm920 = vcmask 1046533
    %v921 = vsel %vm920, %v919, %v916
    %s922 = scalar_lea.vmem %s0, 320
    %v923 = vld [vmem:[%s922] sm:$0x80]
    %vm924 = vcmask 1047559
    %v925 = vsel %vm924, %v923, %v921
    %926 = vrot.lane.b32.xlu0 %v925, 56
    %v927 = vpop.permute.xlu0 %926
    %vm928 = vcmask 523712
    %s929 = scalar_lea.vmem [#allocation0], 64
    %930 = vst.msk [vmem:[%s929] sm:$0x7] %vm928, %v927
    %931 = vst.msk [vmem:[#allocation0] ss:$6 sm:$0x18] %vm928, %v927
    %s932 = scalar_lea.vmem [#allocation0], 20
    %933 = vst.msk [vmem:[%s932] sm:$0x60] %vm928, %v927
    %s934 = scalar_lea.vmem [#allocation0], 43
    %935 = vst.msk [vmem:[%s934] sm:$0x80] %vm928, %v927
    %s936 = scalar_lea.vmem %s0, 343
    %s937 = smov 3
    %v938 = vld [vmem:[%s936] ss:$16 sm:%s937]
    %s939 = scalar_lea.vmem %s0, 373
    %v940 = vld [vmem:[%s939] sm:$0x4]
    %vm941 = vcmask 1042434
    %v942 = vsel %vm941, %v940, %v938
    %943 = vrot.lane.b32.xlu0 %v942, 56
    %v944 = vpop.permute.xlu0 %943
    %vm945 = vcmask 523712
    %s946 = scalar_lea.vmem [#allocation0], 56
    %947 = vst.msk [vmem:[%s946] sm:$0x7] %vm945, %v944
    %s948 = scalar_lea.vmem %s0, 6
    %s949 = smov 3
    %v950 = vld [vmem:[%s948] ss:$16 sm:%s949]
    %s951 = scalar_lea.vmem %s0, 6
    %s952 = smov 12
    %v953 = vld [vmem:[%s951] ss:$16 sm:%s952]
    %vm954 = vcmask 1043458
    %v955 = vsel %vm954, %v953, %v950
    %s956 = scalar_lea.vmem %s0, 6
    %s957 = smov 48
    %v958 = vld [vmem:[%s956] ss:$16 sm:%s957]
    %vm959 = vcmask 1045508
    %v960 = vsel %vm959, %v958, %v955
    %s961 = scalar_lea.vmem %s0, 6
    %s962 = smov 192
    %v963 = vld [vmem:[%s961] ss:$16 sm:%s962]
    %vm964 = vcmask 1047558
    %v965 = vsel %vm964, %v963, %v960
    %966 = vrot.lane.b32.xlu0 %v965, 48
    %v967 = vpop.permute.xlu0 %966
    %vm968 = vcmask 458112
    %969 = vst.msk [vmem:[#allocation0] sm:$0x7] %vm968, %v967
    %s970 = scalar_lea.vmem [#allocation0], 5
    %971 = vst.msk [vmem:[%s970] sm:$0x38] %vm968, %v967
    %s972 = scalar_lea.vmem [#allocation0], 10
    %973 = vst.msk [vmem:[%s972] sm:$0xc0] %vm968, %v967
    %s974 = scalar_lea.vmem %s0, 198
    %s975 = smov 3
    %v976 = vld [vmem:[%s974] ss:$16 sm:%s975]
    %s977 = scalar_lea.vmem %s0, 198
    %s978 = smov 12
    %v979 = vld [vmem:[%s977] ss:$16 sm:%s978]
    %vm980 = vcmask 1043458
    %v981 = vsel %vm980, %v979, %v976
    %s982 = scalar_lea.vmem %s0, 198
    %s983 = smov 48
    %v984 = vld [vmem:[%s982] ss:$16 sm:%s983]
    %vm985 = vcmask 1045508
    %v986 = vsel %vm985, %v984, %v981
    %s987 = scalar_lea.vmem %s0, 198
    %s988 = smov 192
    %v989 = vld [vmem:[%s987] ss:$16 sm:%s988]
    %vm990 = vcmask 1047558
    %v991 = vsel %vm990, %v989, %v986
    %992 = vrot.lane.b32.xlu0 %v991, 48
    %v993 = vpop.permute.xlu0 %992
    %vm994 = vcmask 458112
    %s995 = scalar_lea.vmem [#allocation0], 32
    %996 = vst.msk [vmem:[%s995] sm:$0x7] %vm994, %v993
    %s997 = scalar_lea.vmem [#allocation0], 37
    %998 = vst.msk [vmem:[%s997] sm:$0x38] %vm994, %v993
    %s999 = scalar_lea.vmem [#allocation0], 42
    %1000 = vst.msk [vmem:[%s999] sm:$0xc0] %vm994, %v993
    %s1001 = scalar_lea.vmem %s0, 390
    %s1002 = smov 3
    %v1003 = vld [vmem:[%s1001] ss:$16 sm:%s1002]
    %s1004 = scalar_lea.vmem %s0, 420
    %v1005 = vld [vmem:[%s1004] sm:$0x4]
    %vm1006 = vcmask 1042434
    %v1007 = vsel %vm1006, %v1005, %v1003
    %s1008 = scalar_lea.vmem %s0, 86
    %s1009 = smov 24
    %v1010 = vld [vmem:[%s1008] ss:$16 sm:%s1009]
    %vm1011 = vcmask 1044483
    %v1012 = vsel %vm1011, %v1010, %v1007
    %s1013 = scalar_lea.vmem %s0, 86
    %s1014 = smov 96
    %v1015 = vld [vmem:[%s1013] ss:$16 sm:%s1014]
    %vm1016 = vcmask 1046533
    %v1017 = vsel %vm1016, %v1015, %v1012
    %s1018 = scalar_lea.vmem %s0, 319
    %v1019 = vld [vmem:[%s1018] sm:$0x80]
    %vm1020 = vcmask 1047559
    %v1021 = vsel %vm1020, %v1019, %v1017
    %1022 = vrot.lane.b32.xlu0 %v1021, 48
    %v1023 = vpop.permute.xlu0 %1022
    %vm1024 = vcmask 458112
    %s1025 = scalar_lea.vmem [#allocation0], 64
    %1026 = vst.msk [vmem:[%s1025] sm:$0x7] %vm1024, %v1023
    %1027 = vst.msk [vmem:[#allocation0] ss:$6 sm:$0x18] %vm1024, %v1023
    %s1028 = scalar_lea.vmem [#allocation0], 20
    %1029 = vst.msk [vmem:[%s1028] sm:$0x60] %vm1024, %v1023
    %s1030 = scalar_lea.vmem [#allocation0], 43
    %1031 = vst.msk [vmem:[%s1030] sm:$0x80] %vm1024, %v1023
    %s1032 = scalar_lea.vmem %s0, 342
    %s1033 = smov 3
    %v1034 = vld [vmem:[%s1032] ss:$16 sm:%s1033]
    %s1035 = scalar_lea.vmem %s0, 372
    %v1036 = vld [vmem:[%s1035] sm:$0x4]
    %vm1037 = vcmask 1042434
    %v1038 = vsel %vm1037, %v1036, %v1034
    %1039 = vrot.lane.b32.xlu0 %v1038, 48
    %v1040 = vpop.permute.xlu0 %1039
    %vm1041 = vcmask 458112
    %s1042 = scalar_lea.vmem [#allocation0], 56
    %1043 = vst.msk [vmem:[%s1042] sm:$0x7] %vm1041, %v1040
    %s1044 = scalar_lea.vmem %s0, 5
    %s1045 = smov 3
    %v1046 = vld [vmem:[%s1044] ss:$16 sm:%s1045]
    %s1047 = scalar_lea.vmem %s0, 5
    %s1048 = smov 12
    %v1049 = vld [vmem:[%s1047] ss:$16 sm:%s1048]
    %vm1050 = vcmask 1043458
    %v1051 = vsel %vm1050, %v1049, %v1046
    %s1052 = scalar_lea.vmem %s0, 5
    %s1053 = smov 48
    %v1054 = vld [vmem:[%s1052] ss:$16 sm:%s1053]
    %vm1055 = vcmask 1045508
    %v1056 = vsel %vm1055, %v1054, %v1051
    %s1057 = scalar_lea.vmem %s0, 5
    %s1058 = smov 192
    %v1059 = vld [vmem:[%s1057] ss:$16 sm:%s1058]
    %vm1060 = vcmask 1047558
    %v1061 = vsel %vm1060, %v1059, %v1056
    %1062 = vrot.lane.b32.xlu0 %v1061, 40
    %v1063 = vpop.permute.xlu0 %1062
    %vm1064 = vcmask 392512
    %1065 = vst.msk [vmem:[#allocation0] sm:$0x7] %vm1064, %v1063
    %s1066 = scalar_lea.vmem [#allocation0], 5
    %1067 = vst.msk [vmem:[%s1066] sm:$0x38] %vm1064, %v1063
    %s1068 = scalar_lea.vmem [#allocation0], 10
    %1069 = vst.msk [vmem:[%s1068] sm:$0xc0] %vm1064, %v1063
    %s1070 = scalar_lea.vmem %s0, 197
    %s1071 = smov 3
    %v1072 = vld [vmem:[%s1070] ss:$16 sm:%s1071]
    %s1073 = scalar_lea.vmem %s0, 197
    %s1074 = smov 12
    %v1075 = vld [vmem:[%s1073] ss:$16 sm:%s1074]
    %vm1076 = vcmask 1043458
    %v1077 = vsel %vm1076, %v1075, %v1072
    %s1078 = scalar_lea.vmem %s0, 197
    %s1079 = smov 48
    %v1080 = vld [vmem:[%s1078] ss:$16 sm:%s1079]
    %vm1081 = vcmask 1045508
    %v1082 = vsel %vm1081, %v1080, %v1077
    %s1083 = scalar_lea.vmem %s0, 197
    %s1084 = smov 192
    %v1085 = vld [vmem:[%s1083] ss:$16 sm:%s1084]
    %vm1086 = vcmask 1047558
    %v1087 = vsel %vm1086, %v1085, %v1082
    %1088 = vrot.lane.b32.xlu0 %v1087, 40
    %v1089 = vpop.permute.xlu0 %1088
    %vm1090 = vcmask 392512
    %s1091 = scalar_lea.vmem [#allocation0], 32
    %1092 = vst.msk [vmem:[%s1091] sm:$0x7] %vm1090, %v1089
    %s1093 = scalar_lea.vmem [#allocation0], 37
    %1094 = vst.msk [vmem:[%s1093] sm:$0x38] %vm1090, %v1089
    %s1095 = scalar_lea.vmem [#allocation0], 42
    %1096 = vst.msk [vmem:[%s1095] sm:$0xc0] %vm1090, %v1089
    %s1097 = scalar_lea.vmem %s0, 389
    %s1098 = smov 3
    %v1099 = vld [vmem:[%s1097] ss:$16 sm:%s1098]
    %s1100 = scalar_lea.vmem %s0, 419
    %v1101 = vld [vmem:[%s1100] sm:$0x4]
    %vm1102 = vcmask 1042434
    %v1103 = vsel %vm1102, %v1101, %v1099
    %s1104 = scalar_lea.vmem %s0, 85
    %s1105 = smov 24
    %v1106 = vld [vmem:[%s1104] ss:$16 sm:%s1105]
    %vm1107 = vcmask 1044483
    %v1108 = vsel %vm1107, %v1106, %v1103
    %s1109 = scalar_lea.vmem %s0, 85
    %s1110 = smov 96
    %v1111 = vld [vmem:[%s1109] ss:$16 sm:%s1110]
    %vm1112 = vcmask 1046533
    %v1113 = vsel %vm1112, %v1111, %v1108
    %s1114 = scalar_lea.vmem %s0, 318
    %v1115 = vld [vmem:[%s1114] sm:$0x80]
    %vm1116 = vcmask 1047559
    %v1117 = vsel %vm1116, %v1115, %v1113
    %1118 = vrot.lane.b32.xlu0 %v1117, 40
    %v1119 = vpop.permute.xlu0 %1118
    %vm1120 = vcmask 392512
    %s1121 = scalar_lea.vmem [#allocation0], 64
    %1122 = vst.msk [vmem:[%s1121] sm:$0x7] %vm1120, %v1119
    %1123 = vst.msk [vmem:[#allocation0] ss:$6 sm:$0x18] %vm1120, %v1119
    %s1124 = scalar_lea.vmem [#allocation0], 20
    %1125 = vst.msk [vmem:[%s1124] sm:$0x60] %vm1120, %v1119
    %s1126 = scalar_lea.vmem [#allocation0], 43
    %1127 = vst.msk [vmem:[%s1126] sm:$0x80] %vm1120, %v1119
    %s1128 = scalar_lea.vmem %s0, 341
    %s1129 = smov 3
    %v1130 = vld [vmem:[%s1128] ss:$16 sm:%s1129]
    %s1131 = scalar_lea.vmem %s0, 371
    %v1132 = vld [vmem:[%s1131] sm:$0x4]
    %vm1133 = vcmask 1042434
    %v1134 = vsel %vm1133, %v1132, %v1130
    %1135 = vrot.lane.b32.xlu0 %v1134, 40
    %v1136 = vpop.permute.xlu0 %1135
    %vm1137 = vcmask 392512
    %s1138 = scalar_lea.vmem [#allocation0], 56
    %1139 = vst.msk [vmem:[%s1138] sm:$0x7] %vm1137, %v1136
    %s1140 = scalar_lea.vmem %s0, 4
    %s1141 = smov 3
    %v1142 = vld [vmem:[%s1140] ss:$16 sm:%s1141]
    %s1143 = scalar_lea.vmem %s0, 4
    %s1144 = smov 12
    %v1145 = vld [vmem:[%s1143] ss:$16 sm:%s1144]
    %vm1146 = vcmask 1043458
    %v1147 = vsel %vm1146, %v1145, %v1142
    %s1148 = scalar_lea.vmem %s0, 4
    %s1149 = smov 48
    %v1150 = vld [vmem:[%s1148] ss:$16 sm:%s1149]
    %vm1151 = vcmask 1045508
    %v1152 = vsel %vm1151, %v1150, %v1147
    %s1153 = scalar_lea.vmem %s0, 4
    %s1154 = smov 192
    %v1155 = vld [vmem:[%s1153] ss:$16 sm:%s1154]
    %vm1156 = vcmask 1047558
    %v1157 = vsel %vm1156, %v1155, %v1152
    %1158 = vrot.lane.b32.xlu0 %v1157, 32
    %v1159 = vpop.permute.xlu0 %1158
    %vm1160 = vcmask 326912
    %1161 = vst.msk [vmem:[#allocation0] sm:$0x7] %vm1160, %v1159
    %s1162 = scalar_lea.vmem [#allocation0], 5
    %1163 = vst.msk [vmem:[%s1162] sm:$0x38] %vm1160, %v1159
    %s1164 = scalar_lea.vmem [#allocation0], 10
    %1165 = vst.msk [vmem:[%s1164] sm:$0xc0] %vm1160, %v1159
    %s1166 = scalar_lea.vmem %s0, 196
    %s1167 = smov 3
    %v1168 = vld [vmem:[%s1166] ss:$16 sm:%s1167]
    %s1169 = scalar_lea.vmem %s0, 196
    %s1170 = smov 12
    %v1171 = vld [vmem:[%s1169] ss:$16 sm:%s1170]
    %vm1172 = vcmask 1043458
    %v1173 = vsel %vm1172, %v1171, %v1168
    %s1174 = scalar_lea.vmem %s0, 196
    %s1175 = smov 48
    %v1176 = vld [vmem:[%s1174] ss:$16 sm:%s1175]
    %vm1177 = vcmask 1045508
    %v1178 = vsel %vm1177, %v1176, %v1173
    %s1179 = scalar_lea.vmem %s0, 196
    %s1180 = smov 192
    %v1181 = vld [vmem:[%s1179] ss:$16 sm:%s1180]
    %vm1182 = vcmask 1047558
    %v1183 = vsel %vm1182, %v1181, %v1178
    %1184 = vrot.lane.b32.xlu0 %v1183, 32
    %v1185 = vpop.permute.xlu0 %1184
    %vm1186 = vcmask 326912
    %s1187 = scalar_lea.vmem [#allocation0], 32
    %1188 = vst.msk [vmem:[%s1187] sm:$0x7] %vm1186, %v1185
    %s1189 = scalar_lea.vmem [#allocation0], 37
    %1190 = vst.msk [vmem:[%s1189] sm:$0x38] %vm1186, %v1185
    %s1191 = scalar_lea.vmem [#allocation0], 42
    %1192 = vst.msk [vmem:[%s1191] sm:$0xc0] %vm1186, %v1185
    %s1193 = scalar_lea.vmem %s0, 388
    %s1194 = smov 3
    %v1195 = vld [vmem:[%s1193] ss:$16 sm:%s1194]
    %s1196 = scalar_lea.vmem %s0, 418
    %v1197 = vld [vmem:[%s1196] sm:$0x4]
    %vm1198 = vcmask 1042434
    %v1199 = vsel %vm1198, %v1197, %v1195
    %s1200 = scalar_lea.vmem %s0, 84
    %s1201 = smov 24
    %v1202 = vld [vmem:[%s1200] ss:$16 sm:%s1201]
    %vm1203 = vcmask 1044483
    %v1204 = vsel %vm1203, %v1202, %v1199
    %s1205 = scalar_lea.vmem %s0, 84
    %s1206 = smov 96
    %v1207 = vld [vmem:[%s1205] ss:$16 sm:%s1206]
    %vm1208 = vcmask 1046533
    %v1209 = vsel %vm1208, %v1207, %v1204
    %s1210 = scalar_lea.vmem %s0, 317
    %v1211 = vld [vmem:[%s1210] sm:$0x80]
    %vm1212 = vcmask 1047559
    %v1213 = vsel %vm1212, %v1211, %v1209
    %1214 = vrot.lane.b32.xlu0 %v1213, 32
    %v1215 = vpop.permute.xlu0 %1214
    %vm1216 = vcmask 326912
    %s1217 = scalar_lea.vmem [#allocation0], 64
    %1218 = vst.msk [vmem:[%s1217] sm:$0x7] %vm1216, %v1215
    %1219 = vst.msk [vmem:[#allocation0] ss:$6 sm:$0x18] %vm1216, %v1215
    %s1220 = scalar_lea.vmem [#allocation0], 20
    %1221 = vst.msk [vmem:[%s1220] sm:$0x60] %vm1216, %v1215
    %s1222 = scalar_lea.vmem [#allocation0], 43
    %1223 = vst.msk [vmem:[%s1222] sm:$0x80] %vm1216, %v1215
    %s1224 = scalar_lea.vmem %s0, 340
    %s1225 = smov 3
    %v1226 = vld [vmem:[%s1224] ss:$16 sm:%s1225]
    %s1227 = scalar_lea.vmem %s0, 370
    %v1228 = vld [vmem:[%s1227] sm:$0x4]
    %vm1229 = vcmask 1042434
    %v1230 = vsel %vm1229, %v1228, %v1226
    %1231 = vrot.lane.b32.xlu0 %v1230, 32
    %v1232 = vpop.permute.xlu0 %1231
    %vm1233 = vcmask 326912
    %s1234 = scalar_lea.vmem [#allocation0], 56
    %1235 = vst.msk [vmem:[%s1234] sm:$0x7] %vm1233, %v1232
    %s1236 = scalar_lea.vmem %s0, 3
    %s1237 = smov 3
    %v1238 = vld [vmem:[%s1236] ss:$16 sm:%s1237]
    %s1239 = scalar_lea.vmem %s0, 3
    %s1240 = smov 12
    %v1241 = vld [vmem:[%s1239] ss:$16 sm:%s1240]
    %vm1242 = vcmask 1043458
    %v1243 = vsel %vm1242, %v1241, %v1238
    %s1244 = scalar_lea.vmem %s0, 3
    %s1245 = smov 48
    %v1246 = vld [vmem:[%s1244] ss:$16 sm:%s1245]
    %vm1247 = vcmask 1045508
    %v1248 = vsel %vm1247, %v1246, %v1243
    %s1249 = scalar_lea.vmem %s0, 3
    %s1250 = smov 192
    %v1251 = vld [vmem:[%s1249] ss:$16 sm:%s1250]
    %vm1252 = vcmask 1047558
    %v1253 = vsel %vm1252, %v1251, %v1248
    %1254 = vrot.lane.b32.xlu0 %v1253, 24
    %v1255 = vpop.permute.xlu0 %1254
    %vm1256 = vcmask 261312
    %1257 = vst.msk [vmem:[#allocation0] sm:$0x7] %vm1256, %v1255
    %s1258 = scalar_lea.vmem [#allocation0], 5
    %1259 = vst.msk [vmem:[%s1258] sm:$0x38] %vm1256, %v1255
    %s1260 = scalar_lea.vmem [#allocation0], 10
    %1261 = vst.msk [vmem:[%s1260] sm:$0xc0] %vm1256, %v1255
    %s1262 = scalar_lea.vmem %s0, 195
    %s1263 = smov 3
    %v1264 = vld [vmem:[%s1262] ss:$16 sm:%s1263]
    %s1265 = scalar_lea.vmem %s0, 195
    %s1266 = smov 12
    %v1267 = vld [vmem:[%s1265] ss:$16 sm:%s1266]
    %vm1268 = vcmask 1043458
    %v1269 = vsel %vm1268, %v1267, %v1264
    %s1270 = scalar_lea.vmem %s0, 195
    %s1271 = smov 48
    %v1272 = vld [vmem:[%s1270] ss:$16 sm:%s1271]
    %vm1273 = vcmask 1045508
    %v1274 = vsel %vm1273, %v1272, %v1269
    %s1275 = scalar_lea.vmem %s0, 195
    %s1276 = smov 192
    %v1277 = vld [vmem:[%s1275] ss:$16 sm:%s1276]
    %vm1278 = vcmask 1047558
    %v1279 = vsel %vm1278, %v1277, %v1274
    %1280 = vrot.lane.b32.xlu0 %v1279, 24
    %v1281 = vpop.permute.xlu0 %1280
    %vm1282 = vcmask 261312
    %s1283 = scalar_lea.vmem [#allocation0], 32
    %1284 = vst.msk [vmem:[%s1283] sm:$0x7] %vm1282, %v1281
    %s1285 = scalar_lea.vmem [#allocation0], 37
    %1286 = vst.msk [vmem:[%s1285] sm:$0x38] %vm1282, %v1281
    %s1287 = scalar_lea.vmem [#allocation0], 42
    %1288 = vst.msk [vmem:[%s1287] sm:$0xc0] %vm1282, %v1281
    %s1289 = scalar_lea.vmem %s0, 387
    %s1290 = smov 3
    %v1291 = vld [vmem:[%s1289] ss:$16 sm:%s1290]
    %s1292 = scalar_lea.vmem %s0, 417
    %v1293 = vld [vmem:[%s1292] sm:$0x4]
    %vm1294 = vcmask 1042434
    %v1295 = vsel %vm1294, %v1293, %v1291
    %s1296 = scalar_lea.vmem %s0, 83
    %s1297 = smov 24
    %v1298 = vld [vmem:[%s1296] ss:$16 sm:%s1297]
    %vm1299 = vcmask 1044483
    %v1300 = vsel %vm1299, %v1298, %v1295
    %s1301 = scalar_lea.vmem %s0, 83
    %s1302 = smov 96
    %v1303 = vld [vmem:[%s1301] ss:$16 sm:%s1302]
    %vm1304 = vcmask 1046533
    %v1305 = vsel %vm1304, %v1303, %v1300
    %s1306 = scalar_lea.vmem %s0, 316
    %v1307 = vld [vmem:[%s1306] sm:$0x80]
    %vm1308 = vcmask 1047559
    %v1309 = vsel %vm1308, %v1307, %v1305
    %1310 = vrot.lane.b32.xlu0 %v1309, 24
    %v1311 = vpop.permute.xlu0 %1310
    %vm1312 = vcmask 261312
    %s1313 = scalar_lea.vmem [#allocation0], 64
    %1314 = vst.msk [vmem:[%s1313] sm:$0x7] %vm1312, %v1311
    %1315 = vst.msk [vmem:[#allocation0] ss:$6 sm:$0x18] %vm1312, %v1311
    %s1316 = scalar_lea.vmem [#allocation0], 20
    %1317 = vst.msk [vmem:[%s1316] sm:$0x60] %vm1312, %v1311
    %s1318 = scalar_lea.vmem [#allocation0], 43
    %1319 = vst.msk [vmem:[%s1318] sm:$0x80] %vm1312, %v1311
    %s1320 = scalar_lea.vmem %s0, 339
    %s1321 = smov 3
    %v1322 = vld [vmem:[%s1320] ss:$16 sm:%s1321]
    %s1323 = scalar_lea.vmem %s0, 369
    %v1324 = vld [vmem:[%s1323] sm:$0x4]
    %vm1325 = vcmask 1042434
    %v1326 = vsel %vm1325, %v1324, %v1322
    %1327 = vrot.lane.b32.xlu0 %v1326, 24
    %v1328 = vpop.permute.xlu0 %1327
    %vm1329 = vcmask 261312
    %s1330 = scalar_lea.vmem [#allocation0], 56
    %1331 = vst.msk [vmem:[%s1330] sm:$0x7] %vm1329, %v1328
    %s1332 = scalar_lea.vmem %s0, 2
    %s1333 = smov 3
    %v1334 = vld [vmem:[%s1332] ss:$16 sm:%s1333]
    %s1335 = scalar_lea.vmem %s0, 2
    %s1336 = smov 12
    %v1337 = vld [vmem:[%s1335] ss:$16 sm:%s1336]
    %vm1338 = vcmask 1043458
    %v1339 = vsel %vm1338, %v1337, %v1334
    %s1340 = scalar_lea.vmem %s0, 2
    %s1341 = smov 48
    %v1342 = vld [vmem:[%s1340] ss:$16 sm:%s1341]
    %vm1343 = vcmask 1045508
    %v1344 = vsel %vm1343, %v1342, %v1339
    %s1345 = scalar_lea.vmem %s0, 2
    %s1346 = smov 192
    %v1347 = vld [vmem:[%s1345] ss:$16 sm:%s1346]
    %vm1348 = vcmask 1047558
    %v1349 = vsel %vm1348, %v1347, %v1344
    %1350 = vrot.lane.b32.xlu0 %v1349, 16
    %v1351 = vpop.permute.xlu0 %1350
    %vm1352 = vcmask 195712
    %1353 = vst.msk [vmem:[#allocation0] sm:$0x7] %vm1352, %v1351
    %s1354 = scalar_lea.vmem [#allocation0], 5
    %1355 = vst.msk [vmem:[%s1354] sm:$0x38] %vm1352, %v1351
    %s1356 = scalar_lea.vmem [#allocation0], 10
    %1357 = vst.msk [vmem:[%s1356] sm:$0xc0] %vm1352, %v1351
    %s1358 = scalar_lea.vmem %s0, 194
    %s1359 = smov 3
    %v1360 = vld [vmem:[%s1358] ss:$16 sm:%s1359]
    %s1361 = scalar_lea.vmem %s0, 194
    %s1362 = smov 12
    %v1363 = vld [vmem:[%s1361] ss:$16 sm:%s1362]
    %vm1364 = vcmask 1043458
    %v1365 = vsel %vm1364, %v1363, %v1360
    %s1366 = scalar_lea.vmem %s0, 194
    %s1367 = smov 48
    %v1368 = vld [vmem:[%s1366] ss:$16 sm:%s1367]
    %vm1369 = vcmask 1045508
    %v1370 = vsel %vm1369, %v1368, %v1365
    %s1371 = scalar_lea.vmem %s0, 194
    %s1372 = smov 192
    %v1373 = vld [vmem:[%s1371] ss:$16 sm:%s1372]
    %vm1374 = vcmask 1047558
    %v1375 = vsel %vm1374, %v1373, %v1370
    %1376 = vrot.lane.b32.xlu0 %v1375, 16
    %v1377 = vpop.permute.xlu0 %1376
    %vm1378 = vcmask 195712
    %s1379 = scalar_lea.vmem [#allocation0], 32
    %1380 = vst.msk [vmem:[%s1379] sm:$0x7] %vm1378, %v1377
    %s1381 = scalar_lea.vmem [#allocation0], 37
    %1382 = vst.msk [vmem:[%s1381] sm:$0x38] %vm1378, %v1377
    %s1383 = scalar_lea.vmem [#allocation0], 42
    %1384 = vst.msk [vmem:[%s1383] sm:$0xc0] %vm1378, %v1377
    %s1385 = scalar_lea.vmem %s0, 386
    %s1386 = smov 3
    %v1387 = vld [vmem:[%s1385] ss:$16 sm:%s1386]
    %s1388 = scalar_lea.vmem %s0, 416
    %v1389 = vld [vmem:[%s1388] sm:$0x4]
    %vm1390 = vcmask 1042434
    %v1391 = vsel %vm1390, %v1389, %v1387
    %s1392 = scalar_lea.vmem %s0, 82
    %s1393 = smov 24
    %v1394 = vld [vmem:[%s1392] ss:$16 sm:%s1393]
    %vm1395 = vcmask 1044483
    %v1396 = vsel %vm1395, %v1394, %v1391
    %s1397 = scalar_lea.vmem %s0, 82
    %s1398 = smov 96
    %v1399 = vld [vmem:[%s1397] ss:$16 sm:%s1398]
    %vm1400 = vcmask 1046533
    %v1401 = vsel %vm1400, %v1399, %v1396
    %s1402 = scalar_lea.vmem %s0, 315
    %v1403 = vld [vmem:[%s1402] sm:$0x80]
    %vm1404 = vcmask 1047559
    %v1405 = vsel %vm1404, %v1403, %v1401
    %1406 = vrot.lane.b32.xlu0 %v1405, 16
    %v1407 = vpop.permute.xlu0 %1406
    %vm1408 = vcmask 195712
    %s1409 = scalar_lea.vmem [#allocation0], 64
    %1410 = vst.msk [vmem:[%s1409] sm:$0x7] %vm1408, %v1407
    %1411 = vst.msk [vmem:[#allocation0] ss:$6 sm:$0x18] %vm1408, %v1407
    %s1412 = scalar_lea.vmem [#allocation0], 20
    %1413 = vst.msk [vmem:[%s1412] sm:$0x60] %vm1408, %v1407
    %s1414 = scalar_lea.vmem [#allocation0], 43
    %1415 = vst.msk [vmem:[%s1414] sm:$0x80] %vm1408, %v1407
    %s1416 = scalar_lea.vmem %s0, 338
    %s1417 = smov 3
    %v1418 = vld [vmem:[%s1416] ss:$16 sm:%s1417]
    %s1419 = scalar_lea.vmem %s0, 368
    %v1420 = vld [vmem:[%s1419] sm:$0x4]
    %vm1421 = vcmask 1042434
    %v1422 = vsel %vm1421, %v1420, %v1418
    %1423 = vrot.lane.b32.xlu0 %v1422, 16
    %v1424 = vpop.permute.xlu0 %1423
    %vm1425 = vcmask 195712
    %s1426 = scalar_lea.vmem [#allocation0], 56
    %1427 = vst.msk [vmem:[%s1426] sm:$0x7] %vm1425, %v1424
    %s1428 = scalar_lea.vmem %s0, 1
    %s1429 = smov 3
    %v1430 = vld [vmem:[%s1428] ss:$16 sm:%s1429]
    %s1431 = scalar_lea.vmem %s0, 1
    %s1432 = smov 12
    %v1433 = vld [vmem:[%s1431] ss:$16 sm:%s1432]
    %vm1434 = vcmask 1043458
    %v1435 = vsel %vm1434, %v1433, %v1430
    %s1436 = scalar_lea.vmem %s0, 1
    %s1437 = smov 48
    %v1438 = vld [vmem:[%s1436] ss:$16 sm:%s1437]
    %vm1439 = vcmask 1045508
    %v1440 = vsel %vm1439, %v1438, %v1435
    %s1441 = scalar_lea.vmem %s0, 1
    %s1442 = smov 192
    %v1443 = vld [vmem:[%s1441] ss:$16 sm:%s1442]
    %vm1444 = vcmask 1047558
    %v1445 = vsel %vm1444, %v1443, %v1440
    %1446 = vrot.lane.b32.xlu0 %v1445, 8
    %v1447 = vpop.permute.xlu0 %1446
    %vm1448 = vcmask 130112
    %1449 = vst.msk [vmem:[#allocation0] sm:$0x7] %vm1448, %v1447
    %s1450 = scalar_lea.vmem [#allocation0], 5
    %1451 = vst.msk [vmem:[%s1450] sm:$0x38] %vm1448, %v1447
    %s1452 = scalar_lea.vmem [#allocation0], 10
    %1453 = vst.msk [vmem:[%s1452] sm:$0xc0] %vm1448, %v1447
    %s1454 = scalar_lea.vmem %s0, 193
    %s1455 = smov 3
    %v1456 = vld [vmem:[%s1454] ss:$16 sm:%s1455]
    %s1457 = scalar_lea.vmem %s0, 193
    %s1458 = smov 12
    %v1459 = vld [vmem:[%s1457] ss:$16 sm:%s1458]
    %vm1460 = vcmask 1043458
    %v1461 = vsel %vm1460, %v1459, %v1456
    %s1462 = scalar_lea.vmem %s0, 193
    %s1463 = smov 48
    %v1464 = vld [vmem:[%s1462] ss:$16 sm:%s1463]
    %vm1465 = vcmask 1045508
    %v1466 = vsel %vm1465, %v1464, %v1461
    %s1467 = scalar_lea.vmem %s0, 193
    %s1468 = smov 192
    %v1469 = vld [vmem:[%s1467] ss:$16 sm:%s1468]
    %vm1470 = vcmask 1047558
    %v1471 = vsel %vm1470, %v1469, %v1466
    %1472 = vrot.lane.b32.xlu0 %v1471, 8
    %v1473 = vpop.permute.xlu0 %1472
    %vm1474 = vcmask 130112
    %s1475 = scalar_lea.vmem [#allocation0], 32
    %1476 = vst.msk [vmem:[%s1475] sm:$0x7] %vm1474, %v1473
    %s1477 = scalar_lea.vmem [#allocation0], 37
    %1478 = vst.msk [vmem:[%s1477] sm:$0x38] %vm1474, %v1473
    %s1479 = scalar_lea.vmem [#allocation0], 42
    %1480 = vst.msk [vmem:[%s1479] sm:$0xc0] %vm1474, %v1473
    %s1481 = scalar_lea.vmem %s0, 385
    %s1482 = smov 3
    %v1483 = vld [vmem:[%s1481] ss:$16 sm:%s1482]
    %s1484 = scalar_lea.vmem %s0, 415
    %v1485 = vld [vmem:[%s1484] sm:$0x4]
    %vm1486 = vcmask 1042434
    %v1487 = vsel %vm1486, %v1485, %v1483
    %s1488 = scalar_lea.vmem %s0, 81
    %s1489 = smov 24
    %v1490 = vld [vmem:[%s1488] ss:$16 sm:%s1489]
    %vm1491 = vcmask 1044483
    %v1492 = vsel %vm1491, %v1490, %v1487
    %s1493 = scalar_lea.vmem %s0, 81
    %s1494 = smov 96
    %v1495 = vld [vmem:[%s1493] ss:$16 sm:%s1494]
    %vm1496 = vcmask 1046533
    %v1497 = vsel %vm1496, %v1495, %v1492
    %s1498 = scalar_lea.vmem %s0, 314
    %v1499 = vld [vmem:[%s1498] sm:$0x80]
    %vm1500 = vcmask 1047559
    %v1501 = vsel %vm1500, %v1499, %v1497
    %1502 = vrot.lane.b32.xlu0 %v1501, 8
    %v1503 = vpop.permute.xlu0 %1502
    %vm1504 = vcmask 130112
    %s1505 = scalar_lea.vmem [#allocation0], 64
    %1506 = vst.msk [vmem:[%s1505] sm:$0x7] %vm1504, %v1503
    %1507 = vst.msk [vmem:[#allocation0] ss:$6 sm:$0x18] %vm1504, %v1503
    %s1508 = scalar_lea.vmem [#allocation0], 20
    %1509 = vst.msk [vmem:[%s1508] sm:$0x60] %vm1504, %v1503
    %s1510 = scalar_lea.vmem [#allocation0], 43
    %1511 = vst.msk [vmem:[%s1510] sm:$0x80] %vm1504, %v1503
    %s1512 = scalar_lea.vmem %s0, 337
    %s1513 = smov 3
    %v1514 = vld [vmem:[%s1512] ss:$16 sm:%s1513]
    %s1515 = scalar_lea.vmem %s0, 367
    %v1516 = vld [vmem:[%s1515] sm:$0x4]
    %vm1517 = vcmask 1042434
    %v1518 = vsel %vm1517, %v1516, %v1514
    %1519 = vrot.lane.b32.xlu0 %v1518, 8
    %v1520 = vpop.permute.xlu0 %1519
    %vm1521 = vcmask 130112
    %s1522 = scalar_lea.vmem [#allocation0], 56
    %1523 = vst.msk [vmem:[%s1522] sm:$0x7] %vm1521, %v1520
    %s1525 = ssub.s32 16, 1
    %v1526 = vld [vmem:[#allocation0] sm:%s1525]
    %s1528 = ssub.s32 16, 1
    %1529 = vst [vmem:[%s1] sm:%s1528] %v1526
    %s1530 = scalar_lea.vmem [#allocation0], 8
    %v1531 = vld [vmem:[%s1530] sm:%s1525]
    %s1533 = ssub.s32 16, 1
    %s1534 = scalar_lea.vmem %s1, 4
    %1535 = vst [vmem:[%s1534] sm:%s1533] %v1531
    %s1536 = scalar_lea.vmem [#allocation0], 16
    %v1537 = vld [vmem:[%s1536] sm:%s1525]
    %s1539 = ssub.s32 16, 1
    %s1540 = scalar_lea.vmem %s1, 8
    %1541 = vst [vmem:[%s1540] sm:%s1539] %v1537
    %s1542 = scalar_lea.vmem [#allocation0], 24
    %v1543 = vld [vmem:[%s1542] sm:%s1525]
    %s1545 = ssub.s32 16, 1
    %s1546 = scalar_lea.vmem %s1, 12
    %1547 = vst [vmem:[%s1546] sm:%s1545] %v1543
    %s1548 = scalar_lea.vmem [#allocation0], 32
    %v1549 = vld [vmem:[%s1548] sm:%s1525]
    %s1551 = ssub.s32 16, 1
    %s1552 = scalar_lea.vmem %s1, 16
    %1553 = vst [vmem:[%s1552] sm:%s1551] %v1549
    %s1554 = scalar_lea.vmem [#allocation0], 40
    %v1555 = vld [vmem:[%s1554] sm:%s1525]
    %s1557 = ssub.s32 16, 1
    %s1558 = scalar_lea.vmem %s1, 20
    %1559 = vst [vmem:[%s1558] sm:%s1557] %v1555
    %s1560 = scalar_lea.vmem [#allocation0], 48
    %v1561 = vld [vmem:[%s1560] sm:%s1525]
    %s1563 = ssub.s32 16, 1
    %s1564 = scalar_lea.vmem %s1, 24
    %1565 = vst [vmem:[%s1564] sm:%s1563] %v1561
    %s1566 = scalar_lea.vmem [#allocation0], 56
    %v1567 = vld [vmem:[%s1566] sm:%s1525]
    %s1569 = ssub.s32 16, 1
    %s1570 = scalar_lea.vmem %s1, 28
    %1571 = vst [vmem:[%s1570] sm:%s1569] %v1567
    %s1572 = scalar_lea.vmem [#allocation0], 64
    %v1573 = vld [vmem:[%s1572] sm:%s1525]
    %s1575 = ssub.s32 16, 1
    %s1576 = scalar_lea.vmem %s1, 32
    %1577 = vst [vmem:[%s1576] sm:%s1575] %v1573

// kernel: tile.29
$region0: #{tile.29}
  %s0 = inlined_call_operand.vmem [shape: f32[9,16,8], index: 0, kind: input, shape index: {}]
  %s1 = inlined_call_operand.vmem [shape: f32[9,128], index: 1, kind: output, shape index: {}]
  %s2 = smov 3
  %v3 = vld [vmem:[%s0] ss:$16 sm:%s2]
  %s4 = smov 12
  %v5 = vld [vmem:[%s0] ss:$16 sm:%s4]
  %vm6 = vcmask 1043458
  %v7 = vsel %vm6, %v5, %v3
  %s8 = smov 48
  %v9 = vld [vmem:[%s0] ss:$16 sm:%s8]
  %vm10 = vcmask 1045508
  %v11 = vsel %vm10, %v9, %v7
  %s12 = smov 192
  %v13 = vld [vmem:[%s0] ss:$16 sm:%s12]
  %vm14 = vcmask 1047558
  %v15 = vsel %vm14, %v13, %v11
  %vm16 = vcmask 64512
  %17 = vst.msk [vmem:[%s1] sm:$0xff] %vm16, %v15
  %s18 = scalar_lea.vmem %s0, 128
  %v19 = vld [vmem:[%s18] sm:$0x1]
  %vm20 = vcmask 64512
  %s21 = scalar_lea.vmem %s1, 8
  %22 = vst.msk [vmem:[%s21] sm:$0x1] %vm20, %v19
  %s23 = scalar_lea.vmem %s0, 15
  %s24 = smov 3
  %v25 = vld [vmem:[%s23] ss:$16 sm:%s24]
  %s26 = scalar_lea.vmem %s0, 15
  %s27 = smov 12
  %v28 = vld [vmem:[%s26] ss:$16 sm:%s27]
  %vm29 = vcmask 1043458
  %v30 = vsel %vm29, %v28, %v25
  %s31 = scalar_lea.vmem %s0, 15
  %s32 = smov 48
  %v33 = vld [vmem:[%s31] ss:$16 sm:%s32]
  %vm34 = vcmask 1045508
  %v35 = vsel %vm34, %v33, %v30
  %s36 = scalar_lea.vmem %s0, 15
  %s37 = smov 192
  %v38 = vld [vmem:[%s36] ss:$16 sm:%s37]
  %vm39 = vcmask 1047558
  %v40 = vsel %vm39, %v38, %v35
  %41 = vrot.lane.b32.xlu0 %v40, 120
  %v42 = vpop.permute.xlu0 %41
  %vm43 = vcmask 1048512
  %44 = vst.msk [vmem:[%s1] sm:$0xff] %vm43, %v42
  %s45 = scalar_lea.vmem %s0, 143
  %v46 = vld [vmem:[%s45] sm:$0x1]
  %47 = vrot.lane.b32.xlu0 %v46, 120
  %v48 = vpop.permute.xlu0 %47
  %vm49 = vcmask 1048512
  %s50 = scalar_lea.vmem %s1, 8
  %51 = vst.msk [vmem:[%s50] sm:$0x1] %vm49, %v48
  %s52 = scalar_lea.vmem %s0, 14
  %s53 = smov 3
  %v54 = vld [vmem:[%s52] ss:$16 sm:%s53]
  %s55 = scalar_lea.vmem %s0, 14
  %s56 = smov 12
  %v57 = vld [vmem:[%s55] ss:$16 sm:%s56]
  %vm58 = vcmask 1043458
  %v59 = vsel %vm58, %v57, %v54
  %s60 = scalar_lea.vmem %s0, 14
  %s61 = smov 48
  %v62 = vld [vmem:[%s60] ss:$16 sm:%s61]
  %vm63 = vcmask 1045508
  %v64 = vsel %vm63, %v62, %v59
  %s65 = scalar_lea.vmem %s0, 14
  %s66 = smov 192
  %v67 = vld [vmem:[%s65] ss:$16 sm:%s66]
  %vm68 = vcmask 1047558
  %v69 = vsel %vm68, %v67, %v64
  %70 = vrot.lane.b32.xlu0 %v69, 112
  %v71 = vpop.permute.xlu0 %70
  %vm72 = vcmask 982912
  %73 = vst.msk [vmem:[%s1] sm:$0xff] %vm72, %v71
  %s74 = scalar_lea.vmem %s0, 142
  %v75 = vld [vmem:[%s74] sm:$0x1]
  %76 = vrot.lane.b32.xlu0 %v75, 112
  %v77 = vpop.permute.xlu0 %76
  %vm78 = vcmask 982912
  %s79 = scalar_lea.vmem %s1, 8
  %80 = vst.msk [vmem:[%s79] sm:$0x1] %vm78, %v77
  %s81 = scalar_lea.vmem %s0, 13
  %s82 = smov 3
  %v83 = vld [vmem:[%s81] ss:$16 sm:%s82]
  %s84 = scalar_lea.vmem %s0, 13
  %s85 = smov 12
  %v86 = vld [vmem:[%s84] ss:$16 sm:%s85]
  %vm87 = vcmask 1043458
  %v88 = vsel %vm87, %v86, %v83
  %s89 = scalar_lea.vmem %s0, 13
  %s90 = smov 48
  %v91 = vld [vmem:[%s89] ss:$16 sm:%s90]
  %vm92 = vcmask 1045508
  %v93 = vsel %vm92, %v91, %v88
  %s94 = scalar_lea.vmem %s0, 13
  %s95 = smov 192
  %v96 = vld [vmem:[%s94] ss:$16 sm:%s95]
  %vm97 = vcmask 1047558
  %v98 = vsel %vm97, %v96, %v93
  %99 = vrot.lane.b32.xlu0 %v98, 104
  %v100 = vpop.permute.xlu0 %99
  %vm101 = vcmask 917312
  %102 = vst.msk [vmem:[%s1] sm:$0xff] %vm101, %v100
  %s103 = scalar_lea.vmem %s0, 141
  %v104 = vld [vmem:[%s103] sm:$0x1]
  %105 = vrot.lane.b32.xlu0 %v104, 104
  %v106 = vpop.permute.xlu0 %105
  %vm107 = vcmask 917312
  %s108 = scalar_lea.vmem %s1, 8
  %109 = vst.msk [vmem:[%s108] sm:$0x1] %vm107, %v106
  %s110 = scalar_lea.vmem %s0, 12
  %s111 = smov 3
  %v112 = vld [vmem:[%s110] ss:$16 sm:%s111]
  %s113 = scalar_lea.vmem %s0, 12
  %s114 = smov 12
  %v115 = vld [vmem:[%s113] ss:$16 sm:%s114]
  %vm116 = vcmask 1043458
  %v117 = vsel %vm116, %v115, %v112
  %s118 = scalar_lea.vmem %s0, 12
  %s119 = smov 48
  %v120 = vld [vmem:[%s118] ss:$16 sm:%s119]
  %vm121 = vcmask 1045508
  %v122 = vsel %vm121, %v120, %v117
  %s123 = scalar_lea.vmem %s0, 12
  %s124 = smov 192
  %v125 = vld [vmem:[%s123] ss:$16 sm:%s124]
  %vm126 = vcmask 1047558
  %v127 = vsel %vm126, %v125, %v122
  %128 = vrot.lane.b32.xlu0 %v127, 96
  %v129 = vpop.permute.xlu0 %128
  %vm130 = vcmask 851712
  %131 = vst.msk [vmem:[%s1] sm:$0xff] %vm130, %v129
  %s132 = scalar_lea.vmem %s0, 140
  %v133 = vld [vmem:[%s132] sm:$0x1]
  %134 = vrot.lane.b32.xlu0 %v133, 96
  %v135 = vpop.permute.xlu0 %134
  %vm136 = vcmask 851712
  %s137 = scalar_lea.vmem %s1, 8
  %138 = vst.msk [vmem:[%s137] sm:$0x1] %vm136, %v135
  %s139 = scalar_lea.vmem %s0, 11
  %s140 = smov 3
  %v141 = vld [vmem:[%s139] ss:$16 sm:%s140]
  %s142 = scalar_lea.vmem %s0, 11
  %s143 = smov 12
  %v144 = vld [vmem:[%s142] ss:$16 sm:%s143]
  %vm145 = vcmask 1043458
  %v146 = vsel %vm145, %v144, %v141
  %s147 = scalar_lea.vmem %s0, 11
  %s148 = smov 48
  %v149 = vld [vmem:[%s147] ss:$16 sm:%s148]
  %vm150 = vcmask 1045508
  %v151 = vsel %vm150, %v149, %v146
  %s152 = scalar_lea.vmem %s0, 11
  %s153 = smov 192
  %v154 = vld [vmem:[%s152] ss:$16 sm:%s153]
  %vm155 = vcmask 1047558
  %v156 = vsel %vm155, %v154, %v151
  %157 = vrot.lane.b32.xlu0 %v156, 88
  %v158 = vpop.permute.xlu0 %157
  %vm159 = vcmask 786112
  %160 = vst.msk [vmem:[%s1] sm:$0xff] %vm159, %v158
  %s161 = scalar_lea.vmem %s0, 139
  %v162 = vld [vmem:[%s161] sm:$0x1]
  %163 = vrot.lane.b32.xlu0 %v162, 88
  %v164 = vpop.permute.xlu0 %163
  %vm165 = vcmask 786112
  %s166 = scalar_lea.vmem %s1, 8
  %167 = vst.msk [vmem:[%s166] sm:$0x1] %vm165, %v164
  %s168 = scalar_lea.vmem %s0, 10
  %s169 = smov 3
  %v170 = vld [vmem:[%s168] ss:$16 sm:%s169]
  %s171 = scalar_lea.vmem %s0, 10
  %s172 = smov 12
  %v173 = vld [vmem:[%s171] ss:$16 sm:%s172]
  %vm174 = vcmask 1043458
  %v175 = vsel %vm174, %v173, %v170
  %s176 = scalar_lea.vmem %s0, 10
  %s177 = smov 48
  %v178 = vld [vmem:[%s176] ss:$16 sm:%s177]
  %vm179 = vcmask 1045508
  %v180 = vsel %vm179, %v178, %v175
  %s181 = scalar_lea.vmem %s0, 10
  %s182 = smov 192
  %v183 = vld [vmem:[%s181] ss:$16 sm:%s182]
  %vm184 = vcmask 1047558
  %v185 = vsel %vm184, %v183, %v180
  %186 = vrot.lane.b32.xlu0 %v185, 80
  %v187 = vpop.permute.xlu0 %186
  %vm188 = vcmask 720512
  %189 = vst.msk [vmem:[%s1] sm:$0xff] %vm188, %v187
  %s190 = scalar_lea.vmem %s0, 138
  %v191 = vld [vmem:[%s190] sm:$0x1]
  %192 = vrot.lane.b32.xlu0 %v191, 80
  %v193 = vpop.permute.xlu0 %192
  %vm194 = vcmask 720512
  %s195 = scalar_lea.vmem %s1, 8
  %196 = vst.msk [vmem:[%s195] sm:$0x1] %vm194, %v193
  %s197 = scalar_lea.vmem %s0, 9
  %s198 = smov 3
  %v199 = vld [vmem:[%s197] ss:$16 sm:%s198]
  %s200 = scalar_lea.vmem %s0, 9
  %s201 = smov 12
  %v202 = vld [vmem:[%s200] ss:$16 sm:%s201]
  %vm203 = vcmask 1043458
  %v204 = vsel %vm203, %v202, %v199
  %s205 = scalar_lea.vmem %s0, 9
  %s206 = smov 48
  %v207 = vld [vmem:[%s205] ss:$16 sm:%s206]
  %vm208 = vcmask 1045508
  %v209 = vsel %vm208, %v207, %v204
  %s210 = scalar_lea.vmem %s0, 9
  %s211 = smov 192
  %v212 = vld [vmem:[%s210] ss:$16 sm:%s211]
  %vm213 = vcmask 1047558
  %v214 = vsel %vm213, %v212, %v209
  %215 = vrot.lane.b32.xlu0 %v214, 72
  %v216 = vpop.permute.xlu0 %215
  %vm217 = vcmask 654912
  %218 = vst.msk [vmem:[%s1] sm:$0xff] %vm217, %v216
  %s219 = scalar_lea.vmem %s0, 137
  %v220 = vld [vmem:[%s219] sm:$0x1]
  %221 = vrot.lane.b32.xlu0 %v220, 72
  %v222 = vpop.permute.xlu0 %221
  %vm223 = vcmask 654912
  %s224 = scalar_lea.vmem %s1, 8
  %225 = vst.msk [vmem:[%s224] sm:$0x1] %vm223, %v222
  %s226 = scalar_lea.vmem %s0, 8
  %s227 = smov 3
  %v228 = vld [vmem:[%s226] ss:$16 sm:%s227]
  %s229 = scalar_lea.vmem %s0, 8
  %s230 = smov 12
  %v231 = vld [vmem:[%s229] ss:$16 sm:%s230]
  %vm232 = vcmask 1043458
  %v233 = vsel %vm232, %v231, %v228
  %s234 = scalar_lea.vmem %s0, 8
  %s235 = smov 48
  %v236 = vld [vmem:[%s234] ss:$16 sm:%s235]
  %vm237 = vcmask 1045508
  %v238 = vsel %vm237, %v236, %v233
  %s239 = scalar_lea.vmem %s0, 8
  %s240 = smov 192
  %v241 = vld [vmem:[%s239] ss:$16 sm:%s240]
  %vm242 = vcmask 1047558
  %v243 = vsel %vm242, %v241, %v238
  %244 = vrot.lane.b32.xlu0 %v243, 64
  %v245 = vpop.permute.xlu0 %244
  %vm246 = vcmask 589312
  %247 = vst.msk [vmem:[%s1] sm:$0xff] %vm246, %v245
  %s248 = scalar_lea.vmem %s0, 136
  %v249 = vld [vmem:[%s248] sm:$0x1]
  %250 = vrot.lane.b32.xlu0 %v249, 64
  %v251 = vpop.permute.xlu0 %250
  %vm252 = vcmask 589312
  %s253 = scalar_lea.vmem %s1, 8
  %254 = vst.msk [vmem:[%s253] sm:$0x1] %vm252, %v251
  %s255 = scalar_lea.vmem %s0, 7
  %s256 = smov 3
  %v257 = vld [vmem:[%s255] ss:$16 sm:%s256]
  %s258 = scalar_lea.vmem %s0, 7
  %s259 = smov 12
  %v260 = vld [vmem:[%s258] ss:$16 sm:%s259]
  %vm261 = vcmask 1043458
  %v262 = vsel %vm261, %v260, %v257
  %s263 = scalar_lea.vmem %s0, 7
  %s264 = smov 48
  %v265 = vld [vmem:[%s263] ss:$16 sm:%s264]
  %vm266 = vcmask 1045508
  %v267 = vsel %vm266, %v265, %v262
  %s268 = scalar_lea.vmem %s0, 7
  %s269 = smov 192
  %v270 = vld [vmem:[%s268] ss:$16 sm:%s269]
  %vm271 = vcmask 1047558
  %v272 = vsel %vm271, %v270, %v267
  %273 = vrot.lane.b32.xlu0 %v272, 56
  %v274 = vpop.permute.xlu0 %273
  %vm275 = vcmask 523712
  %276 = vst.msk [vmem:[%s1] sm:$0xff] %vm275, %v274
  %s277 = scalar_lea.vmem %s0, 135
  %v278 = vld [vmem:[%s277] sm:$0x1]
  %279 = vrot.lane.b32.xlu0 %v278, 56
  %v280 = vpop.permute.xlu0 %279
  %vm281 = vcmask 523712
  %s282 = scalar_lea.vmem %s1, 8
  %283 = vst.msk [vmem:[%s282] sm:$0x1] %vm281, %v280
  %s284 = scalar_lea.vmem %s0, 6
  %s285 = smov 3
  %v286 = vld [vmem:[%s284] ss:$16 sm:%s285]
  %s287 = scalar_lea.vmem %s0, 6
  %s288 = smov 12
  %v289 = vld [vmem:[%s287] ss:$16 sm:%s288]
  %vm290 = vcmask 1043458
  %v291 = vsel %vm290, %v289, %v286
  %s292 = scalar_lea.vmem %s0, 6
  %s293 = smov 48
  %v294 = vld [vmem:[%s292] ss:$16 sm:%s293]
  %vm295 = vcmask 1045508
  %v296 = vsel %vm295, %v294, %v291
  %s297 = scalar_lea.vmem %s0, 6
  %s298 = smov 192
  %v299 = vld [vmem:[%s297] ss:$16 sm:%s298]
  %vm300 = vcmask 1047558
  %v301 = vsel %vm300, %v299, %v296
  %302 = vrot.lane.b32.xlu0 %v301, 48
  %v303 = vpop.permute.xlu0 %302
  %vm304 = vcmask 458112
  %305 = vst.msk [vmem:[%s1] sm:$0xff] %vm304, %v303
  %s306 = scalar_lea.vmem %s0, 134
  %v307 = vld [vmem:[%s306] sm:$0x1]
  %308 = vrot.lane.b32.xlu0 %v307, 48
  %v309 = vpop.permute.xlu0 %308
  %vm310 = vcmask 458112
  %s311 = scalar_lea.vmem %s1, 8
  %312 = vst.msk [vmem:[%s311] sm:$0x1] %vm310, %v309
  %s313 = scalar_lea.vmem %s0, 5
  %s314 = smov 3
  %v315 = vld [vmem:[%s313] ss:$16 sm:%s314]
  %s316 = scalar_lea.vmem %s0, 5
  %s317 = smov 12
  %v318 = vld [vmem:[%s316] ss:$16 sm:%s317]
  %vm319 = vcmask 1043458
  %v320 = vsel %vm319, %v318, %v315
  %s321 = scalar_lea.vmem %s0, 5
  %s322 = smov 48
  %v323 = vld [vmem:[%s321] ss:$16 sm:%s322]
  %vm324 = vcmask 1045508
  %v325 = vsel %vm324, %v323, %v320
  %s326 = scalar_lea.vmem %s0, 5
  %s327 = smov 192
  %v328 = vld [vmem:[%s326] ss:$16 sm:%s327]
  %vm329 = vcmask 1047558
  %v330 = vsel %vm329, %v328, %v325
  %331 = vrot.lane.b32.xlu0 %v330, 40
  %v332 = vpop.permute.xlu0 %331
  %vm333 = vcmask 392512
  %334 = vst.msk [vmem:[%s1] sm:$0xff] %vm333, %v332
  %s335 = scalar_lea.vmem %s0, 133
  %v336 = vld [vmem:[%s335] sm:$0x1]
  %337 = vrot.lane.b32.xlu0 %v336, 40
  %v338 = vpop.permute.xlu0 %337
  %vm339 = vcmask 392512
  %s340 = scalar_lea.vmem %s1, 8
  %341 = vst.msk [vmem:[%s340] sm:$0x1] %vm339, %v338
  %s342 = scalar_lea.vmem %s0, 4
  %s343 = smov 3
  %v344 = vld [vmem:[%s342] ss:$16 sm:%s343]
  %s345 = scalar_lea.vmem %s0, 4
  %s346 = smov 12
  %v347 = vld [vmem:[%s345] ss:$16 sm:%s346]
  %vm348 = vcmask 1043458
  %v349 = vsel %vm348, %v347, %v344
  %s350 = scalar_lea.vmem %s0, 4
  %s351 = smov 48
  %v352 = vld [vmem:[%s350] ss:$16 sm:%s351]
  %vm353 = vcmask 1045508
  %v354 = vsel %vm353, %v352, %v349
  %s355 = scalar_lea.vmem %s0, 4
  %s356 = smov 192
  %v357 = vld [vmem:[%s355] ss:$16 sm:%s356]
  %vm358 = vcmask 1047558
  %v359 = vsel %vm358, %v357, %v354
  %360 = vrot.lane.b32.xlu0 %v359, 32
  %v361 = vpop.permute.xlu0 %360
  %vm362 = vcmask 326912
  %363 = vst.msk [vmem:[%s1] sm:$0xff] %vm362, %v361
  %s364 = scalar_lea.vmem %s0, 132
  %v365 = vld [vmem:[%s364] sm:$0x1]
  %366 = vrot.lane.b32.xlu0 %v365, 32
  %v367 = vpop.permute.xlu0 %366
  %vm368 = vcmask 326912
  %s369 = scalar_lea.vmem %s1, 8
  %370 = vst.msk [vmem:[%s369] sm:$0x1] %vm368, %v367
  %s371 = scalar_lea.vmem %s0, 3
  %s372 = smov 3
  %v373 = vld [vmem:[%s371] ss:$16 sm:%s372]
  %s374 = scalar_lea.vmem %s0, 3
  %s375 = smov 12
  %v376 = vld [vmem:[%s374] ss:$16 sm:%s375]
  %vm377 = vcmask 1043458
  %v378 = vsel %vm377, %v376, %v373
  %s379 = scalar_lea.vmem %s0, 3
  %s380 = smov 48
  %v381 = vld [vmem:[%s379] ss:$16 sm:%s380]
  %vm382 = vcmask 1045508
  %v383 = vsel %vm382, %v381, %v378
  %s384 = scalar_lea.vmem %s0, 3
  %s385 = smov 192
  %v386 = vld [vmem:[%s384] ss:$16 sm:%s385]
  %vm387 = vcmask 1047558
  %v388 = vsel %vm387, %v386, %v383
  %389 = vrot.lane.b32.xlu0 %v388, 24
  %v390 = vpop.permute.xlu0 %389
  %vm391 = vcmask 261312
  %392 = vst.msk [vmem:[%s1] sm:$0xff] %vm391, %v390
  %s393 = scalar_lea.vmem %s0, 131
  %v394 = vld [vmem:[%s393] sm:$0x1]
  %395 = vrot.lane.b32.xlu0 %v394, 24
  %v396 = vpop.permute.xlu0 %395
  %vm397 = vcmask 261312
  %s398 = scalar_lea.vmem %s1, 8
  %399 = vst.msk [vmem:[%s398] sm:$0x1] %vm397, %v396
  %s400 = scalar_lea.vmem %s0, 2
  %s401 = smov 3
  %v402 = vld [vmem:[%s400] ss:$16 sm:%s401]
  %s403 = scalar_lea.vmem %s0, 2
  %s404 = smov 12
  %v405 = vld [vmem:[%s403] ss:$16 sm:%s404]
  %vm406 = vcmask 1043458
  %v407 = vsel %vm406, %v405, %v402
  %s408 = scalar_lea.vmem %s0, 2
  %s409 = smov 48
  %v410 = vld [vmem:[%s408] ss:$16 sm:%s409]
  %vm411 = vcmask 1045508
  %v412 = vsel %vm411, %v410, %v407
  %s413 = scalar_lea.vmem %s0, 2
  %s414 = smov 192
  %v415 = vld [vmem:[%s413] ss:$16 sm:%s414]
  %vm416 = vcmask 1047558
  %v417 = vsel %vm416, %v415, %v412
  %418 = vrot.lane.b32.xlu0 %v417, 16
  %v419 = vpop.permute.xlu0 %418
  %vm420 = vcmask 195712
  %421 = vst.msk [vmem:[%s1] sm:$0xff] %vm420, %v419
  %s422 = scalar_lea.vmem %s0, 130
  %v423 = vld [vmem:[%s422] sm:$0x1]
  %424 = vrot.lane.b32.xlu0 %v423, 16
  %v425 = vpop.permute.xlu0 %424
  %vm426 = vcmask 195712
  %s427 = scalar_lea.vmem %s1, 8
  %428 = vst.msk [vmem:[%s427] sm:$0x1] %vm426, %v425
  %s429 = scalar_lea.vmem %s0, 1
  %s430 = smov 3
  %v431 = vld [vmem:[%s429] ss:$16 sm:%s430]
  %s432 = scalar_lea.vmem %s0, 1
  %s433 = smov 12
  %v434 = vld [vmem:[%s432] ss:$16 sm:%s433]
  %vm435 = vcmask 1043458
  %v436 = vsel %vm435, %v434, %v431
  %s437 = scalar_lea.vmem %s0, 1
  %s438 = smov 48
  %v439 = vld [vmem:[%s437] ss:$16 sm:%s438]
  %vm440 = vcmask 1045508
  %v441 = vsel %vm440, %v439, %v436
  %s442 = scalar_lea.vmem %s0, 1
  %s443 = smov 192
  %v444 = vld [vmem:[%s442] ss:$16 sm:%s443]
  %vm445 = vcmask 1047558
  %v446 = vsel %vm445, %v444, %v441
  %447 = vrot.lane.b32.xlu0 %v446, 8
  %v448 = vpop.permute.xlu0 %447
  %vm449 = vcmask 130112
  %450 = vst.msk [vmem:[%s1] sm:$0xff] %vm449, %v448
  %s451 = scalar_lea.vmem %s0, 129
  %v452 = vld [vmem:[%s451] sm:$0x1]
  %453 = vrot.lane.b32.xlu0 %v452, 8
  %v454 = vpop.permute.xlu0 %453
  %vm455 = vcmask 130112
  %s456 = scalar_lea.vmem %s1, 8
  %457 = vst.msk [vmem:[%s456] sm:$0x1] %vm455, %v454

// kernel: tile.46
$region0: #{tile.46}
  %s0 = inlined_call_operand.vmem [shape: f32[4,16,8], index: 0, kind: input, shape index: {}]
  %s1 = inlined_call_operand.vmem [shape: f32[4,128], index: 1, kind: output, shape index: {}]
  $region1: #{tile.46} parent=0
    #allocation0 [shape = 'u8[4096]{0}', space=vmem, size = 0x1000, scoped, tag = 'scoped mem for output reshape']
    %s2 = smov 3
    %v3 = vld [vmem:[%s0] ss:$16 sm:%s2]
    %s4 = smov 12
    %v5 = vld [vmem:[%s0] ss:$16 sm:%s4]
    %vm6 = vcmask 1043458
    %v7 = vsel %vm6, %v5, %v3
    %vm8 = vcmask 64512
    %9 = vst.msk [vmem:[#allocation0] sm:$0xf] %vm8, %v7
    %s10 = scalar_lea.vmem %s0, 15
    %s11 = smov 3
    %v12 = vld [vmem:[%s10] ss:$16 sm:%s11]
    %s13 = scalar_lea.vmem %s0, 15
    %s14 = smov 12
    %v15 = vld [vmem:[%s13] ss:$16 sm:%s14]
    %vm16 = vcmask 1043458
    %v17 = vsel %vm16, %v15, %v12
    %18 = vrot.lane.b32.xlu0 %v17, 120
    %v19 = vpop.permute.xlu0 %18
    %vm20 = vcmask 1048512
    %21 = vst.msk [vmem:[#allocation0] sm:$0xf] %vm20, %v19
    %s22 = scalar_lea.vmem %s0, 14
    %s23 = smov 3
    %v24 = vld [vmem:[%s22] ss:$16 sm:%s23]
    %s25 = scalar_lea.vmem %s0, 14
    %s26 = smov 12
    %v27 = vld [vmem:[%s25] ss:$16 sm:%s26]
    %vm28 = vcmask 1043458
    %v29 = vsel %vm28, %v27, %v24
    %30 = vrot.lane.b32.xlu0 %v29, 112
    %v31 = vpop.permute.xlu0 %30
    %vm32 = vcmask 982912
    %33 = vst.msk [vmem:[#allocation0] sm:$0xf] %vm32, %v31
    %s34 = scalar_lea.vmem %s0, 13
    %s35 = smov 3
    %v36 = vld [vmem:[%s34] ss:$16 sm:%s35]
    %s37 = scalar_lea.vmem %s0, 13
    %s38 = smov 12
    %v39 = vld [vmem:[%s37] ss:$16 sm:%s38]
    %vm40 = vcmask 1043458
    %v41 = vsel %vm40, %v39, %v36
    %42 = vrot.lane.b32.xlu0 %v41, 104
    %v43 = vpop.permute.xlu0 %42
    %vm44 = vcmask 917312
    %45 = vst.msk [vmem:[#allocation0] sm:$0xf] %vm44, %v43
    %s46 = scalar_lea.vmem %s0, 12
    %s47 = smov 3
    %v48 = vld [vmem:[%s46] ss:$16 sm:%s47]
    %s49 = scalar_lea.vmem %s0, 12
    %s50 = smov 12
    %v51 = vld [vmem:[%s49] ss:$16 sm:%s50]
    %vm52 = vcmask 1043458
    %v53 = vsel %vm52, %v51, %v48
    %54 = vrot.lane.b32.xlu0 %v53, 96
    %v55 = vpop.permute.xlu0 %54
    %vm56 = vcmask 851712
    %57 = vst.msk [vmem:[#allocation0] sm:$0xf] %vm56, %v55
    %s58 = scalar_lea.vmem %s0, 11
    %s59 = smov 3
    %v60 = vld [vmem:[%s58] ss:$16 sm:%s59]
    %s61 = scalar_lea.vmem %s0, 11
    %s62 = smov 12
    %v63 = vld [vmem:[%s61] ss:$16 sm:%s62]
    %vm64 = vcmask 1043458
    %v65 = vsel %vm64, %v63, %v60
    %66 = vrot.lane.b32.xlu0 %v65, 88
    %v67 = vpop.permute.xlu0 %66
    %vm68 = vcmask 786112
    %69 = vst.msk [vmem:[#allocation0] sm:$0xf] %vm68, %v67
    %s70 = scalar_lea.vmem %s0, 10
    %s71 = smov 3
    %v72 = vld [vmem:[%s70] ss:$16 sm:%s71]
    %s73 = scalar_lea.vmem %s0, 10
    %s74 = smov 12
    %v75 = vld [vmem:[%s73] ss:$16 sm:%s74]
    %vm76 = vcmask 1043458
    %v77 = vsel %vm76, %v75, %v72
    %78 = vrot.lane.b32.xlu0 %v77, 80
    %v79 = vpop.permute.xlu0 %78
    %vm80 = vcmask 720512
    %81 = vst.msk [vmem:[#allocation0] sm:$0xf] %vm80, %v79
    %s82 = scalar_lea.vmem %s0, 9
    %s83 = smov 3
    %v84 = vld [vmem:[%s82] ss:$16 sm:%s83]
    %s85 = scalar_lea.vmem %s0, 9
    %s86 = smov 12
    %v87 = vld [vmem:[%s85] ss:$16 sm:%s86]
    %vm88 = vcmask 1043458
    %v89 = vsel %vm88, %v87, %v84
    %90 = vrot.lane.b32.xlu0 %v89, 72
    %v91 = vpop.permute.xlu0 %90
    %vm92 = vcmask 654912
    %93 = vst.msk [vmem:[#allocation0] sm:$0xf] %vm92, %v91
    %s94 = scalar_lea.vmem %s0, 8
    %s95 = smov 3
    %v96 = vld [vmem:[%s94] ss:$16 sm:%s95]
    %s97 = scalar_lea.vmem %s0, 8
    %s98 = smov 12
    %v99 = vld [vmem:[%s97] ss:$16 sm:%s98]
    %vm100 = vcmask 1043458
    %v101 = vsel %vm100, %v99, %v96
    %102 = vrot.lane.b32.xlu0 %v101, 64
    %v103 = vpop.permute.xlu0 %102
    %vm104 = vcmask 589312
    %105 = vst.msk [vmem:[#allocation0] sm:$0xf] %vm104, %v103
    %s106 = scalar_lea.vmem %s0, 7
    %s107 = smov 3
    %v108 = vld [vmem:[%s106] ss:$16 sm:%s107]
    %s109 = scalar_lea.vmem %s0, 7
    %s110 = smov 12
    %v111 = vld [vmem:[%s109] ss:$16 sm:%s110]
    %vm112 = vcmask 1043458
    %v113 = vsel %vm112, %v111, %v108
    %114 = vrot.lane.b32.xlu0 %v113, 56
    %v115 = vpop.permute.xlu0 %114
    %vm116 = vcmask 523712
    %117 = vst.msk [vmem:[#allocation0] sm:$0xf] %vm116, %v115
    %s118 = scalar_lea.vmem %s0, 6
    %s119 = smov 3
    %v120 = vld [vmem:[%s118] ss:$16 sm:%s119]
    %s121 = scalar_lea.vmem %s0, 6
    %s122 = smov 12
    %v123 = vld [vmem:[%s121] ss:$16 sm:%s122]
    %vm124 = vcmask 1043458
    %v125 = vsel %vm124, %v123, %v120
    %126 = vrot.lane.b32.xlu0 %v125, 48
    %v127 = vpop.permute.xlu0 %126
    %vm128 = vcmask 458112
    %129 = vst.msk [vmem:[#allocation0] sm:$0xf] %vm128, %v127
    %s130 = scalar_lea.vmem %s0, 5
    %s131 = smov 3
    %v132 = vld [vmem:[%s130] ss:$16 sm:%s131]
    %s133 = scalar_lea.vmem %s0, 5
    %s134 = smov 12
    %v135 = vld [vmem:[%s133] ss:$16 sm:%s134]
    %vm136 = vcmask 1043458
    %v137 = vsel %vm136, %v135, %v132
    %138 = vrot.lane.b32.xlu0 %v137, 40
    %v139 = vpop.permute.xlu0 %138
    %vm140 = vcmask 392512
    %141 = vst.msk [vmem:[#allocation0] sm:$0xf] %vm140, %v139
    %s142 = scalar_lea.vmem %s0, 4
    %s143 = smov 3
    %v144 = vld [vmem:[%s142] ss:$16 sm:%s143]
    %s145 = scalar_lea.vmem %s0, 4
    %s146 = smov 12
    %v147 = vld [vmem:[%s145] ss:$16 sm:%s146]
    %vm148 = vcmask 1043458
    %v149 = vsel %vm148, %v147, %v144
    %150 = vrot.lane.b32.xlu0 %v149, 32
    %v151 = vpop.permute.xlu0 %150
    %vm152 = vcmask 326912
    %153 = vst.msk [vmem:[#allocation0] sm:$0xf] %vm152, %v151
    %s154 = scalar_lea.vmem %s0, 3
    %s155 = smov 3
    %v156 = vld [vmem:[%s154] ss:$16 sm:%s155]
    %s157 = scalar_lea.vmem %s0, 3
    %s158 = smov 12
    %v159 = vld [vmem:[%s157] ss:$16 sm:%s158]
    %vm160 = vcmask 1043458
    %v161 = vsel %vm160, %v159, %v156
    %162 = vrot.lane.b32.xlu0 %v161, 24
    %v163 = vpop.permute.xlu0 %162
    %vm164 = vcmask 261312
    %165 = vst.msk [vmem:[#allocation0] sm:$0xf] %vm164, %v163
    %s166 = scalar_lea.vmem %s0, 2
    %s167 = smov 3
    %v168 = vld [vmem:[%s166] ss:$16 sm:%s167]
    %s169 = scalar_lea.vmem %s0, 2
    %s170 = smov 12
    %v171 = vld [vmem:[%s169] ss:$16 sm:%s170]
    %vm172 = vcmask 1043458
    %v173 = vsel %vm172, %v171, %v168
    %174 = vrot.lane.b32.xlu0 %v173, 16
    %v175 = vpop.permute.xlu0 %174
    %vm176 = vcmask 195712
    %177 = vst.msk [vmem:[#allocation0] sm:$0xf] %vm176, %v175
    %s178 = scalar_lea.vmem %s0, 1
    %s179 = smov 3
    %v180 = vld [vmem:[%s178] ss:$16 sm:%s179]
    %s181 = scalar_lea.vmem %s0, 1
    %s182 = smov 12
    %v183 = vld [vmem:[%s181] ss:$16 sm:%s182]
    %vm184 = vcmask 1043458
    %v185 = vsel %vm184, %v183, %v180
    %186 = vrot.lane.b32.xlu0 %v185, 8
    %v187 = vpop.permute.xlu0 %186
    %vm188 = vcmask 130112
    %189 = vst.msk [vmem:[#allocation0] sm:$0xf] %vm188, %v187
    %s191 = ssub.s32 16, 1
    %v192 = vld [vmem:[#allocation0] sm:%s191]
    %s194 = ssub.s32 16, 1
    %195 = vst [vmem:[%s1] sm:%s194] %v192

// kernel: tile.51
$region0: #{tile.51}
  %s0 = inlined_call_operand.vmem [shape: f32[3,16,8], index: 0, kind: input, shape index: {}]
  %s1 = inlined_call_operand.vmem [shape: f32[3,128], index: 1, kind: output, shape index: {}]
  $region1: #{tile.51} parent=0
    #allocation0 [shape = 'u8[4096]{0}', space=vmem, size = 0x1000, scoped, tag = 'scoped mem for output reshape']
    %s2 = smov 3
    %v3 = vld [vmem:[%s0] ss:$16 sm:%s2]
    %s4 = scalar_lea.vmem %s0, 30
    %v5 = vld [vmem:[%s4] sm:$0x4]
    %vm6 = vcmask 1042434
    %v7 = vsel %vm6, %v5, %v3
    %vm8 = vcmask 64512
    %9 = vst.msk [vmem:[#allocation0] sm:$0x7] %vm8, %v7
    %s10 = scalar_lea.vmem %s0, 15
    %s11 = smov 3
    %v12 = vld [vmem:[%s10] ss:$16 sm:%s11]
    %s13 = scalar_lea.vmem %s0, 45
    %v14 = vld [vmem:[%s13] sm:$0x4]
    %vm15 = vcmask 1042434
    %v16 = vsel %vm15, %v14, %v12
    %17 = vrot.lane.b32.xlu0 %v16, 120
    %v18 = vpop.permute.xlu0 %17
    %vm19 = vcmask 1048512
    %20 = vst.msk [vmem:[#allocation0] sm:$0x7] %vm19, %v18
    %s21 = scalar_lea.vmem %s0, 14
    %s22 = smov 3
    %v23 = vld [vmem:[%s21] ss:$16 sm:%s22]
    %s24 = scalar_lea.vmem %s0, 44
    %v25 = vld [vmem:[%s24] sm:$0x4]
    %vm26 = vcmask 1042434
    %v27 = vsel %vm26, %v25, %v23
    %28 = vrot.lane.b32.xlu0 %v27, 112
    %v29 = vpop.permute.xlu0 %28
    %vm30 = vcmask 982912
    %31 = vst.msk [vmem:[#allocation0] sm:$0x7] %vm30, %v29
    %s32 = scalar_lea.vmem %s0, 13
    %s33 = smov 3
    %v34 = vld [vmem:[%s32] ss:$16 sm:%s33]
    %s35 = scalar_lea.vmem %s0, 43
    %v36 = vld [vmem:[%s35] sm:$0x4]
    %vm37 = vcmask 1042434
    %v38 = vsel %vm37, %v36, %v34
    %39 = vrot.lane.b32.xlu0 %v38, 104
    %v40 = vpop.permute.xlu0 %39
    %vm41 = vcmask 917312
    %42 = vst.msk [vmem:[#allocation0] sm:$0x7] %vm41, %v40
    %s43 = scalar_lea.vmem %s0, 12
    %s44 = smov 3
    %v45 = vld [vmem:[%s43] ss:$16 sm:%s44]
    %s46 = scalar_lea.vmem %s0, 42
    %v47 = vld [vmem:[%s46] sm:$0x4]
    %vm48 = vcmask 1042434
    %v49 = vsel %vm48, %v47, %v45
    %50 = vrot.lane.b32.xlu0 %v49, 96
    %v51 = vpop.permute.xlu0 %50
    %vm52 = vcmask 851712
    %53 = vst.msk [vmem:[#allocation0] sm:$0x7] %vm52, %v51
    %s54 = scalar_lea.vmem %s0, 11
    %s55 = smov 3
    %v56 = vld [vmem:[%s54] ss:$16 sm:%s55]
    %s57 = scalar_lea.vmem %s0, 41
    %v58 = vld [vmem:[%s57] sm:$0x4]
    %vm59 = vcmask 1042434
    %v60 = vsel %vm59, %v58, %v56
    %61 = vrot.lane.b32.xlu0 %v60, 88
    %v62 = vpop.permute.xlu0 %61
    %vm63 = vcmask 786112
    %64 = vst.msk [vmem:[#allocation0] sm:$0x7] %vm63, %v62
    %s65 = scalar_lea.vmem %s0, 10
    %s66 = smov 3
    %v67 = vld [vmem:[%s65] ss:$16 sm:%s66]
    %s68 = scalar_lea.vmem %s0, 40
    %v69 = vld [vmem:[%s68] sm:$0x4]
    %vm70 = vcmask 1042434
    %v71 = vsel %vm70, %v69, %v67
    %72 = vrot.lane.b32.xlu0 %v71, 80
    %v73 = vpop.permute.xlu0 %72
    %vm74 = vcmask 720512
    %75 = vst.msk [vmem:[#allocation0] sm:$0x7] %vm74, %v73
    %s76 = scalar_lea.vmem %s0, 9
    %s77 = smov 3
    %v78 = vld [vmem:[%s76] ss:$16 sm:%s77]
    %s79 = scalar_lea.vmem %s0, 39
    %v80 = vld [vmem:[%s79] sm:$0x4]
    %vm81 = vcmask 1042434
    %v82 = vsel %vm81, %v80, %v78
    %83 = vrot.lane.b32.xlu0 %v82, 72
    %v84 = vpop.permute.xlu0 %83
    %vm85 = vcmask 654912
    %86 = vst.msk [vmem:[#allocation0] sm:$0x7] %vm85, %v84
    %s87 = scalar_lea.vmem %s0, 8
    %s88 = smov 3
    %v89 = vld [vmem:[%s87] ss:$16 sm:%s88]
    %s90 = scalar_lea.vmem %s0, 38
    %v91 = vld [vmem:[%s90] sm:$0x4]
    %vm92 = vcmask 1042434
    %v93 = vsel %vm92, %v91, %v89
    %94 = vrot.lane.b32.xlu0 %v93, 64
    %v95 = vpop.permute.xlu0 %94
    %vm96 = vcmask 589312
    %97 = vst.msk [vmem:[#allocation0] sm:$0x7] %vm96, %v95
    %s98 = scalar_lea.vmem %s0, 7
    %s99 = smov 3
    %v100 = vld [vmem:[%s98] ss:$16 sm:%s99]
    %s101 = scalar_lea.vmem %s0, 37
    %v102 = vld [vmem:[%s101] sm:$0x4]
    %vm103 = vcmask 1042434
    %v104 = vsel %vm103, %v102, %v100
    %105 = vrot.lane.b32.xlu0 %v104, 56
    %v106 = vpop.permute.xlu0 %105
    %vm107 = vcmask 523712
    %108 = vst.msk [vmem:[#allocation0] sm:$0x7] %vm107, %v106
    %s109 = scalar_lea.vmem %s0, 6
    %s110 = smov 3
    %v111 = vld [vmem:[%s109] ss:$16 sm:%s110]
    %s112 = scalar_lea.vmem %s0, 36
    %v113 = vld [vmem:[%s112] sm:$0x4]
    %vm114 = vcmask 1042434
    %v115 = vsel %vm114, %v113, %v111
    %116 = vrot.lane.b32.xlu0 %v115, 48
    %v117 = vpop.permute.xlu0 %116
    %vm118 = vcmask 458112
    %119 = vst.msk [vmem:[#allocation0] sm:$0x7] %vm118, %v117
    %s120 = scalar_lea.vmem %s0, 5
    %s121 = smov 3
    %v122 = vld [vmem:[%s120] ss:$16 sm:%s121]
    %s123 = scalar_lea.vmem %s0, 35
    %v124 = vld [vmem:[%s123] sm:$0x4]
    %vm125 = vcmask 1042434
    %v126 = vsel %vm125, %v124, %v122
    %127 = vrot.lane.b32.xlu0 %v126, 40
    %v128 = vpop.permute.xlu0 %127
    %vm129 = vcmask 392512
    %130 = vst.msk [vmem:[#allocation0] sm:$0x7] %vm129, %v128
    %s131 = scalar_lea.vmem %s0, 4
    %s132 = smov 3
    %v133 = vld [vmem:[%s131] ss:$16 sm:%s132]
    %s134 = scalar_lea.vmem %s0, 34
    %v135 = vld [vmem:[%s134] sm:$0x4]
    %vm136 = vcmask 1042434
    %v137 = vsel %vm136, %v135, %v133
    %138 = vrot.lane.b32.xlu0 %v137, 32
    %v139 = vpop.permute.xlu0 %138
    %vm140 = vcmask 326912
    %141 = vst.msk [vmem:[#allocation0] sm:$0x7] %vm140, %v139
    %s142 = scalar_lea.vmem %s0, 3
    %s143 = smov 3
    %v144 = vld [vmem:[%s142] ss:$16 sm:%s143]
    %s145 = scalar_lea.vmem %s0, 33
    %v146 = vld [vmem:[%s145] sm:$0x4]
    %vm147 = vcmask 1042434
    %v148 = vsel %vm147, %v146, %v144
    %149 = vrot.lane.b32.xlu0 %v148, 24
    %v150 = vpop.permute.xlu0 %149
    %vm151 = vcmask 261312
    %152 = vst.msk [vmem:[#allocation0] sm:$0x7] %vm151, %v150
    %s153 = scalar_lea.vmem %s0, 2
    %s154 = smov 3
    %v155 = vld [vmem:[%s153] ss:$16 sm:%s154]
    %s156 = scalar_lea.vmem %s0, 32
    %v157 = vld [vmem:[%s156] sm:$0x4]
    %vm158 = vcmask 1042434
    %v159 = vsel %vm158, %v157, %v155
    %160 = vrot.lane.b32.xlu0 %v159, 16
    %v161 = vpop.permute.xlu0 %160
    %vm162 = vcmask 195712
    %163 = vst.msk [vmem:[#allocation0] sm:$0x7] %vm162, %v161
    %s164 = scalar_lea.vmem %s0, 1
    %s165 = smov 3
    %v166 = vld [vmem:[%s164] ss:$16 sm:%s165]
    %s167 = scalar_lea.vmem %s0, 31
    %v168 = vld [vmem:[%s167] sm:$0x4]
    %vm169 = vcmask 1042434
    %v170 = vsel %vm169, %v168, %v166
    %171 = vrot.lane.b32.xlu0 %v170, 8
    %v172 = vpop.permute.xlu0 %171
    %vm173 = vcmask 130112
    %174 = vst.msk [vmem:[#allocation0] sm:$0x7] %vm173, %v172
    %s176 = ssub.s32 16, 1
    %v177 = vld [vmem:[#allocation0] sm:%s176]
    %s179 = ssub.s32 16, 1
    %180 = vst [vmem:[%s1] sm:%s179] %v177

// kernel: cmaxgb2_forward.2
$region0: #{cmaxgb2_forward.2}
  #allocation0 [shape = 'u32[]', space=smem, size = 0x4, offset = 0x4, fixed_abs, tag = 'smem constant byte address 0x4 - core index']
  #allocation1 [shape = 'u32[72,128]{1,0:T(1,128)}', space=vmem, size = 0x9000, scoped, tag = 'internal scratch']
  #allocation2 [shape = 'u32[2048]{0}', space=vmem, size = 0x2000, scoped, tag = 'scoped memory for cmaxgb2_forward.2']
  #allocation3 [shape = 'u32[2048]{0}', space=vmem, size = 0x2000, scoped, tag = 'scoped memory for cmaxgb2_forward.2']
  #allocation4 [shape = 'u32[2048]{0}', space=vmem, size = 0x2000, scoped, tag = 'scoped memory for cmaxgb2_forward.2']
  #allocation5 [shape = 'u32[2048]{0}', space=vmem, size = 0x2000, scoped, tag = 'scoped memory for cmaxgb2_forward.2']
  #allocation6 [shape = 'u32[2048]{0}', space=vmem, size = 0x2000, scoped, tag = 'scoped memory for cmaxgb2_forward.2']
  #allocation7 [shape = 'u32[2048]{0}', space=vmem, size = 0x2000, scoped, tag = 'scoped memory for cmaxgb2_forward.2']
  #allocation8 [shape = 'u32[2048]{0}', space=vmem, size = 0x2000, scoped, tag = 'scoped memory for cmaxgb2_forward.2']
  #allocation9 [shape = 'u32[2048]{0}', space=vmem, size = 0x2000, scoped, tag = 'scoped memory for cmaxgb2_forward.2']
  #allocation10 [shape = 'u32[2048]{0}', space=vmem, size = 0x2000, scoped, tag = 'scoped memory for cmaxgb2_forward.2']
  #allocation11 [shape = 'u32[2048]{0}', space=vmem, size = 0x2000, scoped, tag = 'scoped memory for cmaxgb2_forward.2']
  #allocation12 [shape = 'u32[2048]{0}', space=vmem, size = 0x2000, scoped, tag = 'scoped memory for cmaxgb2_forward.2']
  #allocation13 [shape = 'u32[2048]{0}', space=vmem, size = 0x2000, scoped, tag = 'scoped memory for cmaxgb2_forward.2']
  #allocation14 [shape = 'u32[2048]{0}', space=vmem, size = 0x2000, scoped, tag = 'scoped memory for cmaxgb2_forward.2']
  #allocation15 [shape = 'u32[2048]{0}', space=vmem, size = 0x2000, scoped, tag = 'scoped memory for cmaxgb2_forward.2']
  #allocation16 [shape = 'u32[2048]{0}', space=vmem, size = 0x2000, scoped, tag = 'scoped memory for cmaxgb2_forward.2']
  #allocation17 [shape = 'u32[2048]{0}', space=vmem, size = 0x2000, scoped, tag = 'scoped memory for cmaxgb2_forward.2']
  #allocation18 [shape = 'u32[2048]{0}', space=vmem, size = 0x2000, scoped, tag = 'scoped memory for cmaxgb2_forward.2']
  #allocation19 [shape = 'u32[2048]{0}', space=vmem, size = 0x2000, scoped, tag = 'scoped memory for cmaxgb2_forward.2']
  #allocation20 [shape = 'u32[2048]{0}', space=vmem, size = 0x2000, scoped, tag = 'scoped memory for cmaxgb2_forward.2']
  #allocation21 [shape = 'u32[2048]{0}', space=vmem, size = 0x2000, scoped, tag = 'scoped memory for cmaxgb2_forward.2']
  %s0 = inlined_call_operand.vmem [shape: s32[1,128], index: 0, kind: input, shape index: {}]
  %s1 = inlined_call_operand.vmem [shape: f32[9,128], index: 1, kind: input, shape index: {}]
  %s2 = inlined_call_operand.vmem [shape: f32[1,128], index: 2, kind: input, shape index: {}]
  %s3 = inlined_call_operand.vmem [shape: f32[4,9,128], index: 3, kind: input, shape index: {}]
  %s4 = inlined_call_operand.vmem [shape: f32[4,128], index: 4, kind: input, shape index: {}]
  %s5 = inlined_call_operand.vmem [shape: f32[3,9,128], index: 5, kind: input, shape index: {}]
  %s6 = inlined_call_operand.vmem [shape: f32[3,128], index: 6, kind: input, shape index: {}]
  %s7 = inlined_call_operand.vmem [shape: f32[2,1,16,128], index: 7, kind: input, shape index: {}]
  %s8 = inlined_call_operand.<no memory space> [shape: f32[], index: 8, kind: input, shape index: {}]
  %s9 = inlined_call_operand.vmem [shape: f32[2,1,16,128], index: 9, kind: input, shape index: {}]
  %s10 = inlined_call_operand.vmem [shape: f32[2,1,16,128], index: 10, kind: input, shape index: {}]
  %s11 = inlined_call_operand.vmem [shape: f32[2,1,16,128], index: 11, kind: input, shape index: {}]
  %s12 = inlined_call_operand.vmem [shape: f32[2,8,128], index: 12, kind: output, shape index: {}]
  %s13 = sld [smem:[#allocation0]]
  $region77: #{cmaxgb2_forward.2} parent=0
    _
  %s15 = ssub.s32 1, %s13
  %s16 = scalar_select 0, %s15, %s13
  %v17 = vstv %s8
  %v18 = vstv %s8
  %v19 = vstv %s8
  %v20 = vstv %s8
  loop: start=0, step=1, limit=4
  $region2: #{cmaxgb2_forward.2} parent=0 // loop_pre_header
    _
  $region3: #{cmaxgb2_forward.2} parent=0 // loop_header
    %s22 = sphi 0, %s26
    %p23 = scmp.ge.s32.totalorder %s22, 4
    %s36 = sphi 0, %s38
    %s39 = sphi 0, %s36
    %s40 = sphi 0, %s39
    %s56 = sphi 0, %s40
    %s66 = sphi 0, %s68
    %s69 = sphi 0, %s66
    %s70 = sphi 0, %s69
    %s86 = sphi 0, %s70
    %s96 = sphi 0, %s98
    %s99 = sphi 0, %s96
    %s100 = sphi 0, %s99
    %s116 = sphi 0, %s100
    %s122 = sphi 0, %s124
    %s125 = sphi 0, %s122
    %s126 = sphi 0, %s125
    %s142 = sphi 0, %s126
    %s146 = sphi 0, %s146
    %s148 = sphi 0, %s146
    %s149 = sphi 0, %s148
    %s163 = sphi 0, %s149
    %s167 = sphi 0, %s167
    %s169 = sphi 0, %s167
    %s170 = sphi 0, %s169
    %s184 = sphi 0, %s170
    %s188 = sphi 0, %s188
    %s190 = sphi 0, %s188
    %s191 = sphi 0, %s190
    %s205 = sphi 0, %s191
    %s209 = sphi 0, %s209
    %s211 = sphi 0, %s209
    %s212 = sphi 0, %s211
    %s226 = sphi 0, %s212
    %s230 = sphi 0, %s230
    %s232 = sphi 0, %s230
    %s233 = sphi 0, %s232
    %s247 = sphi 0, %s233
    %s251 = sphi 0, %s251
    %s253 = sphi 0, %s251
    %s254 = sphi 0, %s253
    %s268 = sphi 0, %s254
    %s272 = sphi 0, %s272
    %s274 = sphi 0, %s272
    %s275 = sphi 0, %s274
    %s289 = sphi 0, %s275
    %s295 = sphi 0, %s297
    %s298 = sphi 0, %s295
    %s299 = sphi 0, %s298
    %s315 = sphi 0, %s299
  $region4: #{cmaxgb2_forward.2} parent=0 // loop_header_branch
    %25 = sbr.rel (%p23) target = $region8
  $region5: #{cmaxgb2_forward.2} parent=0 // loop_body
    %s27 = ssub.s32 %s22, 1
    %s28 = ssub.s32 %s22, 2
    %s29 = sadd.s32 %s22, 1
    %s32 = ssub.s32 %s22, %s29
    %s33 = ssub.s32 0, 0
    %s34 = sor.u32 %s32, %s33
    %p35 = scmp.eq.s32.totalorder %s34, 0
    %s37 = sadd.s32 %s36, 1
    %s38 = scalar_select %p35, %s36, %s37
    %p41 = pneg %p35
    %p42 = scmp.eq.s32.totalorder %s22, 1
    %p43 = por %p41, %p42
    %p44 = scmp.ne.s32.totalorder %s36, %s39
    %p45 = scmp.eq.s32.totalorder %s22, 0
    %p46 = por %p44, %p45
    %p47 = scmp.ne.s32.totalorder %s36, %s39
    %p48 = scmp.eq.s32.totalorder %s27, 1
    %p49 = por %p47, %p48
    %p50 = scmp.ne.s32.totalorder %s39, %s40
    %p51 = scmp.eq.s32.totalorder %s27, 0
    %p52 = por %p50, %p51
    %p53 = scmp.ne.s32.totalorder %s39, %s40
    %p54 = scmp.eq.s32.totalorder %s28, 1
    %p55 = por %p53, %p54
    %p57 = scmp.ne.s32.totalorder %s40, %s56
    %p58 = scmp.eq.s32.totalorder %s28, 0
    %p59 = por %p57, %p58
    %s62 = ssub.s32 %s22, %s29
    %s63 = ssub.s32 0, 0
    %s64 = sor.u32 %s62, %s63
    %p65 = scmp.eq.s32.totalorder %s64, 0
    %s67 = sadd.s32 %s66, 1
    %s68 = scalar_select %p65, %s66, %s67
    %p71 = pneg %p65
    %p72 = scmp.eq.s32.totalorder %s22, 1
    %p73 = por %p71, %p72
    %p74 = scmp.ne.s32.totalorder %s66, %s69
    %p75 = scmp.eq.s32.totalorder %s22, 0
    %p76 = por %p74, %p75
    %p77 = scmp.ne.s32.totalorder %s66, %s69
    %p78 = scmp.eq.s32.totalorder %s27, 1
    %p79 = por %p77, %p78
    %p80 = scmp.ne.s32.totalorder %s69, %s70
    %p81 = scmp.eq.s32.totalorder %s27, 0
    %p82 = por %p80, %p81
    %p83 = scmp.ne.s32.totalorder %s69, %s70
    %p84 = scmp.eq.s32.totalorder %s28, 1
    %p85 = por %p83, %p84
    %p87 = scmp.ne.s32.totalorder %s70, %s86
    %p88 = scmp.eq.s32.totalorder %s28, 0
    %p89 = por %p87, %p88
    %s92 = ssub.s32 %s22, %s29
    %s93 = ssub.s32 0, 0
    %s94 = sor.u32 %s92, %s93
    %p95 = scmp.eq.s32.totalorder %s94, 0
    %s97 = sadd.s32 %s96, 1
    %s98 = scalar_select %p95, %s96, %s97
    %p101 = pneg %p95
    %p102 = scmp.eq.s32.totalorder %s22, 1
    %p103 = por %p101, %p102
    %p104 = scmp.ne.s32.totalorder %s96, %s99
    %p105 = scmp.eq.s32.totalorder %s22, 0
    %p106 = por %p104, %p105
    %p107 = scmp.ne.s32.totalorder %s96, %s99
    %p108 = scmp.eq.s32.totalorder %s27, 1
    %p109 = por %p107, %p108
    %p110 = scmp.ne.s32.totalorder %s99, %s100
    %p111 = scmp.eq.s32.totalorder %s27, 0
    %p112 = por %p110, %p111
    %p113 = scmp.ne.s32.totalorder %s99, %s100
    %p114 = scmp.eq.s32.totalorder %s28, 1
    %p115 = por %p113, %p114
    %p117 = scmp.ne.s32.totalorder %s100, %s116
    %p118 = scmp.eq.s32.totalorder %s28, 0
    %p119 = por %p117, %p118
    %s120 = ssub.s32 %s22, %s29
    %p121 = scmp.eq.s32.totalorder %s120, 0
    %s123 = sadd.s32 %s122, 1
    %s124 = scalar_select %p121, %s122, %s123
    %p127 = pneg %p121
    %p128 = scmp.eq.s32.totalorder %s22, 1
    %p129 = por %p127, %p128
    %p130 = scmp.ne.s32.totalorder %s122, %s125
    %p131 = scmp.eq.s32.totalorder %s22, 0
    %p132 = por %p130, %p131
    %p133 = scmp.ne.s32.totalorder %s122, %s125
    %p134 = scmp.eq.s32.totalorder %s27, 1
    %p135 = por %p133, %p134
    %p136 = scmp.ne.s32.totalorder %s125, %s126
    %p137 = scmp.eq.s32.totalorder %s27, 0
    %p138 = por %p136, %p137
    %p139 = scmp.ne.s32.totalorder %s125, %s126
    %p140 = scmp.eq.s32.totalorder %s28, 1
    %p141 = por %p139, %p140
    %p143 = scmp.ne.s32.totalorder %s126, %s142
    %p144 = scmp.eq.s32.totalorder %s28, 0
    %p145 = por %p143, %p144
    %s147 = sadd.s32 %s146, 1
    %p150 = scmp.eq.s32.totalorder %s22, 1
    %p151 = scmp.ne.s32.totalorder %s146, %s148
    %p152 = scmp.eq.s32.totalorder %s22, 0
    %p153 = por %p151, %p152
    %p154 = scmp.ne.s32.totalorder %s146, %s148
    %p155 = scmp.eq.s32.totalorder %s27, 1
    %p156 = por %p154, %p155
    %p157 = scmp.ne.s32.totalorder %s148, %s149
    %p158 = scmp.eq.s32.totalorder %s27, 0
    %p159 = por %p157, %p158
    %p160 = scmp.ne.s32.totalorder %s148, %s149
    %p161 = scmp.eq.s32.totalorder %s28, 1
    %p162 = por %p160, %p161
    %p164 = scmp.ne.s32.totalorder %s149, %s163
    %p165 = scmp.eq.s32.totalorder %s28, 0
    %p166 = por %p164, %p165
    %s168 = sadd.s32 %s167, 1
    %p171 = scmp.eq.s32.totalorder %s22, 1
    %p172 = scmp.ne.s32.totalorder %s167, %s169
    %p173 = scmp.eq.s32.totalorder %s22, 0
    %p174 = por %p172, %p173
    %p175 = scmp.ne.s32.totalorder %s167, %s169
    %p176 = scmp.eq.s32.totalorder %s27, 1
    %p177 = por %p175, %p176
    %p178 = scmp.ne.s32.totalorder %s169, %s170
    %p179 = scmp.eq.s32.totalorder %s27, 0
    %p180 = por %p178, %p179
    %p181 = scmp.ne.s32.totalorder %s169, %s170
    %p182 = scmp.eq.s32.totalorder %s28, 1
    %p183 = por %p181, %p182
    %p185 = scmp.ne.s32.totalorder %s170, %s184
    %p186 = scmp.eq.s32.totalorder %s28, 0
    %p187 = por %p185, %p186
    %s189 = sadd.s32 %s188, 1
    %p192 = scmp.eq.s32.totalorder %s22, 1
    %p193 = scmp.ne.s32.totalorder %s188, %s190
    %p194 = scmp.eq.s32.totalorder %s22, 0
    %p195 = por %p193, %p194
    %p196 = scmp.ne.s32.totalorder %s188, %s190
    %p197 = scmp.eq.s32.totalorder %s27, 1
    %p198 = por %p196, %p197
    %p199 = scmp.ne.s32.totalorder %s190, %s191
    %p200 = scmp.eq.s32.totalorder %s27, 0
    %p201 = por %p199, %p200
    %p202 = scmp.ne.s32.totalorder %s190, %s191
    %p203 = scmp.eq.s32.totalorder %s28, 1
    %p204 = por %p202, %p203
    %p206 = scmp.ne.s32.totalorder %s191, %s205
    %p207 = scmp.eq.s32.totalorder %s28, 0
    %p208 = por %p206, %p207
    %s210 = sadd.s32 %s209, 1
    %p213 = scmp.eq.s32.totalorder %s22, 1
    %p214 = scmp.ne.s32.totalorder %s209, %s211
    %p215 = scmp.eq.s32.totalorder %s22, 0
    %p216 = por %p214, %p215
    %p217 = scmp.ne.s32.totalorder %s209, %s211
    %p218 = scmp.eq.s32.totalorder %s27, 1
    %p219 = por %p217, %p218
    %p220 = scmp.ne.s32.totalorder %s211, %s212
    %p221 = scmp.eq.s32.totalorder %s27, 0
    %p222 = por %p220, %p221
    %p223 = scmp.ne.s32.totalorder %s211, %s212
    %p224 = scmp.eq.s32.totalorder %s28, 1
    %p225 = por %p223, %p224
    %p227 = scmp.ne.s32.totalorder %s212, %s226
    %p228 = scmp.eq.s32.totalorder %s28, 0
    %p229 = por %p227, %p228
    %s231 = sadd.s32 %s230, 1
    %p234 = scmp.eq.s32.totalorder %s22, 1
    %p235 = scmp.ne.s32.totalorder %s230, %s232
    %p236 = scmp.eq.s32.totalorder %s22, 0
    %p237 = por %p235, %p236
    %p238 = scmp.ne.s32.totalorder %s230, %s232
    %p239 = scmp.eq.s32.totalorder %s27, 1
    %p240 = por %p238, %p239
    %p241 = scmp.ne.s32.totalorder %s232, %s233
    %p242 = scmp.eq.s32.totalorder %s27, 0
    %p243 = por %p241, %p242
    %p244 = scmp.ne.s32.totalorder %s232, %s233
    %p245 = scmp.eq.s32.totalorder %s28, 1
    %p246 = por %p244, %p245
    %p248 = scmp.ne.s32.totalorder %s233, %s247
    %p249 = scmp.eq.s32.totalorder %s28, 0
    %p250 = por %p248, %p249
    %s252 = sadd.s32 %s251, 1
    %p255 = scmp.eq.s32.totalorder %s22, 1
    %p256 = scmp.ne.s32.totalorder %s251, %s253
    %p257 = scmp.eq.s32.totalorder %s22, 0
    %p258 = por %p256, %p257
    %p259 = scmp.ne.s32.totalorder %s251, %s253
    %p260 = scmp.eq.s32.totalorder %s27, 1
    %p261 = por %p259, %p260
    %p262 = scmp.ne.s32.totalorder %s253, %s254
    %p263 = scmp.eq.s32.totalorder %s27, 0
    %p264 = por %p262, %p263
    %p265 = scmp.ne.s32.totalorder %s253, %s254
    %p266 = scmp.eq.s32.totalorder %s28, 1
    %p267 = por %p265, %p266
    %p269 = scmp.ne.s32.totalorder %s254, %s268
    %p270 = scmp.eq.s32.totalorder %s28, 0
    %p271 = por %p269, %p270
    %s273 = sadd.s32 %s272, 1
    %p276 = scmp.eq.s32.totalorder %s22, 1
    %p277 = scmp.ne.s32.totalorder %s272, %s274
    %p278 = scmp.eq.s32.totalorder %s22, 0
    %p279 = por %p277, %p278
    %p280 = scmp.ne.s32.totalorder %s272, %s274
    %p281 = scmp.eq.s32.totalorder %s27, 1
    %p282 = por %p280, %p281
    %p283 = scmp.ne.s32.totalorder %s274, %s275
    %p284 = scmp.eq.s32.totalorder %s27, 0
    %p285 = por %p283, %p284
    %p286 = scmp.ne.s32.totalorder %s274, %s275
    %p287 = scmp.eq.s32.totalorder %s28, 1
    %p288 = por %p286, %p287
    %p290 = scmp.ne.s32.totalorder %s275, %s289
    %p291 = scmp.eq.s32.totalorder %s28, 0
    %p292 = por %p290, %p291
    %s293 = ssub.s32 %s22, %s29
    %p294 = scmp.eq.s32.totalorder %s293, 0
    %s296 = sadd.s32 %s295, 1
    %s297 = scalar_select %p294, %s295, %s296
    %p300 = pneg %p294
    %p301 = scmp.eq.s32.totalorder %s22, 1
    %p302 = por %p300, %p301
    %p303 = scmp.ne.s32.totalorder %s295, %s298
    %p304 = scmp.eq.s32.totalorder %s22, 0
    %p305 = por %p303, %p304
    %p306 = scmp.ne.s32.totalorder %s295, %s298
    %p307 = scmp.eq.s32.totalorder %s27, 1
    %p308 = por %p306, %p307
    %p309 = scmp.ne.s32.totalorder %s298, %s299
    %p310 = scmp.eq.s32.totalorder %s27, 0
    %p311 = por %p309, %p310
    %p312 = scmp.ne.s32.totalorder %s298, %s299
    %p313 = scmp.eq.s32.totalorder %s28, 1
    %p314 = por %p312, %p313
    %p316 = scmp.ne.s32.totalorder %s299, %s315
    %p317 = scmp.eq.s32.totalorder %s28, 0
    %p318 = por %p316, %p317
    %p319 = scmp.le.s32.totalorder 1, %s22
    %p320 = scmp.lt.s32.totalorder %s22, 3
    %p321 = pnand %p319, %p320
    %p322 = pneg %p321
    // Predicated region
    $region9: #{cmaxgb2_forward.2} parent=5 // pred_check
      _
    $region10: #{cmaxgb2_forward.2} parent=5 // pred_check_branch
      %324 = sbr.rel (%p321) target = $region12
    $region11: #{cmaxgb2_forward.2} parent=5 // pred_region
      %s325 = ssub.s32 %s22, 1
      // Predicated region
      $region13: #{cmaxgb2_forward.2} parent=11 // pred_check
        %p326 = pneg %p159
      $region14: #{cmaxgb2_forward.2} parent=11 // pred_check_branch
        %328 = sbr.rel (%p326) target = $region16
      $region15: #{cmaxgb2_forward.2} parent=11 // pred_region
        _
      $region16: #{cmaxgb2_forward.2} parent=11 // pred_fallthru
        _
      // Predicated region
      $region17: #{cmaxgb2_forward.2} parent=11 // pred_check
        %p329 = pneg %p180
      $region18: #{cmaxgb2_forward.2} parent=11 // pred_check_branch
        %331 = sbr.rel (%p329) target = $region20
      $region19: #{cmaxgb2_forward.2} parent=11 // pred_region
        _
      $region20: #{cmaxgb2_forward.2} parent=11 // pred_fallthru
        _
      // Predicated region
      $region21: #{cmaxgb2_forward.2} parent=11 // pred_check
        %p332 = pneg %p201
      $region22: #{cmaxgb2_forward.2} parent=11 // pred_check_branch
        %334 = sbr.rel (%p332) target = $region24
      $region23: #{cmaxgb2_forward.2} parent=11 // pred_region
        _
      $region24: #{cmaxgb2_forward.2} parent=11 // pred_fallthru
        _
      // Predicated region
      $region25: #{cmaxgb2_forward.2} parent=11 // pred_check
        %p335 = pneg %p222
      $region26: #{cmaxgb2_forward.2} parent=11 // pred_check_branch
        %337 = sbr.rel (%p335) target = $region28
      $region27: #{cmaxgb2_forward.2} parent=11 // pred_region
        _
      $region28: #{cmaxgb2_forward.2} parent=11 // pred_fallthru
        _
      // Predicated region
      $region29: #{cmaxgb2_forward.2} parent=11 // pred_check
        %p338 = pneg %p243
      $region30: #{cmaxgb2_forward.2} parent=11 // pred_check_branch
        %340 = sbr.rel (%p338) target = $region32
      $region31: #{cmaxgb2_forward.2} parent=11 // pred_region
        _
      $region32: #{cmaxgb2_forward.2} parent=11 // pred_fallthru
        _
      // Predicated region
      $region33: #{cmaxgb2_forward.2} parent=11 // pred_check
        %p341 = pneg %p264
      $region34: #{cmaxgb2_forward.2} parent=11 // pred_check_branch
        %343 = sbr.rel (%p341) target = $region36
      $region35: #{cmaxgb2_forward.2} parent=11 // pred_region
        _
      $region36: #{cmaxgb2_forward.2} parent=11 // pred_fallthru
        _
      // Predicated region
      $region37: #{cmaxgb2_forward.2} parent=11 // pred_check
        %p344 = pneg %p285
      $region38: #{cmaxgb2_forward.2} parent=11 // pred_check_branch
        %346 = sbr.rel (%p344) target = $region40
      $region39: #{cmaxgb2_forward.2} parent=11 // pred_region
        _
      $region40: #{cmaxgb2_forward.2} parent=11 // pred_fallthru
        _
    $region12: #{cmaxgb2_forward.2} parent=5 // pred_fallthru
      _
    %p347 = scmp.lt.s32.totalorder %s22, 2
    // Predicated region
    $region41: #{cmaxgb2_forward.2} parent=5 // pred_check
      %p348 = pneg %p347
    $region42: #{cmaxgb2_forward.2} parent=5 // pred_check_branch
      %350 = sbr.rel (%p348) target = $region44
    $region43: #{cmaxgb2_forward.2} parent=5 // pred_region
      // Predicated region
      $region45: #{cmaxgb2_forward.2} parent=43 // pred_check
        %p351 = pneg %p46
      $region46: #{cmaxgb2_forward.2} parent=43 // pred_check_branch
        %353 = sbr.rel (%p351) target = $region48
      $region47: #{cmaxgb2_forward.2} parent=43 // pred_region
        %s355 = ssub.s32 1, 0
        %s356 = smul.u32 8, %s355
        %s357 = smul.u32 %s356, 2
        %p358 = scmp.lt.s32.totalorder %s22, 1
        %s359 = scalar_select %p358, %s22, 1
        %p360 = scmp.lt.s32.totalorder 0, 0
        %s361 = scalar_select %p360, 0, 0
        %s362 = smul.addr %s361, 2
        %s363 = smul.addr %s359, 2
        %s364 = sadd.s32 %s362, %s363
        %s365 = smul.addr %s364, 8
        %s366 = scalar_lea.vmem %s7, %s365
        %s368 = ssub.s32 1, 0
        %s369 = smul.u32 8, %s368
        %s370 = smul.u32 %s369, 2
      $region48: #{cmaxgb2_forward.2} parent=43 // pred_fallthru
        _
      // Predicated region
      $region49: #{cmaxgb2_forward.2} parent=43 // pred_check
        %p371 = pneg %p76
      $region50: #{cmaxgb2_forward.2} parent=43 // pred_check_branch
        %373 = sbr.rel (%p371) target = $region52
      $region51: #{cmaxgb2_forward.2} parent=43 // pred_region
        %s375 = ssub.s32 1, 0
        %s376 = smul.u32 8, %s375
        %s377 = smul.u32 %s376, 2
        %p378 = scmp.lt.s32.totalorder %s22, 1
        %s379 = scalar_select %p378, %s22, 1
        %p380 = scmp.lt.s32.totalorder 0, 0
        %s381 = scalar_select %p380, 0, 0
        %s382 = smul.addr %s381, 2
        %s383 = smul.addr %s379, 2
        %s384 = sadd.s32 %s382, %s383
        %s385 = smul.addr %s384, 8
        %s386 = scalar_lea.vmem %s9, %s385
        %s388 = ssub.s32 1, 0
        %s389 = smul.u32 8, %s388
        %s390 = smul.u32 %s389, 2
      $region52: #{cmaxgb2_forward.2} parent=43 // pred_fallthru
        _
      // Predicated region
      $region53: #{cmaxgb2_forward.2} parent=43 // pred_check
        %p391 = pneg %p106
      $region54: #{cmaxgb2_forward.2} parent=43 // pred_check_branch
        %393 = sbr.rel (%p391) target = $region56
      $region55: #{cmaxgb2_forward.2} parent=43 // pred_region
        %s395 = ssub.s32 1, 0
        %s396 = smul.u32 8, %s395
        %s397 = smul.u32 %s396, 2
        %p398 = scmp.lt.s32.totalorder %s22, 1
        %s399 = scalar_select %p398, %s22, 1
        %p400 = scmp.lt.s32.totalorder 0, 0
        %s401 = scalar_select %p400, 0, 0
        %s402 = smul.addr %s401, 2
        %s403 = smul.addr %s399, 2
        %s404 = sadd.s32 %s402, %s403
        %s405 = smul.addr %s404, 8
        %s406 = scalar_lea.vmem %s10, %s405
        %s408 = ssub.s32 1, 0
        %s409 = smul.u32 8, %s408
        %s410 = smul.u32 %s409, 2
      $region56: #{cmaxgb2_forward.2} parent=43 // pred_fallthru
        _
      // Predicated region
      $region57: #{cmaxgb2_forward.2} parent=43 // pred_check
        %p411 = pneg %p132
      $region58: #{cmaxgb2_forward.2} parent=43 // pred_check_branch
        %413 = sbr.rel (%p411) target = $region60
      $region59: #{cmaxgb2_forward.2} parent=43 // pred_region
        %p414 = scmp.lt.s32.totalorder %s22, 1
        %s415 = scalar_select %p414, %s22, 1
        %s416 = smul.addr %s415, 2
        %s417 = smul.addr %s416, 8
        %s418 = scalar_lea.vmem %s11, %s417
      $region60: #{cmaxgb2_forward.2} parent=43 // pred_fallthru
        _
    $region44: #{cmaxgb2_forward.2} parent=5 // pred_fallthru
      _
    %p419 = scmp.le.s32.totalorder 1, %s22
    %p420 = scmp.lt.s32.totalorder %s22, 3
    %p421 = pnand %p419, %p420
    %p422 = pneg %p421
    // Predicated region
    $region61: #{cmaxgb2_forward.2} parent=5 // pred_check
      _
    $region62: #{cmaxgb2_forward.2} parent=5 // pred_check_branch
      %424 = sbr.rel (%p421) target = $region64
    $region63: #{cmaxgb2_forward.2} parent=5 // pred_region
      #allocation22 [shape = 'u8[32768]{0}', space=vmem, size = 0x8000, dematerialized = true, scoped, tag = 'FusionAdapter Buffer %fusion.1 = f32[2,4,16,128]{3,2,1,0:T(8,128)} fusion(%param_7.2, %param_8.2, %param_9.2, %param_10.3, %param_11.2), kind=kLoop, calls=%fused_computation.1.clone, metadata={op_name="jit(cmaxgb2_forward)/concatenate" stack_frame_id=11}']
      %s425 = ssub.s32 %s22, 1
      %s427 = ssub.s32 1, 0
      %s428 = smul.u32 8, %s427
      %s429 = smul.u32 %s428, 2
      %p430 = scmp.lt.s32.totalorder %s27, 1
      %s431 = scalar_select %p430, %s27, 1
      %p432 = scmp.lt.s32.totalorder 0, 0
      %s433 = scalar_select %p432, 0, 0
      %s434 = smul.addr %s433, 2
      %s435 = smul.addr %s431, 2
      %s436 = sadd.s32 %s434, %s435
      %s437 = smul.addr %s436, 8
      %s438 = scalar_lea.vmem %s7, %s437
      %p439 = pneg %p52
      %p440 = pneg %p49
      %s442 = ssub.s32 1, 0
      %s443 = smul.u32 8, %s442
      %s444 = smul.u32 %s443, 2
      %p445 = scmp.lt.s32.totalorder %s27, 1
      %s446 = scalar_select %p445, %s27, 1
      %p447 = scmp.lt.s32.totalorder 0, 0
      %s448 = scalar_select %p447, 0, 0
      %s449 = smul.addr %s448, 2
      %s450 = smul.addr %s446, 2
      %s451 = sadd.s32 %s449, %s450
      %s452 = smul.addr %s451, 8
      %s453 = scalar_lea.vmem %s9, %s452
      %p454 = pneg %p82
      %p455 = pneg %p79
      %s457 = ssub.s32 1, 0
      %s458 = smul.u32 8, %s457
      %s459 = smul.u32 %s458, 2
      %p460 = scmp.lt.s32.totalorder %s27, 1
      %s461 = scalar_select %p460, %s27, 1
      %p462 = scmp.lt.s32.totalorder 0, 0
      %s463 = scalar_select %p462, 0, 0
      %s464 = smul.addr %s463, 2
      %s465 = smul.addr %s461, 2
      %s466 = sadd.s32 %s464, %s465
      %s467 = smul.addr %s466, 8
      %s468 = scalar_lea.vmem %s10, %s467
      %p469 = pneg %p112
      %p470 = pneg %p109
      %p471 = scmp.lt.s32.totalorder %s27, 1
      %s472 = scalar_select %p471, %s27, 1
      %s473 = smul.addr %s472, 2
      %s474 = smul.addr %s473, 8
      %s475 = scalar_lea.vmem %s11, %s474
      %p476 = pneg %p138
      %p477 = pneg %p135
      %p478 = pneg %p159
      %p479 = pneg %p156
      %p480 = pneg %p180
      %p481 = pneg %p177
      %p482 = pneg %p201
      %p483 = pneg %p198
      %p484 = pneg %p222
      %p485 = pneg %p219
      %p486 = pneg %p243
      %p487 = pneg %p240
      %p488 = pneg %p264
      %p489 = pneg %p261
      %p490 = pneg %p285
      %p491 = pneg %p282
      %p492 = pneg %p311
      %p493 = pneg %p308
      %p494 = scmp.lt.s32.totalorder %s27, 1
      %s495 = scalar_select %p494, %s27, 1
      %s496 = smul.addr %s495, 8
      %s497 = scalar_lea.vmem %s12, %s496
      %s499 = ssub.s32 1, 0
      %s500 = smul.u32 8, %s499
      %s501 = smul.u32 %s500, 2
      %p502 = scmp.lt.s32.totalorder %s27, 1
      %s503 = scalar_select %p502, %s27, 1
      %p504 = scmp.lt.s32.totalorder 0, 0
      %s505 = scalar_select %p504, 0, 0
      %s506 = smul.addr %s505, 2
      %s507 = smul.addr %s503, 2
      %s508 = sadd.s32 %s506, %s507
      %s509 = smul.addr %s508, 8
      %s510 = scalar_lea.vmem %s7, %s509
      %s512 = ssub.s32 1, 0
      %s513 = smul.u32 8, %s512
      %s514 = smul.u32 %s513, 2
      %s516 = ssub.s32 1, 0
      %s517 = smul.u32 8, %s516
      %s518 = smul.u32 %s517, 2
      %p519 = scmp.lt.s32.totalorder %s27, 1
      %s520 = scalar_select %p519, %s27, 1
      %p521 = scmp.lt.s32.totalorder 0, 0
      %s522 = scalar_select %p521, 0, 0
      %s523 = smul.addr %s522, 2
      %s524 = smul.addr %s520, 2
      %s525 = sadd.s32 %s523, %s524
      %s526 = smul.addr %s525, 8
      %s527 = scalar_lea.vmem %s9, %s526
      %s529 = ssub.s32 1, 0
      %s530 = smul.u32 8, %s529
      %s531 = smul.u32 %s530, 2
      %s533 = ssub.s32 1, 0
      %s534 = smul.u32 8, %s533
      %s535 = smul.u32 %s534, 2
      %p536 = scmp.lt.s32.totalorder %s27, 1
      %s537 = scalar_select %p536, %s27, 1
      %p538 = scmp.lt.s32.totalorder 0, 0
      %s539 = scalar_select %p538, 0, 0
      %s540 = smul.addr %s539, 2
      %s541 = smul.addr %s537, 2
      %s542 = sadd.s32 %s540, %s541
      %s543 = smul.addr %s542, 8
      %s544 = scalar_lea.vmem %s10, %s543
      %s546 = ssub.s32 1, 0
      %s547 = smul.u32 8, %s546
      %s548 = smul.u32 %s547, 2
      %p549 = scmp.lt.s32.totalorder %s27, 1
      %s550 = scalar_select %p549, %s27, 1
      %s551 = smul.addr %s550, 2
      %s552 = smul.addr %s551, 8
      %s553 = scalar_lea.vmem %s11, %s552
      %p554 = scmp.lt.s32.totalorder %s27, 1
      %s555 = scalar_select %p554, %s27, 1
      %s556 = smul.addr %s555, 8
      %s557 = scalar_lea.vmem %s12, %s556
      %s558 = ssub.s32 0, 0
      %p559 = scmp.lt.s32.totalorder %s558, 0
      %s560 = scalar_select %p559, 0, 255
      %v561 = vld [vmem:[%s510] sm:%s560]
      %s562 = ssub.s32 0, 0
      %p563 = scmp.lt.s32.totalorder %s562, 0
      %s564 = scalar_select %p563, 0, 255
      %v565 = vld [vmem:[%s527] sm:%s564]
      %s566 = ssub.s32 0, 0
      %p567 = scmp.lt.s32.totalorder %s566, 0
      %s568 = scalar_select %p567, 0, 255
      %v569 = vld [vmem:[%s544] sm:%s568]
      %v570 = vld [vmem:[%s553] sm:$0xff]
      %571 = xla_tuple %v570, %v19
      %572 = xla_tuple %571
      %v573 = vmax.f32 %v570, %v19
      %574 = xla_tuple %v573
      %575 = xla_tuple %v573, %v18
      %576 = xla_tuple %575
      %v577 = vmax.f32 %v573, %v18
      %578 = xla_tuple %v577
      %579 = xla_tuple %v577, %v17
      %580 = xla_tuple %579
      %v581 = vmax.f32 %v577, %v17
      %582 = xla_tuple %v581
      %s584 = ssub.s32 256, 1
      %585 = vst [vmem:[#allocation22] sm:%s584] %v581
      %s586 = scalar_lea.vmem %s510, 8
      %s587 = ssub.s32 0, 0
      %p588 = scmp.lt.s32.totalorder %s587, 0
      %s589 = scalar_select %p588, 0, 255
      %v590 = vld [vmem:[%s586] sm:%s589]
      %s591 = scalar_lea.vmem %s527, 8
      %s592 = ssub.s32 0, 0
      %p593 = scmp.lt.s32.totalorder %s592, 0
      %s594 = scalar_select %p593, 0, 255
      %v595 = vld [vmem:[%s591] sm:%s594]
      %s596 = scalar_lea.vmem %s544, 8
      %s597 = ssub.s32 0, 0
      %p598 = scmp.lt.s32.totalorder %s597, 0
      %s599 = scalar_select %p598, 0, 255
      %v600 = vld [vmem:[%s596] sm:%s599]
      %s601 = scalar_lea.vmem %s553, 8
      %v602 = vld [vmem:[%s601] sm:$0xff]
      %603 = xla_tuple %v602, %v19
      %604 = xla_tuple %603
      %v605 = vmax.f32 %v602, %v19
      %606 = xla_tuple %v605
      %607 = xla_tuple %v605, %v18
      %608 = xla_tuple %607
      %v609 = vmax.f32 %v605, %v18
      %610 = xla_tuple %v609
      %611 = xla_tuple %v609, %v17
      %612 = xla_tuple %611
      %v613 = vmax.f32 %v609, %v17
      %614 = xla_tuple %v613
      %s615 = scalar_lea.vmem [#allocation22], 8
      %s617 = ssub.s32 256, 1
      %618 = vst [vmem:[%s615] sm:%s617] %v613
      %619 = xla_tuple %v20, %v569
      %620 = xla_tuple %619
      %v621 = vmax.f32 %v20, %v569
      %622 = xla_tuple %v621
      %623 = xla_tuple %v621, %v18
      %624 = xla_tuple %623
      %v625 = vmax.f32 %v621, %v18
      %626 = xla_tuple %v625
      %627 = xla_tuple %v625, %v17
      %628 = xla_tuple %627
      %v629 = vmax.f32 %v625, %v17
      %630 = xla_tuple %v629
      %s631 = scalar_lea.vmem [#allocation22], 16
      %s633 = ssub.s32 256, 1
      %634 = vst [vmem:[%s631] sm:%s633] %v629
      %s635 = scalar_lea.vmem %s510, 8
      %s636 = scalar_lea.vmem %s527, 8
      %s637 = scalar_lea.vmem %s544, 8
      %638 = xla_tuple %v20, %v600
      %639 = xla_tuple %638
      %v640 = vmax.f32 %v20, %v600
      %641 = xla_tuple %v640
      %642 = xla_tuple %v640, %v18
      %643 = xla_tuple %642
      %v644 = vmax.f32 %v640, %v18
      %645 = xla_tuple %v644
      %646 = xla_tuple %v644, %v17
      %647 = xla_tuple %646
      %v648 = vmax.f32 %v644, %v17
      %649 = xla_tuple %v648
      %s650 = scalar_lea.vmem [#allocation22], 24
      %s652 = ssub.s32 256, 1
      %653 = vst [vmem:[%s650] sm:%s652] %v648
      %654 = xla_tuple %v20, %v19
      %655 = xla_tuple %654
      %v656 = vmax.f32 %v20, %v19
      %657 = xla_tuple %v656
      %658 = xla_tuple %v656, %v565
      %659 = xla_tuple %658
      %v660 = vmax.f32 %v656, %v565
      %661 = xla_tuple %v660
      %662 = xla_tuple %v660, %v17
      %663 = xla_tuple %662
      %v664 = vmax.f32 %v660, %v17
      %665 = xla_tuple %v664
      %s666 = scalar_lea.vmem [#allocation22], 32
      %s668 = ssub.s32 256, 1
      %669 = vst [vmem:[%s666] sm:%s668] %v664
      %s670 = scalar_lea.vmem %s510, 8
      %s671 = scalar_lea.vmem %s527, 8
      %s672 = scalar_lea.vmem %s544, 8
      %673 = xla_tuple %v20, %v19
      %674 = xla_tuple %673
      %v675 = vmax.f32 %v20, %v19
      %676 = xla_tuple %v675
      %677 = xla_tuple %v675, %v595
      %678 = xla_tuple %677
      %v679 = vmax.f32 %v675, %v595
      %680 = xla_tuple %v679
      %681 = xla_tuple %v679, %v17
      %682 = xla_tuple %681
      %v683 = vmax.f32 %v679, %v17
      %684 = xla_tuple %v683
      %s685 = scalar_lea.vmem [#allocation22], 40
      %s687 = ssub.s32 256, 1
      %688 = vst [vmem:[%s685] sm:%s687] %v683
      %689 = xla_tuple %v20, %v19
      %690 = xla_tuple %689
      %v691 = vmax.f32 %v20, %v19
      %692 = xla_tuple %v691
      %693 = xla_tuple %v691, %v18
      %694 = xla_tuple %693
      %v695 = vmax.f32 %v691, %v18
      %696 = xla_tuple %v695
      %697 = xla_tuple %v695, %v561
      %698 = xla_tuple %697
      %v699 = vmax.f32 %v695, %v561
      %700 = xla_tuple %v699
      %s701 = scalar_lea.vmem [#allocation22], 48
      %s703 = ssub.s32 256, 1
      %704 = vst [vmem:[%s701] sm:%s703] %v699
      %s705 = scalar_lea.vmem %s510, 8
      %s706 = scalar_lea.vmem %s527, 8
      %s707 = scalar_lea.vmem %s544, 8
      %708 = xla_tuple %v20, %v19
      %709 = xla_tuple %708
      %v710 = vmax.f32 %v20, %v19
      %711 = xla_tuple %v710
      %712 = xla_tuple %v710, %v18
      %713 = xla_tuple %712
      %v714 = vmax.f32 %v710, %v18
      %715 = xla_tuple %v714
      %716 = xla_tuple %v714, %v590
      %717 = xla_tuple %716
      %v718 = vmax.f32 %v714, %v590
      %719 = xla_tuple %v718
      %s720 = scalar_lea.vmem [#allocation22], 56
      %s722 = ssub.s32 256, 1
      %723 = vst [vmem:[%s720] sm:%s722] %v718
      %v724 = vld [vmem:[%s1] sm:$0xff]
      %v725 = vld [vmem:[%s1 + $0x8] sm:$0x1]
      %v726 = vld [vmem:[%s2] sm:$0x1]
      %v727 = vld [vmem:[%s3] sm:$0xff]
      %v728 = vld [vmem:[%s3 + $0x8] sm:$0x1]
      %v729 = vld [vmem:[%s3 + $0x10] sm:$0xff]
      %v730 = vld [vmem:[%s3 + $0x18] sm:$0x1]
      %v731 = vld [vmem:[%s3 + $0x20] sm:$0xff]
      %v732 = vld [vmem:[%s3 + $0x28] sm:$0x1]
      %v733 = vld [vmem:[%s3 + $0x30] sm:$0xff]
      %v734 = vld [vmem:[%s3 + $0x38] sm:$0x1]
      %v735 = vld [vmem:[%s4] sm:$0xf]
      %v736 = vld [vmem:[%s5] sm:$0xff]
      %v737 = vld [vmem:[%s5 + $0x8] sm:$0x1]
      %v738 = vld [vmem:[%s5 + $0x20] sm:$0xff]
      %v739 = vld [vmem:[%s5 + $0x28] sm:$0x1]
      %v740 = vld [vmem:[%s6] sm:$0x7]
      %v741 = vlaneseq
      %v742 = vshrl.u32 %v741, 7
      %v743 = vadd.s32 %v742, 8
      %v744 = vld [vmem:[%s0] sm:$0x1]
      %v745 = vperm.slane %v744, 0
      %v746 = vmul.u32 %v742, 2
      %v747 = vmul.u32 %v743, 2
      %v748 = vsub.s32 %v746, 3
      %v749 = vsub.s32 %v747, 3
      %vm750 = vcmp.ge.s32.totalorder %v748, 0
      %vm751 = vcmp.ge.s32.totalorder %v749, 0
      %vm752 = vcmp.lt.s32.totalorder %v748, 16
      %vm753 = vcmp.lt.s32.totalorder %v749, 16
      %vm754 = vmand %vm750, %vm752
      %vm755 = vmand %vm751, %vm753
      %v756 = vadd.s32 %v746, 1
      %v757 = vadd.s32 %v747, 1
      %v758 = vsub.s32 %v756, 3
      %v759 = vsub.s32 %v757, 3
      %vm760 = vcmp.ge.s32.totalorder %v758, 0
      %vm761 = vcmp.ge.s32.totalorder %v759, 0
      %vm762 = vcmp.lt.s32.totalorder %v758, 16
      %vm763 = vcmp.lt.s32.totalorder %v759, 16
      %vm764 = vmand %vm760, %vm762
      %vm765 = vmand %vm761, %vm763
      %v766 = vadd.s32 %v746, 2
      %v767 = vadd.s32 %v747, 2
      %v768 = vsub.s32 %v766, 3
      %v769 = vsub.s32 %v767, 3
      %vm770 = vcmp.ge.s32.totalorder %v768, 0
      %vm771 = vcmp.ge.s32.totalorder %v769, 0
      %vm772 = vcmp.lt.s32.totalorder %v768, 16
      %vm773 = vcmp.lt.s32.totalorder %v769, 16
      %vm774 = vmand %vm770, %vm772
      %vm775 = vmand %vm771, %vm773
      %v776 = vmul.u32 %v745, 2
      %v777 = vsub.s32 %v776, 3
      %vm778 = vcmp.ge.s32.totalorder %v777, 0
      %vm779 = vcmp.lt.s32.totalorder %v777, 16
      %vm780 = vmand %vm778, %vm779
      %v781 = vadd.s32 %v776, 1
      %v782 = vsub.s32 %v781, 3
      %vm783 = vcmp.ge.s32.totalorder %v782, 0
      %vm784 = vcmp.lt.s32.totalorder %v782, 16
      %vm785 = vmand %vm783, %vm784
      %v786 = vadd.s32 %v776, 2
      %v787 = vsub.s32 %v786, 3
      %vm788 = vcmp.ge.s32.totalorder %v787, 0
      %vm789 = vcmp.lt.s32.totalorder %v787, 16
      %vm790 = vmand %vm788, %vm789
      %vm791 = vmand %vm754, %vm780
      %vm792 = vmand %vm755, %vm780
      %vm793 = vmand %vm754, %vm785
      %vm794 = vmand %vm755, %vm785
      %vm795 = vmand %vm754, %vm790
      %vm796 = vmand %vm755, %vm790
      %vm797 = vmand %vm764, %vm780
      %vm798 = vmand %vm765, %vm780
      %vm799 = vmand %vm764, %vm785
      %vm800 = vmand %vm765, %vm785
      %vm801 = vmand %vm764, %vm790
      %vm802 = vmand %vm765, %vm790
      %vm803 = vmand %vm774, %vm780
      %vm804 = vmand %vm775, %vm780
      %vm805 = vmand %vm774, %vm785
      %vm806 = vmand %vm775, %vm785
      %vm807 = vmand %vm774, %vm790
      %vm808 = vmand %vm775, %vm790
      %vm809 = vcmp.ge.s32.totalorder %v742, 1
      %vm810 = vcmp.ge.s32.totalorder %v743, 1
      %vm811 = vcmp.le.s32.totalorder %v742, 8
      %vm812 = vcmp.le.s32.totalorder %v743, 8
      %vm813 = vmand %vm809, %vm811
      %vm814 = vmand %vm810, %vm812
      %vm815 = vcmp.ge.s32.totalorder %v745, 1
      %vm816 = vmand %vm813, %vm815
      %vm817 = vmand %vm814, %vm815
      %vm818 = vcmp.le.s32.totalorder %v745, 8
      %vm819 = vmand %vm816, %vm818
      %vm820 = vmand %vm817, %vm818
      %v821 = vsel %vm819, 1, 0
      %v822 = vsel %vm820, 1, 0
      %v823 = vcvt.s32.f32 %v821
      %v824 = vcvt.s32.f32 %v822
      %v825 = vld [vmem:[#allocation22] sm:$0xff]
      %v826 = vld [vmem:[#allocation22 + $0x8] sm:$0xff]
      %v827 = vld [vmem:[#allocation22 + $0x10] sm:$0xff]
      %v828 = vld [vmem:[#allocation22 + $0x18] sm:$0xff]
      %v829 = vld [vmem:[#allocation22 + $0x20] sm:$0xff]
      %v830 = vld [vmem:[#allocation22 + $0x28] sm:$0xff]
      %v831 = vld [vmem:[#allocation22 + $0x30] sm:$0xff]
      %v832 = vld [vmem:[#allocation22 + $0x38] sm:$0xff]
      %833 = vrot.lane.b32.xlu0 %v825, 120
      %v834 = vpop.permute.xlu0 %833
      %835 = vrot.lane.b32.xlu0 %v826, 120
      %v836 = vpop.permute.xlu0 %835
      %837 = vrot.lane.b32.xlu0 %v829, 120
      %v838 = vpop.permute.xlu0 %837
      %839 = vrot.lane.b32.xlu0 %v830, 120
      %v840 = vpop.permute.xlu0 %839
      %v841 = vrot.slane %v825, 1
      %v842 = vrot.slane %v826, 1
      %vm843 = vcmp.lt.s32.totalorder %v742, 7
      %v844 = vsel %vm843, %v841, %v842
      %v845 = vsel %vm843, %v842, %v841
      %v846 = vrot.slane %v827, 1
      %v847 = vrot.slane %v828, 1
      %v848 = vsel %vm843, %v846, %v847
      %v849 = vsel %vm843, %v847, %v846
      %850 = vrot.lane.b32.xlu0 %v844, 120
      %v851 = vpop.permute.xlu0 %850
      %852 = vrot.lane.b32.xlu0 %v845, 120
      %v853 = vpop.permute.xlu0 %852
      %v854 = vsel %vm791, %v825, -1e+30
      %v855 = vsel %vm792, %v826, -1e+30
      %v856 = vsel %vm793, %v827, -1e+30
      %v857 = vsel %vm794, %v828, -1e+30
      %v858 = vmax.f32 %v854, %v856
      %v859 = vmax.f32 %v855, %v857
      %v860 = vsel %vm795, %v834, -1e+30
      %v861 = vsel %vm796, %v836, -1e+30
      %v862 = vmax.f32 %v858, %v860
      %v863 = vmax.f32 %v859, %v861
      %v864 = vsel %vm797, %v829, -1e+30
      %v865 = vsel %vm798, %v830, -1e+30
      %v866 = vmax.f32 %v862, %v864
      %v867 = vmax.f32 %v863, %v865
      %v868 = vsel %vm799, %v831, -1e+30
      %v869 = vsel %vm800, %v832, -1e+30
      %v870 = vmax.f32 %v866, %v868
      %v871 = vmax.f32 %v867, %v869
      %v872 = vsel %vm801, %v838, -1e+30
      %v873 = vsel %vm802, %v840, -1e+30
      %v874 = vmax.f32 %v870, %v872
      %v875 = vmax.f32 %v871, %v873
      %v876 = vsel %vm803, %v844, -1e+30
      %v877 = vsel %vm804, %v845, -1e+30
      %v878 = vmax.f32 %v874, %v876
      %v879 = vmax.f32 %v875, %v877
      %v880 = vsel %vm805, %v848, -1e+30
      %v881 = vsel %vm806, %v849, -1e+30
      %v882 = vmax.f32 %v878, %v880
      %v883 = vmax.f32 %v879, %v881
      %v884 = vsel %vm807, %v851, -1e+30
      %v885 = vsel %vm808, %v853, -1e+30
      %v886 = vmax.f32 %v882, %v884
      %v887 = vmax.f32 %v883, %v885
      %v888 = vperm.slane %v724, 0
      %v889 = vmul.f32 %v825, %v888
      %v890 = vmul.f32 %v826, %v888
      %v891 = vperm.slane %v724, 1
      %v892 = vmul.f32 %v827, %v891
      %v893 = vmul.f32 %v828, %v891
      %v894 = vadd.f32 %v889, %v892
      %v895 = vadd.f32 %v890, %v893
      %v896 = vperm.slane %v724, 2
      %v897 = vmul.f32 %v834, %v896
      %v898 = vmul.f32 %v836, %v896
      %v899 = vadd.f32 %v894, %v897
      %v900 = vadd.f32 %v895, %v898
      %v901 = vperm.slane %v724, 3
      %v902 = vmul.f32 %v829, %v901
      %v903 = vmul.f32 %v830, %v901
      %v904 = vadd.f32 %v899, %v902
      %v905 = vadd.f32 %v900, %v903
      %v906 = vperm.slane %v724, 4
      %v907 = vmul.f32 %v831, %v906
      %v908 = vmul.f32 %v832, %v906
      %v909 = vadd.f32 %v904, %v907
      %v910 = vadd.f32 %v905, %v908
      %v911 = vperm.slane %v724, 5
      %v912 = vmul.f32 %v838, %v911
      %v913 = vmul.f32 %v840, %v911
      %v914 = vadd.f32 %v909, %v912
      %v915 = vadd.f32 %v910, %v913
      %v916 = vperm.slane %v724, 6
      %v917 = vmul.f32 %v844, %v916
      %v918 = vmul.f32 %v845, %v916
      %v919 = vadd.f32 %v914, %v917
      %v920 = vadd.f32 %v915, %v918
      %v921 = vperm.slane %v724, 7
      %v922 = vmul.f32 %v848, %v921
      %v923 = vmul.f32 %v849, %v921
      %v924 = vadd.f32 %v919, %v922
      %v925 = vadd.f32 %v920, %v923
      %v926 = vperm.slane %v725, 0
      %v927 = vmul.f32 %v851, %v926
      %v928 = vmul.f32 %v853, %v926
      %v929 = vadd.f32 %v924, %v927
      %v930 = vadd.f32 %v925, %v928
      %v932 = vperm.slane %v726, 0
      %v934 = vadd.f32 %v929, %v932
      %v935 = vadd.f32 %v930, %v932
      %v936 = vmul.f32 %v886, %v934
      %v937 = vmul.f32 %v887, %v935
      %v938 = vperm.slane %v736, 0
      %v939 = vmul.f32 %v825, %v938
      %v940 = vmul.f32 %v826, %v938
      %v941 = vperm.slane %v736, 1
      %v942 = vmul.f32 %v827, %v941
      %v943 = vmul.f32 %v828, %v941
      %v944 = vadd.f32 %v939, %v942
      %v945 = vadd.f32 %v940, %v943
      %v946 = vperm.slane %v736, 2
      %v947 = vmul.f32 %v834, %v946
      %v948 = vmul.f32 %v836, %v946
      %v949 = vadd.f32 %v944, %v947
      %v950 = vadd.f32 %v945, %v948
      %v951 = vperm.slane %v736, 3
      %v952 = vmul.f32 %v829, %v951
      %v953 = vmul.f32 %v830, %v951
      %v954 = vadd.f32 %v949, %v952
      %v955 = vadd.f32 %v950, %v953
      %v956 = vperm.slane %v736, 4
      %v957 = vmul.f32 %v831, %v956
      %v958 = vmul.f32 %v832, %v956
      %v959 = vadd.f32 %v954, %v957
      %v960 = vadd.f32 %v955, %v958
      %v961 = vperm.slane %v736, 5
      %v962 = vmul.f32 %v838, %v961
      %v963 = vmul.f32 %v840, %v961
      %v964 = vadd.f32 %v959, %v962
      %v965 = vadd.f32 %v960, %v963
      %v966 = vperm.slane %v736, 6
      %v967 = vmul.f32 %v844, %v966
      %v968 = vmul.f32 %v845, %v966
      %v969 = vadd.f32 %v964, %v967
      %v970 = vadd.f32 %v965, %v968
      %v971 = vperm.slane %v736, 7
      %v972 = vmul.f32 %v848, %v971
      %v973 = vmul.f32 %v849, %v971
      %v974 = vadd.f32 %v969, %v972
      %v975 = vadd.f32 %v970, %v973
      %v976 = vperm.slane %v737, 0
      %v977 = vmul.f32 %v851, %v976
      %v978 = vmul.f32 %v853, %v976
      %v979 = vadd.f32 %v974, %v977
      %v980 = vadd.f32 %v975, %v978
      %v981 = vperm.slane %v740, 0
      %v982 = vadd.f32 %v979, %v981
      %v983 = vadd.f32 %v980, %v981
      %v984 = vxor.u32 %v982, 2147483648
      %v985 = vxor.u32 %v983, 2147483648
      %v986 = vmul.f32 %v984, 1.442695
      %v987 = vpow.pop %v986
      %v988 = vmul.f32 %v985, 1.442695
      %v989 = vpow.pop %v988
      %v990 = vadd.f32 %v987, 1.0
      %v991 = vadd.f32 %v989, 1.0
      %v992 = vrcp.pop %v990
      %v993 = vmul.f32 %v990, %v992
      %v994 = vsub.f32 1.0, %v993
      %v995 = vmul.f32 %v992, %v994
      %v996 = vadd.f32 %v992, %v995
      %vm997 = vweird.f32 %v990
      %vm998 = vweird.f32 %v992
      %vm999 = vmor %vm997, %vm998
      %v1000 = vsel %vm999, %v992, %v996
      %v1001 = vand.u32 2147483647, %v990
      %vm1002 = vcmp.eq.f32.partialorder %v1001, 8.507059e+37
      %v1003 = vand.u32 %v990, 2147483648
      %v1004 = vor.u32 1.1754944e-38, %v1003
      %v1005 = vsel %vm1002, %v1004, %v1000
      %v1006 = vmul.f32 1.0, %v1005
      %v1007 = vrcp.pop %v991
      %v1008 = vmul.f32 %v991, %v1007
      %v1009 = vsub.f32 1.0, %v1008
      %v1010 = vmul.f32 %v1007, %v1009
      %v1011 = vadd.f32 %v1007, %v1010
      %vm1012 = vweird.f32 %v991
      %vm1013 = vweird.f32 %v1007
      %vm1014 = vmor %vm1012, %vm1013
      %v1015 = vsel %vm1014, %v1007, %v1011
      %v1016 = vand.u32 2147483647, %v991
      %vm1017 = vcmp.eq.f32.partialorder %v1016, 8.507059e+37
      %v1018 = vand.u32 %v991, 2147483648
      %v1019 = vor.u32 1.1754944e-38, %v1018
      %v1020 = vsel %vm1017, %v1019, %v1015
      %v1021 = vmul.f32 1.0, %v1020
      %v1022 = vperm.slane %v727, 0
      %v1023 = vmul.f32 %v825, %v1022
      %v1024 = vmul.f32 %v826, %v1022
      %v1025 = vperm.slane %v727, 1
      %v1026 = vmul.f32 %v827, %v1025
      %v1027 = vmul.f32 %v828, %v1025
      %v1028 = vadd.f32 %v1023, %v1026
      %v1029 = vadd.f32 %v1024, %v1027
      %v1030 = vperm.slane %v727, 2
      %v1031 = vmul.f32 %v834, %v1030
      %v1032 = vmul.f32 %v836, %v1030
      %v1033 = vadd.f32 %v1028, %v1031
      %v1034 = vadd.f32 %v1029, %v1032
      %v1035 = vperm.slane %v727, 3
      %v1036 = vmul.f32 %v829, %v1035
      %v1037 = vmul.f32 %v830, %v1035
      %v1038 = vadd.f32 %v1033, %v1036
      %v1039 = vadd.f32 %v1034, %v1037
      %v1040 = vperm.slane %v727, 4
      %v1041 = vmul.f32 %v831, %v1040
      %v1042 = vmul.f32 %v832, %v1040
      %v1043 = vadd.f32 %v1038, %v1041
      %v1044 = vadd.f32 %v1039, %v1042
      %v1045 = vperm.slane %v727, 5
      %v1046 = vmul.f32 %v838, %v1045
      %v1047 = vmul.f32 %v840, %v1045
      %v1048 = vadd.f32 %v1043, %v1046
      %v1049 = vadd.f32 %v1044, %v1047
      %v1050 = vperm.slane %v727, 6
      %v1051 = vmul.f32 %v844, %v1050
      %v1052 = vmul.f32 %v845, %v1050
      %v1053 = vadd.f32 %v1048, %v1051
      %v1054 = vadd.f32 %v1049, %v1052
      %v1055 = vperm.slane %v727, 7
      %v1056 = vmul.f32 %v848, %v1055
      %v1057 = vmul.f32 %v849, %v1055
      %v1058 = vadd.f32 %v1053, %v1056
      %v1059 = vadd.f32 %v1054, %v1057
      %v1060 = vperm.slane %v728, 0
      %v1061 = vmul.f32 %v851, %v1060
      %v1062 = vmul.f32 %v853, %v1060
      %v1063 = vadd.f32 %v1058, %v1061
      %v1064 = vadd.f32 %v1059, %v1062
      %v1065 = vperm.slane %v735, 0
      %v1066 = vadd.f32 %v1063, %v1065
      %v1067 = vadd.f32 %v1064, %v1065
      %v1068 = vperm.slane %v729, 0
      %v1069 = vmul.f32 %v825, %v1068
      %v1070 = vmul.f32 %v826, %v1068
      %v1071 = vperm.slane %v729, 1
      %v1072 = vmul.f32 %v827, %v1071
      %v1073 = vmul.f32 %v828, %v1071
      %v1074 = vadd.f32 %v1069, %v1072
      %v1075 = vadd.f32 %v1070, %v1073
      %v1076 = vperm.slane %v729, 2
      %v1077 = vmul.f32 %v834, %v1076
      %v1078 = vmul.f32 %v836, %v1076
      %v1079 = vadd.f32 %v1074, %v1077
      %v1080 = vadd.f32 %v1075, %v1078
      %v1081 = vperm.slane %v729, 3
      %v1082 = vmul.f32 %v829, %v1081
      %v1083 = vmul.f32 %v830, %v1081
      %v1084 = vadd.f32 %v1079, %v1082
      %v1085 = vadd.f32 %v1080, %v1083
      %v1086 = vperm.slane %v729, 4
      %v1087 = vmul.f32 %v831, %v1086
      %v1088 = vmul.f32 %v832, %v1086
      %v1089 = vadd.f32 %v1084, %v1087
      %v1090 = vadd.f32 %v1085, %v1088
      %v1091 = vperm.slane %v729, 5
      %v1092 = vmul.f32 %v838, %v1091
      %v1093 = vmul.f32 %v840, %v1091
      %v1094 = vadd.f32 %v1089, %v1092
      %v1095 = vadd.f32 %v1090, %v1093
      %v1096 = vperm.slane %v729, 6
      %v1097 = vmul.f32 %v844, %v1096
      %v1098 = vmul.f32 %v845, %v1096
      %v1099 = vadd.f32 %v1094, %v1097
      %v1100 = vadd.f32 %v1095, %v1098
      %v1101 = vperm.slane %v729, 7
      %v1102 = vmul.f32 %v848, %v1101
      %v1103 = vmul.f32 %v849, %v1101
      %v1104 = vadd.f32 %v1099, %v1102
      %v1105 = vadd.f32 %v1100, %v1103
      %v1106 = vperm.slane %v730, 0
      %v1107 = vmul.f32 %v851, %v1106
      %v1108 = vmul.f32 %v853, %v1106
      %v1109 = vadd.f32 %v1104, %v1107
      %v1110 = vadd.f32 %v1105, %v1108
      %v1111 = vperm.slane %v735, 1
      %v1112 = vadd.f32 %v1109, %v1111
      %v1113 = vadd.f32 %v1110, %v1111
      %v1114 = vsub.f32 %v1066, %v1112
      %v1115 = vsub.f32 %v1067, %v1113
      %v1116 = vmul.f32 %v1006, %v1114
      %v1117 = vmul.f32 %v1021, %v1115
      %v1118 = vadd.f32 %v1112, %v1116
      %v1119 = vadd.f32 %v1113, %v1117
      %v1120 = vmul.f32 %v1118, %v823
      %v1121 = vmul.f32 %v1119, %v824
      %v1122 = vperm.slane %v738, 0
      %v1123 = vmul.f32 %v825, %v1122
      %v1124 = vmul.f32 %v826, %v1122
      %v1125 = vperm.slane %v738, 1
      %v1126 = vmul.f32 %v827, %v1125
      %v1127 = vmul.f32 %v828, %v1125
      %v1128 = vadd.f32 %v1123, %v1126
      %v1129 = vadd.f32 %v1124, %v1127
      %v1130 = vperm.slane %v738, 2
      %v1131 = vmul.f32 %v834, %v1130
      %v1132 = vmul.f32 %v836, %v1130
      %v1133 = vadd.f32 %v1128, %v1131
      %v1134 = vadd.f32 %v1129, %v1132
      %v1135 = vperm.slane %v738, 3
      %v1136 = vmul.f32 %v829, %v1135
      %v1137 = vmul.f32 %v830, %v1135
      %v1138 = vadd.f32 %v1133, %v1136
      %v1139 = vadd.f32 %v1134, %v1137
      %v1140 = vperm.slane %v738, 4
      %v1141 = vmul.f32 %v831, %v1140
      %v1142 = vmul.f32 %v832, %v1140
      %v1143 = vadd.f32 %v1138, %v1141
      %v1144 = vadd.f32 %v1139, %v1142
      %v1145 = vperm.slane %v738, 5
      %v1146 = vmul.f32 %v838, %v1145
      %v1147 = vmul.f32 %v840, %v1145
      %v1148 = vadd.f32 %v1143, %v1146
      %v1149 = vadd.f32 %v1144, %v1147
      %v1150 = vperm.slane %v738, 6
      %v1151 = vmul.f32 %v844, %v1150
      %v1152 = vmul.f32 %v845, %v1150
      %v1153 = vadd.f32 %v1148, %v1151
      %v1154 = vadd.f32 %v1149, %v1152
      %v1155 = vperm.slane %v738, 7
      %v1156 = vmul.f32 %v848, %v1155
      %v1157 = vmul.f32 %v849, %v1155
      %v1158 = vadd.f32 %v1153, %v1156
      %v1159 = vadd.f32 %v1154, %v1157
      %v1160 = vperm.slane %v739, 0
      %v1161 = vmul.f32 %v851, %v1160
      %v1162 = vmul.f32 %v853, %v1160
      %v1163 = vadd.f32 %v1158, %v1161
      %v1164 = vadd.f32 %v1159, %v1162
      %v1165 = vperm.slane %v740, 1
      %v1166 = vadd.f32 %v1163, %v1165
      %v1167 = vadd.f32 %v1164, %v1165
      %v1168 = vxor.u32 %v1166, 2147483648
      %v1169 = vxor.u32 %v1167, 2147483648
      %v1170 = vmul.f32 %v1168, 1.442695
      %v1171 = vpow.pop %v1170
      %v1172 = vmul.f32 %v1169, 1.442695
      %v1173 = vpow.pop %v1172
      %v1174 = vadd.f32 %v1171, 1.0
      %v1175 = vadd.f32 %v1173, 1.0
      %v1176 = vrcp.pop %v1174
      %v1177 = vmul.f32 %v1174, %v1176
      %v1178 = vsub.f32 1.0, %v1177
      %v1179 = vmul.f32 %v1176, %v1178
      %v1180 = vadd.f32 %v1176, %v1179
      %vm1181 = vweird.f32 %v1174
      %vm1182 = vweird.f32 %v1176
      %vm1183 = vmor %vm1181, %vm1182
      %v1184 = vsel %vm1183, %v1176, %v1180
      %v1185 = vand.u32 2147483647, %v1174
      %vm1186 = vcmp.eq.f32.partialorder %v1185, 8.507059e+37
      %v1187 = vand.u32 %v1174, 2147483648
      %v1188 = vor.u32 1.1754944e-38, %v1187
      %v1189 = vsel %vm1186, %v1188, %v1184
      %v1190 = vmul.f32 1.0, %v1189
      %v1191 = vrcp.pop %v1175
      %v1192 = vmul.f32 %v1175, %v1191
      %v1193 = vsub.f32 1.0, %v1192
      %v1194 = vmul.f32 %v1191, %v1193
      %v1195 = vadd.f32 %v1191, %v1194
      %vm1196 = vweird.f32 %v1175
      %vm1197 = vweird.f32 %v1191
      %vm1198 = vmor %vm1196, %vm1197
      %v1199 = vsel %vm1198, %v1191, %v1195
      %v1200 = vand.u32 2147483647, %v1175
      %vm1201 = vcmp.eq.f32.partialorder %v1200, 8.507059e+37
      %v1202 = vand.u32 %v1175, 2147483648
      %v1203 = vor.u32 1.1754944e-38, %v1202
      %v1204 = vsel %vm1201, %v1203, %v1199
      %v1205 = vmul.f32 1.0, %v1204
      %v1206 = vperm.slane %v731, 0
      %v1207 = vmul.f32 %v825, %v1206
      %v1208 = vmul.f32 %v826, %v1206
      %v1209 = vperm.slane %v731, 1
      %v1210 = vmul.f32 %v827, %v1209
      %v1211 = vmul.f32 %v828, %v1209
      %v1212 = vadd.f32 %v1207, %v1210
      %v1213 = vadd.f32 %v1208, %v1211
      %v1214 = vperm.slane %v731, 2
      %v1215 = vmul.f32 %v834, %v1214
      %v1216 = vmul.f32 %v836, %v1214
      %v1217 = vadd.f32 %v1212, %v1215
      %v1218 = vadd.f32 %v1213, %v1216
      %v1219 = vperm.slane %v731, 3
      %v1220 = vmul.f32 %v829, %v1219
      %v1221 = vmul.f32 %v830, %v1219
      %v1222 = vadd.f32 %v1217, %v1220
      %v1223 = vadd.f32 %v1218, %v1221
      %v1224 = vperm.slane %v731, 4
      %v1225 = vmul.f32 %v831, %v1224
      %v1226 = vmul.f32 %v832, %v1224
      %v1227 = vadd.f32 %v1222, %v1225
      %v1228 = vadd.f32 %v1223, %v1226
      %v1229 = vperm.slane %v731, 5
      %v1230 = vmul.f32 %v838, %v1229
      %v1231 = vmul.f32 %v840, %v1229
      %v1232 = vadd.f32 %v1227, %v1230
      %v1233 = vadd.f32 %v1228, %v1231
      %v1234 = vperm.slane %v731, 6
      %v1235 = vmul.f32 %v844, %v1234
      %v1236 = vmul.f32 %v845, %v1234
      %v1237 = vadd.f32 %v1232, %v1235
      %v1238 = vadd.f32 %v1233, %v1236
      %v1239 = vperm.slane %v731, 7
      %v1240 = vmul.f32 %v848, %v1239
      %v1241 = vmul.f32 %v849, %v1239
      %v1242 = vadd.f32 %v1237, %v1240
      %v1243 = vadd.f32 %v1238, %v1241
      %v1244 = vperm.slane %v732, 0
      %v1245 = vmul.f32 %v851, %v1244
      %v1246 = vmul.f32 %v853, %v1244
      %v1247 = vadd.f32 %v1242, %v1245
      %v1248 = vadd.f32 %v1243, %v1246
      %v1249 = vperm.slane %v735, 2
      %v1250 = vadd.f32 %v1247, %v1249
      %v1251 = vadd.f32 %v1248, %v1249
      %v1252 = vperm.slane %v733, 0
      %v1253 = vmul.f32 %v825, %v1252
      %v1254 = vmul.f32 %v826, %v1252
      %v1255 = vperm.slane %v733, 1
      %v1256 = vmul.f32 %v827, %v1255
      %v1257 = vmul.f32 %v828, %v1255
      %v1258 = vadd.f32 %v1253, %v1256
      %v1259 = vadd.f32 %v1254, %v1257
      %v1260 = vperm.slane %v733, 2
      %v1261 = vmul.f32 %v834, %v1260
      %v1262 = vmul.f32 %v836, %v1260
      %v1263 = vadd.f32 %v1258, %v1261
      %v1264 = vadd.f32 %v1259, %v1262
      %v1265 = vperm.slane %v733, 3
      %v1266 = vmul.f32 %v829, %v1265
      %v1267 = vmul.f32 %v830, %v1265
      %v1268 = vadd.f32 %v1263, %v1266
      %v1269 = vadd.f32 %v1264, %v1267
      %v1270 = vperm.slane %v733, 4
      %v1271 = vmul.f32 %v831, %v1270
      %v1272 = vmul.f32 %v832, %v1270
      %v1273 = vadd.f32 %v1268, %v1271
      %v1274 = vadd.f32 %v1269, %v1272
      %v1275 = vperm.slane %v733, 5
      %v1276 = vmul.f32 %v838, %v1275
      %v1277 = vmul.f32 %v840, %v1275
      %v1278 = vadd.f32 %v1273, %v1276
      %v1279 = vadd.f32 %v1274, %v1277
      %v1280 = vperm.slane %v733, 6
      %v1281 = vmul.f32 %v844, %v1280
      %v1282 = vmul.f32 %v845, %v1280
      %v1283 = vadd.f32 %v1278, %v1281
      %v1284 = vadd.f32 %v1279, %v1282
      %v1285 = vperm.slane %v733, 7
      %v1286 = vmul.f32 %v848, %v1285
      %v1287 = vmul.f32 %v849, %v1285
      %v1288 = vadd.f32 %v1283, %v1286
      %v1289 = vadd.f32 %v1284, %v1287
      %v1290 = vperm.slane %v734, 0
      %v1291 = vmul.f32 %v851, %v1290
      %v1292 = vmul.f32 %v853, %v1290
      %v1293 = vadd.f32 %v1288, %v1291
      %v1294 = vadd.f32 %v1289, %v1292
      %v1295 = vperm.slane %v735, 3
      %v1296 = vadd.f32 %v1293, %v1295
      %v1297 = vadd.f32 %v1294, %v1295
      %v1298 = vsub.f32 %v1250, %v1296
      %v1299 = vsub.f32 %v1251, %v1297
      %v1300 = vmul.f32 %v1190, %v1298
      %v1301 = vmul.f32 %v1205, %v1299
      %v1302 = vadd.f32 %v1296, %v1300
      %v1303 = vadd.f32 %v1297, %v1301
      %v1304 = vmul.f32 %v1302, %v823
      %v1305 = vmul.f32 %v1303, %v824
      %v1306 = vrot.slane %v1120, 7
      %v1307 = vrot.slane %v1121, 7
      %vm1308 = vcmp.lt.s32.totalorder %v742, 1
      %v1309 = vsel %vm1308, %v1306, %v1307
      %v1310 = vsel %vm1308, %v1307, %v1306
      %1311 = vrot.lane.b32.xlu0 %v1310, 8
      %v1312 = vpop.permute.xlu0 %1311
      %1313 = vrot.lane.b32.xlu0 %v1309, 8
      %v1314 = vpop.permute.xlu0 %1313
      %v1315 = vmul.f32 %v1312, %v1122
      %v1316 = vmul.f32 %v1314, %v1122
      %v1317 = vmul.f32 %v1310, %v1125
      %v1318 = vmul.f32 %v1309, %v1125
      %v1319 = vadd.f32 %v1315, %v1317
      %v1320 = vadd.f32 %v1316, %v1318
      %1321 = vrot.lane.b32.xlu0 %v1310, 120
      %v1322 = vpop.permute.xlu0 %1321
      %1323 = vrot.lane.b32.xlu0 %v1309, 120
      %v1324 = vpop.permute.xlu0 %1323
      %v1325 = vmul.f32 %v1322, %v1130
      %v1326 = vmul.f32 %v1324, %v1130
      %v1327 = vadd.f32 %v1319, %v1325
      %v1328 = vadd.f32 %v1320, %v1326
      %1329 = vrot.lane.b32.xlu0 %v1120, 8
      %v1330 = vpop.permute.xlu0 %1329
      %1331 = vrot.lane.b32.xlu0 %v1121, 8
      %v1332 = vpop.permute.xlu0 %1331
      %v1333 = vmul.f32 %v1330, %v1135
      %v1334 = vmul.f32 %v1332, %v1135
      %v1335 = vadd.f32 %v1327, %v1333
      %v1336 = vadd.f32 %v1328, %v1334
      %v1337 = vmul.f32 %v1120, %v1140
      %v1338 = vmul.f32 %v1121, %v1140
      %v1339 = vadd.f32 %v1335, %v1337
      %v1340 = vadd.f32 %v1336, %v1338
      %1341 = vrot.lane.b32.xlu0 %v1120, 120
      %v1342 = vpop.permute.xlu0 %1341
      %1343 = vrot.lane.b32.xlu0 %v1121, 120
      %v1344 = vpop.permute.xlu0 %1343
      %v1345 = vmul.f32 %v1342, %v1145
      %v1346 = vmul.f32 %v1344, %v1145
      %v1347 = vadd.f32 %v1339, %v1345
      %v1348 = vadd.f32 %v1340, %v1346
      %v1349 = vrot.slane %v1120, 1
      %v1350 = vrot.slane %v1121, 1
      %v1351 = vsel %vm843, %v1349, %v1350
      %v1352 = vsel %vm843, %v1350, %v1349
      %1353 = vrot.lane.b32.xlu0 %v1351, 8
      %v1354 = vpop.permute.xlu0 %1353
      %1355 = vrot.lane.b32.xlu0 %v1352, 8
      %v1356 = vpop.permute.xlu0 %1355
      %v1357 = vmul.f32 %v1354, %v1150
      %v1358 = vmul.f32 %v1356, %v1150
      %v1359 = vadd.f32 %v1347, %v1357
      %v1360 = vadd.f32 %v1348, %v1358
      %v1361 = vmul.f32 %v1351, %v1155
      %v1362 = vmul.f32 %v1352, %v1155
      %v1363 = vadd.f32 %v1359, %v1361
      %v1364 = vadd.f32 %v1360, %v1362
      %1365 = vrot.lane.b32.xlu0 %v1351, 120
      %v1366 = vpop.permute.xlu0 %1365
      %1367 = vrot.lane.b32.xlu0 %v1352, 120
      %v1368 = vpop.permute.xlu0 %1367
      %v1369 = vmul.f32 %v1366, %v1160
      %v1370 = vmul.f32 %v1368, %v1160
      %v1371 = vadd.f32 %v1363, %v1369
      %v1372 = vadd.f32 %v1364, %v1370
      %v1373 = vperm.slane %v740, 2
      %v1374 = vadd.f32 %v1371, %v1373
      %v1375 = vadd.f32 %v1372, %v1373
      %v1376 = vxor.u32 %v1374, 2147483648
      %v1377 = vxor.u32 %v1375, 2147483648
      %v1378 = vmul.f32 %v1376, 1.442695
      %v1379 = vpow.pop %v1378
      %v1380 = vmul.f32 %v1377, 1.442695
      %v1381 = vpow.pop %v1380
      %v1382 = vadd.f32 %v1379, 1.0
      %v1383 = vadd.f32 %v1381, 1.0
      %v1384 = vrcp.pop %v1382
      %v1385 = vmul.f32 %v1382, %v1384
      %v1386 = vsub.f32 1.0, %v1385
      %v1387 = vmul.f32 %v1384, %v1386
      %v1388 = vadd.f32 %v1384, %v1387
      %vm1389 = vweird.f32 %v1382
      %vm1390 = vweird.f32 %v1384
      %vm1391 = vmor %vm1389, %vm1390
      %v1392 = vsel %vm1391, %v1384, %v1388
      %v1393 = vand.u32 2147483647, %v1382
      %vm1394 = vcmp.eq.f32.partialorder %v1393, 8.507059e+37
      %v1395 = vand.u32 %v1382, 2147483648
      %v1396 = vor.u32 1.1754944e-38, %v1395
      %v1397 = vsel %vm1394, %v1396, %v1392
      %v1398 = vmul.f32 1.0, %v1397
      %v1399 = vrcp.pop %v1383
      %v1400 = vmul.f32 %v1383, %v1399
      %v1401 = vsub.f32 1.0, %v1400
      %v1402 = vmul.f32 %v1399, %v1401
      %v1403 = vadd.f32 %v1399, %v1402
      %vm1404 = vweird.f32 %v1383
      %vm1405 = vweird.f32 %v1399
      %vm1406 = vmor %vm1404, %vm1405
      %v1407 = vsel %vm1406, %v1399, %v1403
      %v1408 = vand.u32 2147483647, %v1383
      %vm1409 = vcmp.eq.f32.partialorder %v1408, 8.507059e+37
      %v1410 = vand.u32 %v1383, 2147483648
      %v1411 = vor.u32 1.1754944e-38, %v1410
      %v1412 = vsel %vm1409, %v1411, %v1407
      %v1413 = vmul.f32 1.0, %v1412
      %v1414 = vadd.f32 %v936, %v1304
      %v1415 = vadd.f32 %v937, %v1305
      %v1416 = vsub.f32 %v1120, %v1304
      %v1417 = vsub.f32 %v1121, %v1305
      %v1418 = vmul.f32 %v1398, %v1416
      %v1419 = vmul.f32 %v1413, %v1417
      %v1420 = vadd.f32 %v1414, %v1418
      %v1421 = vadd.f32 %v1415, %v1419
      %v1422 = vmul.f32 %v1420, %v823
      %v1423 = vmul.f32 %v1421, %v824
      %v1424 = vrot.slane %v1422, 1
      %v1425 = vrot.slane %v1423, 1
      %v1426 = vsel %vm843, %v1424, %v1425
      %1427 = vrot.lane.b32.xlu0 %v1426, 120
      %v1428 = vpop.permute.xlu0 %1427
      %1429 = vst [vmem:[%s557] sm:$0xff] %v1428
      %p1430 = scmp.lt.s32.totalorder %s27, 1
      %s1431 = scalar_select %p1430, %s27, 1
      %s1432 = smul.addr %s1431, 8
      %s1433 = scalar_lea.vmem %s12, %s1432
      // Predicated region
      $region65: #{cmaxgb2_forward.2} parent=63 // pred_check
        %p1434 = pneg %p308
      $region66: #{cmaxgb2_forward.2} parent=63 // pred_check_branch
        %1436 = sbr.rel (%p1434) target = $region68
      $region67: #{cmaxgb2_forward.2} parent=63 // pred_region
        _
      $region68: #{cmaxgb2_forward.2} parent=63 // pred_fallthru
        _
    $region64: #{cmaxgb2_forward.2} parent=5 // pred_fallthru
      _
    %p1437 = scmp.le.s32.totalorder 2, %s22
    // Predicated region
    $region69: #{cmaxgb2_forward.2} parent=5 // pred_check
      %p1438 = pneg %p1437
    $region70: #{cmaxgb2_forward.2} parent=5 // pred_check_branch
      %1440 = sbr.rel (%p1438) target = $region72
    $region71: #{cmaxgb2_forward.2} parent=5 // pred_region
      %s1441 = ssub.s32 %s22, 2
      // Predicated region
      $region73: #{cmaxgb2_forward.2} parent=71 // pred_check
        %p1442 = pneg %p314
      $region74: #{cmaxgb2_forward.2} parent=71 // pred_check_branch
        %1444 = sbr.rel (%p1442) target = $region76
      $region75: #{cmaxgb2_forward.2} parent=71 // pred_region
        %p1445 = scmp.lt.s32.totalorder %s28, 1
        %s1446 = scalar_select %p1445, %s28, 1
        %s1447 = smul.addr %s1446, 8
        %s1448 = scalar_lea.vmem %s12, %s1447
      $region76: #{cmaxgb2_forward.2} parent=71 // pred_fallthru
        _
    $region72: #{cmaxgb2_forward.2} parent=5 // pred_fallthru
      _
  $region6: #{cmaxgb2_forward.2} parent=0 // loop_footer
    %s26 = sadd.s32 1, %s22
  $region7: #{cmaxgb2_forward.2} parent=0 // loop_footer_branch
    %21 = sbr.rel target = $region3
  $region8: #{cmaxgb2_forward.2} parent=0 // loop_exit
    _

</llo_original>
